<compile_context>
chip_gen: v5e
topology: v5e:2x2
jax: 0.10.0
libtpu: 0.0.40
codegen_flags: <defaults>
</compile_context>

<pallas_src>
import functools

import jax
import jax.numpy as jnp
from jax.experimental import pallas as pl
from jax.experimental.pallas import tpu as pltpu


def _round_up(x, m):
    return ((x + m - 1) // m) * m


def _pick_bb(B):
    """Largest divisor of B (<= 8) that still leaves >= 2 grid steps if possible."""
    cap = min(8, B)
    fallback = 1
    for bb in range(cap, 0, -1):
        if B % bb == 0:
            if B // bb >= 2:
                return bb
            fallback = max(fallback, bb)
    return fallback


# -----------------------------------------------------------------------------
# Fused forward kernel (BB batch elements per grid step)
# -----------------------------------------------------------------------------
def _stlt_fused_kernel(
    box_ref, pei_ref, gmat_ref, sel_ref, mask_h_ref, mask_o_ref,
    g2h_ref, g2hT_ref, g2o_ref, g2oT_ref, pool_h_ref, pool_o_ref,
    embw_ref, misc_ref, snf_w1_ref, snf_w2_ref,
    wproj_ref, w1_ref, w2_ref, b1_ref, vec_ref,
    clsw1_ref, clsw2_ref, clsb2_ref, out_ref,
    *, T, NB, E, H, depth, BB):
    f32 = jnp.float32
    dh = E // H
    scale = float(dh) ** -0.5
    Lht = BB * 2 * T            # merged hand tokens per step
    Lot = BB * (NB - 2) * T     # merged object tokens per step

    def layernorm(x, g, b, eps):
        mu = jnp.mean(x, axis=-1, keepdims=True)
        xc = x - mu
        var = jnp.mean(xc * xc, axis=-1, keepdims=True)
        return xc * jax.lax.rsqrt(var + eps) * g + b

    def cross_block(x, ctx, pe_x, pe_ctx, d, mask, g2, g2T):
        """Pre-norm cross-attention block (queries=x, keys/values=ctx).

        All heads and all BB merged samples handled by a few large 2-D
        matmuls; `mask` keeps attention block-diagonal across samples,
        g2 / g2T encode the head-block structure.
        """
        wq = wproj_ref[4 * d + 0]
        wkT = wproj_ref[4 * d + 1]     # stored pre-transposed: (E_out, E_in)
        wv = wproj_ref[4 * d + 2]
        wo = wproj_ref[4 * d + 3]
        w1 = w1_ref[d]
        w2 = w2_ref[d]
        b1 = b1_ref[d:d + 1, :]        # (1, Eh)
        vec = vec_ref[d]               # (16, E) packed vectors
        nq_g, nq_b = vec[0:1], vec[1:2]
        nk_g, nk_b = vec[2:3], vec[3:4]
        bq, bv, bo = vec[4:5], vec[6:7], vec[7:8]   # key bias (row 5) cancels
        n2_g, n2_b, b2 = vec[8:9], vec[9:10], vec[10:11]

        N = ctx.shape[0]
        xn = layernorm(x, nq_g, nq_b, 1e-6)
        cn = layernorm(ctx, nk_g, nk_b, 1e-6)
        q = jnp.dot(xn + pe_x, wq, preferred_element_type=f32) + bq          # (Mq, E)
        # kT[e, n] = sum_ei (cn+pe_ctx)[n, ei] * wk[ei, e]  (A @ B^T pattern)
        kT = jax.lax.dot_general(wkT, cn + pe_ctx, (((1,), (1,)), ((), ())),
                                 preferred_element_type=f32)                  # (E, N)
        v = jnp.dot(cn, wv, preferred_element_type=f32) + bv                  # (N, E)

        # Head-block-diagonal key / value slabs: one matmul covers all heads.
        kb = jnp.concatenate([kT] * H, axis=1) * g2T                          # (E, H*N)
        vb = jnp.concatenate([v] * H, axis=0) * g2                            # (H*N, E)

        s = jnp.dot(q, kb, preferred_element_type=f32) * scale + mask         # (Mq, H*N)
        # single softmax over the stacked scores (masked columns -> exp == 0)
        p = jnp.exp(s - jnp.max(s, axis=-1, keepdims=True))
        denom = jnp.dot(p, g2, preferred_element_type=f32)                    # (Mq, E) per-head sums
        ctx_o = jnp.dot(p, vb, preferred_element_type=f32)                    # (Mq, E) heads concat
        ctx_o = ctx_o * pl.reciprocal(denom, approx=True)
        x = x + jnp.dot(ctx_o, wo, preferred_element_type=f32) + bo

        xn2 = layernorm(x, n2_g, n2_b, 1e-6)
        # TODO(synk): PyTorch nn.GELU defaults to exact erf; tanh approximation
        # is used here for robust Mosaic lowering.
        hmid = jax.nn.gelu(jnp.dot(xn2, w1, preferred_element_type=f32) + b1)
        return x + jnp.dot(hmid, w2, preferred_element_type=f32) + b2

    box = box_ref[...]          # (BB*T*NB, 4), rows ordered (sample, frame, box)
    pei = pei_ref[...]          # (BB*T*NB, E)  temporal pe + identity embedding
    misc = misc_ref[...]        # (8, E)
    emb_b, emb_g, emb_be = misc[0:1], misc[1:2], misc[2:3]
    snf_b1, snf_b2, cls_b1 = misc[3:4], misc[4:5], misc[5:6]

    # CategoryBoxEmbeddings: Linear(4 -> E) + LayerNorm
    bt = jnp.dot(box, embw_ref[...], preferred_element_type=f32) + emb_b
    bt = layernorm(bt, emb_g, emb_be, 1e-12)

    # spatial message: per-(sample, frame) sum over boxes minus self,
    # via the precomputed grouping matrix (hoisted constant).
    frame_sum = jnp.dot(gmat_ref[...], bt, preferred_element_type=f32)
    msg = (frame_sum - bt) * (1.0 / (NB - 1))

    # spatial_node_fusion: concat folded into a split first weight; BN folded.
    snf_w1 = snf_w1_ref[...]
    h1 = (jnp.dot(bt, snf_w1[0:E, :], preferred_element_type=f32)
          + jnp.dot(msg, snf_w1[E:2 * E, :], preferred_element_type=f32)
          + snf_b1)
    h1 = jnp.maximum(h1, 0.0)
    h2 = jnp.dot(h1, snf_w2_ref[...], preferred_element_type=f32) + snf_b2
    h2 = jnp.maximum(h2, 0.0)

    tokens = h2 + pei           # (BB*T*NB, E)

    # hand / object split (tokens and their PEs) with two selection matmuls.
    sel = sel_ref[...]
    ho = jnp.dot(sel, tokens, preferred_element_type=f32)
    ho_pe = jnp.dot(sel, pei, preferred_element_type=f32)
    hand, obj = ho[:Lht], ho[Lht:]
    hand_pe, obj_pe = ho_pe[:Lht], ho_pe[Lht:]

    mask_h = mask_h_ref[...]
    mask_o = mask_o_ref[...]
    g2h, g2hT = g2h_ref[...], g2hT_ref[...]
    g2o, g2oT = g2o_ref[...], g2oT_ref[...]

    # HOReasonNet: hand <-> object cross-attention reasoning.
    for lvl in range(depth):
        h_new = cross_block(hand, obj, hand_pe, obj_pe, 2 * lvl,
                            mask_h, g2h, g2hT)
        o_new = cross_block(obj, hand, obj_pe, hand_pe, 2 * lvl + 1,
                            mask_o, g2o, g2oT)
        hand, obj = h_new, o_new

    # per-sample mean over cat([hand_out, obj_out]) + classifier for all
    # merged samples at once (rows padded to a full sublane tile).
    pooled = (jnp.dot(pool_h_ref[...], hand, preferred_element_type=f32)
              + jnp.dot(pool_o_ref[...], obj, preferred_element_type=f32))
    c1 = jnp.maximum(
        jnp.dot(pooled, clsw1_ref[...], preferred_element_type=f32) + cls_b1, 0.0)
    logits = jnp.dot(c1, clsw2_ref[...], preferred_element_type=f32) + clsb2_ref[...]
    out_ref[0] = logits        # (BBp, CP) lane-dense, unmasked store


# -----------------------------------------------------------------------------
# Constant (structure) matrices, built once outside the kernel
# -----------------------------------------------------------------------------
def _build_constants(T, NB, E, H, BB):
    f32 = jnp.float32
    dh = E // H
    TNB = T * NB
    M = BB * TNB
    Lh, Lo = 2 * T, (NB - 2) * T
    Lht, Lot = BB * Lh, BB * Lo
    BBp = max(8, _round_up(BB, 8))

    # frame-grouping matrix: rows with the same (sample, frame)
    r = jnp.arange(M)
    gmat = (r[:, None] // NB == r[None, :] // NB).astype(f32)          # (M, M)

    # hand / object row-selection matrix
    grp = jnp.arange(BB * T)
    hand_idx = (grp[:, None] * NB + jnp.arange(2)[None, :]).reshape(-1)
    obj_idx = (grp[:, None] * NB + 2 + jnp.arange(NB - 2)[None, :]).reshape(-1)
    sel = jax.nn.one_hot(jnp.concatenate([hand_idx, obj_idx]), M, dtype=f32)

    # additive block-diagonal mask across merged samples (tiled over heads)
    def batch_mask(lq, lk):
        qb = jnp.arange(BB * lq) // lq
        kb = jnp.arange(BB * lk) // lk
        base = jnp.where(qb[:, None] == kb[None, :], 0.0, -1e30).astype(f32)
        return jnp.concatenate([base] * H, axis=1)

    mask_h = batch_mask(Lh, Lo)                                        # (Lht, H*Lot)
    mask_o = batch_mask(Lo, Lh)                                        # (Lot, H*Lht)

    # head-group (block-diagonal) selection for the stacked key/value slabs
    def head_sel(n):
        rh = jnp.arange(H * n) // n
        ch = jnp.arange(E) // dh
        return (rh[:, None] == ch[None, :]).astype(f32)                # (H*n, E)

    g2_h = head_sel(Lot)
    g2_o = head_sel(Lht)

    # per-sample mean-pooling matrices (padded to BBp rows)
    inv = 1.0 / float(Lh + Lo)
    bp = jnp.arange(BBp)
    pool_h = (bp[:, None] == (jnp.arange(Lht)[None, :] // Lh)).astype(f32) * inv
    pool_o = (bp[:, None] == (jnp.arange(Lot)[None, :] // Lo)).astype(f32) * inv

    return dict(gmat=gmat, sel=sel, mask_h=mask_h, mask_o=mask_o,
                g2_h=g2_h, g2T_h=g2_h.T, g2_o=g2_o, g2T_o=g2_o.T,
                pool_h=pool_h, pool_o=pool_o)


# -----------------------------------------------------------------------------
# Wrapper
# -----------------------------------------------------------------------------
def stlt_forward(packed, box_input, box_category, cfg):
    B, T, NB, _ = box_input.shape
    E = cfg["embed_dim"]
    H = cfg["num_heads"]
    C = cfg["num_classes"]
    D = cfg["box_depths"]
    Eh = E * cfg["mlp_ratio"]
    TNB = T * NB

    BB = _pick_bb(B)
    G = B // BB
    BBp = max(8, _round_up(BB, 8))
    CP = _round_up(max(C, 128), 128)
    M = BB * TNB
    Lht = BB * 2 * T
    Lot = BB * (NB - 2) * T

    consts = _build_constants(T, NB, E, H, BB)

    # cheap XLA-side prep: embedding gather + temporal-pe broadcast add
    pe_rows = packed["box_temp_table"][:T][None, :, None, :]           # (1,T,1,E)
    pe_ident = (packed["identity_table"][box_category] + pe_rows).reshape(B * TNB, E)
    box_flat = box_input.reshape(B * TNB, 4)

    kernel = functools.partial(
        _stlt_fused_kernel, T=T, NB=NB, E=E, H=H, depth=D, BB=BB)

    cm = lambda g: (0, 0)
    cm3 = lambda g: (0, 0, 0)

    out = pl.pallas_call(
        kernel,
        out_shape=jax.ShapeDtypeStruct((G, BBp, CP), jnp.float32),
        grid=(G,),
        in_specs=[
            pl.BlockSpec((M, 4), lambda g: (g, 0)),      # box coords (per step)
            pl.BlockSpec((M, E), lambda g: (g, 0)),      # pe + identity (per step)
            pl.BlockSpec((M, M), cm),                    # frame grouping
            pl.BlockSpec((Lht + Lot, M), cm),            # hand/obj selection
            pl.BlockSpec((Lht, H * Lot), cm),            # hand-branch mask
            pl.BlockSpec((Lot, H * Lht), cm),            # obj-branch mask
            pl.BlockSpec((H * Lot, E), cm),              # head-group (hand keys)
            pl.BlockSpec((E, H * Lot), cm),
            pl.BlockSpec((H * Lht, E), cm),              # head-group (obj keys)
            pl.BlockSpec((E, H * Lht), cm),
            pl.BlockSpec((BBp, Lht), cm),                # pooling (hand)
            pl.BlockSpec((BBp, Lot), cm),                # pooling (obj)
            pl.BlockSpec((4, E), cm),                    # box embed W
            pl.BlockSpec((8, E), cm),                    # misc bias/ln vectors
            pl.BlockSpec((2 * E, E), cm),                # snf W1
            pl.BlockSpec((E, E), cm),                    # snf W2
            pl.BlockSpec((4 * 2 * D, E, E), cm3),        # packed [wq,wk^T,wv,wo]
            pl.BlockSpec((2 * D, E, Eh), cm3),           # MLP W1
            pl.BlockSpec((2 * D, Eh, E), cm3),           # MLP W2
            pl.BlockSpec((2 * D, Eh), cm),               # MLP b1
            pl.BlockSpec((2 * D, 16, E), cm3),           # packed vectors
            pl.BlockSpec((E, E), cm),                    # cls W1
            pl.BlockSpec((E, CP), cm),                   # cls W2 (lane padded)
            pl.BlockSpec((1, CP), cm),                   # cls b2 (lane padded)
        ],
        out_specs=pl.BlockSpec((1, BBp, CP), lambda g: (g, 0, 0)),
        compiler_params=pltpu.CompilerParams(
            dimension_semantics=("parallel",)),
    )(box_flat, pe_ident, consts["gmat"], consts["sel"],
      consts["mask_h"], consts["mask_o"],
      consts["g2_h"], consts["g2T_h"], consts["g2_o"], consts["g2T_o"],
      consts["pool_h"], consts["pool_o"],
      packed["embed_w"], packed["misc"], packed["snf_w1"], packed["snf_w2"],
      packed["wproj"], packed["blk_w1"], packed["blk_w2"], packed["blk_b1"],
      packed["blk_vec"], packed["cls_w1"], packed["cls_w2p"], packed["cls_b2p"])

    return out[:, :BB, :C].reshape(B, C)


# -----------------------------------------------------------------------------
# Deterministic parameter initialization + packing
# -----------------------------------------------------------------------------
def _init_block(key, E, mlp_ratio):
    ks = jax.random.split(key, 6)
    Eh = E * mlp_ratio

    def nrm(k, shape, scale=0.02):
        return scale * jax.random.normal(k, shape, dtype=jnp.float32)

    return dict(
        nq_g=jnp.ones((E,), jnp.float32), nq_b=jnp.zeros((E,), jnp.float32),
        nk_g=jnp.ones((E,), jnp.float32), nk_b=jnp.zeros((E,), jnp.float32),
        wq=nrm(ks[0], (E, E)), bq=jnp.zeros((E,), jnp.float32),
        wk=nrm(ks[1], (E, E)), bk=jnp.zeros((E,), jnp.float32),
        wv=nrm(ks[2], (E, E)), bv=jnp.zeros((E,), jnp.float32),
        wo=nrm(ks[3], (E, E)), bo=jnp.zeros((E,), jnp.float32),
        n2_g=jnp.ones((E,), jnp.float32), n2_b=jnp.zeros((E,), jnp.float32),
        w1=nrm(ks[4], (E, Eh)), b1=jnp.zeros((Eh,), jnp.float32),
        w2=nrm(ks[5], (Eh, E)), b2=jnp.zeros((E,), jnp.float32),
    )


def init_params(key, cfg):
    E = cfg["embed_dim"]
    T = cfg["nr_frames"]
    C = cfg["num_classes"]
    R = cfg["mlp_ratio"]
    D = cfg["box_depths"]

    keys = list(jax.random.split(key, 64))
    it = iter(keys)

    def nrm(shape, scale=0.02):
        return scale * jax.random.normal(next(it), shape, dtype=jnp.float32)

    params = {}
    params["identity_table"] = nrm((3, E)).at[0].set(0.0)   # padding_idx=0
    params["box_temp_table"] = nrm((T, E))
    params["box_embed_w"] = nrm((4, E))
    params["box_embed_b"] = jnp.zeros((E,), jnp.float32)
    params["box_embed_ln_g"] = jnp.ones((E,), jnp.float32)
    params["box_embed_ln_b"] = jnp.zeros((E,), jnp.float32)

    def bn_fold(k, c):
        ks = jax.random.split(k, 3)
        gamma = 1.0 + 0.1 * jax.random.normal(ks[0], (c,), dtype=jnp.float32)
        beta = 0.1 * jax.random.normal(ks[1], (c,), dtype=jnp.float32)
        mean = 0.05 * jax.random.normal(ks[2], (c,), dtype=jnp.float32)
        var = jnp.ones((c,), jnp.float32)
        scale = gamma * jax.lax.rsqrt(var + 1e-5)
        shift = beta - mean * scale
        return scale, shift

    w1 = nrm((2 * E, E))
    s1, sh1 = bn_fold(next(it), E)
    w2 = nrm((E, E))
    s2, sh2 = bn_fold(next(it), E)
    params["snf_w1"] = w1 * s1[None, :]
    params["snf_b1"] = sh1
    params["snf_w2"] = w2 * s2[None, :]
    params["snf_b2"] = sh2

    params["reason_hand"] = [_init_block(next(it), E, R) for _ in range(D)]
    params["reason_obj"] = [_init_block(next(it), E, R) for _ in range(D)]

    params["cls_w1"] = nrm((E, E))
    params["cls_b1"] = jnp.zeros((E,), jnp.float32)
    params["cls_w2"] = nrm((E, C))
    params["cls_b2"] = jnp.zeros((C,), jnp.float32)
    return params


def pack_params(p, cfg):
    """Pack parameters into the stacked arrays the fused kernel consumes."""
    E = cfg["embed_dim"]
    C = cfg["num_classes"]
    D = cfg["box_depths"]
    CP = _round_up(max(C, 128), 128)

    blocks = []
    for d in range(D):
        blocks.append(p["reason_hand"][d])   # block index 2*d
        blocks.append(p["reason_obj"][d])    # block index 2*d + 1

    def stack(fn):
        return jnp.stack([fn(b) for b in blocks], axis=0)

    # one stream for all projection weights; wk stored pre-transposed
    wproj = jnp.concatenate(
        [jnp.stack([b["wq"], b["wk"].T, b["wv"], b["wo"]], axis=0)
         for b in blocks], axis=0)                          # (4*2D, E, E)

    def vecrows(b):
        rows = [b["nq_g"], b["nq_b"], b["nk_g"], b["nk_b"], b["bq"], b["bk"],
                b["bv"], b["bo"], b["n2_g"], b["n2_b"], b["b2"]]
        rows += [jnp.zeros((E,), jnp.float32)] * (16 - len(rows))
        return jnp.stack(rows, axis=0)

    misc = jnp.stack([
        p["box_embed_b"], p["box_embed_ln_g"], p["box_embed_ln_b"],
        p["snf_b1"], p["snf_b2"], p["cls_b1"],
        jnp.zeros((E,), jnp.float32), jnp.zeros((E,), jnp.float32),
    ], axis=0)

    cls_w2p = jnp.zeros((E, CP), jnp.float32).at[:, :C].set(p["cls_w2"])
    cls_b2p = jnp.zeros((1, CP), jnp.float32).at[0, :C].set(p["cls_b2"])

    return dict(
        identity_table=p["identity_table"],
        box_temp_table=p["box_temp_table"],
        embed_w=p["box_embed_w"],
        misc=misc,
        snf_w1=p["snf_w1"], snf_w2=p["snf_w2"],
        wproj=wproj,
        blk_w1=stack(lambda b: b["w1"]),
        blk_w2=stack(lambda b: b["w2"]),
        blk_b1=stack(lambda b: b["b1"]),
        blk_vec=stack(vecrows),
        cls_w1=p["cls_w1"], cls_w2p=cls_w2p, cls_b2p=cls_b2p,
    )


# -----------------------------------------------------------------------------
# Main
# -----------------------------------------------------------------------------
if __name__ == "__main__":
    cfg = dict(
        embed_dim=32,    # cfg.VIT.EMBED_DIM
        num_heads=4,     # cfg.VIT.NUM_HEADS
        nr_boxes=4,      # cfg.DATA.NUM_BOXES  (2 hands + 2 objects)
        nr_frames=8,     # cfg.DATA.NUM_FRAMES
        num_classes=10,  # cfg.MODEL.NUM_CLASSES
        mlp_ratio=4,     # cfg.VIT.MLP_RATIO
        box_depths=2,    # cfg.REASON.BOX_DEPTHS
    )

    key = jax.random.PRNGKey(0)
    k_param, k_box, k_cat = jax.random.split(key, 3)

    params = init_params(k_param, cfg)
    packed = pack_params(params, cfg)

    # B=8 exercises batch merging (4 samples per grid step) while keeping
    # 2 grid steps so both v7x TensorCores get work.
    B = 8
    box_input = jax.random.uniform(
        k_box, (B, cfg["nr_frames"], cfg["nr_boxes"], 4), dtype=jnp.float32)
    box_category = jax.random.randint(
        k_cat, (B, cfg["nr_frames"], cfg["nr_boxes"]), 0, 3)

    fwd = jax.jit(functools.partial(stlt_forward, cfg=cfg))
    out = fwd(packed, box_input, box_category)
    out = jax.block_until_ready(out)

    assert out.shape == (B, cfg["num_classes"]), out.shape
    assert bool(jnp.all(jnp.isfinite(out)))
    print("KERNEL_OK")
</pallas_src>

<mosaic_0001>
module attributes {stable_mosaic.version = 11 : i64} {
  func.func @_stlt_fused_kernel(%arg0: i32, %arg1: memref<128x4xf32, #tpu.memory_space<vmem>>, %arg2: memref<128x32xf32, #tpu.memory_space<vmem>>, %arg3: memref<128x128xf32, #tpu.memory_space<vmem>>, %arg4: memref<128x128xf32, #tpu.memory_space<vmem>>, %arg5: memref<64x256xf32, #tpu.memory_space<vmem>>, %arg6: memref<64x256xf32, #tpu.memory_space<vmem>>, %arg7: memref<256x32xf32, #tpu.memory_space<vmem>>, %arg8: memref<32x256xf32, #tpu.memory_space<vmem>>, %arg9: memref<256x32xf32, #tpu.memory_space<vmem>>, %arg10: memref<32x256xf32, #tpu.memory_space<vmem>>, %arg11: memref<8x64xf32, #tpu.memory_space<vmem>>, %arg12: memref<8x64xf32, #tpu.memory_space<vmem>>, %arg13: memref<4x32xf32, #tpu.memory_space<vmem>>, %arg14: memref<8x32xf32, #tpu.memory_space<vmem>>, %arg15: memref<64x32xf32, #tpu.memory_space<vmem>>, %arg16: memref<32x32xf32, #tpu.memory_space<vmem>>, %arg17: memref<16x32x32xf32, #tpu.memory_space<vmem>>, %arg18: memref<4x32x128xf32, #tpu.memory_space<vmem>>, %arg19: memref<4x128x32xf32, #tpu.memory_space<vmem>>, %arg20: memref<4x128xf32, #tpu.memory_space<vmem>>, %arg21: memref<4x16x32xf32, #tpu.memory_space<vmem>>, %arg22: memref<32x32xf32, #tpu.memory_space<vmem>>, %arg23: memref<32x128xf32, #tpu.memory_space<vmem>>, %arg24: memref<1x128xf32, #tpu.memory_space<vmem>>, %arg25: memref<1x8x128xf32, #tpu.memory_space<vmem>>) attributes {dimension_semantics = [#tpu.dimension_semantics<parallel>], iteration_bounds = array<i64: 2>, scalar_prefetch = 0 : i64, scratch_operands = 0 : i64, tpu.core_type = #tpu.core_type<tc>, window_params = [{transform_indices = @transform_0, window_bounds = array<i64: 128, 4>}, {transform_indices = @transform_1, window_bounds = array<i64: 128, 32>}, {pipeline_mode = #tpu.pipeline_mode<synchronous>, transform_indices = @transform_2, window_bounds = array<i64: 128, 128>}, {pipeline_mode = #tpu.pipeline_mode<synchronous>, transform_indices = @transform_3, window_bounds = array<i64: 128, 128>}, {pipeline_mode = #tpu.pipeline_mode<synchronous>, transform_indices = @transform_4, window_bounds = array<i64: 64, 256>}, {pipeline_mode = #tpu.pipeline_mode<synchronous>, transform_indices = @transform_5, window_bounds = array<i64: 64, 256>}, {pipeline_mode = #tpu.pipeline_mode<synchronous>, transform_indices = @transform_6, window_bounds = array<i64: 256, 32>}, {pipeline_mode = #tpu.pipeline_mode<synchronous>, transform_indices = @transform_7, window_bounds = array<i64: 32, 256>}, {pipeline_mode = #tpu.pipeline_mode<synchronous>, transform_indices = @transform_8, window_bounds = array<i64: 256, 32>}, {pipeline_mode = #tpu.pipeline_mode<synchronous>, transform_indices = @transform_9, window_bounds = array<i64: 32, 256>}, {pipeline_mode = #tpu.pipeline_mode<synchronous>, transform_indices = @transform_10, window_bounds = array<i64: 8, 64>}, {pipeline_mode = #tpu.pipeline_mode<synchronous>, transform_indices = @transform_11, window_bounds = array<i64: 8, 64>}, {pipeline_mode = #tpu.pipeline_mode<synchronous>, transform_indices = @transform_12, window_bounds = array<i64: 4, 32>}, {pipeline_mode = #tpu.pipeline_mode<synchronous>, transform_indices = @transform_13, window_bounds = array<i64: 8, 32>}, {pipeline_mode = #tpu.pipeline_mode<synchronous>, transform_indices = @transform_14, window_bounds = array<i64: 64, 32>}, {pipeline_mode = #tpu.pipeline_mode<synchronous>, transform_indices = @transform_15, window_bounds = array<i64: 32, 32>}, {pipeline_mode = #tpu.pipeline_mode<synchronous>, transform_indices = @transform_16, window_bounds = array<i64: 16, 32, 32>}, {pipeline_mode = #tpu.pipeline_mode<synchronous>, transform_indices = @transform_17, window_bounds = array<i64: 4, 32, 128>}, {pipeline_mode = #tpu.pipeline_mode<synchronous>, transform_indices = @transform_18, window_bounds = array<i64: 4, 128, 32>}, {pipeline_mode = #tpu.pipeline_mode<synchronous>, transform_indices = @transform_19, window_bounds = array<i64: 4, 128>}, {pipeline_mode = #tpu.pipeline_mode<synchronous>, transform_indices = @transform_20, window_bounds = array<i64: 4, 16, 32>}, {pipeline_mode = #tpu.pipeline_mode<synchronous>, transform_indices = @transform_21, window_bounds = array<i64: 32, 32>}, {pipeline_mode = #tpu.pipeline_mode<synchronous>, transform_indices = @transform_22, window_bounds = array<i64: 32, 128>}, {pipeline_mode = #tpu.pipeline_mode<synchronous>, transform_indices = @transform_23, window_bounds = array<i64: 1, 128>}, {transform_indices = @transform_24, window_bounds = array<i64: 1, 8, 128>}]} {
    %c0 = arith.constant 0 : index
    %c0_0 = arith.constant 0 : index
    %0 = vector.load %arg1[%c0, %c0_0] : memref<128x4xf32, #tpu.memory_space<vmem>>, vector<128x4xf32>
    %c0_1 = arith.constant 0 : index
    %c0_2 = arith.constant 0 : index
    %1 = vector.load %arg2[%c0_1, %c0_2] : memref<128x32xf32, #tpu.memory_space<vmem>>, vector<128x32xf32>
    %c0_3 = arith.constant 0 : index
    %c0_4 = arith.constant 0 : index
    %2 = vector.load %arg14[%c0_3, %c0_4] : memref<8x32xf32, #tpu.memory_space<vmem>>, vector<8x32xf32>
    %3 = vector.extract_strided_slice %2 {offsets = [0, 0], sizes = [1, 32], strides = [1, 1]} : vector<8x32xf32> to vector<1x32xf32>
    %4 = vector.extract_strided_slice %2 {offsets = [1, 0], sizes = [1, 32], strides = [1, 1]} : vector<8x32xf32> to vector<1x32xf32>
    %5 = vector.extract_strided_slice %2 {offsets = [2, 0], sizes = [1, 32], strides = [1, 1]} : vector<8x32xf32> to vector<1x32xf32>
    %6 = vector.extract_strided_slice %2 {offsets = [3, 0], sizes = [1, 32], strides = [1, 1]} : vector<8x32xf32> to vector<1x32xf32>
    %7 = vector.extract_strided_slice %2 {offsets = [4, 0], sizes = [1, 32], strides = [1, 1]} : vector<8x32xf32> to vector<1x32xf32>
    %8 = vector.extract_strided_slice %2 {offsets = [5, 0], sizes = [1, 32], strides = [1, 1]} : vector<8x32xf32> to vector<1x32xf32>
    %c0_5 = arith.constant 0 : index
    %c0_6 = arith.constant 0 : index
    %9 = vector.load %arg13[%c0_5, %c0_6] : memref<4x32xf32, #tpu.memory_space<vmem>>, vector<4x32xf32>
    %cst = arith.constant dense<0.000000e+00> : vector<128x32xf32>
    %10 = tpu.matmul %0, %9, %cst {dimension_numbers = #tpu.dot_dimension_numbers<[1], [0], [0], [1], [0, 0, 1, 1], [], []>} : vector<128x4xf32>, vector<4x32xf32>, vector<128x32xf32> -> vector<128x32xf32>
    %11 = vector.broadcast %3 : vector<1x32xf32> to vector<128x32xf32>
    %12 = arith.addf %10, %11 : vector<128x32xf32>
    %cst_7 = arith.constant dense<0.000000e+00> : vector<128xf32>
    %13 = vector.multi_reduction <add>, %12, %cst_7 [1] : vector<128x32xf32> to vector<128xf32>
    %14 = vector.shape_cast %13 : vector<128xf32> to vector<128x1xf32>
    %cst_8 = arith.constant 3.200000e+01 : f32
    %15 = vector.broadcast %cst_8 : f32 to vector<128x1xf32>
    %16 = arith.divf %14, %15 : vector<128x1xf32>
    %17 = vector.broadcast %16 : vector<128x1xf32> to vector<128x32xf32>
    %18 = arith.subf %12, %17 : vector<128x32xf32>
    %19 = arith.mulf %18, %18 : vector<128x32xf32>
    %cst_9 = arith.constant dense<0.000000e+00> : vector<128xf32>
    %20 = vector.multi_reduction <add>, %19, %cst_9 [1] : vector<128x32xf32> to vector<128xf32>
    %21 = vector.shape_cast %20 : vector<128xf32> to vector<128x1xf32>
    %cst_10 = arith.constant 3.200000e+01 : f32
    %22 = vector.broadcast %cst_10 : f32 to vector<128x1xf32>
    %23 = arith.divf %21, %22 : vector<128x1xf32>
    %cst_11 = arith.constant 9.99999996E-13 : f32
    %24 = vector.broadcast %cst_11 : f32 to vector<128x1xf32>
    %25 = arith.addf %23, %24 : vector<128x1xf32>
    %26 = math.rsqrt %25 : vector<128x1xf32>
    %27 = vector.broadcast %26 : vector<128x1xf32> to vector<128x32xf32>
    %28 = arith.mulf %18, %27 : vector<128x32xf32>
    %29 = vector.broadcast %4 : vector<1x32xf32> to vector<128x32xf32>
    %30 = arith.mulf %28, %29 : vector<128x32xf32>
    %31 = vector.broadcast %5 : vector<1x32xf32> to vector<128x32xf32>
    %32 = arith.addf %30, %31 : vector<128x32xf32>
    %c0_12 = arith.constant 0 : index
    %c0_13 = arith.constant 0 : index
    %33 = vector.load %arg3[%c0_12, %c0_13] : memref<128x128xf32, #tpu.memory_space<vmem>>, vector<128x128xf32>
    %cst_14 = arith.constant dense<0.000000e+00> : vector<128x32xf32>
    %34 = tpu.matmul %33, %32, %cst_14 {dimension_numbers = #tpu.dot_dimension_numbers<[1], [0], [0], [1], [0, 0, 1, 1], [], []>} : vector<128x128xf32>, vector<128x32xf32>, vector<128x32xf32> -> vector<128x32xf32>
    %35 = arith.subf %34, %32 : vector<128x32xf32>
    %cst_15 = arith.constant 0.333333343 : f32
    %36 = vector.broadcast %cst_15 : f32 to vector<128x32xf32>
    %37 = arith.mulf %35, %36 : vector<128x32xf32>
    %c0_16 = arith.constant 0 : index
    %c0_17 = arith.constant 0 : index
    %38 = vector.load %arg15[%c0_16, %c0_17] : memref<64x32xf32, #tpu.memory_space<vmem>>, vector<64x32xf32>
    %39 = vector.extract_strided_slice %38 {offsets = [0, 0], sizes = [32, 32], strides = [1, 1]} : vector<64x32xf32> to vector<32x32xf32>
    %cst_18 = arith.constant dense<0.000000e+00> : vector<128x32xf32>
    %40 = tpu.matmul %32, %39, %cst_18 {dimension_numbers = #tpu.dot_dimension_numbers<[1], [0], [0], [1], [0, 0, 1, 1], [], []>} : vector<128x32xf32>, vector<32x32xf32>, vector<128x32xf32> -> vector<128x32xf32>
    %41 = vector.extract_strided_slice %38 {offsets = [32, 0], sizes = [32, 32], strides = [1, 1]} : vector<64x32xf32> to vector<32x32xf32>
    %cst_19 = arith.constant dense<0.000000e+00> : vector<128x32xf32>
    %42 = tpu.matmul %37, %41, %cst_19 {dimension_numbers = #tpu.dot_dimension_numbers<[1], [0], [0], [1], [0, 0, 1, 1], [], []>} : vector<128x32xf32>, vector<32x32xf32>, vector<128x32xf32> -> vector<128x32xf32>
    %43 = arith.addf %40, %42 : vector<128x32xf32>
    %44 = vector.broadcast %6 : vector<1x32xf32> to vector<128x32xf32>
    %45 = arith.addf %43, %44 : vector<128x32xf32>
    %cst_20 = arith.constant 0.000000e+00 : f32
    %46 = vector.broadcast %cst_20 : f32 to vector<128x32xf32>
    %47 = arith.maximumf %45, %46 : vector<128x32xf32>
    %c0_21 = arith.constant 0 : index
    %c0_22 = arith.constant 0 : index
    %48 = vector.load %arg16[%c0_21, %c0_22] : memref<32x32xf32, #tpu.memory_space<vmem>>, vector<32x32xf32>
    %cst_23 = arith.constant dense<0.000000e+00> : vector<128x32xf32>
    %49 = tpu.matmul %47, %48, %cst_23 {dimension_numbers = #tpu.dot_dimension_numbers<[1], [0], [0], [1], [0, 0, 1, 1], [], []>} : vector<128x32xf32>, vector<32x32xf32>, vector<128x32xf32> -> vector<128x32xf32>
    %50 = vector.broadcast %7 : vector<1x32xf32> to vector<128x32xf32>
    %51 = arith.addf %49, %50 : vector<128x32xf32>
    %cst_24 = arith.constant 0.000000e+00 : f32
    %52 = vector.broadcast %cst_24 : f32 to vector<128x32xf32>
    %53 = arith.maximumf %51, %52 : vector<128x32xf32>
    %54 = arith.addf %53, %1 : vector<128x32xf32>
    %c0_25 = arith.constant 0 : index
    %c0_26 = arith.constant 0 : index
    %55 = vector.load %arg4[%c0_25, %c0_26] : memref<128x128xf32, #tpu.memory_space<vmem>>, vector<128x128xf32>
    %cst_27 = arith.constant dense<0.000000e+00> : vector<128x32xf32>
    %56 = tpu.matmul %55, %54, %cst_27 {dimension_numbers = #tpu.dot_dimension_numbers<[1], [0], [0], [1], [0, 0, 1, 1], [], []>} : vector<128x128xf32>, vector<128x32xf32>, vector<128x32xf32> -> vector<128x32xf32>
    %cst_28 = arith.constant dense<0.000000e+00> : vector<128x32xf32>
    %57 = tpu.matmul %55, %1, %cst_28 {dimension_numbers = #tpu.dot_dimension_numbers<[1], [0], [0], [1], [0, 0, 1, 1], [], []>} : vector<128x128xf32>, vector<128x32xf32>, vector<128x32xf32> -> vector<128x32xf32>
    %58 = vector.extract_strided_slice %56 {offsets = [0, 0], sizes = [64, 32], strides = [1, 1]} : vector<128x32xf32> to vector<64x32xf32>
    %59 = vector.extract_strided_slice %56 {offsets = [64, 0], sizes = [64, 32], strides = [1, 1]} : vector<128x32xf32> to vector<64x32xf32>
    %60 = vector.extract_strided_slice %57 {offsets = [0, 0], sizes = [64, 32], strides = [1, 1]} : vector<128x32xf32> to vector<64x32xf32>
    %61 = vector.extract_strided_slice %57 {offsets = [64, 0], sizes = [64, 32], strides = [1, 1]} : vector<128x32xf32> to vector<64x32xf32>
    %c0_29 = arith.constant 0 : index
    %c0_30 = arith.constant 0 : index
    %62 = vector.load %arg5[%c0_29, %c0_30] : memref<64x256xf32, #tpu.memory_space<vmem>>, vector<64x256xf32>
    %c0_31 = arith.constant 0 : index
    %c0_32 = arith.constant 0 : index
    %63 = vector.load %arg6[%c0_31, %c0_32] : memref<64x256xf32, #tpu.memory_space<vmem>>, vector<64x256xf32>
    %c0_33 = arith.constant 0 : index
    %c0_34 = arith.constant 0 : index
    %64 = vector.load %arg7[%c0_33, %c0_34] : memref<256x32xf32, #tpu.memory_space<vmem>>, vector<256x32xf32>
    %c0_35 = arith.constant 0 : index
    %c0_36 = arith.constant 0 : index
    %65 = vector.load %arg8[%c0_35, %c0_36] : memref<32x256xf32, #tpu.memory_space<vmem>>, vector<32x256xf32>
    %c0_37 = arith.constant 0 : index
    %c0_38 = arith.constant 0 : index
    %66 = vector.load %arg9[%c0_37, %c0_38] : memref<256x32xf32, #tpu.memory_space<vmem>>, vector<256x32xf32>
    %c0_39 = arith.constant 0 : index
    %c0_40 = arith.constant 0 : index
    %67 = vector.load %arg10[%c0_39, %c0_40] : memref<32x256xf32, #tpu.memory_space<vmem>>, vector<32x256xf32>
    %c0_41 = arith.constant 0 : index
    %c0_42 = arith.constant 0 : index
    %c0_43 = arith.constant 0 : index
    %68 = vector.load %arg17[%c0_41, %c0_42, %c0_43] : memref<16x32x32xf32, #tpu.memory_space<vmem>>, vector<1x32x32xf32>
    %69 = vector.shape_cast %68 : vector<1x32x32xf32> to vector<32x32xf32>
    %c1 = arith.constant 1 : index
    %c0_44 = arith.constant 0 : index
    %c0_45 = arith.constant 0 : index
    %70 = vector.load %arg17[%c1, %c0_44, %c0_45] : memref<16x32x32xf32, #tpu.memory_space<vmem>>, vector<1x32x32xf32>
    %71 = vector.shape_cast %70 : vector<1x32x32xf32> to vector<32x32xf32>
    %c2 = arith.constant 2 : index
    %c0_46 = arith.constant 0 : index
    %c0_47 = arith.constant 0 : index
    %72 = vector.load %arg17[%c2, %c0_46, %c0_47] : memref<16x32x32xf32, #tpu.memory_space<vmem>>, vector<1x32x32xf32>
    %73 = vector.shape_cast %72 : vector<1x32x32xf32> to vector<32x32xf32>
    %c3 = arith.constant 3 : index
    %c0_48 = arith.constant 0 : index
    %c0_49 = arith.constant 0 : index
    %74 = vector.load %arg17[%c3, %c0_48, %c0_49] : memref<16x32x32xf32, #tpu.memory_space<vmem>>, vector<1x32x32xf32>
    %75 = vector.shape_cast %74 : vector<1x32x32xf32> to vector<32x32xf32>
    %c0_50 = arith.constant 0 : index
    %c0_51 = arith.constant 0 : index
    %c0_52 = arith.constant 0 : index
    %76 = vector.load %arg18[%c0_50, %c0_51, %c0_52] : memref<4x32x128xf32, #tpu.memory_space<vmem>>, vector<1x32x128xf32>
    %77 = vector.shape_cast %76 : vector<1x32x128xf32> to vector<32x128xf32>
    %c0_53 = arith.constant 0 : index
    %c0_54 = arith.constant 0 : index
    %c0_55 = arith.constant 0 : index
    %78 = vector.load %arg19[%c0_53, %c0_54, %c0_55] : memref<4x128x32xf32, #tpu.memory_space<vmem>>, vector<1x128x32xf32>
    %79 = vector.shape_cast %78 : vector<1x128x32xf32> to vector<128x32xf32>
    %c0_56 = arith.constant 0 : index
    %c0_57 = arith.constant 0 : index
    %80 = vector.load %arg20[%c0_56, %c0_57] : memref<4x128xf32, #tpu.memory_space<vmem>>, vector<1x128xf32>
    %c0_58 = arith.constant 0 : index
    %c0_59 = arith.constant 0 : index
    %c0_60 = arith.constant 0 : index
    %81 = vector.load %arg21[%c0_58, %c0_59, %c0_60] : memref<4x16x32xf32, #tpu.memory_space<vmem>>, vector<1x16x32xf32>
    %82 = vector.shape_cast %81 : vector<1x16x32xf32> to vector<16x32xf32>
    %83 = vector.extract_strided_slice %82 {offsets = [0, 0], sizes = [1, 32], strides = [1, 1]} : vector<16x32xf32> to vector<1x32xf32>
    %84 = vector.extract_strided_slice %82 {offsets = [1, 0], sizes = [1, 32], strides = [1, 1]} : vector<16x32xf32> to vector<1x32xf32>
    %85 = vector.extract_strided_slice %82 {offsets = [2, 0], sizes = [1, 32], strides = [1, 1]} : vector<16x32xf32> to vector<1x32xf32>
    %86 = vector.extract_strided_slice %82 {offsets = [3, 0], sizes = [1, 32], strides = [1, 1]} : vector<16x32xf32> to vector<1x32xf32>
    %87 = vector.extract_strided_slice %82 {offsets = [4, 0], sizes = [1, 32], strides = [1, 1]} : vector<16x32xf32> to vector<1x32xf32>
    %88 = vector.extract_strided_slice %82 {offsets = [6, 0], sizes = [1, 32], strides = [1, 1]} : vector<16x32xf32> to vector<1x32xf32>
    %89 = vector.extract_strided_slice %82 {offsets = [7, 0], sizes = [1, 32], strides = [1, 1]} : vector<16x32xf32> to vector<1x32xf32>
    %90 = vector.extract_strided_slice %82 {offsets = [8, 0], sizes = [1, 32], strides = [1, 1]} : vector<16x32xf32> to vector<1x32xf32>
    %91 = vector.extract_strided_slice %82 {offsets = [9, 0], sizes = [1, 32], strides = [1, 1]} : vector<16x32xf32> to vector<1x32xf32>
    %92 = vector.extract_strided_slice %82 {offsets = [10, 0], sizes = [1, 32], strides = [1, 1]} : vector<16x32xf32> to vector<1x32xf32>
    %cst_61 = arith.constant dense<0.000000e+00> : vector<64xf32>
    %93 = vector.multi_reduction <add>, %58, %cst_61 [1] : vector<64x32xf32> to vector<64xf32>
    %94 = vector.shape_cast %93 : vector<64xf32> to vector<64x1xf32>
    %cst_62 = arith.constant 3.200000e+01 : f32
    %95 = vector.broadcast %cst_62 : f32 to vector<64x1xf32>
    %96 = arith.divf %94, %95 : vector<64x1xf32>
    %97 = vector.broadcast %96 : vector<64x1xf32> to vector<64x32xf32>
    %98 = arith.subf %58, %97 : vector<64x32xf32>
    %99 = arith.mulf %98, %98 : vector<64x32xf32>
    %cst_63 = arith.constant dense<0.000000e+00> : vector<64xf32>
    %100 = vector.multi_reduction <add>, %99, %cst_63 [1] : vector<64x32xf32> to vector<64xf32>
    %101 = vector.shape_cast %100 : vector<64xf32> to vector<64x1xf32>
    %cst_64 = arith.constant 3.200000e+01 : f32
    %102 = vector.broadcast %cst_64 : f32 to vector<64x1xf32>
    %103 = arith.divf %101, %102 : vector<64x1xf32>
    %cst_65 = arith.constant 9.99999997E-7 : f32
    %104 = vector.broadcast %cst_65 : f32 to vector<64x1xf32>
    %105 = arith.addf %103, %104 : vector<64x1xf32>
    %106 = math.rsqrt %105 : vector<64x1xf32>
    %107 = vector.broadcast %106 : vector<64x1xf32> to vector<64x32xf32>
    %108 = arith.mulf %98, %107 : vector<64x32xf32>
    %109 = vector.broadcast %83 : vector<1x32xf32> to vector<64x32xf32>
    %110 = arith.mulf %108, %109 : vector<64x32xf32>
    %111 = vector.broadcast %84 : vector<1x32xf32> to vector<64x32xf32>
    %112 = arith.addf %110, %111 : vector<64x32xf32>
    %cst_66 = arith.constant dense<0.000000e+00> : vector<64xf32>
    %113 = vector.multi_reduction <add>, %59, %cst_66 [1] : vector<64x32xf32> to vector<64xf32>
    %114 = vector.shape_cast %113 : vector<64xf32> to vector<64x1xf32>
    %cst_67 = arith.constant 3.200000e+01 : f32
    %115 = vector.broadcast %cst_67 : f32 to vector<64x1xf32>
    %116 = arith.divf %114, %115 : vector<64x1xf32>
    %117 = vector.broadcast %116 : vector<64x1xf32> to vector<64x32xf32>
    %118 = arith.subf %59, %117 : vector<64x32xf32>
    %119 = arith.mulf %118, %118 : vector<64x32xf32>
    %cst_68 = arith.constant dense<0.000000e+00> : vector<64xf32>
    %120 = vector.multi_reduction <add>, %119, %cst_68 [1] : vector<64x32xf32> to vector<64xf32>
    %121 = vector.shape_cast %120 : vector<64xf32> to vector<64x1xf32>
    %cst_69 = arith.constant 3.200000e+01 : f32
    %122 = vector.broadcast %cst_69 : f32 to vector<64x1xf32>
    %123 = arith.divf %121, %122 : vector<64x1xf32>
    %cst_70 = arith.constant 9.99999997E-7 : f32
    %124 = vector.broadcast %cst_70 : f32 to vector<64x1xf32>
    %125 = arith.addf %123, %124 : vector<64x1xf32>
    %126 = math.rsqrt %125 : vector<64x1xf32>
    %127 = vector.broadcast %126 : vector<64x1xf32> to vector<64x32xf32>
    %128 = arith.mulf %118, %127 : vector<64x32xf32>
    %129 = vector.broadcast %85 : vector<1x32xf32> to vector<64x32xf32>
    %130 = arith.mulf %128, %129 : vector<64x32xf32>
    %131 = vector.broadcast %86 : vector<1x32xf32> to vector<64x32xf32>
    %132 = arith.addf %130, %131 : vector<64x32xf32>
    %133 = arith.addf %112, %60 : vector<64x32xf32>
    %cst_71 = arith.constant dense<0.000000e+00> : vector<64x32xf32>
    %134 = tpu.matmul %133, %69, %cst_71 {dimension_numbers = #tpu.dot_dimension_numbers<[1], [0], [0], [1], [0, 0, 1, 1], [], []>} : vector<64x32xf32>, vector<32x32xf32>, vector<64x32xf32> -> vector<64x32xf32>
    %135 = vector.broadcast %87 : vector<1x32xf32> to vector<64x32xf32>
    %136 = arith.addf %134, %135 : vector<64x32xf32>
    %137 = arith.addf %132, %61 : vector<64x32xf32>
    %cst_72 = arith.constant dense<0.000000e+00> : vector<32x64xf32>
    %138 = tpu.matmul %71, %137, %cst_72 {dimension_numbers = #tpu.dot_dimension_numbers<[1], [1], [0], [0], [0, 0, 1, 0], [], []>} : vector<32x32xf32>, vector<64x32xf32>, vector<32x64xf32> -> vector<32x64xf32>
    %cst_73 = arith.constant dense<0.000000e+00> : vector<64x32xf32>
    %139 = tpu.matmul %132, %73, %cst_73 {dimension_numbers = #tpu.dot_dimension_numbers<[1], [0], [0], [1], [0, 0, 1, 1], [], []>} : vector<64x32xf32>, vector<32x32xf32>, vector<64x32xf32> -> vector<64x32xf32>
    %140 = vector.broadcast %88 : vector<1x32xf32> to vector<64x32xf32>
    %141 = arith.addf %139, %140 : vector<64x32xf32>
    %142 = tpu.concatenate %138, %138, %138, %138 in 1 : vector<32x64xf32>, vector<32x64xf32>, vector<32x64xf32>, vector<32x64xf32> -> vector<32x256xf32>
    %143 = arith.mulf %142, %65 : vector<32x256xf32>
    %144 = tpu.concatenate %141, %141, %141, %141 in 0 : vector<64x32xf32>, vector<64x32xf32>, vector<64x32xf32>, vector<64x32xf32> -> vector<256x32xf32>
    %145 = arith.mulf %144, %64 : vector<256x32xf32>
    %cst_74 = arith.constant dense<0.000000e+00> : vector<64x256xf32>
    %146 = tpu.matmul %136, %143, %cst_74 {dimension_numbers = #tpu.dot_dimension_numbers<[1], [0], [0], [1], [0, 0, 1, 1], [], []>} : vector<64x32xf32>, vector<32x256xf32>, vector<64x256xf32> -> vector<64x256xf32>
    %cst_75 = arith.constant 0.353553385 : f32
    %147 = vector.broadcast %cst_75 : f32 to vector<64x256xf32>
    %148 = arith.mulf %146, %147 : vector<64x256xf32>
    %149 = arith.addf %148, %62 : vector<64x256xf32>
    %cst_76 = arith.constant dense<0xFF800000> : vector<64xf32>
    %150 = vector.multi_reduction <maximumf>, %149, %cst_76 [1] : vector<64x256xf32> to vector<64xf32>
    %151 = vector.shape_cast %150 : vector<64xf32> to vector<64x1xf32>
    %152 = vector.broadcast %151 : vector<64x1xf32> to vector<64x256xf32>
    %153 = arith.subf %149, %152 : vector<64x256xf32>
    %154 = math.exp %153 : vector<64x256xf32>
    %cst_77 = arith.constant dense<0.000000e+00> : vector<64x32xf32>
    %155 = tpu.matmul %154, %64, %cst_77 {dimension_numbers = #tpu.dot_dimension_numbers<[1], [0], [0], [1], [0, 0, 1, 1], [], []>} : vector<64x256xf32>, vector<256x32xf32>, vector<64x32xf32> -> vector<64x32xf32>
    %cst_78 = arith.constant dense<0.000000e+00> : vector<64x32xf32>
    %156 = tpu.matmul %154, %145, %cst_78 {dimension_numbers = #tpu.dot_dimension_numbers<[1], [0], [0], [1], [0, 0, 1, 1], [], []>} : vector<64x256xf32>, vector<256x32xf32>, vector<64x32xf32> -> vector<64x32xf32>
    %157 = tpu.reciprocal %155 {approx = true} : vector<64x32xf32> -> vector<64x32xf32>
    %158 = arith.mulf %156, %157 : vector<64x32xf32>
    %cst_79 = arith.constant dense<0.000000e+00> : vector<64x32xf32>
    %159 = tpu.matmul %158, %75, %cst_79 {dimension_numbers = #tpu.dot_dimension_numbers<[1], [0], [0], [1], [0, 0, 1, 1], [], []>} : vector<64x32xf32>, vector<32x32xf32>, vector<64x32xf32> -> vector<64x32xf32>
    %160 = arith.addf %58, %159 : vector<64x32xf32>
    %161 = vector.broadcast %89 : vector<1x32xf32> to vector<64x32xf32>
    %162 = arith.addf %160, %161 : vector<64x32xf32>
    %cst_80 = arith.constant dense<0.000000e+00> : vector<64xf32>
    %163 = vector.multi_reduction <add>, %162, %cst_80 [1] : vector<64x32xf32> to vector<64xf32>
    %164 = vector.shape_cast %163 : vector<64xf32> to vector<64x1xf32>
    %cst_81 = arith.constant 3.200000e+01 : f32
    %165 = vector.broadcast %cst_81 : f32 to vector<64x1xf32>
    %166 = arith.divf %164, %165 : vector<64x1xf32>
    %167 = vector.broadcast %166 : vector<64x1xf32> to vector<64x32xf32>
    %168 = arith.subf %162, %167 : vector<64x32xf32>
    %169 = arith.mulf %168, %168 : vector<64x32xf32>
    %cst_82 = arith.constant dense<0.000000e+00> : vector<64xf32>
    %170 = vector.multi_reduction <add>, %169, %cst_82 [1] : vector<64x32xf32> to vector<64xf32>
    %171 = vector.shape_cast %170 : vector<64xf32> to vector<64x1xf32>
    %cst_83 = arith.constant 3.200000e+01 : f32
    %172 = vector.broadcast %cst_83 : f32 to vector<64x1xf32>
    %173 = arith.divf %171, %172 : vector<64x1xf32>
    %cst_84 = arith.constant 9.99999997E-7 : f32
    %174 = vector.broadcast %cst_84 : f32 to vector<64x1xf32>
    %175 = arith.addf %173, %174 : vector<64x1xf32>
    %176 = math.rsqrt %175 : vector<64x1xf32>
    %177 = vector.broadcast %176 : vector<64x1xf32> to vector<64x32xf32>
    %178 = arith.mulf %168, %177 : vector<64x32xf32>
    %179 = vector.broadcast %90 : vector<1x32xf32> to vector<64x32xf32>
    %180 = arith.mulf %178, %179 : vector<64x32xf32>
    %181 = vector.broadcast %91 : vector<1x32xf32> to vector<64x32xf32>
    %182 = arith.addf %180, %181 : vector<64x32xf32>
    %cst_85 = arith.constant dense<0.000000e+00> : vector<64x128xf32>
    %183 = tpu.matmul %182, %77, %cst_85 {dimension_numbers = #tpu.dot_dimension_numbers<[1], [0], [0], [1], [0, 0, 1, 1], [], []>} : vector<64x32xf32>, vector<32x128xf32>, vector<64x128xf32> -> vector<64x128xf32>
    %184 = vector.broadcast %80 : vector<1x128xf32> to vector<64x128xf32>
    %185 = arith.addf %183, %184 : vector<64x128xf32>
    %186 = arith.mulf %185, %185 : vector<64x128xf32>
    %187 = arith.mulf %185, %186 : vector<64x128xf32>
    %cst_86 = arith.constant 4.471500e-02 : f32
    %188 = vector.broadcast %cst_86 : f32 to vector<64x128xf32>
    %189 = arith.mulf %188, %187 : vector<64x128xf32>
    %190 = arith.addf %185, %189 : vector<64x128xf32>
    %cst_87 = arith.constant 0.797884583 : f32
    %191 = vector.broadcast %cst_87 : f32 to vector<64x128xf32>
    %192 = arith.mulf %191, %190 : vector<64x128xf32>
    %193 = math.tanh %192 : vector<64x128xf32>
    %cst_88 = arith.constant 1.000000e+00 : f32
    %194 = vector.broadcast %cst_88 : f32 to vector<64x128xf32>
    %195 = arith.addf %194, %193 : vector<64x128xf32>
    %cst_89 = arith.constant 5.000000e-01 : f32
    %196 = vector.broadcast %cst_89 : f32 to vector<64x128xf32>
    %197 = arith.mulf %196, %195 : vector<64x128xf32>
    %198 = arith.mulf %185, %197 : vector<64x128xf32>
    %cst_90 = arith.constant dense<0.000000e+00> : vector<64x32xf32>
    %199 = tpu.matmul %198, %79, %cst_90 {dimension_numbers = #tpu.dot_dimension_numbers<[1], [0], [0], [1], [0, 0, 1, 1], [], []>} : vector<64x128xf32>, vector<128x32xf32>, vector<64x32xf32> -> vector<64x32xf32>
    %200 = arith.addf %162, %199 : vector<64x32xf32>
    %201 = vector.broadcast %92 : vector<1x32xf32> to vector<64x32xf32>
    %202 = arith.addf %200, %201 : vector<64x32xf32>
    %c4 = arith.constant 4 : index
    %c0_91 = arith.constant 0 : index
    %c0_92 = arith.constant 0 : index
    %203 = vector.load %arg17[%c4, %c0_91, %c0_92] : memref<16x32x32xf32, #tpu.memory_space<vmem>>, vector<1x32x32xf32>
    %204 = vector.shape_cast %203 : vector<1x32x32xf32> to vector<32x32xf32>
    %c5 = arith.constant 5 : index
    %c0_93 = arith.constant 0 : index
    %c0_94 = arith.constant 0 : index
    %205 = vector.load %arg17[%c5, %c0_93, %c0_94] : memref<16x32x32xf32, #tpu.memory_space<vmem>>, vector<1x32x32xf32>
    %206 = vector.shape_cast %205 : vector<1x32x32xf32> to vector<32x32xf32>
    %c6 = arith.constant 6 : index
    %c0_95 = arith.constant 0 : index
    %c0_96 = arith.constant 0 : index
    %207 = vector.load %arg17[%c6, %c0_95, %c0_96] : memref<16x32x32xf32, #tpu.memory_space<vmem>>, vector<1x32x32xf32>
    %208 = vector.shape_cast %207 : vector<1x32x32xf32> to vector<32x32xf32>
    %c7 = arith.constant 7 : index
    %c0_97 = arith.constant 0 : index
    %c0_98 = arith.constant 0 : index
    %209 = vector.load %arg17[%c7, %c0_97, %c0_98] : memref<16x32x32xf32, #tpu.memory_space<vmem>>, vector<1x32x32xf32>
    %210 = vector.shape_cast %209 : vector<1x32x32xf32> to vector<32x32xf32>
    %c1_99 = arith.constant 1 : index
    %c0_100 = arith.constant 0 : index
    %c0_101 = arith.constant 0 : index
    %211 = vector.load %arg18[%c1_99, %c0_100, %c0_101] : memref<4x32x128xf32, #tpu.memory_space<vmem>>, vector<1x32x128xf32>
    %212 = vector.shape_cast %211 : vector<1x32x128xf32> to vector<32x128xf32>
    %c1_102 = arith.constant 1 : index
    %c0_103 = arith.constant 0 : index
    %c0_104 = arith.constant 0 : index
    %213 = vector.load %arg19[%c1_102, %c0_103, %c0_104] : memref<4x128x32xf32, #tpu.memory_space<vmem>>, vector<1x128x32xf32>
    %214 = vector.shape_cast %213 : vector<1x128x32xf32> to vector<128x32xf32>
    %c1_105 = arith.constant 1 : index
    %c0_106 = arith.constant 0 : index
    %215 = vector.load %arg20[%c1_105, %c0_106] : memref<4x128xf32, #tpu.memory_space<vmem>>, vector<1x128xf32>
    %c1_107 = arith.constant 1 : index
    %c0_108 = arith.constant 0 : index
    %c0_109 = arith.constant 0 : index
    %216 = vector.load %arg21[%c1_107, %c0_108, %c0_109] : memref<4x16x32xf32, #tpu.memory_space<vmem>>, vector<1x16x32xf32>
    %217 = vector.shape_cast %216 : vector<1x16x32xf32> to vector<16x32xf32>
    %218 = vector.extract_strided_slice %217 {offsets = [0, 0], sizes = [1, 32], strides = [1, 1]} : vector<16x32xf32> to vector<1x32xf32>
    %219 = vector.extract_strided_slice %217 {offsets = [1, 0], sizes = [1, 32], strides = [1, 1]} : vector<16x32xf32> to vector<1x32xf32>
    %220 = vector.extract_strided_slice %217 {offsets = [2, 0], sizes = [1, 32], strides = [1, 1]} : vector<16x32xf32> to vector<1x32xf32>
    %221 = vector.extract_strided_slice %217 {offsets = [3, 0], sizes = [1, 32], strides = [1, 1]} : vector<16x32xf32> to vector<1x32xf32>
    %222 = vector.extract_strided_slice %217 {offsets = [4, 0], sizes = [1, 32], strides = [1, 1]} : vector<16x32xf32> to vector<1x32xf32>
    %223 = vector.extract_strided_slice %217 {offsets = [6, 0], sizes = [1, 32], strides = [1, 1]} : vector<16x32xf32> to vector<1x32xf32>
    %224 = vector.extract_strided_slice %217 {offsets = [7, 0], sizes = [1, 32], strides = [1, 1]} : vector<16x32xf32> to vector<1x32xf32>
    %225 = vector.extract_strided_slice %217 {offsets = [8, 0], sizes = [1, 32], strides = [1, 1]} : vector<16x32xf32> to vector<1x32xf32>
    %226 = vector.extract_strided_slice %217 {offsets = [9, 0], sizes = [1, 32], strides = [1, 1]} : vector<16x32xf32> to vector<1x32xf32>
    %227 = vector.extract_strided_slice %217 {offsets = [10, 0], sizes = [1, 32], strides = [1, 1]} : vector<16x32xf32> to vector<1x32xf32>
    %cst_110 = arith.constant dense<0.000000e+00> : vector<64xf32>
    %228 = vector.multi_reduction <add>, %59, %cst_110 [1] : vector<64x32xf32> to vector<64xf32>
    %229 = vector.shape_cast %228 : vector<64xf32> to vector<64x1xf32>
    %cst_111 = arith.constant 3.200000e+01 : f32
    %230 = vector.broadcast %cst_111 : f32 to vector<64x1xf32>
    %231 = arith.divf %229, %230 : vector<64x1xf32>
    %232 = vector.broadcast %231 : vector<64x1xf32> to vector<64x32xf32>
    %233 = arith.subf %59, %232 : vector<64x32xf32>
    %234 = arith.mulf %233, %233 : vector<64x32xf32>
    %cst_112 = arith.constant dense<0.000000e+00> : vector<64xf32>
    %235 = vector.multi_reduction <add>, %234, %cst_112 [1] : vector<64x32xf32> to vector<64xf32>
    %236 = vector.shape_cast %235 : vector<64xf32> to vector<64x1xf32>
    %cst_113 = arith.constant 3.200000e+01 : f32
    %237 = vector.broadcast %cst_113 : f32 to vector<64x1xf32>
    %238 = arith.divf %236, %237 : vector<64x1xf32>
    %cst_114 = arith.constant 9.99999997E-7 : f32
    %239 = vector.broadcast %cst_114 : f32 to vector<64x1xf32>
    %240 = arith.addf %238, %239 : vector<64x1xf32>
    %241 = math.rsqrt %240 : vector<64x1xf32>
    %242 = vector.broadcast %241 : vector<64x1xf32> to vector<64x32xf32>
    %243 = arith.mulf %233, %242 : vector<64x32xf32>
    %244 = vector.broadcast %218 : vector<1x32xf32> to vector<64x32xf32>
    %245 = arith.mulf %243, %244 : vector<64x32xf32>
    %246 = vector.broadcast %219 : vector<1x32xf32> to vector<64x32xf32>
    %247 = arith.addf %245, %246 : vector<64x32xf32>
    %cst_115 = arith.constant dense<0.000000e+00> : vector<64xf32>
    %248 = vector.multi_reduction <add>, %58, %cst_115 [1] : vector<64x32xf32> to vector<64xf32>
    %249 = vector.shape_cast %248 : vector<64xf32> to vector<64x1xf32>
    %cst_116 = arith.constant 3.200000e+01 : f32
    %250 = vector.broadcast %cst_116 : f32 to vector<64x1xf32>
    %251 = arith.divf %249, %250 : vector<64x1xf32>
    %252 = vector.broadcast %251 : vector<64x1xf32> to vector<64x32xf32>
    %253 = arith.subf %58, %252 : vector<64x32xf32>
    %254 = arith.mulf %253, %253 : vector<64x32xf32>
    %cst_117 = arith.constant dense<0.000000e+00> : vector<64xf32>
    %255 = vector.multi_reduction <add>, %254, %cst_117 [1] : vector<64x32xf32> to vector<64xf32>
    %256 = vector.shape_cast %255 : vector<64xf32> to vector<64x1xf32>
    %cst_118 = arith.constant 3.200000e+01 : f32
    %257 = vector.broadcast %cst_118 : f32 to vector<64x1xf32>
    %258 = arith.divf %256, %257 : vector<64x1xf32>
    %cst_119 = arith.constant 9.99999997E-7 : f32
    %259 = vector.broadcast %cst_119 : f32 to vector<64x1xf32>
    %260 = arith.addf %258, %259 : vector<64x1xf32>
    %261 = math.rsqrt %260 : vector<64x1xf32>
    %262 = vector.broadcast %261 : vector<64x1xf32> to vector<64x32xf32>
    %263 = arith.mulf %253, %262 : vector<64x32xf32>
    %264 = vector.broadcast %220 : vector<1x32xf32> to vector<64x32xf32>
    %265 = arith.mulf %263, %264 : vector<64x32xf32>
    %266 = vector.broadcast %221 : vector<1x32xf32> to vector<64x32xf32>
    %267 = arith.addf %265, %266 : vector<64x32xf32>
    %268 = arith.addf %247, %61 : vector<64x32xf32>
    %cst_120 = arith.constant dense<0.000000e+00> : vector<64x32xf32>
    %269 = tpu.matmul %268, %204, %cst_120 {dimension_numbers = #tpu.dot_dimension_numbers<[1], [0], [0], [1], [0, 0, 1, 1], [], []>} : vector<64x32xf32>, vector<32x32xf32>, vector<64x32xf32> -> vector<64x32xf32>
    %270 = vector.broadcast %222 : vector<1x32xf32> to vector<64x32xf32>
    %271 = arith.addf %269, %270 : vector<64x32xf32>
    %272 = arith.addf %267, %60 : vector<64x32xf32>
    %cst_121 = arith.constant dense<0.000000e+00> : vector<32x64xf32>
    %273 = tpu.matmul %206, %272, %cst_121 {dimension_numbers = #tpu.dot_dimension_numbers<[1], [1], [0], [0], [0, 0, 1, 0], [], []>} : vector<32x32xf32>, vector<64x32xf32>, vector<32x64xf32> -> vector<32x64xf32>
    %cst_122 = arith.constant dense<0.000000e+00> : vector<64x32xf32>
    %274 = tpu.matmul %267, %208, %cst_122 {dimension_numbers = #tpu.dot_dimension_numbers<[1], [0], [0], [1], [0, 0, 1, 1], [], []>} : vector<64x32xf32>, vector<32x32xf32>, vector<64x32xf32> -> vector<64x32xf32>
    %275 = vector.broadcast %223 : vector<1x32xf32> to vector<64x32xf32>
    %276 = arith.addf %274, %275 : vector<64x32xf32>
    %277 = tpu.concatenate %273, %273, %273, %273 in 1 : vector<32x64xf32>, vector<32x64xf32>, vector<32x64xf32>, vector<32x64xf32> -> vector<32x256xf32>
    %278 = arith.mulf %277, %67 : vector<32x256xf32>
    %279 = tpu.concatenate %276, %276, %276, %276 in 0 : vector<64x32xf32>, vector<64x32xf32>, vector<64x32xf32>, vector<64x32xf32> -> vector<256x32xf32>
    %280 = arith.mulf %279, %66 : vector<256x32xf32>
    %cst_123 = arith.constant dense<0.000000e+00> : vector<64x256xf32>
    %281 = tpu.matmul %271, %278, %cst_123 {dimension_numbers = #tpu.dot_dimension_numbers<[1], [0], [0], [1], [0, 0, 1, 1], [], []>} : vector<64x32xf32>, vector<32x256xf32>, vector<64x256xf32> -> vector<64x256xf32>
    %cst_124 = arith.constant 0.353553385 : f32
    %282 = vector.broadcast %cst_124 : f32 to vector<64x256xf32>
    %283 = arith.mulf %281, %282 : vector<64x256xf32>
    %284 = arith.addf %283, %63 : vector<64x256xf32>
    %cst_125 = arith.constant dense<0xFF800000> : vector<64xf32>
    %285 = vector.multi_reduction <maximumf>, %284, %cst_125 [1] : vector<64x256xf32> to vector<64xf32>
    %286 = vector.shape_cast %285 : vector<64xf32> to vector<64x1xf32>
    %287 = vector.broadcast %286 : vector<64x1xf32> to vector<64x256xf32>
    %288 = arith.subf %284, %287 : vector<64x256xf32>
    %289 = math.exp %288 : vector<64x256xf32>
    %cst_126 = arith.constant dense<0.000000e+00> : vector<64x32xf32>
    %290 = tpu.matmul %289, %66, %cst_126 {dimension_numbers = #tpu.dot_dimension_numbers<[1], [0], [0], [1], [0, 0, 1, 1], [], []>} : vector<64x256xf32>, vector<256x32xf32>, vector<64x32xf32> -> vector<64x32xf32>
    %cst_127 = arith.constant dense<0.000000e+00> : vector<64x32xf32>
    %291 = tpu.matmul %289, %280, %cst_127 {dimension_numbers = #tpu.dot_dimension_numbers<[1], [0], [0], [1], [0, 0, 1, 1], [], []>} : vector<64x256xf32>, vector<256x32xf32>, vector<64x32xf32> -> vector<64x32xf32>
    %292 = tpu.reciprocal %290 {approx = true} : vector<64x32xf32> -> vector<64x32xf32>
    %293 = arith.mulf %291, %292 : vector<64x32xf32>
    %cst_128 = arith.constant dense<0.000000e+00> : vector<64x32xf32>
    %294 = tpu.matmul %293, %210, %cst_128 {dimension_numbers = #tpu.dot_dimension_numbers<[1], [0], [0], [1], [0, 0, 1, 1], [], []>} : vector<64x32xf32>, vector<32x32xf32>, vector<64x32xf32> -> vector<64x32xf32>
    %295 = arith.addf %59, %294 : vector<64x32xf32>
    %296 = vector.broadcast %224 : vector<1x32xf32> to vector<64x32xf32>
    %297 = arith.addf %295, %296 : vector<64x32xf32>
    %cst_129 = arith.constant dense<0.000000e+00> : vector<64xf32>
    %298 = vector.multi_reduction <add>, %297, %cst_129 [1] : vector<64x32xf32> to vector<64xf32>
    %299 = vector.shape_cast %298 : vector<64xf32> to vector<64x1xf32>
    %cst_130 = arith.constant 3.200000e+01 : f32
    %300 = vector.broadcast %cst_130 : f32 to vector<64x1xf32>
    %301 = arith.divf %299, %300 : vector<64x1xf32>
    %302 = vector.broadcast %301 : vector<64x1xf32> to vector<64x32xf32>
    %303 = arith.subf %297, %302 : vector<64x32xf32>
    %304 = arith.mulf %303, %303 : vector<64x32xf32>
    %cst_131 = arith.constant dense<0.000000e+00> : vector<64xf32>
    %305 = vector.multi_reduction <add>, %304, %cst_131 [1] : vector<64x32xf32> to vector<64xf32>
    %306 = vector.shape_cast %305 : vector<64xf32> to vector<64x1xf32>
    %cst_132 = arith.constant 3.200000e+01 : f32
    %307 = vector.broadcast %cst_132 : f32 to vector<64x1xf32>
    %308 = arith.divf %306, %307 : vector<64x1xf32>
    %cst_133 = arith.constant 9.99999997E-7 : f32
    %309 = vector.broadcast %cst_133 : f32 to vector<64x1xf32>
    %310 = arith.addf %308, %309 : vector<64x1xf32>
    %311 = math.rsqrt %310 : vector<64x1xf32>
    %312 = vector.broadcast %311 : vector<64x1xf32> to vector<64x32xf32>
    %313 = arith.mulf %303, %312 : vector<64x32xf32>
    %314 = vector.broadcast %225 : vector<1x32xf32> to vector<64x32xf32>
    %315 = arith.mulf %313, %314 : vector<64x32xf32>
    %316 = vector.broadcast %226 : vector<1x32xf32> to vector<64x32xf32>
    %317 = arith.addf %315, %316 : vector<64x32xf32>
    %cst_134 = arith.constant dense<0.000000e+00> : vector<64x128xf32>
    %318 = tpu.matmul %317, %212, %cst_134 {dimension_numbers = #tpu.dot_dimension_numbers<[1], [0], [0], [1], [0, 0, 1, 1], [], []>} : vector<64x32xf32>, vector<32x128xf32>, vector<64x128xf32> -> vector<64x128xf32>
    %319 = vector.broadcast %215 : vector<1x128xf32> to vector<64x128xf32>
    %320 = arith.addf %318, %319 : vector<64x128xf32>
    %321 = arith.mulf %320, %320 : vector<64x128xf32>
    %322 = arith.mulf %320, %321 : vector<64x128xf32>
    %cst_135 = arith.constant 4.471500e-02 : f32
    %323 = vector.broadcast %cst_135 : f32 to vector<64x128xf32>
    %324 = arith.mulf %323, %322 : vector<64x128xf32>
    %325 = arith.addf %320, %324 : vector<64x128xf32>
    %cst_136 = arith.constant 0.797884583 : f32
    %326 = vector.broadcast %cst_136 : f32 to vector<64x128xf32>
    %327 = arith.mulf %326, %325 : vector<64x128xf32>
    %328 = math.tanh %327 : vector<64x128xf32>
    %cst_137 = arith.constant 1.000000e+00 : f32
    %329 = vector.broadcast %cst_137 : f32 to vector<64x128xf32>
    %330 = arith.addf %329, %328 : vector<64x128xf32>
    %cst_138 = arith.constant 5.000000e-01 : f32
    %331 = vector.broadcast %cst_138 : f32 to vector<64x128xf32>
    %332 = arith.mulf %331, %330 : vector<64x128xf32>
    %333 = arith.mulf %320, %332 : vector<64x128xf32>
    %cst_139 = arith.constant dense<0.000000e+00> : vector<64x32xf32>
    %334 = tpu.matmul %333, %214, %cst_139 {dimension_numbers = #tpu.dot_dimension_numbers<[1], [0], [0], [1], [0, 0, 1, 1], [], []>} : vector<64x128xf32>, vector<128x32xf32>, vector<64x32xf32> -> vector<64x32xf32>
    %335 = arith.addf %297, %334 : vector<64x32xf32>
    %336 = vector.broadcast %227 : vector<1x32xf32> to vector<64x32xf32>
    %337 = arith.addf %335, %336 : vector<64x32xf32>
    %c8 = arith.constant 8 : index
    %c0_140 = arith.constant 0 : index
    %c0_141 = arith.constant 0 : index
    %338 = vector.load %arg17[%c8, %c0_140, %c0_141] : memref<16x32x32xf32, #tpu.memory_space<vmem>>, vector<1x32x32xf32>
    %339 = vector.shape_cast %338 : vector<1x32x32xf32> to vector<32x32xf32>
    %c9 = arith.constant 9 : index
    %c0_142 = arith.constant 0 : index
    %c0_143 = arith.constant 0 : index
    %340 = vector.load %arg17[%c9, %c0_142, %c0_143] : memref<16x32x32xf32, #tpu.memory_space<vmem>>, vector<1x32x32xf32>
    %341 = vector.shape_cast %340 : vector<1x32x32xf32> to vector<32x32xf32>
    %c10 = arith.constant 10 : index
    %c0_144 = arith.constant 0 : index
    %c0_145 = arith.constant 0 : index
    %342 = vector.load %arg17[%c10, %c0_144, %c0_145] : memref<16x32x32xf32, #tpu.memory_space<vmem>>, vector<1x32x32xf32>
    %343 = vector.shape_cast %342 : vector<1x32x32xf32> to vector<32x32xf32>
    %c11 = arith.constant 11 : index
    %c0_146 = arith.constant 0 : index
    %c0_147 = arith.constant 0 : index
    %344 = vector.load %arg17[%c11, %c0_146, %c0_147] : memref<16x32x32xf32, #tpu.memory_space<vmem>>, vector<1x32x32xf32>
    %345 = vector.shape_cast %344 : vector<1x32x32xf32> to vector<32x32xf32>
    %c2_148 = arith.constant 2 : index
    %c0_149 = arith.constant 0 : index
    %c0_150 = arith.constant 0 : index
    %346 = vector.load %arg18[%c2_148, %c0_149, %c0_150] : memref<4x32x128xf32, #tpu.memory_space<vmem>>, vector<1x32x128xf32>
    %347 = vector.shape_cast %346 : vector<1x32x128xf32> to vector<32x128xf32>
    %c2_151 = arith.constant 2 : index
    %c0_152 = arith.constant 0 : index
    %c0_153 = arith.constant 0 : index
    %348 = vector.load %arg19[%c2_151, %c0_152, %c0_153] : memref<4x128x32xf32, #tpu.memory_space<vmem>>, vector<1x128x32xf32>
    %349 = vector.shape_cast %348 : vector<1x128x32xf32> to vector<128x32xf32>
    %c2_154 = arith.constant 2 : index
    %c0_155 = arith.constant 0 : index
    %350 = vector.load %arg20[%c2_154, %c0_155] : memref<4x128xf32, #tpu.memory_space<vmem>>, vector<1x128xf32>
    %c2_156 = arith.constant 2 : index
    %c0_157 = arith.constant 0 : index
    %c0_158 = arith.constant 0 : index
    %351 = vector.load %arg21[%c2_156, %c0_157, %c0_158] : memref<4x16x32xf32, #tpu.memory_space<vmem>>, vector<1x16x32xf32>
    %352 = vector.shape_cast %351 : vector<1x16x32xf32> to vector<16x32xf32>
    %353 = vector.extract_strided_slice %352 {offsets = [0, 0], sizes = [1, 32], strides = [1, 1]} : vector<16x32xf32> to vector<1x32xf32>
    %354 = vector.extract_strided_slice %352 {offsets = [1, 0], sizes = [1, 32], strides = [1, 1]} : vector<16x32xf32> to vector<1x32xf32>
    %355 = vector.extract_strided_slice %352 {offsets = [2, 0], sizes = [1, 32], strides = [1, 1]} : vector<16x32xf32> to vector<1x32xf32>
    %356 = vector.extract_strided_slice %352 {offsets = [3, 0], sizes = [1, 32], strides = [1, 1]} : vector<16x32xf32> to vector<1x32xf32>
    %357 = vector.extract_strided_slice %352 {offsets = [4, 0], sizes = [1, 32], strides = [1, 1]} : vector<16x32xf32> to vector<1x32xf32>
    %358 = vector.extract_strided_slice %352 {offsets = [6, 0], sizes = [1, 32], strides = [1, 1]} : vector<16x32xf32> to vector<1x32xf32>
    %359 = vector.extract_strided_slice %352 {offsets = [7, 0], sizes = [1, 32], strides = [1, 1]} : vector<16x32xf32> to vector<1x32xf32>
    %360 = vector.extract_strided_slice %352 {offsets = [8, 0], sizes = [1, 32], strides = [1, 1]} : vector<16x32xf32> to vector<1x32xf32>
    %361 = vector.extract_strided_slice %352 {offsets = [9, 0], sizes = [1, 32], strides = [1, 1]} : vector<16x32xf32> to vector<1x32xf32>
    %362 = vector.extract_strided_slice %352 {offsets = [10, 0], sizes = [1, 32], strides = [1, 1]} : vector<16x32xf32> to vector<1x32xf32>
    %cst_159 = arith.constant dense<0.000000e+00> : vector<64xf32>
    %363 = vector.multi_reduction <add>, %202, %cst_159 [1] : vector<64x32xf32> to vector<64xf32>
    %364 = vector.shape_cast %363 : vector<64xf32> to vector<64x1xf32>
    %cst_160 = arith.constant 3.200000e+01 : f32
    %365 = vector.broadcast %cst_160 : f32 to vector<64x1xf32>
    %366 = arith.divf %364, %365 : vector<64x1xf32>
    %367 = vector.broadcast %366 : vector<64x1xf32> to vector<64x32xf32>
    %368 = arith.subf %202, %367 : vector<64x32xf32>
    %369 = arith.mulf %368, %368 : vector<64x32xf32>
    %cst_161 = arith.constant dense<0.000000e+00> : vector<64xf32>
    %370 = vector.multi_reduction <add>, %369, %cst_161 [1] : vector<64x32xf32> to vector<64xf32>
    %371 = vector.shape_cast %370 : vector<64xf32> to vector<64x1xf32>
    %cst_162 = arith.constant 3.200000e+01 : f32
    %372 = vector.broadcast %cst_162 : f32 to vector<64x1xf32>
    %373 = arith.divf %371, %372 : vector<64x1xf32>
    %cst_163 = arith.constant 9.99999997E-7 : f32
    %374 = vector.broadcast %cst_163 : f32 to vector<64x1xf32>
    %375 = arith.addf %373, %374 : vector<64x1xf32>
    %376 = math.rsqrt %375 : vector<64x1xf32>
    %377 = vector.broadcast %376 : vector<64x1xf32> to vector<64x32xf32>
    %378 = arith.mulf %368, %377 : vector<64x32xf32>
    %379 = vector.broadcast %353 : vector<1x32xf32> to vector<64x32xf32>
    %380 = arith.mulf %378, %379 : vector<64x32xf32>
    %381 = vector.broadcast %354 : vector<1x32xf32> to vector<64x32xf32>
    %382 = arith.addf %380, %381 : vector<64x32xf32>
    %cst_164 = arith.constant dense<0.000000e+00> : vector<64xf32>
    %383 = vector.multi_reduction <add>, %337, %cst_164 [1] : vector<64x32xf32> to vector<64xf32>
    %384 = vector.shape_cast %383 : vector<64xf32> to vector<64x1xf32>
    %cst_165 = arith.constant 3.200000e+01 : f32
    %385 = vector.broadcast %cst_165 : f32 to vector<64x1xf32>
    %386 = arith.divf %384, %385 : vector<64x1xf32>
    %387 = vector.broadcast %386 : vector<64x1xf32> to vector<64x32xf32>
    %388 = arith.subf %337, %387 : vector<64x32xf32>
    %389 = arith.mulf %388, %388 : vector<64x32xf32>
    %cst_166 = arith.constant dense<0.000000e+00> : vector<64xf32>
    %390 = vector.multi_reduction <add>, %389, %cst_166 [1] : vector<64x32xf32> to vector<64xf32>
    %391 = vector.shape_cast %390 : vector<64xf32> to vector<64x1xf32>
    %cst_167 = arith.constant 3.200000e+01 : f32
    %392 = vector.broadcast %cst_167 : f32 to vector<64x1xf32>
    %393 = arith.divf %391, %392 : vector<64x1xf32>
    %cst_168 = arith.constant 9.99999997E-7 : f32
    %394 = vector.broadcast %cst_168 : f32 to vector<64x1xf32>
    %395 = arith.addf %393, %394 : vector<64x1xf32>
    %396 = math.rsqrt %395 : vector<64x1xf32>
    %397 = vector.broadcast %396 : vector<64x1xf32> to vector<64x32xf32>
    %398 = arith.mulf %388, %397 : vector<64x32xf32>
    %399 = vector.broadcast %355 : vector<1x32xf32> to vector<64x32xf32>
    %400 = arith.mulf %398, %399 : vector<64x32xf32>
    %401 = vector.broadcast %356 : vector<1x32xf32> to vector<64x32xf32>
    %402 = arith.addf %400, %401 : vector<64x32xf32>
    %403 = arith.addf %382, %60 : vector<64x32xf32>
    %cst_169 = arith.constant dense<0.000000e+00> : vector<64x32xf32>
    %404 = tpu.matmul %403, %339, %cst_169 {dimension_numbers = #tpu.dot_dimension_numbers<[1], [0], [0], [1], [0, 0, 1, 1], [], []>} : vector<64x32xf32>, vector<32x32xf32>, vector<64x32xf32> -> vector<64x32xf32>
    %405 = vector.broadcast %357 : vector<1x32xf32> to vector<64x32xf32>
    %406 = arith.addf %404, %405 : vector<64x32xf32>
    %407 = arith.addf %402, %61 : vector<64x32xf32>
    %cst_170 = arith.constant dense<0.000000e+00> : vector<32x64xf32>
    %408 = tpu.matmul %341, %407, %cst_170 {dimension_numbers = #tpu.dot_dimension_numbers<[1], [1], [0], [0], [0, 0, 1, 0], [], []>} : vector<32x32xf32>, vector<64x32xf32>, vector<32x64xf32> -> vector<32x64xf32>
    %cst_171 = arith.constant dense<0.000000e+00> : vector<64x32xf32>
    %409 = tpu.matmul %402, %343, %cst_171 {dimension_numbers = #tpu.dot_dimension_numbers<[1], [0], [0], [1], [0, 0, 1, 1], [], []>} : vector<64x32xf32>, vector<32x32xf32>, vector<64x32xf32> -> vector<64x32xf32>
    %410 = vector.broadcast %358 : vector<1x32xf32> to vector<64x32xf32>
    %411 = arith.addf %409, %410 : vector<64x32xf32>
    %412 = tpu.concatenate %408, %408, %408, %408 in 1 : vector<32x64xf32>, vector<32x64xf32>, vector<32x64xf32>, vector<32x64xf32> -> vector<32x256xf32>
    %413 = arith.mulf %412, %65 : vector<32x256xf32>
    %414 = tpu.concatenate %411, %411, %411, %411 in 0 : vector<64x32xf32>, vector<64x32xf32>, vector<64x32xf32>, vector<64x32xf32> -> vector<256x32xf32>
    %415 = arith.mulf %414, %64 : vector<256x32xf32>
    %cst_172 = arith.constant dense<0.000000e+00> : vector<64x256xf32>
    %416 = tpu.matmul %406, %413, %cst_172 {dimension_numbers = #tpu.dot_dimension_numbers<[1], [0], [0], [1], [0, 0, 1, 1], [], []>} : vector<64x32xf32>, vector<32x256xf32>, vector<64x256xf32> -> vector<64x256xf32>
    %cst_173 = arith.constant 0.353553385 : f32
    %417 = vector.broadcast %cst_173 : f32 to vector<64x256xf32>
    %418 = arith.mulf %416, %417 : vector<64x256xf32>
    %419 = arith.addf %418, %62 : vector<64x256xf32>
    %cst_174 = arith.constant dense<0xFF800000> : vector<64xf32>
    %420 = vector.multi_reduction <maximumf>, %419, %cst_174 [1] : vector<64x256xf32> to vector<64xf32>
    %421 = vector.shape_cast %420 : vector<64xf32> to vector<64x1xf32>
    %422 = vector.broadcast %421 : vector<64x1xf32> to vector<64x256xf32>
    %423 = arith.subf %419, %422 : vector<64x256xf32>
    %424 = math.exp %423 : vector<64x256xf32>
    %cst_175 = arith.constant dense<0.000000e+00> : vector<64x32xf32>
    %425 = tpu.matmul %424, %64, %cst_175 {dimension_numbers = #tpu.dot_dimension_numbers<[1], [0], [0], [1], [0, 0, 1, 1], [], []>} : vector<64x256xf32>, vector<256x32xf32>, vector<64x32xf32> -> vector<64x32xf32>
    %cst_176 = arith.constant dense<0.000000e+00> : vector<64x32xf32>
    %426 = tpu.matmul %424, %415, %cst_176 {dimension_numbers = #tpu.dot_dimension_numbers<[1], [0], [0], [1], [0, 0, 1, 1], [], []>} : vector<64x256xf32>, vector<256x32xf32>, vector<64x32xf32> -> vector<64x32xf32>
    %427 = tpu.reciprocal %425 {approx = true} : vector<64x32xf32> -> vector<64x32xf32>
    %428 = arith.mulf %426, %427 : vector<64x32xf32>
    %cst_177 = arith.constant dense<0.000000e+00> : vector<64x32xf32>
    %429 = tpu.matmul %428, %345, %cst_177 {dimension_numbers = #tpu.dot_dimension_numbers<[1], [0], [0], [1], [0, 0, 1, 1], [], []>} : vector<64x32xf32>, vector<32x32xf32>, vector<64x32xf32> -> vector<64x32xf32>
    %430 = arith.addf %202, %429 : vector<64x32xf32>
    %431 = vector.broadcast %359 : vector<1x32xf32> to vector<64x32xf32>
    %432 = arith.addf %430, %431 : vector<64x32xf32>
    %cst_178 = arith.constant dense<0.000000e+00> : vector<64xf32>
    %433 = vector.multi_reduction <add>, %432, %cst_178 [1] : vector<64x32xf32> to vector<64xf32>
    %434 = vector.shape_cast %433 : vector<64xf32> to vector<64x1xf32>
    %cst_179 = arith.constant 3.200000e+01 : f32
    %435 = vector.broadcast %cst_179 : f32 to vector<64x1xf32>
    %436 = arith.divf %434, %435 : vector<64x1xf32>
    %437 = vector.broadcast %436 : vector<64x1xf32> to vector<64x32xf32>
    %438 = arith.subf %432, %437 : vector<64x32xf32>
    %439 = arith.mulf %438, %438 : vector<64x32xf32>
    %cst_180 = arith.constant dense<0.000000e+00> : vector<64xf32>
    %440 = vector.multi_reduction <add>, %439, %cst_180 [1] : vector<64x32xf32> to vector<64xf32>
    %441 = vector.shape_cast %440 : vector<64xf32> to vector<64x1xf32>
    %cst_181 = arith.constant 3.200000e+01 : f32
    %442 = vector.broadcast %cst_181 : f32 to vector<64x1xf32>
    %443 = arith.divf %441, %442 : vector<64x1xf32>
    %cst_182 = arith.constant 9.99999997E-7 : f32
    %444 = vector.broadcast %cst_182 : f32 to vector<64x1xf32>
    %445 = arith.addf %443, %444 : vector<64x1xf32>
    %446 = math.rsqrt %445 : vector<64x1xf32>
    %447 = vector.broadcast %446 : vector<64x1xf32> to vector<64x32xf32>
    %448 = arith.mulf %438, %447 : vector<64x32xf32>
    %449 = vector.broadcast %360 : vector<1x32xf32> to vector<64x32xf32>
    %450 = arith.mulf %448, %449 : vector<64x32xf32>
    %451 = vector.broadcast %361 : vector<1x32xf32> to vector<64x32xf32>
    %452 = arith.addf %450, %451 : vector<64x32xf32>
    %cst_183 = arith.constant dense<0.000000e+00> : vector<64x128xf32>
    %453 = tpu.matmul %452, %347, %cst_183 {dimension_numbers = #tpu.dot_dimension_numbers<[1], [0], [0], [1], [0, 0, 1, 1], [], []>} : vector<64x32xf32>, vector<32x128xf32>, vector<64x128xf32> -> vector<64x128xf32>
    %454 = vector.broadcast %350 : vector<1x128xf32> to vector<64x128xf32>
    %455 = arith.addf %453, %454 : vector<64x128xf32>
    %456 = arith.mulf %455, %455 : vector<64x128xf32>
    %457 = arith.mulf %455, %456 : vector<64x128xf32>
    %cst_184 = arith.constant 4.471500e-02 : f32
    %458 = vector.broadcast %cst_184 : f32 to vector<64x128xf32>
    %459 = arith.mulf %458, %457 : vector<64x128xf32>
    %460 = arith.addf %455, %459 : vector<64x128xf32>
    %cst_185 = arith.constant 0.797884583 : f32
    %461 = vector.broadcast %cst_185 : f32 to vector<64x128xf32>
    %462 = arith.mulf %461, %460 : vector<64x128xf32>
    %463 = math.tanh %462 : vector<64x128xf32>
    %cst_186 = arith.constant 1.000000e+00 : f32
    %464 = vector.broadcast %cst_186 : f32 to vector<64x128xf32>
    %465 = arith.addf %464, %463 : vector<64x128xf32>
    %cst_187 = arith.constant 5.000000e-01 : f32
    %466 = vector.broadcast %cst_187 : f32 to vector<64x128xf32>
    %467 = arith.mulf %466, %465 : vector<64x128xf32>
    %468 = arith.mulf %455, %467 : vector<64x128xf32>
    %cst_188 = arith.constant dense<0.000000e+00> : vector<64x32xf32>
    %469 = tpu.matmul %468, %349, %cst_188 {dimension_numbers = #tpu.dot_dimension_numbers<[1], [0], [0], [1], [0, 0, 1, 1], [], []>} : vector<64x128xf32>, vector<128x32xf32>, vector<64x32xf32> -> vector<64x32xf32>
    %470 = arith.addf %432, %469 : vector<64x32xf32>
    %471 = vector.broadcast %362 : vector<1x32xf32> to vector<64x32xf32>
    %472 = arith.addf %470, %471 : vector<64x32xf32>
    %c12 = arith.constant 12 : index
    %c0_189 = arith.constant 0 : index
    %c0_190 = arith.constant 0 : index
    %473 = vector.load %arg17[%c12, %c0_189, %c0_190] : memref<16x32x32xf32, #tpu.memory_space<vmem>>, vector<1x32x32xf32>
    %474 = vector.shape_cast %473 : vector<1x32x32xf32> to vector<32x32xf32>
    %c13 = arith.constant 13 : index
    %c0_191 = arith.constant 0 : index
    %c0_192 = arith.constant 0 : index
    %475 = vector.load %arg17[%c13, %c0_191, %c0_192] : memref<16x32x32xf32, #tpu.memory_space<vmem>>, vector<1x32x32xf32>
    %476 = vector.shape_cast %475 : vector<1x32x32xf32> to vector<32x32xf32>
    %c14 = arith.constant 14 : index
    %c0_193 = arith.constant 0 : index
    %c0_194 = arith.constant 0 : index
    %477 = vector.load %arg17[%c14, %c0_193, %c0_194] : memref<16x32x32xf32, #tpu.memory_space<vmem>>, vector<1x32x32xf32>
    %478 = vector.shape_cast %477 : vector<1x32x32xf32> to vector<32x32xf32>
    %c15 = arith.constant 15 : index
    %c0_195 = arith.constant 0 : index
    %c0_196 = arith.constant 0 : index
    %479 = vector.load %arg17[%c15, %c0_195, %c0_196] : memref<16x32x32xf32, #tpu.memory_space<vmem>>, vector<1x32x32xf32>
    %480 = vector.shape_cast %479 : vector<1x32x32xf32> to vector<32x32xf32>
    %c3_197 = arith.constant 3 : index
    %c0_198 = arith.constant 0 : index
    %c0_199 = arith.constant 0 : index
    %481 = vector.load %arg18[%c3_197, %c0_198, %c0_199] : memref<4x32x128xf32, #tpu.memory_space<vmem>>, vector<1x32x128xf32>
    %482 = vector.shape_cast %481 : vector<1x32x128xf32> to vector<32x128xf32>
    %c3_200 = arith.constant 3 : index
    %c0_201 = arith.constant 0 : index
    %c0_202 = arith.constant 0 : index
    %483 = vector.load %arg19[%c3_200, %c0_201, %c0_202] : memref<4x128x32xf32, #tpu.memory_space<vmem>>, vector<1x128x32xf32>
    %484 = vector.shape_cast %483 : vector<1x128x32xf32> to vector<128x32xf32>
    %c3_203 = arith.constant 3 : index
    %c0_204 = arith.constant 0 : index
    %485 = vector.load %arg20[%c3_203, %c0_204] : memref<4x128xf32, #tpu.memory_space<vmem>>, vector<1x128xf32>
    %c3_205 = arith.constant 3 : index
    %c0_206 = arith.constant 0 : index
    %c0_207 = arith.constant 0 : index
    %486 = vector.load %arg21[%c3_205, %c0_206, %c0_207] : memref<4x16x32xf32, #tpu.memory_space<vmem>>, vector<1x16x32xf32>
    %487 = vector.shape_cast %486 : vector<1x16x32xf32> to vector<16x32xf32>
    %488 = vector.extract_strided_slice %487 {offsets = [0, 0], sizes = [1, 32], strides = [1, 1]} : vector<16x32xf32> to vector<1x32xf32>
    %489 = vector.extract_strided_slice %487 {offsets = [1, 0], sizes = [1, 32], strides = [1, 1]} : vector<16x32xf32> to vector<1x32xf32>
    %490 = vector.extract_strided_slice %487 {offsets = [2, 0], sizes = [1, 32], strides = [1, 1]} : vector<16x32xf32> to vector<1x32xf32>
    %491 = vector.extract_strided_slice %487 {offsets = [3, 0], sizes = [1, 32], strides = [1, 1]} : vector<16x32xf32> to vector<1x32xf32>
    %492 = vector.extract_strided_slice %487 {offsets = [4, 0], sizes = [1, 32], strides = [1, 1]} : vector<16x32xf32> to vector<1x32xf32>
    %493 = vector.extract_strided_slice %487 {offsets = [6, 0], sizes = [1, 32], strides = [1, 1]} : vector<16x32xf32> to vector<1x32xf32>
    %494 = vector.extract_strided_slice %487 {offsets = [7, 0], sizes = [1, 32], strides = [1, 1]} : vector<16x32xf32> to vector<1x32xf32>
    %495 = vector.extract_strided_slice %487 {offsets = [8, 0], sizes = [1, 32], strides = [1, 1]} : vector<16x32xf32> to vector<1x32xf32>
    %496 = vector.extract_strided_slice %487 {offsets = [9, 0], sizes = [1, 32], strides = [1, 1]} : vector<16x32xf32> to vector<1x32xf32>
    %497 = vector.extract_strided_slice %487 {offsets = [10, 0], sizes = [1, 32], strides = [1, 1]} : vector<16x32xf32> to vector<1x32xf32>
    %cst_208 = arith.constant dense<0.000000e+00> : vector<64xf32>
    %498 = vector.multi_reduction <add>, %337, %cst_208 [1] : vector<64x32xf32> to vector<64xf32>
    %499 = vector.shape_cast %498 : vector<64xf32> to vector<64x1xf32>
    %cst_209 = arith.constant 3.200000e+01 : f32
    %500 = vector.broadcast %cst_209 : f32 to vector<64x1xf32>
    %501 = arith.divf %499, %500 : vector<64x1xf32>
    %502 = vector.broadcast %501 : vector<64x1xf32> to vector<64x32xf32>
    %503 = arith.subf %337, %502 : vector<64x32xf32>
    %504 = arith.mulf %503, %503 : vector<64x32xf32>
    %cst_210 = arith.constant dense<0.000000e+00> : vector<64xf32>
    %505 = vector.multi_reduction <add>, %504, %cst_210 [1] : vector<64x32xf32> to vector<64xf32>
    %506 = vector.shape_cast %505 : vector<64xf32> to vector<64x1xf32>
    %cst_211 = arith.constant 3.200000e+01 : f32
    %507 = vector.broadcast %cst_211 : f32 to vector<64x1xf32>
    %508 = arith.divf %506, %507 : vector<64x1xf32>
    %cst_212 = arith.constant 9.99999997E-7 : f32
    %509 = vector.broadcast %cst_212 : f32 to vector<64x1xf32>
    %510 = arith.addf %508, %509 : vector<64x1xf32>
    %511 = math.rsqrt %510 : vector<64x1xf32>
    %512 = vector.broadcast %511 : vector<64x1xf32> to vector<64x32xf32>
    %513 = arith.mulf %503, %512 : vector<64x32xf32>
    %514 = vector.broadcast %488 : vector<1x32xf32> to vector<64x32xf32>
    %515 = arith.mulf %513, %514 : vector<64x32xf32>
    %516 = vector.broadcast %489 : vector<1x32xf32> to vector<64x32xf32>
    %517 = arith.addf %515, %516 : vector<64x32xf32>
    %cst_213 = arith.constant dense<0.000000e+00> : vector<64xf32>
    %518 = vector.multi_reduction <add>, %202, %cst_213 [1] : vector<64x32xf32> to vector<64xf32>
    %519 = vector.shape_cast %518 : vector<64xf32> to vector<64x1xf32>
    %cst_214 = arith.constant 3.200000e+01 : f32
    %520 = vector.broadcast %cst_214 : f32 to vector<64x1xf32>
    %521 = arith.divf %519, %520 : vector<64x1xf32>
    %522 = vector.broadcast %521 : vector<64x1xf32> to vector<64x32xf32>
    %523 = arith.subf %202, %522 : vector<64x32xf32>
    %524 = arith.mulf %523, %523 : vector<64x32xf32>
    %cst_215 = arith.constant dense<0.000000e+00> : vector<64xf32>
    %525 = vector.multi_reduction <add>, %524, %cst_215 [1] : vector<64x32xf32> to vector<64xf32>
    %526 = vector.shape_cast %525 : vector<64xf32> to vector<64x1xf32>
    %cst_216 = arith.constant 3.200000e+01 : f32
    %527 = vector.broadcast %cst_216 : f32 to vector<64x1xf32>
    %528 = arith.divf %526, %527 : vector<64x1xf32>
    %cst_217 = arith.constant 9.99999997E-7 : f32
    %529 = vector.broadcast %cst_217 : f32 to vector<64x1xf32>
    %530 = arith.addf %528, %529 : vector<64x1xf32>
    %531 = math.rsqrt %530 : vector<64x1xf32>
    %532 = vector.broadcast %531 : vector<64x1xf32> to vector<64x32xf32>
    %533 = arith.mulf %523, %532 : vector<64x32xf32>
    %534 = vector.broadcast %490 : vector<1x32xf32> to vector<64x32xf32>
    %535 = arith.mulf %533, %534 : vector<64x32xf32>
    %536 = vector.broadcast %491 : vector<1x32xf32> to vector<64x32xf32>
    %537 = arith.addf %535, %536 : vector<64x32xf32>
    %538 = arith.addf %517, %61 : vector<64x32xf32>
    %cst_218 = arith.constant dense<0.000000e+00> : vector<64x32xf32>
    %539 = tpu.matmul %538, %474, %cst_218 {dimension_numbers = #tpu.dot_dimension_numbers<[1], [0], [0], [1], [0, 0, 1, 1], [], []>} : vector<64x32xf32>, vector<32x32xf32>, vector<64x32xf32> -> vector<64x32xf32>
    %540 = vector.broadcast %492 : vector<1x32xf32> to vector<64x32xf32>
    %541 = arith.addf %539, %540 : vector<64x32xf32>
    %542 = arith.addf %537, %60 : vector<64x32xf32>
    %cst_219 = arith.constant dense<0.000000e+00> : vector<32x64xf32>
    %543 = tpu.matmul %476, %542, %cst_219 {dimension_numbers = #tpu.dot_dimension_numbers<[1], [1], [0], [0], [0, 0, 1, 0], [], []>} : vector<32x32xf32>, vector<64x32xf32>, vector<32x64xf32> -> vector<32x64xf32>
    %cst_220 = arith.constant dense<0.000000e+00> : vector<64x32xf32>
    %544 = tpu.matmul %537, %478, %cst_220 {dimension_numbers = #tpu.dot_dimension_numbers<[1], [0], [0], [1], [0, 0, 1, 1], [], []>} : vector<64x32xf32>, vector<32x32xf32>, vector<64x32xf32> -> vector<64x32xf32>
    %545 = vector.broadcast %493 : vector<1x32xf32> to vector<64x32xf32>
    %546 = arith.addf %544, %545 : vector<64x32xf32>
    %547 = tpu.concatenate %543, %543, %543, %543 in 1 : vector<32x64xf32>, vector<32x64xf32>, vector<32x64xf32>, vector<32x64xf32> -> vector<32x256xf32>
    %548 = arith.mulf %547, %67 : vector<32x256xf32>
    %549 = tpu.concatenate %546, %546, %546, %546 in 0 : vector<64x32xf32>, vector<64x32xf32>, vector<64x32xf32>, vector<64x32xf32> -> vector<256x32xf32>
    %550 = arith.mulf %549, %66 : vector<256x32xf32>
    %cst_221 = arith.constant dense<0.000000e+00> : vector<64x256xf32>
    %551 = tpu.matmul %541, %548, %cst_221 {dimension_numbers = #tpu.dot_dimension_numbers<[1], [0], [0], [1], [0, 0, 1, 1], [], []>} : vector<64x32xf32>, vector<32x256xf32>, vector<64x256xf32> -> vector<64x256xf32>
    %cst_222 = arith.constant 0.353553385 : f32
    %552 = vector.broadcast %cst_222 : f32 to vector<64x256xf32>
    %553 = arith.mulf %551, %552 : vector<64x256xf32>
    %554 = arith.addf %553, %63 : vector<64x256xf32>
    %cst_223 = arith.constant dense<0xFF800000> : vector<64xf32>
    %555 = vector.multi_reduction <maximumf>, %554, %cst_223 [1] : vector<64x256xf32> to vector<64xf32>
    %556 = vector.shape_cast %555 : vector<64xf32> to vector<64x1xf32>
    %557 = vector.broadcast %556 : vector<64x1xf32> to vector<64x256xf32>
    %558 = arith.subf %554, %557 : vector<64x256xf32>
    %559 = math.exp %558 : vector<64x256xf32>
    %cst_224 = arith.constant dense<0.000000e+00> : vector<64x32xf32>
    %560 = tpu.matmul %559, %66, %cst_224 {dimension_numbers = #tpu.dot_dimension_numbers<[1], [0], [0], [1], [0, 0, 1, 1], [], []>} : vector<64x256xf32>, vector<256x32xf32>, vector<64x32xf32> -> vector<64x32xf32>
    %cst_225 = arith.constant dense<0.000000e+00> : vector<64x32xf32>
    %561 = tpu.matmul %559, %550, %cst_225 {dimension_numbers = #tpu.dot_dimension_numbers<[1], [0], [0], [1], [0, 0, 1, 1], [], []>} : vector<64x256xf32>, vector<256x32xf32>, vector<64x32xf32> -> vector<64x32xf32>
    %562 = tpu.reciprocal %560 {approx = true} : vector<64x32xf32> -> vector<64x32xf32>
    %563 = arith.mulf %561, %562 : vector<64x32xf32>
    %cst_226 = arith.constant dense<0.000000e+00> : vector<64x32xf32>
    %564 = tpu.matmul %563, %480, %cst_226 {dimension_numbers = #tpu.dot_dimension_numbers<[1], [0], [0], [1], [0, 0, 1, 1], [], []>} : vector<64x32xf32>, vector<32x32xf32>, vector<64x32xf32> -> vector<64x32xf32>
    %565 = arith.addf %337, %564 : vector<64x32xf32>
    %566 = vector.broadcast %494 : vector<1x32xf32> to vector<64x32xf32>
    %567 = arith.addf %565, %566 : vector<64x32xf32>
    %cst_227 = arith.constant dense<0.000000e+00> : vector<64xf32>
    %568 = vector.multi_reduction <add>, %567, %cst_227 [1] : vector<64x32xf32> to vector<64xf32>
    %569 = vector.shape_cast %568 : vector<64xf32> to vector<64x1xf32>
    %cst_228 = arith.constant 3.200000e+01 : f32
    %570 = vector.broadcast %cst_228 : f32 to vector<64x1xf32>
    %571 = arith.divf %569, %570 : vector<64x1xf32>
    %572 = vector.broadcast %571 : vector<64x1xf32> to vector<64x32xf32>
    %573 = arith.subf %567, %572 : vector<64x32xf32>
    %574 = arith.mulf %573, %573 : vector<64x32xf32>
    %cst_229 = arith.constant dense<0.000000e+00> : vector<64xf32>
    %575 = vector.multi_reduction <add>, %574, %cst_229 [1] : vector<64x32xf32> to vector<64xf32>
    %576 = vector.shape_cast %575 : vector<64xf32> to vector<64x1xf32>
    %cst_230 = arith.constant 3.200000e+01 : f32
    %577 = vector.broadcast %cst_230 : f32 to vector<64x1xf32>
    %578 = arith.divf %576, %577 : vector<64x1xf32>
    %cst_231 = arith.constant 9.99999997E-7 : f32
    %579 = vector.broadcast %cst_231 : f32 to vector<64x1xf32>
    %580 = arith.addf %578, %579 : vector<64x1xf32>
    %581 = math.rsqrt %580 : vector<64x1xf32>
    %582 = vector.broadcast %581 : vector<64x1xf32> to vector<64x32xf32>
    %583 = arith.mulf %573, %582 : vector<64x32xf32>
    %584 = vector.broadcast %495 : vector<1x32xf32> to vector<64x32xf32>
    %585 = arith.mulf %583, %584 : vector<64x32xf32>
    %586 = vector.broadcast %496 : vector<1x32xf32> to vector<64x32xf32>
    %587 = arith.addf %585, %586 : vector<64x32xf32>
    %cst_232 = arith.constant dense<0.000000e+00> : vector<64x128xf32>
    %588 = tpu.matmul %587, %482, %cst_232 {dimension_numbers = #tpu.dot_dimension_numbers<[1], [0], [0], [1], [0, 0, 1, 1], [], []>} : vector<64x32xf32>, vector<32x128xf32>, vector<64x128xf32> -> vector<64x128xf32>
    %589 = vector.broadcast %485 : vector<1x128xf32> to vector<64x128xf32>
    %590 = arith.addf %588, %589 : vector<64x128xf32>
    %591 = arith.mulf %590, %590 : vector<64x128xf32>
    %592 = arith.mulf %590, %591 : vector<64x128xf32>
    %cst_233 = arith.constant 4.471500e-02 : f32
    %593 = vector.broadcast %cst_233 : f32 to vector<64x128xf32>
    %594 = arith.mulf %593, %592 : vector<64x128xf32>
    %595 = arith.addf %590, %594 : vector<64x128xf32>
    %cst_234 = arith.constant 0.797884583 : f32
    %596 = vector.broadcast %cst_234 : f32 to vector<64x128xf32>
    %597 = arith.mulf %596, %595 : vector<64x128xf32>
    %598 = math.tanh %597 : vector<64x128xf32>
    %cst_235 = arith.constant 1.000000e+00 : f32
    %599 = vector.broadcast %cst_235 : f32 to vector<64x128xf32>
    %600 = arith.addf %599, %598 : vector<64x128xf32>
    %cst_236 = arith.constant 5.000000e-01 : f32
    %601 = vector.broadcast %cst_236 : f32 to vector<64x128xf32>
    %602 = arith.mulf %601, %600 : vector<64x128xf32>
    %603 = arith.mulf %590, %602 : vector<64x128xf32>
    %cst_237 = arith.constant dense<0.000000e+00> : vector<64x32xf32>
    %604 = tpu.matmul %603, %484, %cst_237 {dimension_numbers = #tpu.dot_dimension_numbers<[1], [0], [0], [1], [0, 0, 1, 1], [], []>} : vector<64x128xf32>, vector<128x32xf32>, vector<64x32xf32> -> vector<64x32xf32>
    %605 = arith.addf %567, %604 : vector<64x32xf32>
    %606 = vector.broadcast %497 : vector<1x32xf32> to vector<64x32xf32>
    %607 = arith.addf %605, %606 : vector<64x32xf32>
    %c0_238 = arith.constant 0 : index
    %c0_239 = arith.constant 0 : index
    %608 = vector.load %arg11[%c0_238, %c0_239] : memref<8x64xf32, #tpu.memory_space<vmem>>, vector<8x64xf32>
    %cst_240 = arith.constant dense<0.000000e+00> : vector<8x32xf32>
    %609 = tpu.matmul %608, %472, %cst_240 {dimension_numbers = #tpu.dot_dimension_numbers<[1], [0], [0], [1], [0, 0, 1, 1], [], []>} : vector<8x64xf32>, vector<64x32xf32>, vector<8x32xf32> -> vector<8x32xf32>
    %c0_241 = arith.constant 0 : index
    %c0_242 = arith.constant 0 : index
    %610 = vector.load %arg12[%c0_241, %c0_242] : memref<8x64xf32, #tpu.memory_space<vmem>>, vector<8x64xf32>
    %cst_243 = arith.constant dense<0.000000e+00> : vector<8x32xf32>
    %611 = tpu.matmul %610, %607, %cst_243 {dimension_numbers = #tpu.dot_dimension_numbers<[1], [0], [0], [1], [0, 0, 1, 1], [], []>} : vector<8x64xf32>, vector<64x32xf32>, vector<8x32xf32> -> vector<8x32xf32>
    %612 = arith.addf %609, %611 : vector<8x32xf32>
    %c0_244 = arith.constant 0 : index
    %c0_245 = arith.constant 0 : index
    %613 = vector.load %arg22[%c0_244, %c0_245] : memref<32x32xf32, #tpu.memory_space<vmem>>, vector<32x32xf32>
    %cst_246 = arith.constant dense<0.000000e+00> : vector<8x32xf32>
    %614 = tpu.matmul %612, %613, %cst_246 {dimension_numbers = #tpu.dot_dimension_numbers<[1], [0], [0], [1], [0, 0, 1, 1], [], []>} : vector<8x32xf32>, vector<32x32xf32>, vector<8x32xf32> -> vector<8x32xf32>
    %615 = vector.broadcast %8 : vector<1x32xf32> to vector<8x32xf32>
    %616 = arith.addf %614, %615 : vector<8x32xf32>
    %cst_247 = arith.constant 0.000000e+00 : f32
    %617 = vector.broadcast %cst_247 : f32 to vector<8x32xf32>
    %618 = arith.maximumf %616, %617 : vector<8x32xf32>
    %c0_248 = arith.constant 0 : index
    %c0_249 = arith.constant 0 : index
    %619 = vector.load %arg23[%c0_248, %c0_249] : memref<32x128xf32, #tpu.memory_space<vmem>>, vector<32x128xf32>
    %cst_250 = arith.constant dense<0.000000e+00> : vector<8x128xf32>
    %620 = tpu.matmul %618, %619, %cst_250 {dimension_numbers = #tpu.dot_dimension_numbers<[1], [0], [0], [1], [0, 0, 1, 1], [], []>} : vector<8x32xf32>, vector<32x128xf32>, vector<8x128xf32> -> vector<8x128xf32>
    %c0_251 = arith.constant 0 : index
    %c0_252 = arith.constant 0 : index
    %621 = vector.load %arg24[%c0_251, %c0_252] : memref<1x128xf32, #tpu.memory_space<vmem>>, vector<1x128xf32>
    %622 = vector.broadcast %621 : vector<1x128xf32> to vector<8x128xf32>
    %623 = arith.addf %620, %622 : vector<8x128xf32>
    %c0_253 = arith.constant 0 : index
    %c0_254 = arith.constant 0 : index
    %c0_255 = arith.constant 0 : index
    %624 = vector.load %arg25[%c0_253, %c0_254, %c0_255] : memref<1x8x128xf32, #tpu.memory_space<vmem>>, vector<1x8x128xf32>
    %625 = vector.shape_cast %624 : vector<1x8x128xf32> to vector<8x128xf32>
    %626 = vector.shape_cast %623 : vector<8x128xf32> to vector<1x8x128xf32>
    tpu.vector_store %arg25[%c0_253, %c0_254, %c0_255], %626 {strides = array<i32>} : memref<1x8x128xf32, #tpu.memory_space<vmem>>, vector<1x8x128xf32>,
    return
  }
  func.func @transform_0(%arg0: i32) -> (i32, i32) {
    %c0_i32 = arith.constant 0 : i32
    %c0_i32_0 = arith.constant 0 : i32
    return %arg0, %c0_i32 : i32, i32
  }
  func.func @transform_1(%arg0: i32) -> (i32, i32) {
    %c0_i32 = arith.constant 0 : i32
    %c0_i32_0 = arith.constant 0 : i32
    return %arg0, %c0_i32 : i32, i32
  }
  func.func @transform_2(%arg0: i32) -> (i32, i32) {
    %c0_i32 = arith.constant 0 : i32
    %c0_i32_0 = arith.constant 0 : i32
    %c0_i32_1 = arith.constant 0 : i32
    return %c0_i32, %c0_i32_0 : i32, i32
  }
  func.func @transform_3(%arg0: i32) -> (i32, i32) {
    %c0_i32 = arith.constant 0 : i32
    %c0_i32_0 = arith.constant 0 : i32
    %c0_i32_1 = arith.constant 0 : i32
    return %c0_i32, %c0_i32_0 : i32, i32
  }
  func.func @transform_4(%arg0: i32) -> (i32, i32) {
    %c0_i32 = arith.constant 0 : i32
    %c0_i32_0 = arith.constant 0 : i32
    %c0_i32_1 = arith.constant 0 : i32
    return %c0_i32, %c0_i32_0 : i32, i32
  }
  func.func @transform_5(%arg0: i32) -> (i32, i32) {
    %c0_i32 = arith.constant 0 : i32
    %c0_i32_0 = arith.constant 0 : i32
    %c0_i32_1 = arith.constant 0 : i32
    return %c0_i32, %c0_i32_0 : i32, i32
  }
  func.func @transform_6(%arg0: i32) -> (i32, i32) {
    %c0_i32 = arith.constant 0 : i32
    %c0_i32_0 = arith.constant 0 : i32
    %c0_i32_1 = arith.constant 0 : i32
    return %c0_i32, %c0_i32_0 : i32, i32
  }
  func.func @transform_7(%arg0: i32) -> (i32, i32) {
    %c0_i32 = arith.constant 0 : i32
    %c0_i32_0 = arith.constant 0 : i32
    %c0_i32_1 = arith.constant 0 : i32
    return %c0_i32, %c0_i32_0 : i32, i32
  }
  func.func @transform_8(%arg0: i32) -> (i32, i32) {
    %c0_i32 = arith.constant 0 : i32
    %c0_i32_0 = arith.constant 0 : i32
    %c0_i32_1 = arith.constant 0 : i32
    return %c0_i32, %c0_i32_0 : i32, i32
  }
  func.func @transform_9(%arg0: i32) -> (i32, i32) {
    %c0_i32 = arith.constant 0 : i32
    %c0_i32_0 = arith.constant 0 : i32
    %c0_i32_1 = arith.constant 0 : i32
    return %c0_i32, %c0_i32_0 : i32, i32
  }
  func.func @transform_10(%arg0: i32) -> (i32, i32) {
    %c0_i32 = arith.constant 0 : i32
    %c0_i32_0 = arith.constant 0 : i32
    %c0_i32_1 = arith.constant 0 : i32
    return %c0_i32, %c0_i32_0 : i32, i32
  }
  func.func @transform_11(%arg0: i32) -> (i32, i32) {
    %c0_i32 = arith.constant 0 : i32
    %c0_i32_0 = arith.constant 0 : i32
    %c0_i32_1 = arith.constant 0 : i32
    return %c0_i32, %c0_i32_0 : i32, i32
  }
  func.func @transform_12(%arg0: i32) -> (i32, i32) {
    %c0_i32 = arith.constant 0 : i32
    %c0_i32_0 = arith.constant 0 : i32
    %c0_i32_1 = arith.constant 0 : i32
    return %c0_i32, %c0_i32_0 : i32, i32
  }
  func.func @transform_13(%arg0: i32) -> (i32, i32) {
    %c0_i32 = arith.constant 0 : i32
    %c0_i32_0 = arith.constant 0 : i32
    %c0_i32_1 = arith.constant 0 : i32
    return %c0_i32, %c0_i32_0 : i32, i32
  }
  func.func @transform_14(%arg0: i32) -> (i32, i32) {
    %c0_i32 = arith.constant 0 : i32
    %c0_i32_0 = arith.constant 0 : i32
    %c0_i32_1 = arith.constant 0 : i32
    return %c0_i32, %c0_i32_0 : i32, i32
  }
  func.func @transform_15(%arg0: i32) -> (i32, i32) {
    %c0_i32 = arith.constant 0 : i32
    %c0_i32_0 = arith.constant 0 : i32
    %c0_i32_1 = arith.constant 0 : i32
    return %c0_i32, %c0_i32_0 : i32, i32
  }
  func.func @transform_16(%arg0: i32) -> (i32, i32, i32) {
    %c0_i32 = arith.constant 0 : i32
    %c0_i32_0 = arith.constant 0 : i32
    %c0_i32_1 = arith.constant 0 : i32
    %c0_i32_2 = arith.constant 0 : i32
    return %c0_i32, %c0_i32_0, %c0_i32_1 : i32, i32, i32
  }
  func.func @transform_17(%arg0: i32) -> (i32, i32, i32) {
    %c0_i32 = arith.constant 0 : i32
    %c0_i32_0 = arith.constant 0 : i32
    %c0_i32_1 = arith.constant 0 : i32
    %c0_i32_2 = arith.constant 0 : i32
    return %c0_i32, %c0_i32_0, %c0_i32_1 : i32, i32, i32
  }
  func.func @transform_18(%arg0: i32) -> (i32, i32, i32) {
    %c0_i32 = arith.constant 0 : i32
    %c0_i32_0 = arith.constant 0 : i32
    %c0_i32_1 = arith.constant 0 : i32
    %c0_i32_2 = arith.constant 0 : i32
    return %c0_i32, %c0_i32_0, %c0_i32_1 : i32, i32, i32
  }
  func.func @transform_19(%arg0: i32) -> (i32, i32) {
    %c0_i32 = arith.constant 0 : i32
    %c0_i32_0 = arith.constant 0 : i32
    %c0_i32_1 = arith.constant 0 : i32
    return %c0_i32, %c0_i32_0 : i32, i32
  }
  func.func @transform_20(%arg0: i32) -> (i32, i32, i32) {
    %c0_i32 = arith.constant 0 : i32
    %c0_i32_0 = arith.constant 0 : i32
    %c0_i32_1 = arith.constant 0 : i32
    %c0_i32_2 = arith.constant 0 : i32
    return %c0_i32, %c0_i32_0, %c0_i32_1 : i32, i32, i32
  }
  func.func @transform_21(%arg0: i32) -> (i32, i32) {
    %c0_i32 = arith.constant 0 : i32
    %c0_i32_0 = arith.constant 0 : i32
    %c0_i32_1 = arith.constant 0 : i32
    return %c0_i32, %c0_i32_0 : i32, i32
  }
  func.func @transform_22(%arg0: i32) -> (i32, i32) {
    %c0_i32 = arith.constant 0 : i32
    %c0_i32_0 = arith.constant 0 : i32
    %c0_i32_1 = arith.constant 0 : i32
    return %c0_i32, %c0_i32_0 : i32, i32
  }
  func.func @transform_23(%arg0: i32) -> (i32, i32) {
    %c0_i32 = arith.constant 0 : i32
    %c0_i32_0 = arith.constant 0 : i32
    %c0_i32_1 = arith.constant 0 : i32
    return %c0_i32, %c0_i32_0 : i32, i32
  }
  func.func @transform_24(%arg0: i32) -> (i32, i32, i32) {
    %c0_i32 = arith.constant 0 : i32
    %c0_i32_0 = arith.constant 0 : i32
    %c0_i32_1 = arith.constant 0 : i32
    return %arg0, %c0_i32, %c0_i32_0 : i32, i32, i32
  }
}

</mosaic_0001>

<llo_original>
// kernel: stlt_forward.1
$region0: #{stlt_forward.1}
  #allocation0 [shape = 'u32[]', space=smem, size = 0x4, offset = 0x4, fixed_abs, tag = 'smem constant byte address 0x4 - core index']
  #allocation1 [shape = 'u32[72,128]{1,0:T(1,128)}', space=vmem, size = 0x9000, scoped, tag = 'internal scratch']
  %s0 = inlined_call_operand.vmem [shape: f32[256,4], index: 0, kind: input, shape index: {}]
  %s1 = inlined_call_operand.vmem [shape: f32[256,32], index: 1, kind: input, shape index: {}]
  %s2 = inlined_call_operand.vmem [shape: f32[128,128], index: 2, kind: input, shape index: {}]
  %s3 = inlined_call_operand.vmem [shape: f32[128,128], index: 3, kind: input, shape index: {}]
  %s4 = inlined_call_operand.vmem [shape: f32[64,256], index: 4, kind: input, shape index: {}, may-alias: {4,5}]
  %s5 = inlined_call_operand.vmem [shape: f32[64,256], index: 5, kind: input, shape index: {}, may-alias: {4,5}]
  %s6 = inlined_call_operand.vmem [shape: f32[256,32], index: 6, kind: input, shape index: {}, may-alias: {6,8}]
  %s7 = inlined_call_operand.vmem [shape: f32[32,256], index: 7, kind: input, shape index: {}, may-alias: {7,9}]
  %s8 = inlined_call_operand.vmem [shape: f32[256,32], index: 8, kind: input, shape index: {}, may-alias: {6,8}]
  %s9 = inlined_call_operand.vmem [shape: f32[32,256], index: 9, kind: input, shape index: {}, may-alias: {7,9}]
  %s10 = inlined_call_operand.vmem [shape: f32[8,64], index: 10, kind: input, shape index: {}, may-alias: {10,11}]
  %s11 = inlined_call_operand.vmem [shape: f32[8,64], index: 11, kind: input, shape index: {}, may-alias: {10,11}]
  %s12 = inlined_call_operand.vmem [shape: f32[4,32], index: 12, kind: input, shape index: {}]
  %s13 = inlined_call_operand.vmem [shape: f32[8,32], index: 13, kind: input, shape index: {}]
  %s14 = inlined_call_operand.vmem [shape: f32[64,32], index: 14, kind: input, shape index: {}]
  %s15 = inlined_call_operand.vmem [shape: f32[32,32], index: 15, kind: input, shape index: {}]
  %s16 = inlined_call_operand.vmem [shape: f32[16,32,32], index: 16, kind: input, shape index: {}]
  %s17 = inlined_call_operand.vmem [shape: f32[4,32,128], index: 17, kind: input, shape index: {}]
  %s18 = inlined_call_operand.vmem [shape: f32[4,128,32], index: 18, kind: input, shape index: {}]
  %s19 = inlined_call_operand.vmem [shape: f32[4,128], index: 19, kind: input, shape index: {}]
  %s20 = inlined_call_operand.vmem [shape: f32[4,16,32], index: 20, kind: input, shape index: {}]
  %s21 = inlined_call_operand.vmem [shape: f32[32,32], index: 21, kind: input, shape index: {}]
  %s22 = inlined_call_operand.vmem [shape: f32[32,128], index: 22, kind: input, shape index: {}]
  %s23 = inlined_call_operand.vmem [shape: f32[1,128], index: 23, kind: input, shape index: {}]
  %s24 = inlined_call_operand.vmem [shape: f32[2,8,128], index: 24, kind: output, shape index: {}]
  %s25 = sld [smem:[#allocation0]]
  $region129: #{stlt_forward.1} parent=0
    _
  %s27 = ssub.s32 1, %s25
  %s28 = scalar_select 0, %s27, %s25
  loop: start=0, step=1, limit=4
  $region2: #{stlt_forward.1} parent=0 // loop_pre_header
    _
  $region3: #{stlt_forward.1} parent=0 // loop_header
    %s30 = sphi 0, %s34
    %p31 = scmp.ge.s32.totalorder %s30, 4
    %s40 = sphi 0, %s42
    %s43 = sphi 0, %s40
    %s44 = sphi 0, %s43
    %s60 = sphi 0, %s44
    %s66 = sphi 0, %s68
    %s69 = sphi 0, %s66
    %s70 = sphi 0, %s69
    %s86 = sphi 0, %s70
    %s90 = sphi 0, %s90
    %s92 = sphi 0, %s90
    %s93 = sphi 0, %s92
    %s107 = sphi 0, %s93
    %s111 = sphi 0, %s111
    %s113 = sphi 0, %s111
    %s114 = sphi 0, %s113
    %s128 = sphi 0, %s114
    %s132 = sphi 0, %s132
    %s134 = sphi 0, %s132
    %s135 = sphi 0, %s134
    %s149 = sphi 0, %s135
    %s153 = sphi 0, %s153
    %s155 = sphi 0, %s153
    %s156 = sphi 0, %s155
    %s170 = sphi 0, %s156
    %s174 = sphi 0, %s174
    %s176 = sphi 0, %s174
    %s177 = sphi 0, %s176
    %s191 = sphi 0, %s177
    %s195 = sphi 0, %s195
    %s197 = sphi 0, %s195
    %s198 = sphi 0, %s197
    %s212 = sphi 0, %s198
    %s216 = sphi 0, %s216
    %s218 = sphi 0, %s216
    %s219 = sphi 0, %s218
    %s233 = sphi 0, %s219
    %s237 = sphi 0, %s237
    %s239 = sphi 0, %s237
    %s240 = sphi 0, %s239
    %s254 = sphi 0, %s240
    %s258 = sphi 0, %s258
    %s260 = sphi 0, %s258
    %s261 = sphi 0, %s260
    %s275 = sphi 0, %s261
    %s279 = sphi 0, %s279
    %s281 = sphi 0, %s279
    %s282 = sphi 0, %s281
    %s296 = sphi 0, %s282
    %s300 = sphi 0, %s300
    %s302 = sphi 0, %s300
    %s303 = sphi 0, %s302
    %s317 = sphi 0, %s303
    %s321 = sphi 0, %s321
    %s323 = sphi 0, %s321
    %s324 = sphi 0, %s323
    %s338 = sphi 0, %s324
    %s342 = sphi 0, %s342
    %s344 = sphi 0, %s342
    %s345 = sphi 0, %s344
    %s359 = sphi 0, %s345
    %s363 = sphi 0, %s363
    %s365 = sphi 0, %s363
    %s366 = sphi 0, %s365
    %s380 = sphi 0, %s366
    %s384 = sphi 0, %s384
    %s386 = sphi 0, %s384
    %s387 = sphi 0, %s386
    %s401 = sphi 0, %s387
    %s405 = sphi 0, %s405
    %s407 = sphi 0, %s405
    %s408 = sphi 0, %s407
    %s422 = sphi 0, %s408
    %s426 = sphi 0, %s426
    %s428 = sphi 0, %s426
    %s429 = sphi 0, %s428
    %s443 = sphi 0, %s429
    %s447 = sphi 0, %s447
    %s449 = sphi 0, %s447
    %s450 = sphi 0, %s449
    %s464 = sphi 0, %s450
    %s468 = sphi 0, %s468
    %s470 = sphi 0, %s468
    %s471 = sphi 0, %s470
    %s485 = sphi 0, %s471
    %s489 = sphi 0, %s489
    %s491 = sphi 0, %s489
    %s492 = sphi 0, %s491
    %s506 = sphi 0, %s492
    %s510 = sphi 0, %s510
    %s512 = sphi 0, %s510
    %s513 = sphi 0, %s512
    %s527 = sphi 0, %s513
    %s531 = sphi 0, %s531
    %s533 = sphi 0, %s531
    %s534 = sphi 0, %s533
    %s548 = sphi 0, %s534
    %s554 = sphi 0, %s556
    %s557 = sphi 0, %s554
    %s558 = sphi 0, %s557
    %s574 = sphi 0, %s558
  $region4: #{stlt_forward.1} parent=0 // loop_header_branch
    %33 = sbr.rel (%p31) target = $region8
  $region5: #{stlt_forward.1} parent=0 // loop_body
    %s35 = ssub.s32 %s30, 1
    %s36 = ssub.s32 %s30, 2
    %s37 = sadd.s32 %s30, 1
    %s38 = ssub.s32 %s30, %s37
    %p39 = scmp.eq.s32.totalorder %s38, 0
    %s41 = sadd.s32 %s40, 1
    %s42 = scalar_select %p39, %s40, %s41
    %p45 = pneg %p39
    %p46 = scmp.eq.s32.totalorder %s30, 1
    %p47 = por %p45, %p46
    %p48 = scmp.ne.s32.totalorder %s40, %s43
    %p49 = scmp.eq.s32.totalorder %s30, 0
    %p50 = por %p48, %p49
    %p51 = scmp.ne.s32.totalorder %s40, %s43
    %p52 = scmp.eq.s32.totalorder %s35, 1
    %p53 = por %p51, %p52
    %p54 = scmp.ne.s32.totalorder %s43, %s44
    %p55 = scmp.eq.s32.totalorder %s35, 0
    %p56 = por %p54, %p55
    %p57 = scmp.ne.s32.totalorder %s43, %s44
    %p58 = scmp.eq.s32.totalorder %s36, 1
    %p59 = por %p57, %p58
    %p61 = scmp.ne.s32.totalorder %s44, %s60
    %p62 = scmp.eq.s32.totalorder %s36, 0
    %p63 = por %p61, %p62
    %s64 = ssub.s32 %s30, %s37
    %p65 = scmp.eq.s32.totalorder %s64, 0
    %s67 = sadd.s32 %s66, 1
    %s68 = scalar_select %p65, %s66, %s67
    %p71 = pneg %p65
    %p72 = scmp.eq.s32.totalorder %s30, 1
    %p73 = por %p71, %p72
    %p74 = scmp.ne.s32.totalorder %s66, %s69
    %p75 = scmp.eq.s32.totalorder %s30, 0
    %p76 = por %p74, %p75
    %p77 = scmp.ne.s32.totalorder %s66, %s69
    %p78 = scmp.eq.s32.totalorder %s35, 1
    %p79 = por %p77, %p78
    %p80 = scmp.ne.s32.totalorder %s69, %s70
    %p81 = scmp.eq.s32.totalorder %s35, 0
    %p82 = por %p80, %p81
    %p83 = scmp.ne.s32.totalorder %s69, %s70
    %p84 = scmp.eq.s32.totalorder %s36, 1
    %p85 = por %p83, %p84
    %p87 = scmp.ne.s32.totalorder %s70, %s86
    %p88 = scmp.eq.s32.totalorder %s36, 0
    %p89 = por %p87, %p88
    %s91 = sadd.s32 %s90, 1
    %p94 = scmp.eq.s32.totalorder %s30, 1
    %p95 = scmp.ne.s32.totalorder %s90, %s92
    %p96 = scmp.eq.s32.totalorder %s30, 0
    %p97 = por %p95, %p96
    %p98 = scmp.ne.s32.totalorder %s90, %s92
    %p99 = scmp.eq.s32.totalorder %s35, 1
    %p100 = por %p98, %p99
    %p101 = scmp.ne.s32.totalorder %s92, %s93
    %p102 = scmp.eq.s32.totalorder %s35, 0
    %p103 = por %p101, %p102
    %p104 = scmp.ne.s32.totalorder %s92, %s93
    %p105 = scmp.eq.s32.totalorder %s36, 1
    %p106 = por %p104, %p105
    %p108 = scmp.ne.s32.totalorder %s93, %s107
    %p109 = scmp.eq.s32.totalorder %s36, 0
    %p110 = por %p108, %p109
    %s112 = sadd.s32 %s111, 1
    %p115 = scmp.eq.s32.totalorder %s30, 1
    %p116 = scmp.ne.s32.totalorder %s111, %s113
    %p117 = scmp.eq.s32.totalorder %s30, 0
    %p118 = por %p116, %p117
    %p119 = scmp.ne.s32.totalorder %s111, %s113
    %p120 = scmp.eq.s32.totalorder %s35, 1
    %p121 = por %p119, %p120
    %p122 = scmp.ne.s32.totalorder %s113, %s114
    %p123 = scmp.eq.s32.totalorder %s35, 0
    %p124 = por %p122, %p123
    %p125 = scmp.ne.s32.totalorder %s113, %s114
    %p126 = scmp.eq.s32.totalorder %s36, 1
    %p127 = por %p125, %p126
    %p129 = scmp.ne.s32.totalorder %s114, %s128
    %p130 = scmp.eq.s32.totalorder %s36, 0
    %p131 = por %p129, %p130
    %s133 = sadd.s32 %s132, 1
    %p136 = scmp.eq.s32.totalorder %s30, 1
    %p137 = scmp.ne.s32.totalorder %s132, %s134
    %p138 = scmp.eq.s32.totalorder %s30, 0
    %p139 = por %p137, %p138
    %p140 = scmp.ne.s32.totalorder %s132, %s134
    %p141 = scmp.eq.s32.totalorder %s35, 1
    %p142 = por %p140, %p141
    %p143 = scmp.ne.s32.totalorder %s134, %s135
    %p144 = scmp.eq.s32.totalorder %s35, 0
    %p145 = por %p143, %p144
    %p146 = scmp.ne.s32.totalorder %s134, %s135
    %p147 = scmp.eq.s32.totalorder %s36, 1
    %p148 = por %p146, %p147
    %p150 = scmp.ne.s32.totalorder %s135, %s149
    %p151 = scmp.eq.s32.totalorder %s36, 0
    %p152 = por %p150, %p151
    %s154 = sadd.s32 %s153, 1
    %p157 = scmp.eq.s32.totalorder %s30, 1
    %p158 = scmp.ne.s32.totalorder %s153, %s155
    %p159 = scmp.eq.s32.totalorder %s30, 0
    %p160 = por %p158, %p159
    %p161 = scmp.ne.s32.totalorder %s153, %s155
    %p162 = scmp.eq.s32.totalorder %s35, 1
    %p163 = por %p161, %p162
    %p164 = scmp.ne.s32.totalorder %s155, %s156
    %p165 = scmp.eq.s32.totalorder %s35, 0
    %p166 = por %p164, %p165
    %p167 = scmp.ne.s32.totalorder %s155, %s156
    %p168 = scmp.eq.s32.totalorder %s36, 1
    %p169 = por %p167, %p168
    %p171 = scmp.ne.s32.totalorder %s156, %s170
    %p172 = scmp.eq.s32.totalorder %s36, 0
    %p173 = por %p171, %p172
    %s175 = sadd.s32 %s174, 1
    %p178 = scmp.eq.s32.totalorder %s30, 1
    %p179 = scmp.ne.s32.totalorder %s174, %s176
    %p180 = scmp.eq.s32.totalorder %s30, 0
    %p181 = por %p179, %p180
    %p182 = scmp.ne.s32.totalorder %s174, %s176
    %p183 = scmp.eq.s32.totalorder %s35, 1
    %p184 = por %p182, %p183
    %p185 = scmp.ne.s32.totalorder %s176, %s177
    %p186 = scmp.eq.s32.totalorder %s35, 0
    %p187 = por %p185, %p186
    %p188 = scmp.ne.s32.totalorder %s176, %s177
    %p189 = scmp.eq.s32.totalorder %s36, 1
    %p190 = por %p188, %p189
    %p192 = scmp.ne.s32.totalorder %s177, %s191
    %p193 = scmp.eq.s32.totalorder %s36, 0
    %p194 = por %p192, %p193
    %s196 = sadd.s32 %s195, 1
    %p199 = scmp.eq.s32.totalorder %s30, 1
    %p200 = scmp.ne.s32.totalorder %s195, %s197
    %p201 = scmp.eq.s32.totalorder %s30, 0
    %p202 = por %p200, %p201
    %p203 = scmp.ne.s32.totalorder %s195, %s197
    %p204 = scmp.eq.s32.totalorder %s35, 1
    %p205 = por %p203, %p204
    %p206 = scmp.ne.s32.totalorder %s197, %s198
    %p207 = scmp.eq.s32.totalorder %s35, 0
    %p208 = por %p206, %p207
    %p209 = scmp.ne.s32.totalorder %s197, %s198
    %p210 = scmp.eq.s32.totalorder %s36, 1
    %p211 = por %p209, %p210
    %p213 = scmp.ne.s32.totalorder %s198, %s212
    %p214 = scmp.eq.s32.totalorder %s36, 0
    %p215 = por %p213, %p214
    %s217 = sadd.s32 %s216, 1
    %p220 = scmp.eq.s32.totalorder %s30, 1
    %p221 = scmp.ne.s32.totalorder %s216, %s218
    %p222 = scmp.eq.s32.totalorder %s30, 0
    %p223 = por %p221, %p222
    %p224 = scmp.ne.s32.totalorder %s216, %s218
    %p225 = scmp.eq.s32.totalorder %s35, 1
    %p226 = por %p224, %p225
    %p227 = scmp.ne.s32.totalorder %s218, %s219
    %p228 = scmp.eq.s32.totalorder %s35, 0
    %p229 = por %p227, %p228
    %p230 = scmp.ne.s32.totalorder %s218, %s219
    %p231 = scmp.eq.s32.totalorder %s36, 1
    %p232 = por %p230, %p231
    %p234 = scmp.ne.s32.totalorder %s219, %s233
    %p235 = scmp.eq.s32.totalorder %s36, 0
    %p236 = por %p234, %p235
    %s238 = sadd.s32 %s237, 1
    %p241 = scmp.eq.s32.totalorder %s30, 1
    %p242 = scmp.ne.s32.totalorder %s237, %s239
    %p243 = scmp.eq.s32.totalorder %s30, 0
    %p244 = por %p242, %p243
    %p245 = scmp.ne.s32.totalorder %s237, %s239
    %p246 = scmp.eq.s32.totalorder %s35, 1
    %p247 = por %p245, %p246
    %p248 = scmp.ne.s32.totalorder %s239, %s240
    %p249 = scmp.eq.s32.totalorder %s35, 0
    %p250 = por %p248, %p249
    %p251 = scmp.ne.s32.totalorder %s239, %s240
    %p252 = scmp.eq.s32.totalorder %s36, 1
    %p253 = por %p251, %p252
    %p255 = scmp.ne.s32.totalorder %s240, %s254
    %p256 = scmp.eq.s32.totalorder %s36, 0
    %p257 = por %p255, %p256
    %s259 = sadd.s32 %s258, 1
    %p262 = scmp.eq.s32.totalorder %s30, 1
    %p263 = scmp.ne.s32.totalorder %s258, %s260
    %p264 = scmp.eq.s32.totalorder %s30, 0
    %p265 = por %p263, %p264
    %p266 = scmp.ne.s32.totalorder %s258, %s260
    %p267 = scmp.eq.s32.totalorder %s35, 1
    %p268 = por %p266, %p267
    %p269 = scmp.ne.s32.totalorder %s260, %s261
    %p270 = scmp.eq.s32.totalorder %s35, 0
    %p271 = por %p269, %p270
    %p272 = scmp.ne.s32.totalorder %s260, %s261
    %p273 = scmp.eq.s32.totalorder %s36, 1
    %p274 = por %p272, %p273
    %p276 = scmp.ne.s32.totalorder %s261, %s275
    %p277 = scmp.eq.s32.totalorder %s36, 0
    %p278 = por %p276, %p277
    %s280 = sadd.s32 %s279, 1
    %p283 = scmp.eq.s32.totalorder %s30, 1
    %p284 = scmp.ne.s32.totalorder %s279, %s281
    %p285 = scmp.eq.s32.totalorder %s30, 0
    %p286 = por %p284, %p285
    %p287 = scmp.ne.s32.totalorder %s279, %s281
    %p288 = scmp.eq.s32.totalorder %s35, 1
    %p289 = por %p287, %p288
    %p290 = scmp.ne.s32.totalorder %s281, %s282
    %p291 = scmp.eq.s32.totalorder %s35, 0
    %p292 = por %p290, %p291
    %p293 = scmp.ne.s32.totalorder %s281, %s282
    %p294 = scmp.eq.s32.totalorder %s36, 1
    %p295 = por %p293, %p294
    %p297 = scmp.ne.s32.totalorder %s282, %s296
    %p298 = scmp.eq.s32.totalorder %s36, 0
    %p299 = por %p297, %p298
    %s301 = sadd.s32 %s300, 1
    %p304 = scmp.eq.s32.totalorder %s30, 1
    %p305 = scmp.ne.s32.totalorder %s300, %s302
    %p306 = scmp.eq.s32.totalorder %s30, 0
    %p307 = por %p305, %p306
    %p308 = scmp.ne.s32.totalorder %s300, %s302
    %p309 = scmp.eq.s32.totalorder %s35, 1
    %p310 = por %p308, %p309
    %p311 = scmp.ne.s32.totalorder %s302, %s303
    %p312 = scmp.eq.s32.totalorder %s35, 0
    %p313 = por %p311, %p312
    %p314 = scmp.ne.s32.totalorder %s302, %s303
    %p315 = scmp.eq.s32.totalorder %s36, 1
    %p316 = por %p314, %p315
    %p318 = scmp.ne.s32.totalorder %s303, %s317
    %p319 = scmp.eq.s32.totalorder %s36, 0
    %p320 = por %p318, %p319
    %s322 = sadd.s32 %s321, 1
    %p325 = scmp.eq.s32.totalorder %s30, 1
    %p326 = scmp.ne.s32.totalorder %s321, %s323
    %p327 = scmp.eq.s32.totalorder %s30, 0
    %p328 = por %p326, %p327
    %p329 = scmp.ne.s32.totalorder %s321, %s323
    %p330 = scmp.eq.s32.totalorder %s35, 1
    %p331 = por %p329, %p330
    %p332 = scmp.ne.s32.totalorder %s323, %s324
    %p333 = scmp.eq.s32.totalorder %s35, 0
    %p334 = por %p332, %p333
    %p335 = scmp.ne.s32.totalorder %s323, %s324
    %p336 = scmp.eq.s32.totalorder %s36, 1
    %p337 = por %p335, %p336
    %p339 = scmp.ne.s32.totalorder %s324, %s338
    %p340 = scmp.eq.s32.totalorder %s36, 0
    %p341 = por %p339, %p340
    %s343 = sadd.s32 %s342, 1
    %p346 = scmp.eq.s32.totalorder %s30, 1
    %p347 = scmp.ne.s32.totalorder %s342, %s344
    %p348 = scmp.eq.s32.totalorder %s30, 0
    %p349 = por %p347, %p348
    %p350 = scmp.ne.s32.totalorder %s342, %s344
    %p351 = scmp.eq.s32.totalorder %s35, 1
    %p352 = por %p350, %p351
    %p353 = scmp.ne.s32.totalorder %s344, %s345
    %p354 = scmp.eq.s32.totalorder %s35, 0
    %p355 = por %p353, %p354
    %p356 = scmp.ne.s32.totalorder %s344, %s345
    %p357 = scmp.eq.s32.totalorder %s36, 1
    %p358 = por %p356, %p357
    %p360 = scmp.ne.s32.totalorder %s345, %s359
    %p361 = scmp.eq.s32.totalorder %s36, 0
    %p362 = por %p360, %p361
    %s364 = sadd.s32 %s363, 1
    %p367 = scmp.eq.s32.totalorder %s30, 1
    %p368 = scmp.ne.s32.totalorder %s363, %s365
    %p369 = scmp.eq.s32.totalorder %s30, 0
    %p370 = por %p368, %p369
    %p371 = scmp.ne.s32.totalorder %s363, %s365
    %p372 = scmp.eq.s32.totalorder %s35, 1
    %p373 = por %p371, %p372
    %p374 = scmp.ne.s32.totalorder %s365, %s366
    %p375 = scmp.eq.s32.totalorder %s35, 0
    %p376 = por %p374, %p375
    %p377 = scmp.ne.s32.totalorder %s365, %s366
    %p378 = scmp.eq.s32.totalorder %s36, 1
    %p379 = por %p377, %p378
    %p381 = scmp.ne.s32.totalorder %s366, %s380
    %p382 = scmp.eq.s32.totalorder %s36, 0
    %p383 = por %p381, %p382
    %s385 = sadd.s32 %s384, 1
    %p388 = scmp.eq.s32.totalorder %s30, 1
    %p389 = scmp.ne.s32.totalorder %s384, %s386
    %p390 = scmp.eq.s32.totalorder %s30, 0
    %p391 = por %p389, %p390
    %p392 = scmp.ne.s32.totalorder %s384, %s386
    %p393 = scmp.eq.s32.totalorder %s35, 1
    %p394 = por %p392, %p393
    %p395 = scmp.ne.s32.totalorder %s386, %s387
    %p396 = scmp.eq.s32.totalorder %s35, 0
    %p397 = por %p395, %p396
    %p398 = scmp.ne.s32.totalorder %s386, %s387
    %p399 = scmp.eq.s32.totalorder %s36, 1
    %p400 = por %p398, %p399
    %p402 = scmp.ne.s32.totalorder %s387, %s401
    %p403 = scmp.eq.s32.totalorder %s36, 0
    %p404 = por %p402, %p403
    %s406 = sadd.s32 %s405, 1
    %p409 = scmp.eq.s32.totalorder %s30, 1
    %p410 = scmp.ne.s32.totalorder %s405, %s407
    %p411 = scmp.eq.s32.totalorder %s30, 0
    %p412 = por %p410, %p411
    %p413 = scmp.ne.s32.totalorder %s405, %s407
    %p414 = scmp.eq.s32.totalorder %s35, 1
    %p415 = por %p413, %p414
    %p416 = scmp.ne.s32.totalorder %s407, %s408
    %p417 = scmp.eq.s32.totalorder %s35, 0
    %p418 = por %p416, %p417
    %p419 = scmp.ne.s32.totalorder %s407, %s408
    %p420 = scmp.eq.s32.totalorder %s36, 1
    %p421 = por %p419, %p420
    %p423 = scmp.ne.s32.totalorder %s408, %s422
    %p424 = scmp.eq.s32.totalorder %s36, 0
    %p425 = por %p423, %p424
    %s427 = sadd.s32 %s426, 1
    %p430 = scmp.eq.s32.totalorder %s30, 1
    %p431 = scmp.ne.s32.totalorder %s426, %s428
    %p432 = scmp.eq.s32.totalorder %s30, 0
    %p433 = por %p431, %p432
    %p434 = scmp.ne.s32.totalorder %s426, %s428
    %p435 = scmp.eq.s32.totalorder %s35, 1
    %p436 = por %p434, %p435
    %p437 = scmp.ne.s32.totalorder %s428, %s429
    %p438 = scmp.eq.s32.totalorder %s35, 0
    %p439 = por %p437, %p438
    %p440 = scmp.ne.s32.totalorder %s428, %s429
    %p441 = scmp.eq.s32.totalorder %s36, 1
    %p442 = por %p440, %p441
    %p444 = scmp.ne.s32.totalorder %s429, %s443
    %p445 = scmp.eq.s32.totalorder %s36, 0
    %p446 = por %p444, %p445
    %s448 = sadd.s32 %s447, 1
    %p451 = scmp.eq.s32.totalorder %s30, 1
    %p452 = scmp.ne.s32.totalorder %s447, %s449
    %p453 = scmp.eq.s32.totalorder %s30, 0
    %p454 = por %p452, %p453
    %p455 = scmp.ne.s32.totalorder %s447, %s449
    %p456 = scmp.eq.s32.totalorder %s35, 1
    %p457 = por %p455, %p456
    %p458 = scmp.ne.s32.totalorder %s449, %s450
    %p459 = scmp.eq.s32.totalorder %s35, 0
    %p460 = por %p458, %p459
    %p461 = scmp.ne.s32.totalorder %s449, %s450
    %p462 = scmp.eq.s32.totalorder %s36, 1
    %p463 = por %p461, %p462
    %p465 = scmp.ne.s32.totalorder %s450, %s464
    %p466 = scmp.eq.s32.totalorder %s36, 0
    %p467 = por %p465, %p466
    %s469 = sadd.s32 %s468, 1
    %p472 = scmp.eq.s32.totalorder %s30, 1
    %p473 = scmp.ne.s32.totalorder %s468, %s470
    %p474 = scmp.eq.s32.totalorder %s30, 0
    %p475 = por %p473, %p474
    %p476 = scmp.ne.s32.totalorder %s468, %s470
    %p477 = scmp.eq.s32.totalorder %s35, 1
    %p478 = por %p476, %p477
    %p479 = scmp.ne.s32.totalorder %s470, %s471
    %p480 = scmp.eq.s32.totalorder %s35, 0
    %p481 = por %p479, %p480
    %p482 = scmp.ne.s32.totalorder %s470, %s471
    %p483 = scmp.eq.s32.totalorder %s36, 1
    %p484 = por %p482, %p483
    %p486 = scmp.ne.s32.totalorder %s471, %s485
    %p487 = scmp.eq.s32.totalorder %s36, 0
    %p488 = por %p486, %p487
    %s490 = sadd.s32 %s489, 1
    %p493 = scmp.eq.s32.totalorder %s30, 1
    %p494 = scmp.ne.s32.totalorder %s489, %s491
    %p495 = scmp.eq.s32.totalorder %s30, 0
    %p496 = por %p494, %p495
    %p497 = scmp.ne.s32.totalorder %s489, %s491
    %p498 = scmp.eq.s32.totalorder %s35, 1
    %p499 = por %p497, %p498
    %p500 = scmp.ne.s32.totalorder %s491, %s492
    %p501 = scmp.eq.s32.totalorder %s35, 0
    %p502 = por %p500, %p501
    %p503 = scmp.ne.s32.totalorder %s491, %s492
    %p504 = scmp.eq.s32.totalorder %s36, 1
    %p505 = por %p503, %p504
    %p507 = scmp.ne.s32.totalorder %s492, %s506
    %p508 = scmp.eq.s32.totalorder %s36, 0
    %p509 = por %p507, %p508
    %s511 = sadd.s32 %s510, 1
    %p514 = scmp.eq.s32.totalorder %s30, 1
    %p515 = scmp.ne.s32.totalorder %s510, %s512
    %p516 = scmp.eq.s32.totalorder %s30, 0
    %p517 = por %p515, %p516
    %p518 = scmp.ne.s32.totalorder %s510, %s512
    %p519 = scmp.eq.s32.totalorder %s35, 1
    %p520 = por %p518, %p519
    %p521 = scmp.ne.s32.totalorder %s512, %s513
    %p522 = scmp.eq.s32.totalorder %s35, 0
    %p523 = por %p521, %p522
    %p524 = scmp.ne.s32.totalorder %s512, %s513
    %p525 = scmp.eq.s32.totalorder %s36, 1
    %p526 = por %p524, %p525
    %p528 = scmp.ne.s32.totalorder %s513, %s527
    %p529 = scmp.eq.s32.totalorder %s36, 0
    %p530 = por %p528, %p529
    %s532 = sadd.s32 %s531, 1
    %p535 = scmp.eq.s32.totalorder %s30, 1
    %p536 = scmp.ne.s32.totalorder %s531, %s533
    %p537 = scmp.eq.s32.totalorder %s30, 0
    %p538 = por %p536, %p537
    %p539 = scmp.ne.s32.totalorder %s531, %s533
    %p540 = scmp.eq.s32.totalorder %s35, 1
    %p541 = por %p539, %p540
    %p542 = scmp.ne.s32.totalorder %s533, %s534
    %p543 = scmp.eq.s32.totalorder %s35, 0
    %p544 = por %p542, %p543
    %p545 = scmp.ne.s32.totalorder %s533, %s534
    %p546 = scmp.eq.s32.totalorder %s36, 1
    %p547 = por %p545, %p546
    %p549 = scmp.ne.s32.totalorder %s534, %s548
    %p550 = scmp.eq.s32.totalorder %s36, 0
    %p551 = por %p549, %p550
    %s552 = ssub.s32 %s30, %s37
    %p553 = scmp.eq.s32.totalorder %s552, 0
    %s555 = sadd.s32 %s554, 1
    %s556 = scalar_select %p553, %s554, %s555
    %p559 = pneg %p553
    %p560 = scmp.eq.s32.totalorder %s30, 1
    %p561 = por %p559, %p560
    %p562 = scmp.ne.s32.totalorder %s554, %s557
    %p563 = scmp.eq.s32.totalorder %s30, 0
    %p564 = por %p562, %p563
    %p565 = scmp.ne.s32.totalorder %s554, %s557
    %p566 = scmp.eq.s32.totalorder %s35, 1
    %p567 = por %p565, %p566
    %p568 = scmp.ne.s32.totalorder %s557, %s558
    %p569 = scmp.eq.s32.totalorder %s35, 0
    %p570 = por %p568, %p569
    %p571 = scmp.ne.s32.totalorder %s557, %s558
    %p572 = scmp.eq.s32.totalorder %s36, 1
    %p573 = por %p571, %p572
    %p575 = scmp.ne.s32.totalorder %s558, %s574
    %p576 = scmp.eq.s32.totalorder %s36, 0
    %p577 = por %p575, %p576
    %p578 = scmp.le.s32.totalorder 1, %s30
    %p579 = scmp.lt.s32.totalorder %s30, 3
    %p580 = pnand %p578, %p579
    %p581 = pneg %p580
    // Predicated region
    $region9: #{stlt_forward.1} parent=5 // pred_check
      _
    $region10: #{stlt_forward.1} parent=5 // pred_check_branch
      %583 = sbr.rel (%p580) target = $region12
    $region11: #{stlt_forward.1} parent=5 // pred_region
      %s584 = ssub.s32 %s30, 1
      // Predicated region
      $region13: #{stlt_forward.1} parent=11 // pred_check
        %p585 = pneg %p103
      $region14: #{stlt_forward.1} parent=11 // pred_check_branch
        %587 = sbr.rel (%p585) target = $region16
      $region15: #{stlt_forward.1} parent=11 // pred_region
        _
      $region16: #{stlt_forward.1} parent=11 // pred_fallthru
        _
      // Predicated region
      $region17: #{stlt_forward.1} parent=11 // pred_check
        %p588 = pneg %p124
      $region18: #{stlt_forward.1} parent=11 // pred_check_branch
        %590 = sbr.rel (%p588) target = $region20
      $region19: #{stlt_forward.1} parent=11 // pred_region
        _
      $region20: #{stlt_forward.1} parent=11 // pred_fallthru
        _
      // Predicated region
      $region21: #{stlt_forward.1} parent=11 // pred_check
        %p591 = pneg %p145
      $region22: #{stlt_forward.1} parent=11 // pred_check_branch
        %593 = sbr.rel (%p591) target = $region24
      $region23: #{stlt_forward.1} parent=11 // pred_region
        _
      $region24: #{stlt_forward.1} parent=11 // pred_fallthru
        _
      // Predicated region
      $region25: #{stlt_forward.1} parent=11 // pred_check
        %p594 = pneg %p166
      $region26: #{stlt_forward.1} parent=11 // pred_check_branch
        %596 = sbr.rel (%p594) target = $region28
      $region27: #{stlt_forward.1} parent=11 // pred_region
        _
      $region28: #{stlt_forward.1} parent=11 // pred_fallthru
        _
      // Predicated region
      $region29: #{stlt_forward.1} parent=11 // pred_check
        %p597 = pneg %p187
      $region30: #{stlt_forward.1} parent=11 // pred_check_branch
        %599 = sbr.rel (%p597) target = $region32
      $region31: #{stlt_forward.1} parent=11 // pred_region
        _
      $region32: #{stlt_forward.1} parent=11 // pred_fallthru
        _
      // Predicated region
      $region33: #{stlt_forward.1} parent=11 // pred_check
        %p600 = pneg %p208
      $region34: #{stlt_forward.1} parent=11 // pred_check_branch
        %602 = sbr.rel (%p600) target = $region36
      $region35: #{stlt_forward.1} parent=11 // pred_region
        _
      $region36: #{stlt_forward.1} parent=11 // pred_fallthru
        _
      // Predicated region
      $region37: #{stlt_forward.1} parent=11 // pred_check
        %p603 = pneg %p229
      $region38: #{stlt_forward.1} parent=11 // pred_check_branch
        %605 = sbr.rel (%p603) target = $region40
      $region39: #{stlt_forward.1} parent=11 // pred_region
        _
      $region40: #{stlt_forward.1} parent=11 // pred_fallthru
        _
      // Predicated region
      $region41: #{stlt_forward.1} parent=11 // pred_check
        %p606 = pneg %p250
      $region42: #{stlt_forward.1} parent=11 // pred_check_branch
        %608 = sbr.rel (%p606) target = $region44
      $region43: #{stlt_forward.1} parent=11 // pred_region
        _
      $region44: #{stlt_forward.1} parent=11 // pred_fallthru
        _
      // Predicated region
      $region45: #{stlt_forward.1} parent=11 // pred_check
        %p609 = pneg %p271
      $region46: #{stlt_forward.1} parent=11 // pred_check_branch
        %611 = sbr.rel (%p609) target = $region48
      $region47: #{stlt_forward.1} parent=11 // pred_region
        _
      $region48: #{stlt_forward.1} parent=11 // pred_fallthru
        _
      // Predicated region
      $region49: #{stlt_forward.1} parent=11 // pred_check
        %p612 = pneg %p292
      $region50: #{stlt_forward.1} parent=11 // pred_check_branch
        %614 = sbr.rel (%p612) target = $region52
      $region51: #{stlt_forward.1} parent=11 // pred_region
        _
      $region52: #{stlt_forward.1} parent=11 // pred_fallthru
        _
      // Predicated region
      $region53: #{stlt_forward.1} parent=11 // pred_check
        %p615 = pneg %p313
      $region54: #{stlt_forward.1} parent=11 // pred_check_branch
        %617 = sbr.rel (%p615) target = $region56
      $region55: #{stlt_forward.1} parent=11 // pred_region
        _
      $region56: #{stlt_forward.1} parent=11 // pred_fallthru
        _
      // Predicated region
      $region57: #{stlt_forward.1} parent=11 // pred_check
        %p618 = pneg %p334
      $region58: #{stlt_forward.1} parent=11 // pred_check_branch
        %620 = sbr.rel (%p618) target = $region60
      $region59: #{stlt_forward.1} parent=11 // pred_region
        _
      $region60: #{stlt_forward.1} parent=11 // pred_fallthru
        _
      // Predicated region
      $region61: #{stlt_forward.1} parent=11 // pred_check
        %p621 = pneg %p355
      $region62: #{stlt_forward.1} parent=11 // pred_check_branch
        %623 = sbr.rel (%p621) target = $region64
      $region63: #{stlt_forward.1} parent=11 // pred_region
        _
      $region64: #{stlt_forward.1} parent=11 // pred_fallthru
        _
      // Predicated region
      $region65: #{stlt_forward.1} parent=11 // pred_check
        %p624 = pneg %p376
      $region66: #{stlt_forward.1} parent=11 // pred_check_branch
        %626 = sbr.rel (%p624) target = $region68
      $region67: #{stlt_forward.1} parent=11 // pred_region
        _
      $region68: #{stlt_forward.1} parent=11 // pred_fallthru
        _
      // Predicated region
      $region69: #{stlt_forward.1} parent=11 // pred_check
        %p627 = pneg %p397
      $region70: #{stlt_forward.1} parent=11 // pred_check_branch
        %629 = sbr.rel (%p627) target = $region72
      $region71: #{stlt_forward.1} parent=11 // pred_region
        _
      $region72: #{stlt_forward.1} parent=11 // pred_fallthru
        _
      // Predicated region
      $region73: #{stlt_forward.1} parent=11 // pred_check
        %p630 = pneg %p418
      $region74: #{stlt_forward.1} parent=11 // pred_check_branch
        %632 = sbr.rel (%p630) target = $region76
      $region75: #{stlt_forward.1} parent=11 // pred_region
        _
      $region76: #{stlt_forward.1} parent=11 // pred_fallthru
        _
      // Predicated region
      $region77: #{stlt_forward.1} parent=11 // pred_check
        %p633 = pneg %p439
      $region78: #{stlt_forward.1} parent=11 // pred_check_branch
        %635 = sbr.rel (%p633) target = $region80
      $region79: #{stlt_forward.1} parent=11 // pred_region
        _
      $region80: #{stlt_forward.1} parent=11 // pred_fallthru
        _
      // Predicated region
      $region81: #{stlt_forward.1} parent=11 // pred_check
        %p636 = pneg %p460
      $region82: #{stlt_forward.1} parent=11 // pred_check_branch
        %638 = sbr.rel (%p636) target = $region84
      $region83: #{stlt_forward.1} parent=11 // pred_region
        _
      $region84: #{stlt_forward.1} parent=11 // pred_fallthru
        _
      // Predicated region
      $region85: #{stlt_forward.1} parent=11 // pred_check
        %p639 = pneg %p481
      $region86: #{stlt_forward.1} parent=11 // pred_check_branch
        %641 = sbr.rel (%p639) target = $region88
      $region87: #{stlt_forward.1} parent=11 // pred_region
        _
      $region88: #{stlt_forward.1} parent=11 // pred_fallthru
        _
      // Predicated region
      $region89: #{stlt_forward.1} parent=11 // pred_check
        %p642 = pneg %p502
      $region90: #{stlt_forward.1} parent=11 // pred_check_branch
        %644 = sbr.rel (%p642) target = $region92
      $region91: #{stlt_forward.1} parent=11 // pred_region
        _
      $region92: #{stlt_forward.1} parent=11 // pred_fallthru
        _
      // Predicated region
      $region93: #{stlt_forward.1} parent=11 // pred_check
        %p645 = pneg %p523
      $region94: #{stlt_forward.1} parent=11 // pred_check_branch
        %647 = sbr.rel (%p645) target = $region96
      $region95: #{stlt_forward.1} parent=11 // pred_region
        _
      $region96: #{stlt_forward.1} parent=11 // pred_fallthru
        _
      // Predicated region
      $region97: #{stlt_forward.1} parent=11 // pred_check
        %p648 = pneg %p544
      $region98: #{stlt_forward.1} parent=11 // pred_check_branch
        %650 = sbr.rel (%p648) target = $region100
      $region99: #{stlt_forward.1} parent=11 // pred_region
        _
      $region100: #{stlt_forward.1} parent=11 // pred_fallthru
        _
    $region12: #{stlt_forward.1} parent=5 // pred_fallthru
      _
    %p651 = scmp.lt.s32.totalorder %s30, 2
    // Predicated region
    $region101: #{stlt_forward.1} parent=5 // pred_check
      %p652 = pneg %p651
    $region102: #{stlt_forward.1} parent=5 // pred_check_branch
      %654 = sbr.rel (%p652) target = $region104
    $region103: #{stlt_forward.1} parent=5 // pred_region
      // Predicated region
      $region105: #{stlt_forward.1} parent=103 // pred_check
        %p655 = pneg %p50
      $region106: #{stlt_forward.1} parent=103 // pred_check_branch
        %657 = sbr.rel (%p655) target = $region108
      $region107: #{stlt_forward.1} parent=103 // pred_region
        %s658 = smul.u32 16, %s30
        %p659 = scmp.lt.s32.totalorder %s658, 31
        %s660 = scalar_select %p659, %s658, 31
        %s661 = smul.addr %s660, 8
        %s662 = scalar_lea.vmem %s0, %s661
        %s663 = smul.u32 16, %s30
      $region108: #{stlt_forward.1} parent=103 // pred_fallthru
        _
      // Predicated region
      $region109: #{stlt_forward.1} parent=103 // pred_check
        %p664 = pneg %p76
      $region110: #{stlt_forward.1} parent=103 // pred_check_branch
        %666 = sbr.rel (%p664) target = $region112
      $region111: #{stlt_forward.1} parent=103 // pred_region
        %s667 = smul.u32 16, %s30
        %p668 = scmp.lt.s32.totalorder %s667, 31
        %s669 = scalar_select %p668, %s667, 31
        %s670 = smul.addr %s669, 8
        %s671 = scalar_lea.vmem %s1, %s670
        %s672 = smul.u32 16, %s30
      $region112: #{stlt_forward.1} parent=103 // pred_fallthru
        _
    $region104: #{stlt_forward.1} parent=5 // pred_fallthru
      _
    %p673 = scmp.le.s32.totalorder 1, %s30
    %p674 = scmp.lt.s32.totalorder %s30, 3
    %p675 = pnand %p673, %p674
    %p676 = pneg %p675
    // Predicated region
    $region113: #{stlt_forward.1} parent=5 // pred_check
      _
    $region114: #{stlt_forward.1} parent=5 // pred_check_branch
      %678 = sbr.rel (%p675) target = $region116
    $region115: #{stlt_forward.1} parent=5 // pred_region
      %s679 = ssub.s32 %s30, 1
      %s680 = smul.u32 16, %s35
      %p681 = scmp.lt.s32.totalorder %s680, 31
      %s682 = scalar_select %p681, %s680, 31
      %s683 = smul.addr %s682, 8
      %s684 = scalar_lea.vmem %s0, %s683
      %p685 = pneg %p56
      %p686 = pneg %p53
      %s687 = smul.u32 16, %s35
      %p688 = scmp.lt.s32.totalorder %s687, 31
      %s689 = scalar_select %p688, %s687, 31
      %s690 = smul.addr %s689, 8
      %s691 = scalar_lea.vmem %s1, %s690
      %p692 = pneg %p82
      %p693 = pneg %p79
      %p694 = pneg %p103
      %p695 = pneg %p100
      %p696 = pneg %p124
      %p697 = pneg %p121
      %p698 = pneg %p145
      %p699 = pneg %p142
      %p700 = pneg %p166
      %p701 = pneg %p163
      %p702 = pneg %p187
      %p703 = pneg %p184
      %p704 = pneg %p208
      %p705 = pneg %p205
      %p706 = pneg %p229
      %p707 = pneg %p226
      %p708 = pneg %p250
      %p709 = pneg %p247
      %p710 = pneg %p271
      %p711 = pneg %p268
      %p712 = pneg %p292
      %p713 = pneg %p289
      %p714 = pneg %p313
      %p715 = pneg %p310
      %p716 = pneg %p334
      %p717 = pneg %p331
      %p718 = pneg %p355
      %p719 = pneg %p352
      %p720 = pneg %p376
      %p721 = pneg %p373
      %p722 = pneg %p397
      %p723 = pneg %p394
      %p724 = pneg %p418
      %p725 = pneg %p415
      %p726 = pneg %p439
      %p727 = pneg %p436
      %p728 = pneg %p460
      %p729 = pneg %p457
      %p730 = pneg %p481
      %p731 = pneg %p478
      %p732 = pneg %p502
      %p733 = pneg %p499
      %p734 = pneg %p523
      %p735 = pneg %p520
      %p736 = pneg %p544
      %p737 = pneg %p541
      %p738 = pneg %p570
      %p739 = pneg %p567
      %p740 = scmp.lt.s32.totalorder %s35, 1
      %s741 = scalar_select %p740, %s35, 1
      %s742 = smul.addr %s741, 8
      %s743 = scalar_lea.vmem %s24, %s742
      %s744 = smul.u32 16, %s35
      %p745 = scmp.lt.s32.totalorder %s744, 31
      %s746 = scalar_select %p745, %s744, 31
      %s747 = smul.addr %s746, 8
      %s748 = scalar_lea.vmem %s0, %s747
      %s749 = smul.u32 16, %s35
      %s750 = smul.u32 16, %s35
      %p751 = scmp.lt.s32.totalorder %s750, 31
      %s752 = scalar_select %p751, %s750, 31
      %s753 = smul.addr %s752, 8
      %s754 = scalar_lea.vmem %s1, %s753
      %s755 = smul.u32 16, %s35
      %p756 = scmp.lt.s32.totalorder %s35, 1
      %s757 = scalar_select %p756, %s35, 1
      %s758 = smul.addr %s757, 8
      %s759 = scalar_lea.vmem %s24, %s758
      %v760 = vld [vmem:[%s748] sm:$0xff]
      %v761 = vld [vmem:[%s748 + $0x8] sm:$0xff]
      %v762 = vld [vmem:[%s748 + $0x10] sm:$0xff]
      %v763 = vld [vmem:[%s748 + $0x18] sm:$0xff]
      %v764 = vld [vmem:[%s748 + $0x20] sm:$0xff]
      %v765 = vld [vmem:[%s748 + $0x28] sm:$0xff]
      %v766 = vld [vmem:[%s748 + $0x30] sm:$0xff]
      %v767 = vld [vmem:[%s748 + $0x38] sm:$0xff]
      %v768 = vld [vmem:[%s748 + $0x40] sm:$0xff]
      %v769 = vld [vmem:[%s748 + $0x48] sm:$0xff]
      %v770 = vld [vmem:[%s748 + $0x50] sm:$0xff]
      %v771 = vld [vmem:[%s748 + $0x58] sm:$0xff]
      %v772 = vld [vmem:[%s748 + $0x60] sm:$0xff]
      %v773 = vld [vmem:[%s748 + $0x68] sm:$0xff]
      %v774 = vld [vmem:[%s748 + $0x70] sm:$0xff]
      %v775 = vld [vmem:[%s748 + $0x78] sm:$0xff]
      %v776 = vld [vmem:[%s754] sm:$0xff]
      %v777 = vld [vmem:[%s754 + $0x8] sm:$0xff]
      %v778 = vld [vmem:[%s754 + $0x10] sm:$0xff]
      %v779 = vld [vmem:[%s754 + $0x18] sm:$0xff]
      %v780 = vld [vmem:[%s754 + $0x20] sm:$0xff]
      %v781 = vld [vmem:[%s754 + $0x28] sm:$0xff]
      %v782 = vld [vmem:[%s754 + $0x30] sm:$0xff]
      %v783 = vld [vmem:[%s754 + $0x38] sm:$0xff]
      %v784 = vld [vmem:[%s754 + $0x40] sm:$0xff]
      %v785 = vld [vmem:[%s754 + $0x48] sm:$0xff]
      %v786 = vld [vmem:[%s754 + $0x50] sm:$0xff]
      %v787 = vld [vmem:[%s754 + $0x58] sm:$0xff]
      %v788 = vld [vmem:[%s754 + $0x60] sm:$0xff]
      %v789 = vld [vmem:[%s754 + $0x68] sm:$0xff]
      %v790 = vld [vmem:[%s754 + $0x70] sm:$0xff]
      %v791 = vld [vmem:[%s754 + $0x78] sm:$0xff]
      %v792 = vld [vmem:[%s13] sm:$0xff]
      %v793 = vld [vmem:[%s12] sm:$0xf]
      %v794 = vperm.slane %v792, 0
      %vm795 = vcmask 31744
      %v797 = vsel %vm795, %v760, 0
      %v800 = vsel %vm795, %v761, 0
      %v803 = vsel %vm795, %v762, 0
      %v806 = vsel %vm795, %v763, 0
      %v809 = vsel %vm795, %v764, 0
      %v812 = vsel %vm795, %v765, 0
      %v815 = vsel %vm795, %v766, 0
      %v818 = vsel %vm795, %v767, 0
      %v821 = vsel %vm795, %v768, 0
      %v824 = vsel %vm795, %v769, 0
      %v827 = vsel %vm795, %v770, 0
      %v830 = vsel %vm795, %v771, 0
      %v833 = vsel %vm795, %v772, 0
      %v836 = vsel %vm795, %v773, 0
      %v839 = vsel %vm795, %v774, 0
      %v842 = vsel %vm795, %v775, 0
      %vm844 = vcmask 1043456
      %v846 = vsel %vm844, %v793, 0
      %848 = vmatpush.msra.mxu0 0.0
      %849 = vmatpush.msra.mxu0 0.0
      %850 = vmatpush.msra.mxu0 0.0
      %851 = vmatpush.msra.mxu0 0.0
      %852 = vmatpush.msra.mxu0 0.0
      %853 = vmatpush.msra.mxu0 0.0
      %854 = vmatpush.msra.mxu0 0.0
      %855 = vmatpush.msra.mxu0 0.0
      %856 = vmatpush.msra.mxu0 0.0
      %857 = vmatpush.msra.mxu0 0.0
      %858 = vmatpush.msra.mxu0 0.0
      %859 = vmatpush.msra.mxu0 0.0
      %860 = vmatpush.msra.mxu0 0.0
      %861 = vmatpush.msra.mxu0 0.0
      %862 = vmatpush.msra.mxu0 0.0
      %863 = vmatpush.msra.mxu0 %v846
      %864 = vmatmul.f32.gmra.mxu0 %v797
      %v865 = vpop.f32.mrf.mxu0
      %v866 = vadd.f32 %v794, %v865
      %867 = vmatmul.f32.gmra.mxu0 %v800
      %v868 = vpop.f32.mrf.mxu0
      %v869 = vadd.f32 %v794, %v868
      %870 = vmatmul.f32.gmra.mxu0 %v803
      %v871 = vpop.f32.mrf.mxu0
      %v872 = vadd.f32 %v794, %v871
      %873 = vmatmul.f32.gmra.mxu0 %v806
      %v874 = vpop.f32.mrf.mxu0
      %v875 = vadd.f32 %v794, %v874
      %876 = vmatmul.f32.gmra.mxu0 %v809
      %v877 = vpop.f32.mrf.mxu0
      %v878 = vadd.f32 %v794, %v877
      %879 = vmatmul.f32.gmra.mxu0 %v812
      %v880 = vpop.f32.mrf.mxu0
      %v881 = vadd.f32 %v794, %v880
      %882 = vmatmul.f32.gmra.mxu0 %v815
      %v883 = vpop.f32.mrf.mxu0
      %v884 = vadd.f32 %v794, %v883
      %885 = vmatmul.f32.gmra.mxu0 %v818
      %v886 = vpop.f32.mrf.mxu0
      %v887 = vadd.f32 %v794, %v886
      %888 = vmatmul.f32.gmra.mxu0 %v821
      %v889 = vpop.f32.mrf.mxu0
      %v890 = vadd.f32 %v794, %v889
      %891 = vmatmul.f32.gmra.mxu0 %v824
      %v892 = vpop.f32.mrf.mxu0
      %v893 = vadd.f32 %v794, %v892
      %894 = vmatmul.f32.gmra.mxu0 %v827
      %v895 = vpop.f32.mrf.mxu0
      %v896 = vadd.f32 %v794, %v895
      %897 = vmatmul.f32.gmra.mxu0 %v830
      %v898 = vpop.f32.mrf.mxu0
      %v899 = vadd.f32 %v794, %v898
      %900 = vmatmul.f32.gmra.mxu0 %v833
      %v901 = vpop.f32.mrf.mxu0
      %v902 = vadd.f32 %v794, %v901
      %903 = vmatmul.f32.gmra.mxu0 %v836
      %v904 = vpop.f32.mrf.mxu0
      %v905 = vadd.f32 %v794, %v904
      %906 = vmatmul.f32.gmra.mxu0 %v839
      %v907 = vpop.f32.mrf.mxu0
      %v908 = vadd.f32 %v794, %v907
      %909 = vmatmul.f32.gmra.mxu0 %v842
      %v910 = vpop.f32.mrf.mxu0
      %v911 = vadd.f32 %v794, %v910
      %912 = vdwg.mxu0
      %vm913 = vcmask 261120
      %v914 = vsel %vm913, %v866, 0.0
      %915 = vadd.xlane.f32.xlu0 %v914
      %v916 = vpop.xlane.xlu0 %915
      %v917 = vsel %vm913, %v869, 0.0
      %918 = vadd.xlane.f32.xlu0 %v917
      %v919 = vpop.xlane.xlu0 %918
      %v920 = vsel %vm913, %v872, 0.0
      %921 = vadd.xlane.f32.xlu0 %v920
      %v922 = vpop.xlane.xlu0 %921
      %v923 = vsel %vm913, %v875, 0.0
      %924 = vadd.xlane.f32.xlu0 %v923
      %v925 = vpop.xlane.xlu0 %924
      %v926 = vsel %vm913, %v878, 0.0
      %927 = vadd.xlane.f32.xlu0 %v926
      %v928 = vpop.xlane.xlu0 %927
      %v929 = vsel %vm913, %v881, 0.0
      %930 = vadd.xlane.f32.xlu0 %v929
      %v931 = vpop.xlane.xlu0 %930
      %v932 = vsel %vm913, %v884, 0.0
      %933 = vadd.xlane.f32.xlu0 %v932
      %v934 = vpop.xlane.xlu0 %933
      %v935 = vsel %vm913, %v887, 0.0
      %936 = vadd.xlane.f32.xlu0 %v935
      %v937 = vpop.xlane.xlu0 %936
      %v938 = vsel %vm913, %v890, 0.0
      %939 = vadd.xlane.f32.xlu0 %v938
      %v940 = vpop.xlane.xlu0 %939
      %v941 = vsel %vm913, %v893, 0.0
      %942 = vadd.xlane.f32.xlu0 %v941
      %v943 = vpop.xlane.xlu0 %942
      %v944 = vsel %vm913, %v896, 0.0
      %945 = vadd.xlane.f32.xlu0 %v944
      %v946 = vpop.xlane.xlu0 %945
      %v947 = vsel %vm913, %v899, 0.0
      %948 = vadd.xlane.f32.xlu0 %v947
      %v949 = vpop.xlane.xlu0 %948
      %v950 = vsel %vm913, %v902, 0.0
      %951 = vadd.xlane.f32.xlu0 %v950
      %v952 = vpop.xlane.xlu0 %951
      %v953 = vsel %vm913, %v905, 0.0
      %954 = vadd.xlane.f32.xlu0 %v953
      %v955 = vpop.xlane.xlu0 %954
      %v956 = vsel %vm913, %v908, 0.0
      %957 = vadd.xlane.f32.xlu0 %v956
      %v958 = vpop.xlane.xlu0 %957
      %v959 = vsel %vm913, %v911, 0.0
      %960 = vadd.xlane.f32.xlu0 %v959
      %v961 = vpop.xlane.xlu0 %960
      %v962 = vrcp.pop 32.0
      %v963 = vmul.f32 32.0, %v962
      %v964 = vsub.f32 1.0, %v963
      %v965 = vmul.f32 %v962, %v964
      %v966 = vadd.f32 %v962, %v965
      %vm967 = vweird.f32 %v962
      %v968 = vsel %vm967, %v962, %v966
      %v969 = vmul.f32 %v916, %v968
      %v970 = vmul.f32 %v919, %v968
      %v971 = vmul.f32 %v922, %v968
      %v972 = vmul.f32 %v925, %v968
      %v973 = vmul.f32 %v928, %v968
      %v974 = vmul.f32 %v931, %v968
      %v975 = vmul.f32 %v934, %v968
      %v976 = vmul.f32 %v937, %v968
      %v977 = vmul.f32 %v940, %v968
      %v978 = vmul.f32 %v943, %v968
      %v979 = vmul.f32 %v946, %v968
      %v980 = vmul.f32 %v949, %v968
      %v981 = vmul.f32 %v952, %v968
      %v982 = vmul.f32 %v955, %v968
      %v983 = vmul.f32 %v958, %v968
      %v984 = vmul.f32 %v961, %v968
      %v985 = vsub.f32 %v866, %v969
      %v986 = vsub.f32 %v869, %v970
      %v987 = vsub.f32 %v872, %v971
      %v988 = vsub.f32 %v875, %v972
      %v989 = vsub.f32 %v878, %v973
      %v990 = vsub.f32 %v881, %v974
      %v991 = vsub.f32 %v884, %v975
      %v992 = vsub.f32 %v887, %v976
      %v993 = vsub.f32 %v890, %v977
      %v994 = vsub.f32 %v893, %v978
      %v995 = vsub.f32 %v896, %v979
      %v996 = vsub.f32 %v899, %v980
      %v997 = vsub.f32 %v902, %v981
      %v998 = vsub.f32 %v905, %v982
      %v999 = vsub.f32 %v908, %v983
      %v1000 = vsub.f32 %v911, %v984
      %v1001 = vmul.f32 %v985, %v985
      %v1002 = vmul.f32 %v986, %v986
      %v1003 = vmul.f32 %v987, %v987
      %v1004 = vmul.f32 %v988, %v988
      %v1005 = vmul.f32 %v989, %v989
      %v1006 = vmul.f32 %v990, %v990
      %v1007 = vmul.f32 %v991, %v991
      %v1008 = vmul.f32 %v992, %v992
      %v1009 = vmul.f32 %v993, %v993
      %v1010 = vmul.f32 %v994, %v994
      %v1011 = vmul.f32 %v995, %v995
      %v1012 = vmul.f32 %v996, %v996
      %v1013 = vmul.f32 %v997, %v997
      %v1014 = vmul.f32 %v998, %v998
      %v1015 = vmul.f32 %v999, %v999
      %v1016 = vmul.f32 %v1000, %v1000
      %v1017 = vsel %vm913, %v1001, 0.0
      %1018 = vadd.xlane.f32.xlu0 %v1017
      %v1019 = vpop.xlane.xlu0 %1018
      %v1020 = vsel %vm913, %v1002, 0.0
      %1021 = vadd.xlane.f32.xlu0 %v1020
      %v1022 = vpop.xlane.xlu0 %1021
      %v1023 = vsel %vm913, %v1003, 0.0
      %1024 = vadd.xlane.f32.xlu0 %v1023
      %v1025 = vpop.xlane.xlu0 %1024
      %v1026 = vsel %vm913, %v1004, 0.0
      %1027 = vadd.xlane.f32.xlu0 %v1026
      %v1028 = vpop.xlane.xlu0 %1027
      %v1029 = vsel %vm913, %v1005, 0.0
      %1030 = vadd.xlane.f32.xlu0 %v1029
      %v1031 = vpop.xlane.xlu0 %1030
      %v1032 = vsel %vm913, %v1006, 0.0
      %1033 = vadd.xlane.f32.xlu0 %v1032
      %v1034 = vpop.xlane.xlu0 %1033
      %v1035 = vsel %vm913, %v1007, 0.0
      %1036 = vadd.xlane.f32.xlu0 %v1035
      %v1037 = vpop.xlane.xlu0 %1036
      %v1038 = vsel %vm913, %v1008, 0.0
      %1039 = vadd.xlane.f32.xlu0 %v1038
      %v1040 = vpop.xlane.xlu0 %1039
      %v1041 = vsel %vm913, %v1009, 0.0
      %1042 = vadd.xlane.f32.xlu0 %v1041
      %v1043 = vpop.xlane.xlu0 %1042
      %v1044 = vsel %vm913, %v1010, 0.0
      %1045 = vadd.xlane.f32.xlu0 %v1044
      %v1046 = vpop.xlane.xlu0 %1045
      %v1047 = vsel %vm913, %v1011, 0.0
      %1048 = vadd.xlane.f32.xlu0 %v1047
      %v1049 = vpop.xlane.xlu0 %1048
      %v1050 = vsel %vm913, %v1012, 0.0
      %1051 = vadd.xlane.f32.xlu0 %v1050
      %v1052 = vpop.xlane.xlu0 %1051
      %v1053 = vsel %vm913, %v1013, 0.0
      %1054 = vadd.xlane.f32.xlu0 %v1053
      %v1055 = vpop.xlane.xlu0 %1054
      %v1056 = vsel %vm913, %v1014, 0.0
      %1057 = vadd.xlane.f32.xlu0 %v1056
      %v1058 = vpop.xlane.xlu0 %1057
      %v1059 = vsel %vm913, %v1015, 0.0
      %1060 = vadd.xlane.f32.xlu0 %v1059
      %v1061 = vpop.xlane.xlu0 %1060
      %v1062 = vsel %vm913, %v1016, 0.0
      %1063 = vadd.xlane.f32.xlu0 %v1062
      %v1064 = vpop.xlane.xlu0 %1063
      %v1065 = vmul.f32 %v1019, %v968
      %v1066 = vmul.f32 %v1022, %v968
      %v1067 = vmul.f32 %v1025, %v968
      %v1068 = vmul.f32 %v1028, %v968
      %v1069 = vmul.f32 %v1031, %v968
      %v1070 = vmul.f32 %v1034, %v968
      %v1071 = vmul.f32 %v1037, %v968
      %v1072 = vmul.f32 %v1040, %v968
      %v1073 = vmul.f32 %v1043, %v968
      %v1074 = vmul.f32 %v1046, %v968
      %v1075 = vmul.f32 %v1049, %v968
      %v1076 = vmul.f32 %v1052, %v968
      %v1077 = vmul.f32 %v1055, %v968
      %v1078 = vmul.f32 %v1058, %v968
      %v1079 = vmul.f32 %v1061, %v968
      %v1080 = vmul.f32 %v1064, %v968
      %v1081 = vadd.f32 %v1065, 1e-12
      %v1082 = vadd.f32 %v1066, 1e-12
      %v1083 = vadd.f32 %v1067, 1e-12
      %v1084 = vadd.f32 %v1068, 1e-12
      %v1085 = vadd.f32 %v1069, 1e-12
      %v1086 = vadd.f32 %v1070, 1e-12
      %v1087 = vadd.f32 %v1071, 1e-12
      %v1088 = vadd.f32 %v1072, 1e-12
      %v1089 = vadd.f32 %v1073, 1e-12
      %v1090 = vadd.f32 %v1074, 1e-12
      %v1091 = vadd.f32 %v1075, 1e-12
      %v1092 = vadd.f32 %v1076, 1e-12
      %v1093 = vadd.f32 %v1077, 1e-12
      %v1094 = vadd.f32 %v1078, 1e-12
      %v1095 = vadd.f32 %v1079, 1e-12
      %v1096 = vadd.f32 %v1080, 1e-12
      %v1097 = vrsqrt.pop %v1081
      %v1098 = vmul.f32 %v1097, %v1081
      %v1099 = vmul.f32 %v1098, %v1097
      %v1100 = vmul.f32 0.5, %v1099
      %v1101 = vsub.f32 1.5, %v1100
      %v1102 = vmul.f32 %v1097, %v1101
      %vm1103 = vweird.f32 %v1081
      %vm1104 = vweird.f32 %v1097
      %vm1105 = vmor %vm1103, %vm1104
      %v1106 = vsel %vm1105, %v1097, %v1102
      %v1107 = vrsqrt.pop %v1082
      %v1108 = vmul.f32 %v1107, %v1082
      %v1109 = vmul.f32 %v1108, %v1107
      %v1110 = vmul.f32 0.5, %v1109
      %v1111 = vsub.f32 1.5, %v1110
      %v1112 = vmul.f32 %v1107, %v1111
      %vm1113 = vweird.f32 %v1082
      %vm1114 = vweird.f32 %v1107
      %vm1115 = vmor %vm1113, %vm1114
      %v1116 = vsel %vm1115, %v1107, %v1112
      %v1117 = vrsqrt.pop %v1083
      %v1118 = vmul.f32 %v1117, %v1083
      %v1119 = vmul.f32 %v1118, %v1117
      %v1120 = vmul.f32 0.5, %v1119
      %v1121 = vsub.f32 1.5, %v1120
      %v1122 = vmul.f32 %v1117, %v1121
      %vm1123 = vweird.f32 %v1083
      %vm1124 = vweird.f32 %v1117
      %vm1125 = vmor %vm1123, %vm1124
      %v1126 = vsel %vm1125, %v1117, %v1122
      %v1127 = vrsqrt.pop %v1084
      %v1128 = vmul.f32 %v1127, %v1084
      %v1129 = vmul.f32 %v1128, %v1127
      %v1130 = vmul.f32 0.5, %v1129
      %v1131 = vsub.f32 1.5, %v1130
      %v1132 = vmul.f32 %v1127, %v1131
      %vm1133 = vweird.f32 %v1084
      %vm1134 = vweird.f32 %v1127
      %vm1135 = vmor %vm1133, %vm1134
      %v1136 = vsel %vm1135, %v1127, %v1132
      %v1137 = vrsqrt.pop %v1085
      %v1138 = vmul.f32 %v1137, %v1085
      %v1139 = vmul.f32 %v1138, %v1137
      %v1140 = vmul.f32 0.5, %v1139
      %v1141 = vsub.f32 1.5, %v1140
      %v1142 = vmul.f32 %v1137, %v1141
      %vm1143 = vweird.f32 %v1085
      %vm1144 = vweird.f32 %v1137
      %vm1145 = vmor %vm1143, %vm1144
      %v1146 = vsel %vm1145, %v1137, %v1142
      %v1147 = vrsqrt.pop %v1086
      %v1148 = vmul.f32 %v1147, %v1086
      %v1149 = vmul.f32 %v1148, %v1147
      %v1150 = vmul.f32 0.5, %v1149
      %v1151 = vsub.f32 1.5, %v1150
      %v1152 = vmul.f32 %v1147, %v1151
      %vm1153 = vweird.f32 %v1086
      %vm1154 = vweird.f32 %v1147
      %vm1155 = vmor %vm1153, %vm1154
      %v1156 = vsel %vm1155, %v1147, %v1152
      %v1157 = vrsqrt.pop %v1087
      %v1158 = vmul.f32 %v1157, %v1087
      %v1159 = vmul.f32 %v1158, %v1157
      %v1160 = vmul.f32 0.5, %v1159
      %v1161 = vsub.f32 1.5, %v1160
      %v1162 = vmul.f32 %v1157, %v1161
      %vm1163 = vweird.f32 %v1087
      %vm1164 = vweird.f32 %v1157
      %vm1165 = vmor %vm1163, %vm1164
      %v1166 = vsel %vm1165, %v1157, %v1162
      %v1167 = vrsqrt.pop %v1088
      %v1168 = vmul.f32 %v1167, %v1088
      %v1169 = vmul.f32 %v1168, %v1167
      %v1170 = vmul.f32 0.5, %v1169
      %v1171 = vsub.f32 1.5, %v1170
      %v1172 = vmul.f32 %v1167, %v1171
      %vm1173 = vweird.f32 %v1088
      %vm1174 = vweird.f32 %v1167
      %vm1175 = vmor %vm1173, %vm1174
      %v1176 = vsel %vm1175, %v1167, %v1172
      %v1177 = vrsqrt.pop %v1089
      %v1178 = vmul.f32 %v1177, %v1089
      %v1179 = vmul.f32 %v1178, %v1177
      %v1180 = vmul.f32 0.5, %v1179
      %v1181 = vsub.f32 1.5, %v1180
      %v1182 = vmul.f32 %v1177, %v1181
      %vm1183 = vweird.f32 %v1089
      %vm1184 = vweird.f32 %v1177
      %vm1185 = vmor %vm1183, %vm1184
      %v1186 = vsel %vm1185, %v1177, %v1182
      %v1187 = vrsqrt.pop %v1090
      %v1188 = vmul.f32 %v1187, %v1090
      %v1189 = vmul.f32 %v1188, %v1187
      %v1190 = vmul.f32 0.5, %v1189
      %v1191 = vsub.f32 1.5, %v1190
      %v1192 = vmul.f32 %v1187, %v1191
      %vm1193 = vweird.f32 %v1090
      %vm1194 = vweird.f32 %v1187
      %vm1195 = vmor %vm1193, %vm1194
      %v1196 = vsel %vm1195, %v1187, %v1192
      %v1197 = vrsqrt.pop %v1091
      %v1198 = vmul.f32 %v1197, %v1091
      %v1199 = vmul.f32 %v1198, %v1197
      %v1200 = vmul.f32 0.5, %v1199
      %v1201 = vsub.f32 1.5, %v1200
      %v1202 = vmul.f32 %v1197, %v1201
      %vm1203 = vweird.f32 %v1091
      %vm1204 = vweird.f32 %v1197
      %vm1205 = vmor %vm1203, %vm1204
      %v1206 = vsel %vm1205, %v1197, %v1202
      %v1207 = vrsqrt.pop %v1092
      %v1208 = vmul.f32 %v1207, %v1092
      %v1209 = vmul.f32 %v1208, %v1207
      %v1210 = vmul.f32 0.5, %v1209
      %v1211 = vsub.f32 1.5, %v1210
      %v1212 = vmul.f32 %v1207, %v1211
      %vm1213 = vweird.f32 %v1092
      %vm1214 = vweird.f32 %v1207
      %vm1215 = vmor %vm1213, %vm1214
      %v1216 = vsel %vm1215, %v1207, %v1212
      %v1217 = vrsqrt.pop %v1093
      %v1218 = vmul.f32 %v1217, %v1093
      %v1219 = vmul.f32 %v1218, %v1217
      %v1220 = vmul.f32 0.5, %v1219
      %v1221 = vsub.f32 1.5, %v1220
      %v1222 = vmul.f32 %v1217, %v1221
      %vm1223 = vweird.f32 %v1093
      %vm1224 = vweird.f32 %v1217
      %vm1225 = vmor %vm1223, %vm1224
      %v1226 = vsel %vm1225, %v1217, %v1222
      %v1227 = vrsqrt.pop %v1094
      %v1228 = vmul.f32 %v1227, %v1094
      %v1229 = vmul.f32 %v1228, %v1227
      %v1230 = vmul.f32 0.5, %v1229
      %v1231 = vsub.f32 1.5, %v1230
      %v1232 = vmul.f32 %v1227, %v1231
      %vm1233 = vweird.f32 %v1094
      %vm1234 = vweird.f32 %v1227
      %vm1235 = vmor %vm1233, %vm1234
      %v1236 = vsel %vm1235, %v1227, %v1232
      %v1237 = vrsqrt.pop %v1095
      %v1238 = vmul.f32 %v1237, %v1095
      %v1239 = vmul.f32 %v1238, %v1237
      %v1240 = vmul.f32 0.5, %v1239
      %v1241 = vsub.f32 1.5, %v1240
      %v1242 = vmul.f32 %v1237, %v1241
      %vm1243 = vweird.f32 %v1095
      %vm1244 = vweird.f32 %v1237
      %vm1245 = vmor %vm1243, %vm1244
      %v1246 = vsel %vm1245, %v1237, %v1242
      %v1247 = vrsqrt.pop %v1096
      %v1248 = vmul.f32 %v1247, %v1096
      %v1249 = vmul.f32 %v1248, %v1247
      %v1250 = vmul.f32 0.5, %v1249
      %v1251 = vsub.f32 1.5, %v1250
      %v1252 = vmul.f32 %v1247, %v1251
      %vm1253 = vweird.f32 %v1096
      %vm1254 = vweird.f32 %v1247
      %vm1255 = vmor %vm1253, %vm1254
      %v1256 = vsel %vm1255, %v1247, %v1252
      %v1257 = vmul.f32 %v985, %v1106
      %v1258 = vmul.f32 %v986, %v1116
      %v1259 = vmul.f32 %v987, %v1126
      %v1260 = vmul.f32 %v988, %v1136
      %v1261 = vmul.f32 %v989, %v1146
      %v1262 = vmul.f32 %v990, %v1156
      %v1263 = vmul.f32 %v991, %v1166
      %v1264 = vmul.f32 %v992, %v1176
      %v1265 = vmul.f32 %v993, %v1186
      %v1266 = vmul.f32 %v994, %v1196
      %v1267 = vmul.f32 %v995, %v1206
      %v1268 = vmul.f32 %v996, %v1216
      %v1269 = vmul.f32 %v997, %v1226
      %v1270 = vmul.f32 %v998, %v1236
      %v1271 = vmul.f32 %v999, %v1246
      %v1272 = vmul.f32 %v1000, %v1256
      %v1273 = vperm.slane %v792, 1
      %v1274 = vmul.f32 %v1257, %v1273
      %v1275 = vmul.f32 %v1258, %v1273
      %v1276 = vmul.f32 %v1259, %v1273
      %v1277 = vmul.f32 %v1260, %v1273
      %v1278 = vmul.f32 %v1261, %v1273
      %v1279 = vmul.f32 %v1262, %v1273
      %v1280 = vmul.f32 %v1263, %v1273
      %v1281 = vmul.f32 %v1264, %v1273
      %v1282 = vmul.f32 %v1265, %v1273
      %v1283 = vmul.f32 %v1266, %v1273
      %v1284 = vmul.f32 %v1267, %v1273
      %v1285 = vmul.f32 %v1268, %v1273
      %v1286 = vmul.f32 %v1269, %v1273
      %v1287 = vmul.f32 %v1270, %v1273
      %v1288 = vmul.f32 %v1271, %v1273
      %v1289 = vmul.f32 %v1272, %v1273
      %v1290 = vperm.slane %v792, 2
      %v1291 = vadd.f32 %v1274, %v1290
      %v1292 = vadd.f32 %v1275, %v1290
      %v1293 = vadd.f32 %v1276, %v1290
      %v1294 = vadd.f32 %v1277, %v1290
      %v1295 = vadd.f32 %v1278, %v1290
      %v1296 = vadd.f32 %v1279, %v1290
      %v1297 = vadd.f32 %v1280, %v1290
      %v1298 = vadd.f32 %v1281, %v1290
      %v1299 = vadd.f32 %v1282, %v1290
      %v1300 = vadd.f32 %v1283, %v1290
      %v1301 = vadd.f32 %v1284, %v1290
      %v1302 = vadd.f32 %v1285, %v1290
      %v1303 = vadd.f32 %v1286, %v1290
      %v1304 = vadd.f32 %v1287, %v1290
      %v1305 = vadd.f32 %v1288, %v1290
      %v1306 = vadd.f32 %v1289, %v1290
      %v1307 = vld [vmem:[%s2] sm:$0xff]
      %v1308 = vld [vmem:[%s2 + $0x8] sm:$0xff]
      %v1309 = vld [vmem:[%s2 + $0x10] sm:$0xff]
      %v1310 = vld [vmem:[%s2 + $0x18] sm:$0xff]
      %v1311 = vld [vmem:[%s2 + $0x20] sm:$0xff]
      %v1312 = vld [vmem:[%s2 + $0x28] sm:$0xff]
      %v1313 = vld [vmem:[%s2 + $0x30] sm:$0xff]
      %v1314 = vld [vmem:[%s2 + $0x38] sm:$0xff]
      %v1315 = vld [vmem:[%s2 + $0x40] sm:$0xff]
      %v1316 = vld [vmem:[%s2 + $0x48] sm:$0xff]
      %v1317 = vld [vmem:[%s2 + $0x50] sm:$0xff]
      %v1318 = vld [vmem:[%s2 + $0x58] sm:$0xff]
      %v1319 = vld [vmem:[%s2 + $0x60] sm:$0xff]
      %v1320 = vld [vmem:[%s2 + $0x68] sm:$0xff]
      %v1321 = vld [vmem:[%s2 + $0x70] sm:$0xff]
      %v1322 = vld [vmem:[%s2 + $0x78] sm:$0xff]
      %1323 = vmatpush.msra.mxu0 %v1306
      %1324 = vmatpush.msra.mxu0 %v1305
      %1325 = vmatpush.msra.mxu0 %v1304
      %1326 = vmatpush.msra.mxu0 %v1303
      %1327 = vmatpush.msra.mxu0 %v1302
      %1328 = vmatpush.msra.mxu0 %v1301
      %1329 = vmatpush.msra.mxu0 %v1300
      %1330 = vmatpush.msra.mxu0 %v1299
      %1331 = vmatpush.msra.mxu0 %v1298
      %1332 = vmatpush.msra.mxu0 %v1297
      %1333 = vmatpush.msra.mxu0 %v1296
      %1334 = vmatpush.msra.mxu0 %v1295
      %1335 = vmatpush.msra.mxu0 %v1294
      %1336 = vmatpush.msra.mxu0 %v1293
      %1337 = vmatpush.msra.mxu0 %v1292
      %1338 = vmatpush.msra.mxu0 %v1291
      %1339 = vmatmul.f32.gmra.mxu0 %v1307
      %v1340 = vpop.f32.mrf.mxu0
      %v1341 = vadd.f32 0.0, %v1340
      %1342 = vmatmul.f32.gmra.mxu0 %v1308
      %v1343 = vpop.f32.mrf.mxu0
      %v1344 = vadd.f32 0.0, %v1343
      %1345 = vmatmul.f32.gmra.mxu0 %v1309
      %v1346 = vpop.f32.mrf.mxu0
      %v1347 = vadd.f32 0.0, %v1346
      %1348 = vmatmul.f32.gmra.mxu0 %v1310
      %v1349 = vpop.f32.mrf.mxu0
      %v1350 = vadd.f32 0.0, %v1349
      %1351 = vmatmul.f32.gmra.mxu0 %v1311
      %v1352 = vpop.f32.mrf.mxu0
      %v1353 = vadd.f32 0.0, %v1352
      %1354 = vmatmul.f32.gmra.mxu0 %v1312
      %v1355 = vpop.f32.mrf.mxu0
      %v1356 = vadd.f32 0.0, %v1355
      %1357 = vmatmul.f32.gmra.mxu0 %v1313
      %v1358 = vpop.f32.mrf.mxu0
      %v1359 = vadd.f32 0.0, %v1358
      %1360 = vmatmul.f32.gmra.mxu0 %v1314
      %v1361 = vpop.f32.mrf.mxu0
      %v1362 = vadd.f32 0.0, %v1361
      %1363 = vmatmul.f32.gmra.mxu0 %v1315
      %v1364 = vpop.f32.mrf.mxu0
      %v1365 = vadd.f32 0.0, %v1364
      %1366 = vmatmul.f32.gmra.mxu0 %v1316
      %v1367 = vpop.f32.mrf.mxu0
      %v1368 = vadd.f32 0.0, %v1367
      %1369 = vmatmul.f32.gmra.mxu0 %v1317
      %v1370 = vpop.f32.mrf.mxu0
      %v1371 = vadd.f32 0.0, %v1370
      %1372 = vmatmul.f32.gmra.mxu0 %v1318
      %v1373 = vpop.f32.mrf.mxu0
      %v1374 = vadd.f32 0.0, %v1373
      %1375 = vmatmul.f32.gmra.mxu0 %v1319
      %v1376 = vpop.f32.mrf.mxu0
      %v1377 = vadd.f32 0.0, %v1376
      %1378 = vmatmul.f32.gmra.mxu0 %v1320
      %v1379 = vpop.f32.mrf.mxu0
      %v1380 = vadd.f32 0.0, %v1379
      %1381 = vmatmul.f32.gmra.mxu0 %v1321
      %v1382 = vpop.f32.mrf.mxu0
      %v1383 = vadd.f32 0.0, %v1382
      %1384 = vmatmul.f32.gmra.mxu0 %v1322
      %v1385 = vpop.f32.mrf.mxu0
      %v1386 = vadd.f32 0.0, %v1385
      %1387 = vdwg.mxu0
      %v1388 = vsub.f32 %v1341, %v1291
      %v1389 = vsub.f32 %v1344, %v1292
      %v1390 = vsub.f32 %v1347, %v1293
      %v1391 = vsub.f32 %v1350, %v1294
      %v1392 = vsub.f32 %v1353, %v1295
      %v1393 = vsub.f32 %v1356, %v1296
      %v1394 = vsub.f32 %v1359, %v1297
      %v1395 = vsub.f32 %v1362, %v1298
      %v1396 = vsub.f32 %v1365, %v1299
      %v1397 = vsub.f32 %v1368, %v1300
      %v1398 = vsub.f32 %v1371, %v1301
      %v1399 = vsub.f32 %v1374, %v1302
      %v1400 = vsub.f32 %v1377, %v1303
      %v1401 = vsub.f32 %v1380, %v1304
      %v1402 = vsub.f32 %v1383, %v1305
      %v1403 = vsub.f32 %v1386, %v1306
      %v1404 = vmul.f32 %v1388, 0.33333334
      %v1405 = vmul.f32 %v1389, 0.33333334
      %v1406 = vmul.f32 %v1390, 0.33333334
      %v1407 = vmul.f32 %v1391, 0.33333334
      %v1408 = vmul.f32 %v1392, 0.33333334
      %v1409 = vmul.f32 %v1393, 0.33333334
      %v1410 = vmul.f32 %v1394, 0.33333334
      %v1411 = vmul.f32 %v1395, 0.33333334
      %v1412 = vmul.f32 %v1396, 0.33333334
      %v1413 = vmul.f32 %v1397, 0.33333334
      %v1414 = vmul.f32 %v1398, 0.33333334
      %v1415 = vmul.f32 %v1399, 0.33333334
      %v1416 = vmul.f32 %v1400, 0.33333334
      %v1417 = vmul.f32 %v1401, 0.33333334
      %v1418 = vmul.f32 %v1402, 0.33333334
      %v1419 = vmul.f32 %v1403, 0.33333334
      %v1420 = vld [vmem:[%s14] sm:$0xff]
      %v1421 = vld [vmem:[%s14 + $0x8] sm:$0xff]
      %v1422 = vld [vmem:[%s14 + $0x10] sm:$0xff]
      %v1423 = vld [vmem:[%s14 + $0x18] sm:$0xff]
      %v1424 = vld [vmem:[%s14 + $0x20] sm:$0xff]
      %v1425 = vld [vmem:[%s14 + $0x28] sm:$0xff]
      %v1426 = vld [vmem:[%s14 + $0x30] sm:$0xff]
      %v1427 = vld [vmem:[%s14 + $0x38] sm:$0xff]
      %v1429 = vsel %vm913, %v1404, 0
      %v1432 = vsel %vm913, %v1405, 0
      %v1435 = vsel %vm913, %v1406, 0
      %v1438 = vsel %vm913, %v1407, 0
      %v1441 = vsel %vm913, %v1408, 0
      %v1444 = vsel %vm913, %v1409, 0
      %v1447 = vsel %vm913, %v1410, 0
      %v1450 = vsel %vm913, %v1411, 0
      %v1453 = vsel %vm913, %v1412, 0
      %v1456 = vsel %vm913, %v1413, 0
      %v1459 = vsel %vm913, %v1414, 0
      %v1462 = vsel %vm913, %v1415, 0
      %v1465 = vsel %vm913, %v1416, 0
      %v1468 = vsel %vm913, %v1417, 0
      %v1471 = vsel %vm913, %v1418, 0
      %v1474 = vsel %vm913, %v1419, 0
      %1476 = vmatpush.msra.mxu0 0.0
      %1477 = vmatpush.msra.mxu0 0.0
      %1478 = vmatpush.msra.mxu0 0.0
      %1479 = vmatpush.msra.mxu0 0.0
      %1480 = vmatpush.msra.mxu0 0.0
      %1481 = vmatpush.msra.mxu0 0.0
      %1482 = vmatpush.msra.mxu0 0.0
      %1483 = vmatpush.msra.mxu0 0.0
      %1484 = vmatpush.msra.mxu0 0.0
      %1485 = vmatpush.msra.mxu0 0.0
      %1486 = vmatpush.msra.mxu0 0.0
      %1487 = vmatpush.msra.mxu0 0.0
      %1488 = vmatpush.msra.mxu0 %v1427
      %1489 = vmatpush.msra.mxu0 %v1426
      %1490 = vmatpush.msra.mxu0 %v1425
      %1491 = vmatpush.msra.mxu0 %v1424
      %1492 = vmatmul.f32.gmra.mxu0 %v1429
      %v1493 = vpop.f32.mrf.mxu0
      %v1494 = vadd.f32 0.0, %v1493
      %1495 = vmatmul.f32.gmra.mxu0 %v1432
      %v1496 = vpop.f32.mrf.mxu0
      %v1497 = vadd.f32 0.0, %v1496
      %1498 = vmatmul.f32.gmra.mxu0 %v1435
      %v1499 = vpop.f32.mrf.mxu0
      %v1500 = vadd.f32 0.0, %v1499
      %1501 = vmatmul.f32.gmra.mxu0 %v1438
      %v1502 = vpop.f32.mrf.mxu0
      %v1503 = vadd.f32 0.0, %v1502
      %1504 = vmatmul.f32.gmra.mxu0 %v1441
      %v1505 = vpop.f32.mrf.mxu0
      %v1506 = vadd.f32 0.0, %v1505
      %1507 = vmatmul.f32.gmra.mxu0 %v1444
      %v1508 = vpop.f32.mrf.mxu0
      %v1509 = vadd.f32 0.0, %v1508
      %1510 = vmatmul.f32.gmra.mxu0 %v1447
      %v1511 = vpop.f32.mrf.mxu0
      %v1512 = vadd.f32 0.0, %v1511
      %1513 = vmatmul.f32.gmra.mxu0 %v1450
      %v1514 = vpop.f32.mrf.mxu0
      %v1515 = vadd.f32 0.0, %v1514
      %1516 = vmatmul.f32.gmra.mxu0 %v1453
      %v1517 = vpop.f32.mrf.mxu0
      %v1518 = vadd.f32 0.0, %v1517
      %1519 = vmatmul.f32.gmra.mxu0 %v1456
      %v1520 = vpop.f32.mrf.mxu0
      %v1521 = vadd.f32 0.0, %v1520
      %1522 = vmatmul.f32.gmra.mxu0 %v1459
      %v1523 = vpop.f32.mrf.mxu0
      %v1524 = vadd.f32 0.0, %v1523
      %1525 = vmatmul.f32.gmra.mxu0 %v1462
      %v1526 = vpop.f32.mrf.mxu0
      %v1527 = vadd.f32 0.0, %v1526
      %1528 = vmatmul.f32.gmra.mxu0 %v1465
      %v1529 = vpop.f32.mrf.mxu0
      %v1530 = vadd.f32 0.0, %v1529
      %1531 = vmatmul.f32.gmra.mxu0 %v1468
      %v1532 = vpop.f32.mrf.mxu0
      %v1533 = vadd.f32 0.0, %v1532
      %1534 = vmatmul.f32.gmra.mxu0 %v1471
      %v1535 = vpop.f32.mrf.mxu0
      %v1536 = vadd.f32 0.0, %v1535
      %1537 = vmatmul.f32.gmra.mxu0 %v1474
      %v1538 = vpop.f32.mrf.mxu0
      %v1539 = vadd.f32 0.0, %v1538
      %1540 = vdwg.mxu0
      %v1542 = vsel %vm913, %v1291, 0
      %v1545 = vsel %vm913, %v1292, 0
      %v1548 = vsel %vm913, %v1293, 0
      %v1551 = vsel %vm913, %v1294, 0
      %v1554 = vsel %vm913, %v1295, 0
      %v1557 = vsel %vm913, %v1296, 0
      %v1560 = vsel %vm913, %v1297, 0
      %v1563 = vsel %vm913, %v1298, 0
      %v1566 = vsel %vm913, %v1299, 0
      %v1569 = vsel %vm913, %v1300, 0
      %v1572 = vsel %vm913, %v1301, 0
      %v1575 = vsel %vm913, %v1302, 0
      %v1578 = vsel %vm913, %v1303, 0
      %v1581 = vsel %vm913, %v1304, 0
      %v1584 = vsel %vm913, %v1305, 0
      %v1587 = vsel %vm913, %v1306, 0
      %1589 = vmatpush.msra.mxu0 0.0
      %1590 = vmatpush.msra.mxu0 0.0
      %1591 = vmatpush.msra.mxu0 0.0
      %1592 = vmatpush.msra.mxu0 0.0
      %1593 = vmatpush.msra.mxu0 0.0
      %1594 = vmatpush.msra.mxu0 0.0
      %1595 = vmatpush.msra.mxu0 0.0
      %1596 = vmatpush.msra.mxu0 0.0
      %1597 = vmatpush.msra.mxu0 0.0
      %1598 = vmatpush.msra.mxu0 0.0
      %1599 = vmatpush.msra.mxu0 0.0
      %1600 = vmatpush.msra.mxu0 0.0
      %1601 = vmatpush.msra.mxu0 %v1423
      %1602 = vmatpush.msra.mxu0 %v1422
      %1603 = vmatpush.msra.mxu0 %v1421
      %1604 = vmatpush.msra.mxu0 %v1420
      %1605 = vmatmul.f32.gmra.mxu0 %v1542
      %v1606 = vpop.f32.mrf.mxu0
      %v1607 = vadd.f32 %v1494, %v1606
      %1608 = vmatmul.f32.gmra.mxu0 %v1545
      %v1609 = vpop.f32.mrf.mxu0
      %v1610 = vadd.f32 %v1497, %v1609
      %1611 = vmatmul.f32.gmra.mxu0 %v1548
      %v1612 = vpop.f32.mrf.mxu0
      %v1613 = vadd.f32 %v1500, %v1612
      %1614 = vmatmul.f32.gmra.mxu0 %v1551
      %v1615 = vpop.f32.mrf.mxu0
      %v1616 = vadd.f32 %v1503, %v1615
      %1617 = vmatmul.f32.gmra.mxu0 %v1554
      %v1618 = vpop.f32.mrf.mxu0
      %v1619 = vadd.f32 %v1506, %v1618
      %1620 = vmatmul.f32.gmra.mxu0 %v1557
      %v1621 = vpop.f32.mrf.mxu0
      %v1622 = vadd.f32 %v1509, %v1621
      %1623 = vmatmul.f32.gmra.mxu0 %v1560
      %v1624 = vpop.f32.mrf.mxu0
      %v1625 = vadd.f32 %v1512, %v1624
      %1626 = vmatmul.f32.gmra.mxu0 %v1563
      %v1627 = vpop.f32.mrf.mxu0
      %v1628 = vadd.f32 %v1515, %v1627
      %1629 = vmatmul.f32.gmra.mxu0 %v1566
      %v1630 = vpop.f32.mrf.mxu0
      %v1631 = vadd.f32 %v1518, %v1630
      %1632 = vmatmul.f32.gmra.mxu0 %v1569
      %v1633 = vpop.f32.mrf.mxu0
      %v1634 = vadd.f32 %v1521, %v1633
      %1635 = vmatmul.f32.gmra.mxu0 %v1572
      %v1636 = vpop.f32.mrf.mxu0
      %v1637 = vadd.f32 %v1524, %v1636
      %1638 = vmatmul.f32.gmra.mxu0 %v1575
      %v1639 = vpop.f32.mrf.mxu0
      %v1640 = vadd.f32 %v1527, %v1639
      %1641 = vmatmul.f32.gmra.mxu0 %v1578
      %v1642 = vpop.f32.mrf.mxu0
      %v1643 = vadd.f32 %v1530, %v1642
      %1644 = vmatmul.f32.gmra.mxu0 %v1581
      %v1645 = vpop.f32.mrf.mxu0
      %v1646 = vadd.f32 %v1533, %v1645
      %1647 = vmatmul.f32.gmra.mxu0 %v1584
      %v1648 = vpop.f32.mrf.mxu0
      %v1649 = vadd.f32 %v1536, %v1648
      %1650 = vmatmul.f32.gmra.mxu0 %v1587
      %v1651 = vpop.f32.mrf.mxu0
      %v1652 = vadd.f32 %v1539, %v1651
      %1653 = vdwg.mxu0
      %v1654 = vperm.slane %v792, 3
      %v1655 = vadd.f32 %v1607, %v1654
      %v1656 = vadd.f32 %v1610, %v1654
      %v1657 = vadd.f32 %v1613, %v1654
      %v1658 = vadd.f32 %v1616, %v1654
      %v1659 = vadd.f32 %v1619, %v1654
      %v1660 = vadd.f32 %v1622, %v1654
      %v1661 = vadd.f32 %v1625, %v1654
      %v1662 = vadd.f32 %v1628, %v1654
      %v1663 = vadd.f32 %v1631, %v1654
      %v1664 = vadd.f32 %v1634, %v1654
      %v1665 = vadd.f32 %v1637, %v1654
      %v1666 = vadd.f32 %v1640, %v1654
      %v1667 = vadd.f32 %v1643, %v1654
      %v1668 = vadd.f32 %v1646, %v1654
      %v1669 = vadd.f32 %v1649, %v1654
      %v1670 = vadd.f32 %v1652, %v1654
      %v1671 = vmax.f32 %v1655, 0.0
      %v1672 = vmax.f32 %v1656, 0.0
      %v1673 = vmax.f32 %v1657, 0.0
      %v1674 = vmax.f32 %v1658, 0.0
      %v1675 = vmax.f32 %v1659, 0.0
      %v1676 = vmax.f32 %v1660, 0.0
      %v1677 = vmax.f32 %v1661, 0.0
      %v1678 = vmax.f32 %v1662, 0.0
      %v1679 = vmax.f32 %v1663, 0.0
      %v1680 = vmax.f32 %v1664, 0.0
      %v1681 = vmax.f32 %v1665, 0.0
      %v1682 = vmax.f32 %v1666, 0.0
      %v1683 = vmax.f32 %v1667, 0.0
      %v1684 = vmax.f32 %v1668, 0.0
      %v1685 = vmax.f32 %v1669, 0.0
      %v1686 = vmax.f32 %v1670, 0.0
      %v1687 = vld [vmem:[%s15] sm:$0xff]
      %v1688 = vld [vmem:[%s15 + $0x8] sm:$0xff]
      %v1689 = vld [vmem:[%s15 + $0x10] sm:$0xff]
      %v1690 = vld [vmem:[%s15 + $0x18] sm:$0xff]
      %v1691 = vperm.slane %v792, 4
      %v1693 = vsel %vm913, %v1671, 0
      %v1696 = vsel %vm913, %v1672, 0
      %v1699 = vsel %vm913, %v1673, 0
      %v1702 = vsel %vm913, %v1674, 0
      %v1705 = vsel %vm913, %v1675, 0
      %v1708 = vsel %vm913, %v1676, 0
      %v1711 = vsel %vm913, %v1677, 0
      %v1714 = vsel %vm913, %v1678, 0
      %v1717 = vsel %vm913, %v1679, 0
      %v1720 = vsel %vm913, %v1680, 0
      %v1723 = vsel %vm913, %v1681, 0
      %v1726 = vsel %vm913, %v1682, 0
      %v1729 = vsel %vm913, %v1683, 0
      %v1732 = vsel %vm913, %v1684, 0
      %v1735 = vsel %vm913, %v1685, 0
      %v1738 = vsel %vm913, %v1686, 0
      %1740 = vmatpush.msra.mxu0 0.0
      %1741 = vmatpush.msra.mxu0 0.0
      %1742 = vmatpush.msra.mxu0 0.0
      %1743 = vmatpush.msra.mxu0 0.0
      %1744 = vmatpush.msra.mxu0 0.0
      %1745 = vmatpush.msra.mxu0 0.0
      %1746 = vmatpush.msra.mxu0 0.0
      %1747 = vmatpush.msra.mxu0 0.0
      %1748 = vmatpush.msra.mxu0 0.0
      %1749 = vmatpush.msra.mxu0 0.0
      %1750 = vmatpush.msra.mxu0 0.0
      %1751 = vmatpush.msra.mxu0 0.0
      %1752 = vmatpush.msra.mxu0 %v1690
      %1753 = vmatpush.msra.mxu0 %v1689
      %1754 = vmatpush.msra.mxu0 %v1688
      %1755 = vmatpush.msra.mxu0 %v1687
      %1756 = vmatmul.f32.gmra.mxu0 %v1693
      %v1757 = vpop.f32.mrf.mxu0
      %v1758 = vadd.f32 %v1691, %v1757
      %1759 = vmatmul.f32.gmra.mxu0 %v1696
      %v1760 = vpop.f32.mrf.mxu0
      %v1761 = vadd.f32 %v1691, %v1760
      %1762 = vmatmul.f32.gmra.mxu0 %v1699
      %v1763 = vpop.f32.mrf.mxu0
      %v1764 = vadd.f32 %v1691, %v1763
      %1765 = vmatmul.f32.gmra.mxu0 %v1702
      %v1766 = vpop.f32.mrf.mxu0
      %v1767 = vadd.f32 %v1691, %v1766
      %1768 = vmatmul.f32.gmra.mxu0 %v1705
      %v1769 = vpop.f32.mrf.mxu0
      %v1770 = vadd.f32 %v1691, %v1769
      %1771 = vmatmul.f32.gmra.mxu0 %v1708
      %v1772 = vpop.f32.mrf.mxu0
      %v1773 = vadd.f32 %v1691, %v1772
      %1774 = vmatmul.f32.gmra.mxu0 %v1711
      %v1775 = vpop.f32.mrf.mxu0
      %v1776 = vadd.f32 %v1691, %v1775
      %1777 = vmatmul.f32.gmra.mxu0 %v1714
      %v1778 = vpop.f32.mrf.mxu0
      %v1779 = vadd.f32 %v1691, %v1778
      %1780 = vmatmul.f32.gmra.mxu0 %v1717
      %v1781 = vpop.f32.mrf.mxu0
      %v1782 = vadd.f32 %v1691, %v1781
      %1783 = vmatmul.f32.gmra.mxu0 %v1720
      %v1784 = vpop.f32.mrf.mxu0
      %v1785 = vadd.f32 %v1691, %v1784
      %1786 = vmatmul.f32.gmra.mxu0 %v1723
      %v1787 = vpop.f32.mrf.mxu0
      %v1788 = vadd.f32 %v1691, %v1787
      %1789 = vmatmul.f32.gmra.mxu0 %v1726
      %v1790 = vpop.f32.mrf.mxu0
      %v1791 = vadd.f32 %v1691, %v1790
      %1792 = vmatmul.f32.gmra.mxu0 %v1729
      %v1793 = vpop.f32.mrf.mxu0
      %v1794 = vadd.f32 %v1691, %v1793
      %1795 = vmatmul.f32.gmra.mxu0 %v1732
      %v1796 = vpop.f32.mrf.mxu0
      %v1797 = vadd.f32 %v1691, %v1796
      %1798 = vmatmul.f32.gmra.mxu0 %v1735
      %v1799 = vpop.f32.mrf.mxu0
      %v1800 = vadd.f32 %v1691, %v1799
      %1801 = vmatmul.f32.gmra.mxu0 %v1738
      %v1802 = vpop.f32.mrf.mxu0
      %v1803 = vadd.f32 %v1691, %v1802
      %1804 = vdwg.mxu0
      %v1805 = vmax.f32 %v1758, 0.0
      %v1806 = vmax.f32 %v1761, 0.0
      %v1807 = vmax.f32 %v1764, 0.0
      %v1808 = vmax.f32 %v1767, 0.0
      %v1809 = vmax.f32 %v1770, 0.0
      %v1810 = vmax.f32 %v1773, 0.0
      %v1811 = vmax.f32 %v1776, 0.0
      %v1812 = vmax.f32 %v1779, 0.0
      %v1813 = vmax.f32 %v1782, 0.0
      %v1814 = vmax.f32 %v1785, 0.0
      %v1815 = vmax.f32 %v1788, 0.0
      %v1816 = vmax.f32 %v1791, 0.0
      %v1817 = vmax.f32 %v1794, 0.0
      %v1818 = vmax.f32 %v1797, 0.0
      %v1819 = vmax.f32 %v1800, 0.0
      %v1820 = vmax.f32 %v1803, 0.0
      %v1821 = vadd.f32 %v1805, %v776
      %v1822 = vadd.f32 %v1806, %v777
      %v1823 = vadd.f32 %v1807, %v778
      %v1824 = vadd.f32 %v1808, %v779
      %v1825 = vadd.f32 %v1809, %v780
      %v1826 = vadd.f32 %v1810, %v781
      %v1827 = vadd.f32 %v1811, %v782
      %v1828 = vadd.f32 %v1812, %v783
      %v1829 = vadd.f32 %v1813, %v784
      %v1830 = vadd.f32 %v1814, %v785
      %v1831 = vadd.f32 %v1815, %v786
      %v1832 = vadd.f32 %v1816, %v787
      %v1833 = vadd.f32 %v1817, %v788
      %v1834 = vadd.f32 %v1818, %v789
      %v1835 = vadd.f32 %v1819, %v790
      %v1836 = vadd.f32 %v1820, %v791
      %v1837 = vld [vmem:[%s3] sm:$0xff]
      %v1838 = vld [vmem:[%s3 + $0x8] sm:$0xff]
      %v1839 = vld [vmem:[%s3 + $0x10] sm:$0xff]
      %v1840 = vld [vmem:[%s3 + $0x18] sm:$0xff]
      %v1841 = vld [vmem:[%s3 + $0x20] sm:$0xff]
      %v1842 = vld [vmem:[%s3 + $0x28] sm:$0xff]
      %v1843 = vld [vmem:[%s3 + $0x30] sm:$0xff]
      %v1844 = vld [vmem:[%s3 + $0x38] sm:$0xff]
      %v1845 = vld [vmem:[%s3 + $0x40] sm:$0xff]
      %v1846 = vld [vmem:[%s3 + $0x48] sm:$0xff]
      %v1847 = vld [vmem:[%s3 + $0x50] sm:$0xff]
      %v1848 = vld [vmem:[%s3 + $0x58] sm:$0xff]
      %v1849 = vld [vmem:[%s3 + $0x60] sm:$0xff]
      %v1850 = vld [vmem:[%s3 + $0x68] sm:$0xff]
      %v1851 = vld [vmem:[%s3 + $0x70] sm:$0xff]
      %v1852 = vld [vmem:[%s3 + $0x78] sm:$0xff]
      %1853 = vmatpush.msra.mxu0 %v1836
      %1854 = vmatpush.msra.mxu0 %v1835
      %1855 = vmatpush.msra.mxu0 %v1834
      %1856 = vmatpush.msra.mxu0 %v1833
      %1857 = vmatpush.msra.mxu0 %v1832
      %1858 = vmatpush.msra.mxu0 %v1831
      %1859 = vmatpush.msra.mxu0 %v1830
      %1860 = vmatpush.msra.mxu0 %v1829
      %1861 = vmatpush.msra.mxu0 %v1828
      %1862 = vmatpush.msra.mxu0 %v1827
      %1863 = vmatpush.msra.mxu0 %v1826
      %1864 = vmatpush.msra.mxu0 %v1825
      %1865 = vmatpush.msra.mxu0 %v1824
      %1866 = vmatpush.msra.mxu0 %v1823
      %1867 = vmatpush.msra.mxu0 %v1822
      %1868 = vmatpush.msra.mxu0 %v1821
      %1869 = vmatmul.f32.gmra.mxu0 %v1837
      %v1870 = vpop.f32.mrf.mxu0
      %v1871 = vadd.f32 0.0, %v1870
      %1872 = vmatmul.f32.gmra.mxu0 %v1838
      %v1873 = vpop.f32.mrf.mxu0
      %v1874 = vadd.f32 0.0, %v1873
      %1875 = vmatmul.f32.gmra.mxu0 %v1839
      %v1876 = vpop.f32.mrf.mxu0
      %v1877 = vadd.f32 0.0, %v1876
      %1878 = vmatmul.f32.gmra.mxu0 %v1840
      %v1879 = vpop.f32.mrf.mxu0
      %v1880 = vadd.f32 0.0, %v1879
      %1881 = vmatmul.f32.gmra.mxu0 %v1841
      %v1882 = vpop.f32.mrf.mxu0
      %v1883 = vadd.f32 0.0, %v1882
      %1884 = vmatmul.f32.gmra.mxu0 %v1842
      %v1885 = vpop.f32.mrf.mxu0
      %v1886 = vadd.f32 0.0, %v1885
      %1887 = vmatmul.f32.gmra.mxu0 %v1843
      %v1888 = vpop.f32.mrf.mxu0
      %v1889 = vadd.f32 0.0, %v1888
      %1890 = vmatmul.f32.gmra.mxu0 %v1844
      %v1891 = vpop.f32.mrf.mxu0
      %v1892 = vadd.f32 0.0, %v1891
      %1893 = vmatmul.f32.gmra.mxu0 %v1845
      %v1894 = vpop.f32.mrf.mxu0
      %v1895 = vadd.f32 0.0, %v1894
      %1896 = vmatmul.f32.gmra.mxu0 %v1846
      %v1897 = vpop.f32.mrf.mxu0
      %v1898 = vadd.f32 0.0, %v1897
      %1899 = vmatmul.f32.gmra.mxu0 %v1847
      %v1900 = vpop.f32.mrf.mxu0
      %v1901 = vadd.f32 0.0, %v1900
      %1902 = vmatmul.f32.gmra.mxu0 %v1848
      %v1903 = vpop.f32.mrf.mxu0
      %v1904 = vadd.f32 0.0, %v1903
      %1905 = vmatmul.f32.gmra.mxu0 %v1849
      %v1906 = vpop.f32.mrf.mxu0
      %v1907 = vadd.f32 0.0, %v1906
      %1908 = vmatmul.f32.gmra.mxu0 %v1850
      %v1909 = vpop.f32.mrf.mxu0
      %v1910 = vadd.f32 0.0, %v1909
      %1911 = vmatmul.f32.gmra.mxu0 %v1851
      %v1912 = vpop.f32.mrf.mxu0
      %v1913 = vadd.f32 0.0, %v1912
      %1914 = vmatmul.f32.gmra.mxu0 %v1852
      %v1915 = vpop.f32.mrf.mxu0
      %v1916 = vadd.f32 0.0, %v1915
      %1917 = vdwg.mxu0
      %1918 = vmatpush.msra.mxu0 %v791
      %1919 = vmatpush.msra.mxu0 %v790
      %1920 = vmatpush.msra.mxu0 %v789
      %1921 = vmatpush.msra.mxu0 %v788
      %1922 = vmatpush.msra.mxu0 %v787
      %1923 = vmatpush.msra.mxu0 %v786
      %1924 = vmatpush.msra.mxu0 %v785
      %1925 = vmatpush.msra.mxu0 %v784
      %1926 = vmatpush.msra.mxu0 %v783
      %1927 = vmatpush.msra.mxu0 %v782
      %1928 = vmatpush.msra.mxu0 %v781
      %1929 = vmatpush.msra.mxu0 %v780
      %1930 = vmatpush.msra.mxu0 %v779
      %1931 = vmatpush.msra.mxu0 %v778
      %1932 = vmatpush.msra.mxu0 %v777
      %1933 = vmatpush.msra.mxu0 %v776
      %1934 = vmatmul.f32.gmra.mxu0 %v1837
      %v1935 = vpop.f32.mrf.mxu0
      %v1936 = vadd.f32 0.0, %v1935
      %1937 = vmatmul.f32.gmra.mxu0 %v1838
      %v1938 = vpop.f32.mrf.mxu0
      %v1939 = vadd.f32 0.0, %v1938
      %1940 = vmatmul.f32.gmra.mxu0 %v1839
      %v1941 = vpop.f32.mrf.mxu0
      %v1942 = vadd.f32 0.0, %v1941
      %1943 = vmatmul.f32.gmra.mxu0 %v1840
      %v1944 = vpop.f32.mrf.mxu0
      %v1945 = vadd.f32 0.0, %v1944
      %1946 = vmatmul.f32.gmra.mxu0 %v1841
      %v1947 = vpop.f32.mrf.mxu0
      %v1948 = vadd.f32 0.0, %v1947
      %1949 = vmatmul.f32.gmra.mxu0 %v1842
      %v1950 = vpop.f32.mrf.mxu0
      %v1951 = vadd.f32 0.0, %v1950
      %1952 = vmatmul.f32.gmra.mxu0 %v1843
      %v1953 = vpop.f32.mrf.mxu0
      %v1954 = vadd.f32 0.0, %v1953
      %1955 = vmatmul.f32.gmra.mxu0 %v1844
      %v1956 = vpop.f32.mrf.mxu0
      %v1957 = vadd.f32 0.0, %v1956
      %1958 = vmatmul.f32.gmra.mxu0 %v1845
      %v1959 = vpop.f32.mrf.mxu0
      %v1960 = vadd.f32 0.0, %v1959
      %1961 = vmatmul.f32.gmra.mxu0 %v1846
      %v1962 = vpop.f32.mrf.mxu0
      %v1963 = vadd.f32 0.0, %v1962
      %1964 = vmatmul.f32.gmra.mxu0 %v1847
      %v1965 = vpop.f32.mrf.mxu0
      %v1966 = vadd.f32 0.0, %v1965
      %1967 = vmatmul.f32.gmra.mxu0 %v1848
      %v1968 = vpop.f32.mrf.mxu0
      %v1969 = vadd.f32 0.0, %v1968
      %1970 = vmatmul.f32.gmra.mxu0 %v1849
      %v1971 = vpop.f32.mrf.mxu0
      %v1972 = vadd.f32 0.0, %v1971
      %1973 = vmatmul.f32.gmra.mxu0 %v1850
      %v1974 = vpop.f32.mrf.mxu0
      %v1975 = vadd.f32 0.0, %v1974
      %1976 = vmatmul.f32.gmra.mxu0 %v1851
      %v1977 = vpop.f32.mrf.mxu0
      %v1978 = vadd.f32 0.0, %v1977
      %1979 = vmatmul.f32.gmra.mxu0 %v1852
      %v1980 = vpop.f32.mrf.mxu0
      %v1981 = vadd.f32 0.0, %v1980
      %1982 = vdwg.mxu0
      %v1983 = vld [vmem:[%s4] sm:$0xff]
      %v1984 = vld [vmem:[%s4 + $0x8] sm:$0xff]
      %v1985 = vld [vmem:[%s4 + $0x10] sm:$0xff]
      %v1986 = vld [vmem:[%s4 + $0x18] sm:$0xff]
      %v1987 = vld [vmem:[%s4 + $0x20] sm:$0xff]
      %v1988 = vld [vmem:[%s4 + $0x28] sm:$0xff]
      %v1989 = vld [vmem:[%s4 + $0x30] sm:$0xff]
      %v1990 = vld [vmem:[%s4 + $0x38] sm:$0xff]
      %v1991 = vld [vmem:[%s4 + $0x40] sm:$0xff]
      %v1992 = vld [vmem:[%s4 + $0x48] sm:$0xff]
      %v1993 = vld [vmem:[%s4 + $0x50] sm:$0xff]
      %v1994 = vld [vmem:[%s4 + $0x58] sm:$0xff]
      %v1995 = vld [vmem:[%s4 + $0x60] sm:$0xff]
      %v1996 = vld [vmem:[%s4 + $0x68] sm:$0xff]
      %v1997 = vld [vmem:[%s4 + $0x70] sm:$0xff]
      %v1998 = vld [vmem:[%s4 + $0x78] sm:$0xff]
      %v1999 = vld [vmem:[%s5] sm:$0xff]
      %v2000 = vld [vmem:[%s5 + $0x8] sm:$0xff]
      %v2001 = vld [vmem:[%s5 + $0x10] sm:$0xff]
      %v2002 = vld [vmem:[%s5 + $0x18] sm:$0xff]
      %v2003 = vld [vmem:[%s5 + $0x20] sm:$0xff]
      %v2004 = vld [vmem:[%s5 + $0x28] sm:$0xff]
      %v2005 = vld [vmem:[%s5 + $0x30] sm:$0xff]
      %v2006 = vld [vmem:[%s5 + $0x38] sm:$0xff]
      %v2007 = vld [vmem:[%s5 + $0x40] sm:$0xff]
      %v2008 = vld [vmem:[%s5 + $0x48] sm:$0xff]
      %v2009 = vld [vmem:[%s5 + $0x50] sm:$0xff]
      %v2010 = vld [vmem:[%s5 + $0x58] sm:$0xff]
      %v2011 = vld [vmem:[%s5 + $0x60] sm:$0xff]
      %v2012 = vld [vmem:[%s5 + $0x68] sm:$0xff]
      %v2013 = vld [vmem:[%s5 + $0x70] sm:$0xff]
      %v2014 = vld [vmem:[%s5 + $0x78] sm:$0xff]
      %v2015 = vld [vmem:[%s6] sm:$0xff]
      %v2016 = vld [vmem:[%s6 + $0x8] sm:$0xff]
      %v2017 = vld [vmem:[%s6 + $0x10] sm:$0xff]
      %v2018 = vld [vmem:[%s6 + $0x18] sm:$0xff]
      %v2019 = vld [vmem:[%s6 + $0x20] sm:$0xff]
      %v2020 = vld [vmem:[%s6 + $0x28] sm:$0xff]
      %v2021 = vld [vmem:[%s6 + $0x30] sm:$0xff]
      %v2022 = vld [vmem:[%s6 + $0x38] sm:$0xff]
      %v2023 = vld [vmem:[%s6 + $0x40] sm:$0xff]
      %v2024 = vld [vmem:[%s6 + $0x48] sm:$0xff]
      %v2025 = vld [vmem:[%s6 + $0x50] sm:$0xff]
      %v2026 = vld [vmem:[%s6 + $0x58] sm:$0xff]
      %v2027 = vld [vmem:[%s6 + $0x60] sm:$0xff]
      %v2028 = vld [vmem:[%s6 + $0x68] sm:$0xff]
      %v2029 = vld [vmem:[%s6 + $0x70] sm:$0xff]
      %v2030 = vld [vmem:[%s6 + $0x78] sm:$0xff]
      %v2031 = vld [vmem:[%s6 + $0x80] sm:$0xff]
      %v2032 = vld [vmem:[%s6 + $0x88] sm:$0xff]
      %v2033 = vld [vmem:[%s6 + $0x90] sm:$0xff]
      %v2034 = vld [vmem:[%s6 + $0x98] sm:$0xff]
      %v2035 = vld [vmem:[%s6 + $0xa0] sm:$0xff]
      %v2036 = vld [vmem:[%s6 + $0xa8] sm:$0xff]
      %v2037 = vld [vmem:[%s6 + $0xb0] sm:$0xff]
      %v2038 = vld [vmem:[%s6 + $0xb8] sm:$0xff]
      %v2039 = vld [vmem:[%s6 + $0xc0] sm:$0xff]
      %v2040 = vld [vmem:[%s6 + $0xc8] sm:$0xff]
      %v2041 = vld [vmem:[%s6 + $0xd0] sm:$0xff]
      %v2042 = vld [vmem:[%s6 + $0xd8] sm:$0xff]
      %v2043 = vld [vmem:[%s6 + $0xe0] sm:$0xff]
      %v2044 = vld [vmem:[%s6 + $0xe8] sm:$0xff]
      %v2045 = vld [vmem:[%s6 + $0xf0] sm:$0xff]
      %v2046 = vld [vmem:[%s6 + $0xf8] sm:$0xff]
      %v2047 = vld [vmem:[%s7] sm:$0xff]
      %v2048 = vld [vmem:[%s7 + $0x8] sm:$0xff]
      %v2049 = vld [vmem:[%s7 + $0x10] sm:$0xff]
      %v2050 = vld [vmem:[%s7 + $0x18] sm:$0xff]
      %v2051 = vld [vmem:[%s7 + $0x20] sm:$0xff]
      %v2052 = vld [vmem:[%s7 + $0x28] sm:$0xff]
      %v2053 = vld [vmem:[%s7 + $0x30] sm:$0xff]
      %v2054 = vld [vmem:[%s7 + $0x38] sm:$0xff]
      %v2055 = vld [vmem:[%s8] sm:$0xff]
      %v2056 = vld [vmem:[%s8 + $0x8] sm:$0xff]
      %v2057 = vld [vmem:[%s8 + $0x10] sm:$0xff]
      %v2058 = vld [vmem:[%s8 + $0x18] sm:$0xff]
      %v2059 = vld [vmem:[%s8 + $0x20] sm:$0xff]
      %v2060 = vld [vmem:[%s8 + $0x28] sm:$0xff]
      %v2061 = vld [vmem:[%s8 + $0x30] sm:$0xff]
      %v2062 = vld [vmem:[%s8 + $0x38] sm:$0xff]
      %v2063 = vld [vmem:[%s8 + $0x40] sm:$0xff]
      %v2064 = vld [vmem:[%s8 + $0x48] sm:$0xff]
      %v2065 = vld [vmem:[%s8 + $0x50] sm:$0xff]
      %v2066 = vld [vmem:[%s8 + $0x58] sm:$0xff]
      %v2067 = vld [vmem:[%s8 + $0x60] sm:$0xff]
      %v2068 = vld [vmem:[%s8 + $0x68] sm:$0xff]
      %v2069 = vld [vmem:[%s8 + $0x70] sm:$0xff]
      %v2070 = vld [vmem:[%s8 + $0x78] sm:$0xff]
      %v2071 = vld [vmem:[%s8 + $0x80] sm:$0xff]
      %v2072 = vld [vmem:[%s8 + $0x88] sm:$0xff]
      %v2073 = vld [vmem:[%s8 + $0x90] sm:$0xff]
      %v2074 = vld [vmem:[%s8 + $0x98] sm:$0xff]
      %v2075 = vld [vmem:[%s8 + $0xa0] sm:$0xff]
      %v2076 = vld [vmem:[%s8 + $0xa8] sm:$0xff]
      %v2077 = vld [vmem:[%s8 + $0xb0] sm:$0xff]
      %v2078 = vld [vmem:[%s8 + $0xb8] sm:$0xff]
      %v2079 = vld [vmem:[%s8 + $0xc0] sm:$0xff]
      %v2080 = vld [vmem:[%s8 + $0xc8] sm:$0xff]
      %v2081 = vld [vmem:[%s8 + $0xd0] sm:$0xff]
      %v2082 = vld [vmem:[%s8 + $0xd8] sm:$0xff]
      %v2083 = vld [vmem:[%s8 + $0xe0] sm:$0xff]
      %v2084 = vld [vmem:[%s8 + $0xe8] sm:$0xff]
      %v2085 = vld [vmem:[%s8 + $0xf0] sm:$0xff]
      %v2086 = vld [vmem:[%s8 + $0xf8] sm:$0xff]
      %v2087 = vld [vmem:[%s9] sm:$0xff]
      %v2088 = vld [vmem:[%s9 + $0x8] sm:$0xff]
      %v2089 = vld [vmem:[%s9 + $0x10] sm:$0xff]
      %v2090 = vld [vmem:[%s9 + $0x18] sm:$0xff]
      %v2091 = vld [vmem:[%s9 + $0x20] sm:$0xff]
      %v2092 = vld [vmem:[%s9 + $0x28] sm:$0xff]
      %v2093 = vld [vmem:[%s9 + $0x30] sm:$0xff]
      %v2094 = vld [vmem:[%s9 + $0x38] sm:$0xff]
      %v2095 = vld [vmem:[%s16] sm:$0xff]
      %v2096 = vld [vmem:[%s16 + $0x8] sm:$0xff]
      %v2097 = vld [vmem:[%s16 + $0x10] sm:$0xff]
      %v2098 = vld [vmem:[%s16 + $0x18] sm:$0xff]
      %s2099 = scalar_lea.vmem %s16, 32
      %v2100 = vld [vmem:[%s2099] sm:$0xff]
      %v2101 = vld [vmem:[%s2099 + $0x8] sm:$0xff]
      %v2102 = vld [vmem:[%s2099 + $0x10] sm:$0xff]
      %v2103 = vld [vmem:[%s2099 + $0x18] sm:$0xff]
      %s2104 = scalar_lea.vmem %s16, 64
      %v2105 = vld [vmem:[%s2104] sm:$0xff]
      %v2106 = vld [vmem:[%s2104 + $0x8] sm:$0xff]
      %v2107 = vld [vmem:[%s2104 + $0x10] sm:$0xff]
      %v2108 = vld [vmem:[%s2104 + $0x18] sm:$0xff]
      %s2109 = scalar_lea.vmem %s16, 96
      %v2110 = vld [vmem:[%s2109] sm:$0xff]
      %v2111 = vld [vmem:[%s2109 + $0x8] sm:$0xff]
      %v2112 = vld [vmem:[%s2109 + $0x10] sm:$0xff]
      %v2113 = vld [vmem:[%s2109 + $0x18] sm:$0xff]
      %v2114 = vld [vmem:[%s17] sm:$0xff]
      %v2115 = vld [vmem:[%s17 + $0x8] sm:$0xff]
      %v2116 = vld [vmem:[%s17 + $0x10] sm:$0xff]
      %v2117 = vld [vmem:[%s17 + $0x18] sm:$0xff]
      %v2118 = vld [vmem:[%s18] sm:$0xff]
      %v2119 = vld [vmem:[%s18 + $0x8] sm:$0xff]
      %v2120 = vld [vmem:[%s18 + $0x10] sm:$0xff]
      %v2121 = vld [vmem:[%s18 + $0x18] sm:$0xff]
      %v2122 = vld [vmem:[%s18 + $0x20] sm:$0xff]
      %v2123 = vld [vmem:[%s18 + $0x28] sm:$0xff]
      %v2124 = vld [vmem:[%s18 + $0x30] sm:$0xff]
      %v2125 = vld [vmem:[%s18 + $0x38] sm:$0xff]
      %v2126 = vld [vmem:[%s18 + $0x40] sm:$0xff]
      %v2127 = vld [vmem:[%s18 + $0x48] sm:$0xff]
      %v2128 = vld [vmem:[%s18 + $0x50] sm:$0xff]
      %v2129 = vld [vmem:[%s18 + $0x58] sm:$0xff]
      %v2130 = vld [vmem:[%s18 + $0x60] sm:$0xff]
      %v2131 = vld [vmem:[%s18 + $0x68] sm:$0xff]
      %v2132 = vld [vmem:[%s18 + $0x70] sm:$0xff]
      %v2133 = vld [vmem:[%s18 + $0x78] sm:$0xff]
      %v2134 = vld [vmem:[%s19] sm:$0x1]
      %v2135 = vld [vmem:[%s20] sm:$0xff]
      %v2136 = vld [vmem:[%s20 + $0x8] sm:$0xff]
      %v2137 = vsel %vm913, %v1871, 0.0
      %2138 = vadd.xlane.f32.xlu0 %v2137
      %v2139 = vpop.xlane.xlu0 %2138
      %v2140 = vsel %vm913, %v1874, 0.0
      %2141 = vadd.xlane.f32.xlu0 %v2140
      %v2142 = vpop.xlane.xlu0 %2141
      %v2143 = vsel %vm913, %v1877, 0.0
      %2144 = vadd.xlane.f32.xlu0 %v2143
      %v2145 = vpop.xlane.xlu0 %2144
      %v2146 = vsel %vm913, %v1880, 0.0
      %2147 = vadd.xlane.f32.xlu0 %v2146
      %v2148 = vpop.xlane.xlu0 %2147
      %v2149 = vsel %vm913, %v1883, 0.0
      %2150 = vadd.xlane.f32.xlu0 %v2149
      %v2151 = vpop.xlane.xlu0 %2150
      %v2152 = vsel %vm913, %v1886, 0.0
      %2153 = vadd.xlane.f32.xlu0 %v2152
      %v2154 = vpop.xlane.xlu0 %2153
      %v2155 = vsel %vm913, %v1889, 0.0
      %2156 = vadd.xlane.f32.xlu0 %v2155
      %v2157 = vpop.xlane.xlu0 %2156
      %v2158 = vsel %vm913, %v1892, 0.0
      %2159 = vadd.xlane.f32.xlu0 %v2158
      %v2160 = vpop.xlane.xlu0 %2159
      %v2161 = vmul.f32 %v2139, %v968
      %v2162 = vmul.f32 %v2142, %v968
      %v2163 = vmul.f32 %v2145, %v968
      %v2164 = vmul.f32 %v2148, %v968
      %v2165 = vmul.f32 %v2151, %v968
      %v2166 = vmul.f32 %v2154, %v968
      %v2167 = vmul.f32 %v2157, %v968
      %v2168 = vmul.f32 %v2160, %v968
      %v2169 = vsub.f32 %v1871, %v2161
      %v2170 = vsub.f32 %v1874, %v2162
      %v2171 = vsub.f32 %v1877, %v2163
      %v2172 = vsub.f32 %v1880, %v2164
      %v2173 = vsub.f32 %v1883, %v2165
      %v2174 = vsub.f32 %v1886, %v2166
      %v2175 = vsub.f32 %v1889, %v2167
      %v2176 = vsub.f32 %v1892, %v2168
      %v2177 = vmul.f32 %v2169, %v2169
      %v2178 = vmul.f32 %v2170, %v2170
      %v2179 = vmul.f32 %v2171, %v2171
      %v2180 = vmul.f32 %v2172, %v2172
      %v2181 = vmul.f32 %v2173, %v2173
      %v2182 = vmul.f32 %v2174, %v2174
      %v2183 = vmul.f32 %v2175, %v2175
      %v2184 = vmul.f32 %v2176, %v2176
      %v2185 = vsel %vm913, %v2177, 0.0
      %2186 = vadd.xlane.f32.xlu0 %v2185
      %v2187 = vpop.xlane.xlu0 %2186
      %v2188 = vsel %vm913, %v2178, 0.0
      %2189 = vadd.xlane.f32.xlu0 %v2188
      %v2190 = vpop.xlane.xlu0 %2189
      %v2191 = vsel %vm913, %v2179, 0.0
      %2192 = vadd.xlane.f32.xlu0 %v2191
      %v2193 = vpop.xlane.xlu0 %2192
      %v2194 = vsel %vm913, %v2180, 0.0
      %2195 = vadd.xlane.f32.xlu0 %v2194
      %v2196 = vpop.xlane.xlu0 %2195
      %v2197 = vsel %vm913, %v2181, 0.0
      %2198 = vadd.xlane.f32.xlu0 %v2197
      %v2199 = vpop.xlane.xlu0 %2198
      %v2200 = vsel %vm913, %v2182, 0.0
      %2201 = vadd.xlane.f32.xlu0 %v2200
      %v2202 = vpop.xlane.xlu0 %2201
      %v2203 = vsel %vm913, %v2183, 0.0
      %2204 = vadd.xlane.f32.xlu0 %v2203
      %v2205 = vpop.xlane.xlu0 %2204
      %v2206 = vsel %vm913, %v2184, 0.0
      %2207 = vadd.xlane.f32.xlu0 %v2206
      %v2208 = vpop.xlane.xlu0 %2207
      %v2209 = vmul.f32 %v2187, %v968
      %v2210 = vmul.f32 %v2190, %v968
      %v2211 = vmul.f32 %v2193, %v968
      %v2212 = vmul.f32 %v2196, %v968
      %v2213 = vmul.f32 %v2199, %v968
      %v2214 = vmul.f32 %v2202, %v968
      %v2215 = vmul.f32 %v2205, %v968
      %v2216 = vmul.f32 %v2208, %v968
      %v2217 = vadd.f32 %v2209, 1e-06
      %v2218 = vadd.f32 %v2210, 1e-06
      %v2219 = vadd.f32 %v2211, 1e-06
      %v2220 = vadd.f32 %v2212, 1e-06
      %v2221 = vadd.f32 %v2213, 1e-06
      %v2222 = vadd.f32 %v2214, 1e-06
      %v2223 = vadd.f32 %v2215, 1e-06
      %v2224 = vadd.f32 %v2216, 1e-06
      %v2225 = vrsqrt.pop %v2217
      %v2226 = vmul.f32 %v2225, %v2217
      %v2227 = vmul.f32 %v2226, %v2225
      %v2228 = vmul.f32 0.5, %v2227
      %v2229 = vsub.f32 1.5, %v2228
      %v2230 = vmul.f32 %v2225, %v2229
      %vm2231 = vweird.f32 %v2217
      %vm2232 = vweird.f32 %v2225
      %vm2233 = vmor %vm2231, %vm2232
      %v2234 = vsel %vm2233, %v2225, %v2230
      %v2235 = vrsqrt.pop %v2218
      %v2236 = vmul.f32 %v2235, %v2218
      %v2237 = vmul.f32 %v2236, %v2235
      %v2238 = vmul.f32 0.5, %v2237
      %v2239 = vsub.f32 1.5, %v2238
      %v2240 = vmul.f32 %v2235, %v2239
      %vm2241 = vweird.f32 %v2218
      %vm2242 = vweird.f32 %v2235
      %vm2243 = vmor %vm2241, %vm2242
      %v2244 = vsel %vm2243, %v2235, %v2240
      %v2245 = vrsqrt.pop %v2219
      %v2246 = vmul.f32 %v2245, %v2219
      %v2247 = vmul.f32 %v2246, %v2245
      %v2248 = vmul.f32 0.5, %v2247
      %v2249 = vsub.f32 1.5, %v2248
      %v2250 = vmul.f32 %v2245, %v2249
      %vm2251 = vweird.f32 %v2219
      %vm2252 = vweird.f32 %v2245
      %vm2253 = vmor %vm2251, %vm2252
      %v2254 = vsel %vm2253, %v2245, %v2250
      %v2255 = vrsqrt.pop %v2220
      %v2256 = vmul.f32 %v2255, %v2220
      %v2257 = vmul.f32 %v2256, %v2255
      %v2258 = vmul.f32 0.5, %v2257
      %v2259 = vsub.f32 1.5, %v2258
      %v2260 = vmul.f32 %v2255, %v2259
      %vm2261 = vweird.f32 %v2220
      %vm2262 = vweird.f32 %v2255
      %vm2263 = vmor %vm2261, %vm2262
      %v2264 = vsel %vm2263, %v2255, %v2260
      %v2265 = vrsqrt.pop %v2221
      %v2266 = vmul.f32 %v2265, %v2221
      %v2267 = vmul.f32 %v2266, %v2265
      %v2268 = vmul.f32 0.5, %v2267
      %v2269 = vsub.f32 1.5, %v2268
      %v2270 = vmul.f32 %v2265, %v2269
      %vm2271 = vweird.f32 %v2221
      %vm2272 = vweird.f32 %v2265
      %vm2273 = vmor %vm2271, %vm2272
      %v2274 = vsel %vm2273, %v2265, %v2270
      %v2275 = vrsqrt.pop %v2222
      %v2276 = vmul.f32 %v2275, %v2222
      %v2277 = vmul.f32 %v2276, %v2275
      %v2278 = vmul.f32 0.5, %v2277
      %v2279 = vsub.f32 1.5, %v2278
      %v2280 = vmul.f32 %v2275, %v2279
      %vm2281 = vweird.f32 %v2222
      %vm2282 = vweird.f32 %v2275
      %vm2283 = vmor %vm2281, %vm2282
      %v2284 = vsel %vm2283, %v2275, %v2280
      %v2285 = vrsqrt.pop %v2223
      %v2286 = vmul.f32 %v2285, %v2223
      %v2287 = vmul.f32 %v2286, %v2285
      %v2288 = vmul.f32 0.5, %v2287
      %v2289 = vsub.f32 1.5, %v2288
      %v2290 = vmul.f32 %v2285, %v2289
      %vm2291 = vweird.f32 %v2223
      %vm2292 = vweird.f32 %v2285
      %vm2293 = vmor %vm2291, %vm2292
      %v2294 = vsel %vm2293, %v2285, %v2290
      %v2295 = vrsqrt.pop %v2224
      %v2296 = vmul.f32 %v2295, %v2224
      %v2297 = vmul.f32 %v2296, %v2295
      %v2298 = vmul.f32 0.5, %v2297
      %v2299 = vsub.f32 1.5, %v2298
      %v2300 = vmul.f32 %v2295, %v2299
      %vm2301 = vweird.f32 %v2224
      %vm2302 = vweird.f32 %v2295
      %vm2303 = vmor %vm2301, %vm2302
      %v2304 = vsel %vm2303, %v2295, %v2300
      %v2305 = vmul.f32 %v2169, %v2234
      %v2306 = vmul.f32 %v2170, %v2244
      %v2307 = vmul.f32 %v2171, %v2254
      %v2308 = vmul.f32 %v2172, %v2264
      %v2309 = vmul.f32 %v2173, %v2274
      %v2310 = vmul.f32 %v2174, %v2284
      %v2311 = vmul.f32 %v2175, %v2294
      %v2312 = vmul.f32 %v2176, %v2304
      %v2313 = vperm.slane %v2135, 0
      %v2314 = vmul.f32 %v2305, %v2313
      %v2315 = vmul.f32 %v2306, %v2313
      %v2316 = vmul.f32 %v2307, %v2313
      %v2317 = vmul.f32 %v2308, %v2313
      %v2318 = vmul.f32 %v2309, %v2313
      %v2319 = vmul.f32 %v2310, %v2313
      %v2320 = vmul.f32 %v2311, %v2313
      %v2321 = vmul.f32 %v2312, %v2313
      %v2322 = vperm.slane %v2135, 1
      %v2323 = vadd.f32 %v2314, %v2322
      %v2324 = vadd.f32 %v2315, %v2322
      %v2325 = vadd.f32 %v2316, %v2322
      %v2326 = vadd.f32 %v2317, %v2322
      %v2327 = vadd.f32 %v2318, %v2322
      %v2328 = vadd.f32 %v2319, %v2322
      %v2329 = vadd.f32 %v2320, %v2322
      %v2330 = vadd.f32 %v2321, %v2322
      %v2331 = vsel %vm913, %v1895, 0.0
      %2332 = vadd.xlane.f32.xlu0 %v2331
      %v2333 = vpop.xlane.xlu0 %2332
      %v2334 = vsel %vm913, %v1898, 0.0
      %2335 = vadd.xlane.f32.xlu0 %v2334
      %v2336 = vpop.xlane.xlu0 %2335
      %v2337 = vsel %vm913, %v1901, 0.0
      %2338 = vadd.xlane.f32.xlu0 %v2337
      %v2339 = vpop.xlane.xlu0 %2338
      %v2340 = vsel %vm913, %v1904, 0.0
      %2341 = vadd.xlane.f32.xlu0 %v2340
      %v2342 = vpop.xlane.xlu0 %2341
      %v2343 = vsel %vm913, %v1907, 0.0
      %2344 = vadd.xlane.f32.xlu0 %v2343
      %v2345 = vpop.xlane.xlu0 %2344
      %v2346 = vsel %vm913, %v1910, 0.0
      %2347 = vadd.xlane.f32.xlu0 %v2346
      %v2348 = vpop.xlane.xlu0 %2347
      %v2349 = vsel %vm913, %v1913, 0.0
      %2350 = vadd.xlane.f32.xlu0 %v2349
      %v2351 = vpop.xlane.xlu0 %2350
      %v2352 = vsel %vm913, %v1916, 0.0
      %2353 = vadd.xlane.f32.xlu0 %v2352
      %v2354 = vpop.xlane.xlu0 %2353
      %v2355 = vmul.f32 %v2333, %v968
      %v2356 = vmul.f32 %v2336, %v968
      %v2357 = vmul.f32 %v2339, %v968
      %v2358 = vmul.f32 %v2342, %v968
      %v2359 = vmul.f32 %v2345, %v968
      %v2360 = vmul.f32 %v2348, %v968
      %v2361 = vmul.f32 %v2351, %v968
      %v2362 = vmul.f32 %v2354, %v968
      %v2363 = vsub.f32 %v1895, %v2355
      %v2364 = vsub.f32 %v1898, %v2356
      %v2365 = vsub.f32 %v1901, %v2357
      %v2366 = vsub.f32 %v1904, %v2358
      %v2367 = vsub.f32 %v1907, %v2359
      %v2368 = vsub.f32 %v1910, %v2360
      %v2369 = vsub.f32 %v1913, %v2361
      %v2370 = vsub.f32 %v1916, %v2362
      %v2371 = vmul.f32 %v2363, %v2363
      %v2372 = vmul.f32 %v2364, %v2364
      %v2373 = vmul.f32 %v2365, %v2365
      %v2374 = vmul.f32 %v2366, %v2366
      %v2375 = vmul.f32 %v2367, %v2367
      %v2376 = vmul.f32 %v2368, %v2368
      %v2377 = vmul.f32 %v2369, %v2369
      %v2378 = vmul.f32 %v2370, %v2370
      %v2379 = vsel %vm913, %v2371, 0.0
      %2380 = vadd.xlane.f32.xlu0 %v2379
      %v2381 = vpop.xlane.xlu0 %2380
      %v2382 = vsel %vm913, %v2372, 0.0
      %2383 = vadd.xlane.f32.xlu0 %v2382
      %v2384 = vpop.xlane.xlu0 %2383
      %v2385 = vsel %vm913, %v2373, 0.0
      %2386 = vadd.xlane.f32.xlu0 %v2385
      %v2387 = vpop.xlane.xlu0 %2386
      %v2388 = vsel %vm913, %v2374, 0.0
      %2389 = vadd.xlane.f32.xlu0 %v2388
      %v2390 = vpop.xlane.xlu0 %2389
      %v2391 = vsel %vm913, %v2375, 0.0
      %2392 = vadd.xlane.f32.xlu0 %v2391
      %v2393 = vpop.xlane.xlu0 %2392
      %v2394 = vsel %vm913, %v2376, 0.0
      %2395 = vadd.xlane.f32.xlu0 %v2394
      %v2396 = vpop.xlane.xlu0 %2395
      %v2397 = vsel %vm913, %v2377, 0.0
      %2398 = vadd.xlane.f32.xlu0 %v2397
      %v2399 = vpop.xlane.xlu0 %2398
      %v2400 = vsel %vm913, %v2378, 0.0
      %2401 = vadd.xlane.f32.xlu0 %v2400
      %v2402 = vpop.xlane.xlu0 %2401
      %v2403 = vmul.f32 %v2381, %v968
      %v2404 = vmul.f32 %v2384, %v968
      %v2405 = vmul.f32 %v2387, %v968
      %v2406 = vmul.f32 %v2390, %v968
      %v2407 = vmul.f32 %v2393, %v968
      %v2408 = vmul.f32 %v2396, %v968
      %v2409 = vmul.f32 %v2399, %v968
      %v2410 = vmul.f32 %v2402, %v968
      %v2411 = vadd.f32 %v2403, 1e-06
      %v2412 = vadd.f32 %v2404, 1e-06
      %v2413 = vadd.f32 %v2405, 1e-06
      %v2414 = vadd.f32 %v2406, 1e-06
      %v2415 = vadd.f32 %v2407, 1e-06
      %v2416 = vadd.f32 %v2408, 1e-06
      %v2417 = vadd.f32 %v2409, 1e-06
      %v2418 = vadd.f32 %v2410, 1e-06
      %v2419 = vrsqrt.pop %v2411
      %v2420 = vmul.f32 %v2419, %v2411
      %v2421 = vmul.f32 %v2420, %v2419
      %v2422 = vmul.f32 0.5, %v2421
      %v2423 = vsub.f32 1.5, %v2422
      %v2424 = vmul.f32 %v2419, %v2423
      %vm2425 = vweird.f32 %v2411
      %vm2426 = vweird.f32 %v2419
      %vm2427 = vmor %vm2425, %vm2426
      %v2428 = vsel %vm2427, %v2419, %v2424
      %v2429 = vrsqrt.pop %v2412
      %v2430 = vmul.f32 %v2429, %v2412
      %v2431 = vmul.f32 %v2430, %v2429
      %v2432 = vmul.f32 0.5, %v2431
      %v2433 = vsub.f32 1.5, %v2432
      %v2434 = vmul.f32 %v2429, %v2433
      %vm2435 = vweird.f32 %v2412
      %vm2436 = vweird.f32 %v2429
      %vm2437 = vmor %vm2435, %vm2436
      %v2438 = vsel %vm2437, %v2429, %v2434
      %v2439 = vrsqrt.pop %v2413
      %v2440 = vmul.f32 %v2439, %v2413
      %v2441 = vmul.f32 %v2440, %v2439
      %v2442 = vmul.f32 0.5, %v2441
      %v2443 = vsub.f32 1.5, %v2442
      %v2444 = vmul.f32 %v2439, %v2443
      %vm2445 = vweird.f32 %v2413
      %vm2446 = vweird.f32 %v2439
      %vm2447 = vmor %vm2445, %vm2446
      %v2448 = vsel %vm2447, %v2439, %v2444
      %v2449 = vrsqrt.pop %v2414
      %v2450 = vmul.f32 %v2449, %v2414
      %v2451 = vmul.f32 %v2450, %v2449
      %v2452 = vmul.f32 0.5, %v2451
      %v2453 = vsub.f32 1.5, %v2452
      %v2454 = vmul.f32 %v2449, %v2453
      %vm2455 = vweird.f32 %v2414
      %vm2456 = vweird.f32 %v2449
      %vm2457 = vmor %vm2455, %vm2456
      %v2458 = vsel %vm2457, %v2449, %v2454
      %v2459 = vrsqrt.pop %v2415
      %v2460 = vmul.f32 %v2459, %v2415
      %v2461 = vmul.f32 %v2460, %v2459
      %v2462 = vmul.f32 0.5, %v2461
      %v2463 = vsub.f32 1.5, %v2462
      %v2464 = vmul.f32 %v2459, %v2463
      %vm2465 = vweird.f32 %v2415
      %vm2466 = vweird.f32 %v2459
      %vm2467 = vmor %vm2465, %vm2466
      %v2468 = vsel %vm2467, %v2459, %v2464
      %v2469 = vrsqrt.pop %v2416
      %v2470 = vmul.f32 %v2469, %v2416
      %v2471 = vmul.f32 %v2470, %v2469
      %v2472 = vmul.f32 0.5, %v2471
      %v2473 = vsub.f32 1.5, %v2472
      %v2474 = vmul.f32 %v2469, %v2473
      %vm2475 = vweird.f32 %v2416
      %vm2476 = vweird.f32 %v2469
      %vm2477 = vmor %vm2475, %vm2476
      %v2478 = vsel %vm2477, %v2469, %v2474
      %v2479 = vrsqrt.pop %v2417
      %v2480 = vmul.f32 %v2479, %v2417
      %v2481 = vmul.f32 %v2480, %v2479
      %v2482 = vmul.f32 0.5, %v2481
      %v2483 = vsub.f32 1.5, %v2482
      %v2484 = vmul.f32 %v2479, %v2483
      %vm2485 = vweird.f32 %v2417
      %vm2486 = vweird.f32 %v2479
      %vm2487 = vmor %vm2485, %vm2486
      %v2488 = vsel %vm2487, %v2479, %v2484
      %v2489 = vrsqrt.pop %v2418
      %v2490 = vmul.f32 %v2489, %v2418
      %v2491 = vmul.f32 %v2490, %v2489
      %v2492 = vmul.f32 0.5, %v2491
      %v2493 = vsub.f32 1.5, %v2492
      %v2494 = vmul.f32 %v2489, %v2493
      %vm2495 = vweird.f32 %v2418
      %vm2496 = vweird.f32 %v2489
      %vm2497 = vmor %vm2495, %vm2496
      %v2498 = vsel %vm2497, %v2489, %v2494
      %v2499 = vmul.f32 %v2363, %v2428
      %v2500 = vmul.f32 %v2364, %v2438
      %v2501 = vmul.f32 %v2365, %v2448
      %v2502 = vmul.f32 %v2366, %v2458
      %v2503 = vmul.f32 %v2367, %v2468
      %v2504 = vmul.f32 %v2368, %v2478
      %v2505 = vmul.f32 %v2369, %v2488
      %v2506 = vmul.f32 %v2370, %v2498
      %v2507 = vperm.slane %v2135, 2
      %v2508 = vmul.f32 %v2499, %v2507
      %v2509 = vmul.f32 %v2500, %v2507
      %v2510 = vmul.f32 %v2501, %v2507
      %v2511 = vmul.f32 %v2502, %v2507
      %v2512 = vmul.f32 %v2503, %v2507
      %v2513 = vmul.f32 %v2504, %v2507
      %v2514 = vmul.f32 %v2505, %v2507
      %v2515 = vmul.f32 %v2506, %v2507
      %v2516 = vperm.slane %v2135, 3
      %v2517 = vadd.f32 %v2508, %v2516
      %v2518 = vadd.f32 %v2509, %v2516
      %v2519 = vadd.f32 %v2510, %v2516
      %v2520 = vadd.f32 %v2511, %v2516
      %v2521 = vadd.f32 %v2512, %v2516
      %v2522 = vadd.f32 %v2513, %v2516
      %v2523 = vadd.f32 %v2514, %v2516
      %v2524 = vadd.f32 %v2515, %v2516
      %v2525 = vadd.f32 %v2323, %v1936
      %v2526 = vadd.f32 %v2324, %v1939
      %v2527 = vadd.f32 %v2325, %v1942
      %v2528 = vadd.f32 %v2326, %v1945
      %v2529 = vadd.f32 %v2327, %v1948
      %v2530 = vadd.f32 %v2328, %v1951
      %v2531 = vadd.f32 %v2329, %v1954
      %v2532 = vadd.f32 %v2330, %v1957
      %v2533 = vperm.slane %v2135, 4
      %v2535 = vsel %vm913, %v2525, 0
      %v2538 = vsel %vm913, %v2526, 0
      %v2541 = vsel %vm913, %v2527, 0
      %v2544 = vsel %vm913, %v2528, 0
      %v2547 = vsel %vm913, %v2529, 0
      %v2550 = vsel %vm913, %v2530, 0
      %v2553 = vsel %vm913, %v2531, 0
      %v2556 = vsel %vm913, %v2532, 0
      %2558 = vmatpush.msra.mxu0 0.0
      %2559 = vmatpush.msra.mxu0 0.0
      %2560 = vmatpush.msra.mxu0 0.0
      %2561 = vmatpush.msra.mxu0 0.0
      %2562 = vmatpush.msra.mxu0 0.0
      %2563 = vmatpush.msra.mxu0 0.0
      %2564 = vmatpush.msra.mxu0 0.0
      %2565 = vmatpush.msra.mxu0 0.0
      %2566 = vmatpush.msra.mxu0 0.0
      %2567 = vmatpush.msra.mxu0 0.0
      %2568 = vmatpush.msra.mxu0 0.0
      %2569 = vmatpush.msra.mxu0 0.0
      %2570 = vmatpush.msra.mxu0 %v2098
      %2571 = vmatpush.msra.mxu0 %v2097
      %2572 = vmatpush.msra.mxu0 %v2096
      %2573 = vmatpush.msra.mxu0 %v2095
      %2574 = vmatmul.f32.gmra.mxu0 %v2535
      %v2575 = vpop.f32.mrf.mxu0
      %v2576 = vadd.f32 %v2533, %v2575
      %2577 = vmatmul.f32.gmra.mxu0 %v2538
      %v2578 = vpop.f32.mrf.mxu0
      %v2579 = vadd.f32 %v2533, %v2578
      %2580 = vmatmul.f32.gmra.mxu0 %v2541
      %v2581 = vpop.f32.mrf.mxu0
      %v2582 = vadd.f32 %v2533, %v2581
      %2583 = vmatmul.f32.gmra.mxu0 %v2544
      %v2584 = vpop.f32.mrf.mxu0
      %v2585 = vadd.f32 %v2533, %v2584
      %2586 = vmatmul.f32.gmra.mxu0 %v2547
      %v2587 = vpop.f32.mrf.mxu0
      %v2588 = vadd.f32 %v2533, %v2587
      %2589 = vmatmul.f32.gmra.mxu0 %v2550
      %v2590 = vpop.f32.mrf.mxu0
      %v2591 = vadd.f32 %v2533, %v2590
      %2592 = vmatmul.f32.gmra.mxu0 %v2553
      %v2593 = vpop.f32.mrf.mxu0
      %v2594 = vadd.f32 %v2533, %v2593
      %2595 = vmatmul.f32.gmra.mxu0 %v2556
      %v2596 = vpop.f32.mrf.mxu0
      %v2597 = vadd.f32 %v2533, %v2596
      %2598 = vdwg.mxu0
      %v2599 = vadd.f32 %v2517, %v1960
      %v2600 = vadd.f32 %v2518, %v1963
      %v2601 = vadd.f32 %v2519, %v1966
      %v2602 = vadd.f32 %v2520, %v1969
      %v2603 = vadd.f32 %v2521, %v1972
      %v2604 = vadd.f32 %v2522, %v1975
      %v2605 = vadd.f32 %v2523, %v1978
      %v2606 = vadd.f32 %v2524, %v1981
      %v2608 = vsel %vm913, %v2100, 0
      %v2611 = vsel %vm913, %v2101, 0
      %v2614 = vsel %vm913, %v2102, 0
      %v2617 = vsel %vm913, %v2103, 0
      %v2620 = vsel %vm913, %v2599, 0
      %v2623 = vsel %vm913, %v2600, 0
      %v2626 = vsel %vm913, %v2601, 0
      %v2629 = vsel %vm913, %v2602, 0
      %v2632 = vsel %vm913, %v2603, 0
      %v2635 = vsel %vm913, %v2604, 0
      %v2638 = vsel %vm913, %v2605, 0
      %v2641 = vsel %vm913, %v2606, 0
      %2643 = vmatpush.xpose.msra.mxu0 0.0
      %2644 = vmatpush.xpose.msra.mxu0 0.0
      %2645 = vmatpush.xpose.msra.mxu0 0.0
      %2646 = vmatpush.xpose.msra.mxu0 0.0
      %2647 = vmatpush.xpose.msra.mxu0 0.0
      %2648 = vmatpush.xpose.msra.mxu0 0.0
      %2649 = vmatpush.xpose.msra.mxu0 0.0
      %2650 = vmatpush.xpose.msra.mxu0 0.0
      %2651 = vmatpush.xpose.msra.mxu0 %v2641
      %2652 = vmatpush.xpose.msra.mxu0 %v2638
      %2653 = vmatpush.xpose.msra.mxu0 %v2635
      %2654 = vmatpush.xpose.msra.mxu0 %v2632
      %2655 = vmatpush.xpose.msra.mxu0 %v2629
      %2656 = vmatpush.xpose.msra.mxu0 %v2626
      %2657 = vmatpush.xpose.msra.mxu0 %v2623
      %2658 = vmatpush.xpose.msra.mxu0 %v2620
      %2659 = vmatmul.f32.gmra.mxu0 %v2608
      %v2660 = vpop.f32.mrf.mxu0
      %v2661 = vadd.f32 0.0, %v2660
      %2662 = vmatmul.f32.gmra.mxu0 %v2611
      %v2663 = vpop.f32.mrf.mxu0
      %v2664 = vadd.f32 0.0, %v2663
      %2665 = vmatmul.f32.gmra.mxu0 %v2614
      %v2666 = vpop.f32.mrf.mxu0
      %v2667 = vadd.f32 0.0, %v2666
      %2668 = vmatmul.f32.gmra.mxu0 %v2617
      %v2669 = vpop.f32.mrf.mxu0
      %v2670 = vadd.f32 0.0, %v2669
      %2671 = vdwg.mxu0
      %v2672 = vperm.slane %v2135, 6
      %v2674 = vsel %vm913, %v2517, 0
      %v2677 = vsel %vm913, %v2518, 0
      %v2680 = vsel %vm913, %v2519, 0
      %v2683 = vsel %vm913, %v2520, 0
      %v2686 = vsel %vm913, %v2521, 0
      %v2689 = vsel %vm913, %v2522, 0
      %v2692 = vsel %vm913, %v2523, 0
      %v2695 = vsel %vm913, %v2524, 0
      %2697 = vmatpush.msra.mxu0 0.0
      %2698 = vmatpush.msra.mxu0 0.0
      %2699 = vmatpush.msra.mxu0 0.0
      %2700 = vmatpush.msra.mxu0 0.0
      %2701 = vmatpush.msra.mxu0 0.0
      %2702 = vmatpush.msra.mxu0 0.0
      %2703 = vmatpush.msra.mxu0 0.0
      %2704 = vmatpush.msra.mxu0 0.0
      %2705 = vmatpush.msra.mxu0 0.0
      %2706 = vmatpush.msra.mxu0 0.0
      %2707 = vmatpush.msra.mxu0 0.0
      %2708 = vmatpush.msra.mxu0 0.0
      %2709 = vmatpush.msra.mxu0 %v2108
      %2710 = vmatpush.msra.mxu0 %v2107
      %2711 = vmatpush.msra.mxu0 %v2106
      %2712 = vmatpush.msra.mxu0 %v2105
      %2713 = vmatmul.f32.gmra.mxu0 %v2674
      %v2714 = vpop.f32.mrf.mxu0
      %v2715 = vadd.f32 %v2672, %v2714
      %2716 = vmatmul.f32.gmra.mxu0 %v2677
      %v2717 = vpop.f32.mrf.mxu0
      %v2718 = vadd.f32 %v2672, %v2717
      %2719 = vmatmul.f32.gmra.mxu0 %v2680
      %v2720 = vpop.f32.mrf.mxu0
      %v2721 = vadd.f32 %v2672, %v2720
      %2722 = vmatmul.f32.gmra.mxu0 %v2683
      %v2723 = vpop.f32.mrf.mxu0
      %v2724 = vadd.f32 %v2672, %v2723
      %2725 = vmatmul.f32.gmra.mxu0 %v2686
      %v2726 = vpop.f32.mrf.mxu0
      %v2727 = vadd.f32 %v2672, %v2726
      %2728 = vmatmul.f32.gmra.mxu0 %v2689
      %v2729 = vpop.f32.mrf.mxu0
      %v2730 = vadd.f32 %v2672, %v2729
      %2731 = vmatmul.f32.gmra.mxu0 %v2692
      %v2732 = vpop.f32.mrf.mxu0
      %v2733 = vadd.f32 %v2672, %v2732
      %2734 = vmatmul.f32.gmra.mxu0 %v2695
      %v2735 = vpop.f32.mrf.mxu0
      %v2736 = vadd.f32 %v2672, %v2735
      %2737 = vdwg.mxu0
      %2742 = vrot.lane.b32.xlu0 %v2661, 64
      %v2743 = vpop.permute.xlu0 %2742
      %2744 = vrot.lane.b32.xlu0 %v2664, 64
      %v2745 = vpop.permute.xlu0 %2744
      %2746 = vrot.lane.b32.xlu0 %v2667, 64
      %v2747 = vpop.permute.xlu0 %2746
      %2748 = vrot.lane.b32.xlu0 %v2670, 64
      %v2749 = vpop.permute.xlu0 %2748
      %vm2754 = vcmask 523264
      %v2755 = vsel %vm2754, %v2661, %v2743
      %v2756 = vsel %vm2754, %v2664, %v2745
      %v2757 = vsel %vm2754, %v2667, %v2747
      %v2758 = vsel %vm2754, %v2670, %v2749
      %v2759 = vmul.f32 %v2755, %v2047
      %v2760 = vmul.f32 %v2755, %v2048
      %v2761 = vmul.f32 %v2756, %v2049
      %v2762 = vmul.f32 %v2756, %v2050
      %v2763 = vmul.f32 %v2757, %v2051
      %v2764 = vmul.f32 %v2757, %v2052
      %v2765 = vmul.f32 %v2758, %v2053
      %v2766 = vmul.f32 %v2758, %v2054
      %v2767 = vmul.f32 %v2715, %v2015
      %v2768 = vmul.f32 %v2718, %v2016
      %v2769 = vmul.f32 %v2721, %v2017
      %v2770 = vmul.f32 %v2724, %v2018
      %v2771 = vmul.f32 %v2727, %v2019
      %v2772 = vmul.f32 %v2730, %v2020
      %v2773 = vmul.f32 %v2733, %v2021
      %v2774 = vmul.f32 %v2736, %v2022
      %v2775 = vmul.f32 %v2715, %v2023
      %v2776 = vmul.f32 %v2718, %v2024
      %v2777 = vmul.f32 %v2721, %v2025
      %v2778 = vmul.f32 %v2724, %v2026
      %v2779 = vmul.f32 %v2727, %v2027
      %v2780 = vmul.f32 %v2730, %v2028
      %v2781 = vmul.f32 %v2733, %v2029
      %v2782 = vmul.f32 %v2736, %v2030
      %v2783 = vmul.f32 %v2715, %v2031
      %v2784 = vmul.f32 %v2718, %v2032
      %v2785 = vmul.f32 %v2721, %v2033
      %v2786 = vmul.f32 %v2724, %v2034
      %v2787 = vmul.f32 %v2727, %v2035
      %v2788 = vmul.f32 %v2730, %v2036
      %v2789 = vmul.f32 %v2733, %v2037
      %v2790 = vmul.f32 %v2736, %v2038
      %v2791 = vmul.f32 %v2715, %v2039
      %v2792 = vmul.f32 %v2718, %v2040
      %v2793 = vmul.f32 %v2721, %v2041
      %v2794 = vmul.f32 %v2724, %v2042
      %v2795 = vmul.f32 %v2727, %v2043
      %v2796 = vmul.f32 %v2730, %v2044
      %v2797 = vmul.f32 %v2733, %v2045
      %v2798 = vmul.f32 %v2736, %v2046
      %v2800 = vsel %vm913, %v2576, 0
      %v2803 = vsel %vm913, %v2579, 0
      %v2806 = vsel %vm913, %v2582, 0
      %v2809 = vsel %vm913, %v2585, 0
      %v2812 = vsel %vm913, %v2588, 0
      %v2815 = vsel %vm913, %v2591, 0
      %v2818 = vsel %vm913, %v2594, 0
      %v2821 = vsel %vm913, %v2597, 0
      %2823 = vmatpush.msra.mxu0 0.0
      %2824 = vmatpush.msra.mxu0 0.0
      %2825 = vmatpush.msra.mxu0 0.0
      %2826 = vmatpush.msra.mxu0 0.0
      %2827 = vmatpush.msra.mxu0 0.0
      %2828 = vmatpush.msra.mxu0 0.0
      %2829 = vmatpush.msra.mxu0 0.0
      %2830 = vmatpush.msra.mxu0 0.0
      %2831 = vmatpush.msra.mxu0 0.0
      %2832 = vmatpush.msra.mxu0 0.0
      %2833 = vmatpush.msra.mxu0 0.0
      %2834 = vmatpush.msra.mxu0 0.0
      %2835 = vmatpush.msra.mxu0 %v2765
      %2836 = vmatpush.msra.mxu0 %v2763
      %2837 = vmatpush.msra.mxu0 %v2761
      %2838 = vmatpush.msra.mxu0 %v2759
      %2839 = vmatmul.f32.gmra.mxu0 %v2800
      %v2840 = vpop.f32.mrf.mxu0
      %v2841 = vadd.f32 0.0, %v2840
      %2842 = vmatmul.f32.gmra.mxu0 %v2803
      %v2843 = vpop.f32.mrf.mxu0
      %v2844 = vadd.f32 0.0, %v2843
      %2845 = vmatmul.f32.gmra.mxu0 %v2806
      %v2846 = vpop.f32.mrf.mxu0
      %v2847 = vadd.f32 0.0, %v2846
      %2848 = vmatmul.f32.gmra.mxu0 %v2809
      %v2849 = vpop.f32.mrf.mxu0
      %v2850 = vadd.f32 0.0, %v2849
      %2851 = vmatmul.f32.gmra.mxu0 %v2812
      %v2852 = vpop.f32.mrf.mxu0
      %v2853 = vadd.f32 0.0, %v2852
      %2854 = vmatmul.f32.gmra.mxu0 %v2815
      %v2855 = vpop.f32.mrf.mxu0
      %v2856 = vadd.f32 0.0, %v2855
      %2857 = vmatmul.f32.gmra.mxu0 %v2818
      %v2858 = vpop.f32.mrf.mxu0
      %v2859 = vadd.f32 0.0, %v2858
      %2860 = vmatmul.f32.gmra.mxu0 %v2821
      %v2861 = vpop.f32.mrf.mxu0
      %v2862 = vadd.f32 0.0, %v2861
      %2863 = vdwg.mxu0
      %2864 = vmatpush.msra.mxu0 0.0
      %2865 = vmatpush.msra.mxu0 0.0
      %2866 = vmatpush.msra.mxu0 0.0
      %2867 = vmatpush.msra.mxu0 0.0
      %2868 = vmatpush.msra.mxu0 0.0
      %2869 = vmatpush.msra.mxu0 0.0
      %2870 = vmatpush.msra.mxu0 0.0
      %2871 = vmatpush.msra.mxu0 0.0
      %2872 = vmatpush.msra.mxu0 0.0
      %2873 = vmatpush.msra.mxu0 0.0
      %2874 = vmatpush.msra.mxu0 0.0
      %2875 = vmatpush.msra.mxu0 0.0
      %2876 = vmatpush.msra.mxu0 %v2766
      %2877 = vmatpush.msra.mxu0 %v2764
      %2878 = vmatpush.msra.mxu0 %v2762
      %2879 = vmatpush.msra.mxu0 %v2760
      %2880 = vmatmul.f32.gmra.mxu0 %v2800
      %v2881 = vpop.f32.mrf.mxu0
      %v2882 = vadd.f32 0.0, %v2881
      %2883 = vmatmul.f32.gmra.mxu0 %v2803
      %v2884 = vpop.f32.mrf.mxu0
      %v2885 = vadd.f32 0.0, %v2884
      %2886 = vmatmul.f32.gmra.mxu0 %v2806
      %v2887 = vpop.f32.mrf.mxu0
      %v2888 = vadd.f32 0.0, %v2887
      %2889 = vmatmul.f32.gmra.mxu0 %v2809
      %v2890 = vpop.f32.mrf.mxu0
      %v2891 = vadd.f32 0.0, %v2890
      %2892 = vmatmul.f32.gmra.mxu0 %v2812
      %v2893 = vpop.f32.mrf.mxu0
      %v2894 = vadd.f32 0.0, %v2893
      %2895 = vmatmul.f32.gmra.mxu0 %v2815
      %v2896 = vpop.f32.mrf.mxu0
      %v2897 = vadd.f32 0.0, %v2896
      %2898 = vmatmul.f32.gmra.mxu0 %v2818
      %v2899 = vpop.f32.mrf.mxu0
      %v2900 = vadd.f32 0.0, %v2899
      %2901 = vmatmul.f32.gmra.mxu0 %v2821
      %v2902 = vpop.f32.mrf.mxu0
      %v2903 = vadd.f32 0.0, %v2902
      %2904 = vdwg.mxu0
      %v2905 = vmul.f32 %v2841, 0.35355338
      %v2906 = vmul.f32 %v2882, 0.35355338
      %v2907 = vmul.f32 %v2844, 0.35355338
      %v2908 = vmul.f32 %v2885, 0.35355338
      %v2909 = vmul.f32 %v2847, 0.35355338
      %v2910 = vmul.f32 %v2888, 0.35355338
      %v2911 = vmul.f32 %v2850, 0.35355338
      %v2912 = vmul.f32 %v2891, 0.35355338
      %v2913 = vmul.f32 %v2853, 0.35355338
      %v2914 = vmul.f32 %v2894, 0.35355338
      %v2915 = vmul.f32 %v2856, 0.35355338
      %v2916 = vmul.f32 %v2897, 0.35355338
      %v2917 = vmul.f32 %v2859, 0.35355338
      %v2918 = vmul.f32 %v2900, 0.35355338
      %v2919 = vmul.f32 %v2862, 0.35355338
      %v2920 = vmul.f32 %v2903, 0.35355338
      %v2921 = vadd.f32 %v2905, %v1983
      %v2922 = vadd.f32 %v2906, %v1984
      %v2923 = vadd.f32 %v2907, %v1985
      %v2924 = vadd.f32 %v2908, %v1986
      %v2925 = vadd.f32 %v2909, %v1987
      %v2926 = vadd.f32 %v2910, %v1988
      %v2927 = vadd.f32 %v2911, %v1989
      %v2928 = vadd.f32 %v2912, %v1990
      %v2929 = vadd.f32 %v2913, %v1991
      %v2930 = vadd.f32 %v2914, %v1992
      %v2931 = vadd.f32 %v2915, %v1993
      %v2932 = vadd.f32 %v2916, %v1994
      %v2933 = vadd.f32 %v2917, %v1995
      %v2934 = vadd.f32 %v2918, %v1996
      %v2935 = vadd.f32 %v2919, %v1997
      %v2936 = vadd.f32 %v2920, %v1998
      %v2937 = vmax.f32 %v2921, %v2922
      %2938 = vmax.xlane.f32.xlu0 %v2937
      %v2939 = vpop.xlane.xlu0 %2938
      %v2940 = vmax.f32 %v2923, %v2924
      %2941 = vmax.xlane.f32.xlu0 %v2940
      %v2942 = vpop.xlane.xlu0 %2941
      %v2943 = vmax.f32 %v2925, %v2926
      %2944 = vmax.xlane.f32.xlu0 %v2943
      %v2945 = vpop.xlane.xlu0 %2944
      %v2946 = vmax.f32 %v2927, %v2928
      %2947 = vmax.xlane.f32.xlu0 %v2946
      %v2948 = vpop.xlane.xlu0 %2947
      %v2949 = vmax.f32 %v2929, %v2930
      %2950 = vmax.xlane.f32.xlu0 %v2949
      %v2951 = vpop.xlane.xlu0 %2950
      %v2952 = vmax.f32 %v2931, %v2932
      %2953 = vmax.xlane.f32.xlu0 %v2952
      %v2954 = vpop.xlane.xlu0 %2953
      %v2955 = vmax.f32 %v2933, %v2934
      %2956 = vmax.xlane.f32.xlu0 %v2955
      %v2957 = vpop.xlane.xlu0 %2956
      %v2958 = vmax.f32 %v2935, %v2936
      %2959 = vmax.xlane.f32.xlu0 %v2958
      %v2960 = vpop.xlane.xlu0 %2959
      %v2961 = vsub.f32 %v2921, %v2939
      %v2962 = vsub.f32 %v2922, %v2939
      %v2963 = vsub.f32 %v2923, %v2942
      %v2964 = vsub.f32 %v2924, %v2942
      %v2965 = vsub.f32 %v2925, %v2945
      %v2966 = vsub.f32 %v2926, %v2945
      %v2967 = vsub.f32 %v2927, %v2948
      %v2968 = vsub.f32 %v2928, %v2948
      %v2969 = vsub.f32 %v2929, %v2951
      %v2970 = vsub.f32 %v2930, %v2951
      %v2971 = vsub.f32 %v2931, %v2954
      %v2972 = vsub.f32 %v2932, %v2954
      %v2973 = vsub.f32 %v2933, %v2957
      %v2974 = vsub.f32 %v2934, %v2957
      %v2975 = vsub.f32 %v2935, %v2960
      %v2976 = vsub.f32 %v2936, %v2960
      %v2977 = vmul.f32 %v2961, 1.442695
      %v2978 = vpow.pop %v2977
      %v2979 = vmul.f32 %v2962, 1.442695
      %v2980 = vpow.pop %v2979
      %v2981 = vmul.f32 %v2963, 1.442695
      %v2982 = vpow.pop %v2981
      %v2983 = vmul.f32 %v2964, 1.442695
      %v2984 = vpow.pop %v2983
      %v2985 = vmul.f32 %v2965, 1.442695
      %v2986 = vpow.pop %v2985
      %v2987 = vmul.f32 %v2966, 1.442695
      %v2988 = vpow.pop %v2987
      %v2989 = vmul.f32 %v2967, 1.442695
      %v2990 = vpow.pop %v2989
      %v2991 = vmul.f32 %v2968, 1.442695
      %v2992 = vpow.pop %v2991
      %v2993 = vmul.f32 %v2969, 1.442695
      %v2994 = vpow.pop %v2993
      %v2995 = vmul.f32 %v2970, 1.442695
      %v2996 = vpow.pop %v2995
      %v2997 = vmul.f32 %v2971, 1.442695
      %v2998 = vpow.pop %v2997
      %v2999 = vmul.f32 %v2972, 1.442695
      %v3000 = vpow.pop %v2999
      %v3001 = vmul.f32 %v2973, 1.442695
      %v3002 = vpow.pop %v3001
      %v3003 = vmul.f32 %v2974, 1.442695
      %v3004 = vpow.pop %v3003
      %v3005 = vmul.f32 %v2975, 1.442695
      %v3006 = vpow.pop %v3005
      %v3007 = vmul.f32 %v2976, 1.442695
      %v3008 = vpow.pop %v3007
      %3009 = vmatpush.msra.mxu0 %v2030
      %3010 = vmatpush.msra.mxu0 %v2029
      %3011 = vmatpush.msra.mxu0 %v2028
      %3012 = vmatpush.msra.mxu0 %v2027
      %3013 = vmatpush.msra.mxu0 %v2026
      %3014 = vmatpush.msra.mxu0 %v2025
      %3015 = vmatpush.msra.mxu0 %v2024
      %3016 = vmatpush.msra.mxu0 %v2023
      %3017 = vmatpush.msra.mxu0 %v2022
      %3018 = vmatpush.msra.mxu0 %v2021
      %3019 = vmatpush.msra.mxu0 %v2020
      %3020 = vmatpush.msra.mxu0 %v2019
      %3021 = vmatpush.msra.mxu0 %v2018
      %3022 = vmatpush.msra.mxu0 %v2017
      %3023 = vmatpush.msra.mxu0 %v2016
      %3024 = vmatpush.msra.mxu0 %v2015
      %3025 = vmatmul.f32.gmra.mxu0 %v2978
      %v3026 = vpop.f32.mrf.mxu0
      %v3027 = vadd.f32 0.0, %v3026
      %3028 = vmatmul.f32.gmra.mxu0 %v2982
      %v3029 = vpop.f32.mrf.mxu0
      %v3030 = vadd.f32 0.0, %v3029
      %3031 = vmatmul.f32.gmra.mxu0 %v2986
      %v3032 = vpop.f32.mrf.mxu0
      %v3033 = vadd.f32 0.0, %v3032
      %3034 = vmatmul.f32.gmra.mxu0 %v2990
      %v3035 = vpop.f32.mrf.mxu0
      %v3036 = vadd.f32 0.0, %v3035
      %3037 = vmatmul.f32.gmra.mxu0 %v2994
      %v3038 = vpop.f32.mrf.mxu0
      %v3039 = vadd.f32 0.0, %v3038
      %3040 = vmatmul.f32.gmra.mxu0 %v2998
      %v3041 = vpop.f32.mrf.mxu0
      %v3042 = vadd.f32 0.0, %v3041
      %3043 = vmatmul.f32.gmra.mxu0 %v3002
      %v3044 = vpop.f32.mrf.mxu0
      %v3045 = vadd.f32 0.0, %v3044
      %3046 = vmatmul.f32.gmra.mxu0 %v3006
      %v3047 = vpop.f32.mrf.mxu0
      %v3048 = vadd.f32 0.0, %v3047
      %3049 = vdwg.mxu0
      %3050 = vmatpush.msra.mxu0 %v2046
      %3051 = vmatpush.msra.mxu0 %v2045
      %3052 = vmatpush.msra.mxu0 %v2044
      %3053 = vmatpush.msra.mxu0 %v2043
      %3054 = vmatpush.msra.mxu0 %v2042
      %3055 = vmatpush.msra.mxu0 %v2041
      %3056 = vmatpush.msra.mxu0 %v2040
      %3057 = vmatpush.msra.mxu0 %v2039
      %3058 = vmatpush.msra.mxu0 %v2038
      %3059 = vmatpush.msra.mxu0 %v2037
      %3060 = vmatpush.msra.mxu0 %v2036
      %3061 = vmatpush.msra.mxu0 %v2035
      %3062 = vmatpush.msra.mxu0 %v2034
      %3063 = vmatpush.msra.mxu0 %v2033
      %3064 = vmatpush.msra.mxu0 %v2032
      %3065 = vmatpush.msra.mxu0 %v2031
      %3066 = vmatmul.f32.gmra.mxu0 %v2980
      %v3067 = vpop.f32.mrf.mxu0
      %v3068 = vadd.f32 %v3027, %v3067
      %3069 = vmatmul.f32.gmra.mxu0 %v2984
      %v3070 = vpop.f32.mrf.mxu0
      %v3071 = vadd.f32 %v3030, %v3070
      %3072 = vmatmul.f32.gmra.mxu0 %v2988
      %v3073 = vpop.f32.mrf.mxu0
      %v3074 = vadd.f32 %v3033, %v3073
      %3075 = vmatmul.f32.gmra.mxu0 %v2992
      %v3076 = vpop.f32.mrf.mxu0
      %v3077 = vadd.f32 %v3036, %v3076
      %3078 = vmatmul.f32.gmra.mxu0 %v2996
      %v3079 = vpop.f32.mrf.mxu0
      %v3080 = vadd.f32 %v3039, %v3079
      %3081 = vmatmul.f32.gmra.mxu0 %v3000
      %v3082 = vpop.f32.mrf.mxu0
      %v3083 = vadd.f32 %v3042, %v3082
      %3084 = vmatmul.f32.gmra.mxu0 %v3004
      %v3085 = vpop.f32.mrf.mxu0
      %v3086 = vadd.f32 %v3045, %v3085
      %3087 = vmatmul.f32.gmra.mxu0 %v3008
      %v3088 = vpop.f32.mrf.mxu0
      %v3089 = vadd.f32 %v3048, %v3088
      %3090 = vdwg.mxu0
      %3091 = vmatpush.msra.mxu0 %v2782
      %3092 = vmatpush.msra.mxu0 %v2781
      %3093 = vmatpush.msra.mxu0 %v2780
      %3094 = vmatpush.msra.mxu0 %v2779
      %3095 = vmatpush.msra.mxu0 %v2778
      %3096 = vmatpush.msra.mxu0 %v2777
      %3097 = vmatpush.msra.mxu0 %v2776
      %3098 = vmatpush.msra.mxu0 %v2775
      %3099 = vmatpush.msra.mxu0 %v2774
      %3100 = vmatpush.msra.mxu0 %v2773
      %3101 = vmatpush.msra.mxu0 %v2772
      %3102 = vmatpush.msra.mxu0 %v2771
      %3103 = vmatpush.msra.mxu0 %v2770
      %3104 = vmatpush.msra.mxu0 %v2769
      %3105 = vmatpush.msra.mxu0 %v2768
      %3106 = vmatpush.msra.mxu0 %v2767
      %3107 = vmatmul.f32.gmra.mxu0 %v2978
      %v3108 = vpop.f32.mrf.mxu0
      %v3109 = vadd.f32 0.0, %v3108
      %3110 = vmatmul.f32.gmra.mxu0 %v2982
      %v3111 = vpop.f32.mrf.mxu0
      %v3112 = vadd.f32 0.0, %v3111
      %3113 = vmatmul.f32.gmra.mxu0 %v2986
      %v3114 = vpop.f32.mrf.mxu0
      %v3115 = vadd.f32 0.0, %v3114
      %3116 = vmatmul.f32.gmra.mxu0 %v2990
      %v3117 = vpop.f32.mrf.mxu0
      %v3118 = vadd.f32 0.0, %v3117
      %3119 = vmatmul.f32.gmra.mxu0 %v2994
      %v3120 = vpop.f32.mrf.mxu0
      %v3121 = vadd.f32 0.0, %v3120
      %3122 = vmatmul.f32.gmra.mxu0 %v2998
      %v3123 = vpop.f32.mrf.mxu0
      %v3124 = vadd.f32 0.0, %v3123
      %3125 = vmatmul.f32.gmra.mxu0 %v3002
      %v3126 = vpop.f32.mrf.mxu0
      %v3127 = vadd.f32 0.0, %v3126
      %3128 = vmatmul.f32.gmra.mxu0 %v3006
      %v3129 = vpop.f32.mrf.mxu0
      %v3130 = vadd.f32 0.0, %v3129
      %3131 = vdwg.mxu0
      %3132 = vmatpush.msra.mxu0 %v2798
      %3133 = vmatpush.msra.mxu0 %v2797
      %3134 = vmatpush.msra.mxu0 %v2796
      %3135 = vmatpush.msra.mxu0 %v2795
      %3136 = vmatpush.msra.mxu0 %v2794
      %3137 = vmatpush.msra.mxu0 %v2793
      %3138 = vmatpush.msra.mxu0 %v2792
      %3139 = vmatpush.msra.mxu0 %v2791
      %3140 = vmatpush.msra.mxu0 %v2790
      %3141 = vmatpush.msra.mxu0 %v2789
      %3142 = vmatpush.msra.mxu0 %v2788
      %3143 = vmatpush.msra.mxu0 %v2787
      %3144 = vmatpush.msra.mxu0 %v2786
      %3145 = vmatpush.msra.mxu0 %v2785
      %3146 = vmatpush.msra.mxu0 %v2784
      %3147 = vmatpush.msra.mxu0 %v2783
      %3148 = vmatmul.f32.gmra.mxu0 %v2980
      %v3149 = vpop.f32.mrf.mxu0
      %v3150 = vadd.f32 %v3109, %v3149
      %3151 = vmatmul.f32.gmra.mxu0 %v2984
      %v3152 = vpop.f32.mrf.mxu0
      %v3153 = vadd.f32 %v3112, %v3152
      %3154 = vmatmul.f32.gmra.mxu0 %v2988
      %v3155 = vpop.f32.mrf.mxu0
      %v3156 = vadd.f32 %v3115, %v3155
      %3157 = vmatmul.f32.gmra.mxu0 %v2992
      %v3158 = vpop.f32.mrf.mxu0
      %v3159 = vadd.f32 %v3118, %v3158
      %3160 = vmatmul.f32.gmra.mxu0 %v2996
      %v3161 = vpop.f32.mrf.mxu0
      %v3162 = vadd.f32 %v3121, %v3161
      %3163 = vmatmul.f32.gmra.mxu0 %v3000
      %v3164 = vpop.f32.mrf.mxu0
      %v3165 = vadd.f32 %v3124, %v3164
      %3166 = vmatmul.f32.gmra.mxu0 %v3004
      %v3167 = vpop.f32.mrf.mxu0
      %v3168 = vadd.f32 %v3127, %v3167
      %3169 = vmatmul.f32.gmra.mxu0 %v3008
      %v3170 = vpop.f32.mrf.mxu0
      %v3171 = vadd.f32 %v3130, %v3170
      %3172 = vdwg.mxu0
      %v3173 = vrcp.pop %v3068
      %v3174 = vrcp.pop %v3071
      %v3175 = vrcp.pop %v3074
      %v3176 = vrcp.pop %v3077
      %v3177 = vrcp.pop %v3080
      %v3178 = vrcp.pop %v3083
      %v3179 = vrcp.pop %v3086
      %v3180 = vrcp.pop %v3089
      %v3181 = vmul.f32 %v3150, %v3173
      %v3182 = vmul.f32 %v3153, %v3174
      %v3183 = vmul.f32 %v3156, %v3175
      %v3184 = vmul.f32 %v3159, %v3176
      %v3185 = vmul.f32 %v3162, %v3177
      %v3186 = vmul.f32 %v3165, %v3178
      %v3187 = vmul.f32 %v3168, %v3179
      %v3188 = vmul.f32 %v3171, %v3180
      %v3190 = vsel %vm913, %v3181, 0
      %v3193 = vsel %vm913, %v3182, 0
      %v3196 = vsel %vm913, %v3183, 0
      %v3199 = vsel %vm913, %v3184, 0
      %v3202 = vsel %vm913, %v3185, 0
      %v3205 = vsel %vm913, %v3186, 0
      %v3208 = vsel %vm913, %v3187, 0
      %v3211 = vsel %vm913, %v3188, 0
      %3213 = vmatpush.msra.mxu0 0.0
      %3214 = vmatpush.msra.mxu0 0.0
      %3215 = vmatpush.msra.mxu0 0.0
      %3216 = vmatpush.msra.mxu0 0.0
      %3217 = vmatpush.msra.mxu0 0.0
      %3218 = vmatpush.msra.mxu0 0.0
      %3219 = vmatpush.msra.mxu0 0.0
      %3220 = vmatpush.msra.mxu0 0.0
      %3221 = vmatpush.msra.mxu0 0.0
      %3222 = vmatpush.msra.mxu0 0.0
      %3223 = vmatpush.msra.mxu0 0.0
      %3224 = vmatpush.msra.mxu0 0.0
      %3225 = vmatpush.msra.mxu0 %v2113
      %3226 = vmatpush.msra.mxu0 %v2112
      %3227 = vmatpush.msra.mxu0 %v2111
      %3228 = vmatpush.msra.mxu0 %v2110
      %3229 = vmatmul.f32.gmra.mxu0 %v3190
      %v3230 = vpop.f32.mrf.mxu0
      %v3231 = vadd.f32 0.0, %v3230
      %3232 = vmatmul.f32.gmra.mxu0 %v3193
      %v3233 = vpop.f32.mrf.mxu0
      %v3234 = vadd.f32 0.0, %v3233
      %3235 = vmatmul.f32.gmra.mxu0 %v3196
      %v3236 = vpop.f32.mrf.mxu0
      %v3237 = vadd.f32 0.0, %v3236
      %3238 = vmatmul.f32.gmra.mxu0 %v3199
      %v3239 = vpop.f32.mrf.mxu0
      %v3240 = vadd.f32 0.0, %v3239
      %3241 = vmatmul.f32.gmra.mxu0 %v3202
      %v3242 = vpop.f32.mrf.mxu0
      %v3243 = vadd.f32 0.0, %v3242
      %3244 = vmatmul.f32.gmra.mxu0 %v3205
      %v3245 = vpop.f32.mrf.mxu0
      %v3246 = vadd.f32 0.0, %v3245
      %3247 = vmatmul.f32.gmra.mxu0 %v3208
      %v3248 = vpop.f32.mrf.mxu0
      %v3249 = vadd.f32 0.0, %v3248
      %3250 = vmatmul.f32.gmra.mxu0 %v3211
      %v3251 = vpop.f32.mrf.mxu0
      %v3252 = vadd.f32 0.0, %v3251
      %3253 = vdwg.mxu0
      %v3254 = vadd.f32 %v1871, %v3231
      %v3255 = vadd.f32 %v1874, %v3234
      %v3256 = vadd.f32 %v1877, %v3237
      %v3257 = vadd.f32 %v1880, %v3240
      %v3258 = vadd.f32 %v1883, %v3243
      %v3259 = vadd.f32 %v1886, %v3246
      %v3260 = vadd.f32 %v1889, %v3249
      %v3261 = vadd.f32 %v1892, %v3252
      %v3262 = vperm.slane %v2135, 7
      %v3263 = vadd.f32 %v3254, %v3262
      %v3264 = vadd.f32 %v3255, %v3262
      %v3265 = vadd.f32 %v3256, %v3262
      %v3266 = vadd.f32 %v3257, %v3262
      %v3267 = vadd.f32 %v3258, %v3262
      %v3268 = vadd.f32 %v3259, %v3262
      %v3269 = vadd.f32 %v3260, %v3262
      %v3270 = vadd.f32 %v3261, %v3262
      %v3271 = vsel %vm913, %v3263, 0.0
      %3272 = vadd.xlane.f32.xlu0 %v3271
      %v3273 = vpop.xlane.xlu0 %3272
      %v3274 = vsel %vm913, %v3264, 0.0
      %3275 = vadd.xlane.f32.xlu0 %v3274
      %v3276 = vpop.xlane.xlu0 %3275
      %v3277 = vsel %vm913, %v3265, 0.0
      %3278 = vadd.xlane.f32.xlu0 %v3277
      %v3279 = vpop.xlane.xlu0 %3278
      %v3280 = vsel %vm913, %v3266, 0.0
      %3281 = vadd.xlane.f32.xlu0 %v3280
      %v3282 = vpop.xlane.xlu0 %3281
      %v3283 = vsel %vm913, %v3267, 0.0
      %3284 = vadd.xlane.f32.xlu0 %v3283
      %v3285 = vpop.xlane.xlu0 %3284
      %v3286 = vsel %vm913, %v3268, 0.0
      %3287 = vadd.xlane.f32.xlu0 %v3286
      %v3288 = vpop.xlane.xlu0 %3287
      %v3289 = vsel %vm913, %v3269, 0.0
      %3290 = vadd.xlane.f32.xlu0 %v3289
      %v3291 = vpop.xlane.xlu0 %3290
      %v3292 = vsel %vm913, %v3270, 0.0
      %3293 = vadd.xlane.f32.xlu0 %v3292
      %v3294 = vpop.xlane.xlu0 %3293
      %v3295 = vmul.f32 %v3273, %v968
      %v3296 = vmul.f32 %v3276, %v968
      %v3297 = vmul.f32 %v3279, %v968
      %v3298 = vmul.f32 %v3282, %v968
      %v3299 = vmul.f32 %v3285, %v968
      %v3300 = vmul.f32 %v3288, %v968
      %v3301 = vmul.f32 %v3291, %v968
      %v3302 = vmul.f32 %v3294, %v968
      %v3303 = vsub.f32 %v3263, %v3295
      %v3304 = vsub.f32 %v3264, %v3296
      %v3305 = vsub.f32 %v3265, %v3297
      %v3306 = vsub.f32 %v3266, %v3298
      %v3307 = vsub.f32 %v3267, %v3299
      %v3308 = vsub.f32 %v3268, %v3300
      %v3309 = vsub.f32 %v3269, %v3301
      %v3310 = vsub.f32 %v3270, %v3302
      %v3311 = vmul.f32 %v3303, %v3303
      %v3312 = vmul.f32 %v3304, %v3304
      %v3313 = vmul.f32 %v3305, %v3305
      %v3314 = vmul.f32 %v3306, %v3306
      %v3315 = vmul.f32 %v3307, %v3307
      %v3316 = vmul.f32 %v3308, %v3308
      %v3317 = vmul.f32 %v3309, %v3309
      %v3318 = vmul.f32 %v3310, %v3310
      %v3319 = vsel %vm913, %v3311, 0.0
      %3320 = vadd.xlane.f32.xlu0 %v3319
      %v3321 = vpop.xlane.xlu0 %3320
      %v3322 = vsel %vm913, %v3312, 0.0
      %3323 = vadd.xlane.f32.xlu0 %v3322
      %v3324 = vpop.xlane.xlu0 %3323
      %v3325 = vsel %vm913, %v3313, 0.0
      %3326 = vadd.xlane.f32.xlu0 %v3325
      %v3327 = vpop.xlane.xlu0 %3326
      %v3328 = vsel %vm913, %v3314, 0.0
      %3329 = vadd.xlane.f32.xlu0 %v3328
      %v3330 = vpop.xlane.xlu0 %3329
      %v3331 = vsel %vm913, %v3315, 0.0
      %3332 = vadd.xlane.f32.xlu0 %v3331
      %v3333 = vpop.xlane.xlu0 %3332
      %v3334 = vsel %vm913, %v3316, 0.0
      %3335 = vadd.xlane.f32.xlu0 %v3334
      %v3336 = vpop.xlane.xlu0 %3335
      %v3337 = vsel %vm913, %v3317, 0.0
      %3338 = vadd.xlane.f32.xlu0 %v3337
      %v3339 = vpop.xlane.xlu0 %3338
      %v3340 = vsel %vm913, %v3318, 0.0
      %3341 = vadd.xlane.f32.xlu0 %v3340
      %v3342 = vpop.xlane.xlu0 %3341
      %v3343 = vmul.f32 %v3321, %v968
      %v3344 = vmul.f32 %v3324, %v968
      %v3345 = vmul.f32 %v3327, %v968
      %v3346 = vmul.f32 %v3330, %v968
      %v3347 = vmul.f32 %v3333, %v968
      %v3348 = vmul.f32 %v3336, %v968
      %v3349 = vmul.f32 %v3339, %v968
      %v3350 = vmul.f32 %v3342, %v968
      %v3351 = vadd.f32 %v3343, 1e-06
      %v3352 = vadd.f32 %v3344, 1e-06
      %v3353 = vadd.f32 %v3345, 1e-06
      %v3354 = vadd.f32 %v3346, 1e-06
      %v3355 = vadd.f32 %v3347, 1e-06
      %v3356 = vadd.f32 %v3348, 1e-06
      %v3357 = vadd.f32 %v3349, 1e-06
      %v3358 = vadd.f32 %v3350, 1e-06
      %v3359 = vrsqrt.pop %v3351
      %v3360 = vmul.f32 %v3359, %v3351
      %v3361 = vmul.f32 %v3360, %v3359
      %v3362 = vmul.f32 0.5, %v3361
      %v3363 = vsub.f32 1.5, %v3362
      %v3364 = vmul.f32 %v3359, %v3363
      %vm3365 = vweird.f32 %v3351
      %vm3366 = vweird.f32 %v3359
      %vm3367 = vmor %vm3365, %vm3366
      %v3368 = vsel %vm3367, %v3359, %v3364
      %v3369 = vrsqrt.pop %v3352
      %v3370 = vmul.f32 %v3369, %v3352
      %v3371 = vmul.f32 %v3370, %v3369
      %v3372 = vmul.f32 0.5, %v3371
      %v3373 = vsub.f32 1.5, %v3372
      %v3374 = vmul.f32 %v3369, %v3373
      %vm3375 = vweird.f32 %v3352
      %vm3376 = vweird.f32 %v3369
      %vm3377 = vmor %vm3375, %vm3376
      %v3378 = vsel %vm3377, %v3369, %v3374
      %v3379 = vrsqrt.pop %v3353
      %v3380 = vmul.f32 %v3379, %v3353
      %v3381 = vmul.f32 %v3380, %v3379
      %v3382 = vmul.f32 0.5, %v3381
      %v3383 = vsub.f32 1.5, %v3382
      %v3384 = vmul.f32 %v3379, %v3383
      %vm3385 = vweird.f32 %v3353
      %vm3386 = vweird.f32 %v3379
      %vm3387 = vmor %vm3385, %vm3386
      %v3388 = vsel %vm3387, %v3379, %v3384
      %v3389 = vrsqrt.pop %v3354
      %v3390 = vmul.f32 %v3389, %v3354
      %v3391 = vmul.f32 %v3390, %v3389
      %v3392 = vmul.f32 0.5, %v3391
      %v3393 = vsub.f32 1.5, %v3392
      %v3394 = vmul.f32 %v3389, %v3393
      %vm3395 = vweird.f32 %v3354
      %vm3396 = vweird.f32 %v3389
      %vm3397 = vmor %vm3395, %vm3396
      %v3398 = vsel %vm3397, %v3389, %v3394
      %v3399 = vrsqrt.pop %v3355
      %v3400 = vmul.f32 %v3399, %v3355
      %v3401 = vmul.f32 %v3400, %v3399
      %v3402 = vmul.f32 0.5, %v3401
      %v3403 = vsub.f32 1.5, %v3402
      %v3404 = vmul.f32 %v3399, %v3403
      %vm3405 = vweird.f32 %v3355
      %vm3406 = vweird.f32 %v3399
      %vm3407 = vmor %vm3405, %vm3406
      %v3408 = vsel %vm3407, %v3399, %v3404
      %v3409 = vrsqrt.pop %v3356
      %v3410 = vmul.f32 %v3409, %v3356
      %v3411 = vmul.f32 %v3410, %v3409
      %v3412 = vmul.f32 0.5, %v3411
      %v3413 = vsub.f32 1.5, %v3412
      %v3414 = vmul.f32 %v3409, %v3413
      %vm3415 = vweird.f32 %v3356
      %vm3416 = vweird.f32 %v3409
      %vm3417 = vmor %vm3415, %vm3416
      %v3418 = vsel %vm3417, %v3409, %v3414
      %v3419 = vrsqrt.pop %v3357
      %v3420 = vmul.f32 %v3419, %v3357
      %v3421 = vmul.f32 %v3420, %v3419
      %v3422 = vmul.f32 0.5, %v3421
      %v3423 = vsub.f32 1.5, %v3422
      %v3424 = vmul.f32 %v3419, %v3423
      %vm3425 = vweird.f32 %v3357
      %vm3426 = vweird.f32 %v3419
      %vm3427 = vmor %vm3425, %vm3426
      %v3428 = vsel %vm3427, %v3419, %v3424
      %v3429 = vrsqrt.pop %v3358
      %v3430 = vmul.f32 %v3429, %v3358
      %v3431 = vmul.f32 %v3430, %v3429
      %v3432 = vmul.f32 0.5, %v3431
      %v3433 = vsub.f32 1.5, %v3432
      %v3434 = vmul.f32 %v3429, %v3433
      %vm3435 = vweird.f32 %v3358
      %vm3436 = vweird.f32 %v3429
      %vm3437 = vmor %vm3435, %vm3436
      %v3438 = vsel %vm3437, %v3429, %v3434
      %v3439 = vmul.f32 %v3303, %v3368
      %v3440 = vmul.f32 %v3304, %v3378
      %v3441 = vmul.f32 %v3305, %v3388
      %v3442 = vmul.f32 %v3306, %v3398
      %v3443 = vmul.f32 %v3307, %v3408
      %v3444 = vmul.f32 %v3308, %v3418
      %v3445 = vmul.f32 %v3309, %v3428
      %v3446 = vmul.f32 %v3310, %v3438
      %v3447 = vperm.slane %v2136, 0
      %v3448 = vmul.f32 %v3439, %v3447
      %v3449 = vmul.f32 %v3440, %v3447
      %v3450 = vmul.f32 %v3441, %v3447
      %v3451 = vmul.f32 %v3442, %v3447
      %v3452 = vmul.f32 %v3443, %v3447
      %v3453 = vmul.f32 %v3444, %v3447
      %v3454 = vmul.f32 %v3445, %v3447
      %v3455 = vmul.f32 %v3446, %v3447
      %v3456 = vperm.slane %v2136, 1
      %v3457 = vadd.f32 %v3448, %v3456
      %v3458 = vadd.f32 %v3449, %v3456
      %v3459 = vadd.f32 %v3450, %v3456
      %v3460 = vadd.f32 %v3451, %v3456
      %v3461 = vadd.f32 %v3452, %v3456
      %v3462 = vadd.f32 %v3453, %v3456
      %v3463 = vadd.f32 %v3454, %v3456
      %v3464 = vadd.f32 %v3455, %v3456
      %v3465 = vperm.slane %v2134, 0
      %v3467 = vsel %vm913, %v3457, 0
      %v3470 = vsel %vm913, %v3458, 0
      %v3473 = vsel %vm913, %v3459, 0
      %v3476 = vsel %vm913, %v3460, 0
      %v3479 = vsel %vm913, %v3461, 0
      %v3482 = vsel %vm913, %v3462, 0
      %v3485 = vsel %vm913, %v3463, 0
      %v3488 = vsel %vm913, %v3464, 0
      %3490 = vmatpush.msra.mxu0 0.0
      %3491 = vmatpush.msra.mxu0 0.0
      %3492 = vmatpush.msra.mxu0 0.0
      %3493 = vmatpush.msra.mxu0 0.0
      %3494 = vmatpush.msra.mxu0 0.0
      %3495 = vmatpush.msra.mxu0 0.0
      %3496 = vmatpush.msra.mxu0 0.0
      %3497 = vmatpush.msra.mxu0 0.0
      %3498 = vmatpush.msra.mxu0 0.0
      %3499 = vmatpush.msra.mxu0 0.0
      %3500 = vmatpush.msra.mxu0 0.0
      %3501 = vmatpush.msra.mxu0 0.0
      %3502 = vmatpush.msra.mxu0 %v2117
      %3503 = vmatpush.msra.mxu0 %v2116
      %3504 = vmatpush.msra.mxu0 %v2115
      %3505 = vmatpush.msra.mxu0 %v2114
      %3506 = vmatmul.f32.gmra.mxu0 %v3467
      %v3507 = vpop.f32.mrf.mxu0
      %v3508 = vadd.f32 %v3465, %v3507
      %3509 = vmatmul.f32.gmra.mxu0 %v3470
      %v3510 = vpop.f32.mrf.mxu0
      %v3511 = vadd.f32 %v3465, %v3510
      %3512 = vmatmul.f32.gmra.mxu0 %v3473
      %v3513 = vpop.f32.mrf.mxu0
      %v3514 = vadd.f32 %v3465, %v3513
      %3515 = vmatmul.f32.gmra.mxu0 %v3476
      %v3516 = vpop.f32.mrf.mxu0
      %v3517 = vadd.f32 %v3465, %v3516
      %3518 = vmatmul.f32.gmra.mxu0 %v3479
      %v3519 = vpop.f32.mrf.mxu0
      %v3520 = vadd.f32 %v3465, %v3519
      %3521 = vmatmul.f32.gmra.mxu0 %v3482
      %v3522 = vpop.f32.mrf.mxu0
      %v3523 = vadd.f32 %v3465, %v3522
      %3524 = vmatmul.f32.gmra.mxu0 %v3485
      %v3525 = vpop.f32.mrf.mxu0
      %v3526 = vadd.f32 %v3465, %v3525
      %3527 = vmatmul.f32.gmra.mxu0 %v3488
      %v3528 = vpop.f32.mrf.mxu0
      %v3529 = vadd.f32 %v3465, %v3528
      %3530 = vdwg.mxu0
      %v3531 = vmul.f32 %v3508, %v3508
      %v3532 = vmul.f32 %v3511, %v3511
      %v3533 = vmul.f32 %v3514, %v3514
      %v3534 = vmul.f32 %v3517, %v3517
      %v3535 = vmul.f32 %v3520, %v3520
      %v3536 = vmul.f32 %v3523, %v3523
      %v3537 = vmul.f32 %v3526, %v3526
      %v3538 = vmul.f32 %v3529, %v3529
      %v3539 = vmul.f32 %v3508, %v3531
      %v3540 = vmul.f32 %v3511, %v3532
      %v3541 = vmul.f32 %v3514, %v3533
      %v3542 = vmul.f32 %v3517, %v3534
      %v3543 = vmul.f32 %v3520, %v3535
      %v3544 = vmul.f32 %v3523, %v3536
      %v3545 = vmul.f32 %v3526, %v3537
      %v3546 = vmul.f32 %v3529, %v3538
      %v3547 = vmul.f32 %v3539, 0.044715
      %v3548 = vmul.f32 %v3540, 0.044715
      %v3549 = vmul.f32 %v3541, 0.044715
      %v3550 = vmul.f32 %v3542, 0.044715
      %v3551 = vmul.f32 %v3543, 0.044715
      %v3552 = vmul.f32 %v3544, 0.044715
      %v3553 = vmul.f32 %v3545, 0.044715
      %v3554 = vmul.f32 %v3546, 0.044715
      %v3555 = vadd.f32 %v3508, %v3547
      %v3556 = vadd.f32 %v3511, %v3548
      %v3557 = vadd.f32 %v3514, %v3549
      %v3558 = vadd.f32 %v3517, %v3550
      %v3559 = vadd.f32 %v3520, %v3551
      %v3560 = vadd.f32 %v3523, %v3552
      %v3561 = vadd.f32 %v3526, %v3553
      %v3562 = vadd.f32 %v3529, %v3554
      %v3563 = vmul.f32 %v3555, 0.7978846
      %v3564 = vmul.f32 %v3556, 0.7978846
      %v3565 = vmul.f32 %v3557, 0.7978846
      %v3566 = vmul.f32 %v3558, 0.7978846
      %v3567 = vmul.f32 %v3559, 0.7978846
      %v3568 = vmul.f32 %v3560, 0.7978846
      %v3569 = vmul.f32 %v3561, 0.7978846
      %v3570 = vmul.f32 %v3562, 0.7978846
      %v3571 = vtanh.pop %v3563
      %v3572 = vtanh.pop %v3564
      %v3573 = vtanh.pop %v3565
      %v3574 = vtanh.pop %v3566
      %v3575 = vtanh.pop %v3567
      %v3576 = vtanh.pop %v3568
      %v3577 = vtanh.pop %v3569
      %v3578 = vtanh.pop %v3570
      %v3579 = vadd.f32 %v3571, 1.0
      %v3580 = vadd.f32 %v3572, 1.0
      %v3581 = vadd.f32 %v3573, 1.0
      %v3582 = vadd.f32 %v3574, 1.0
      %v3583 = vadd.f32 %v3575, 1.0
      %v3584 = vadd.f32 %v3576, 1.0
      %v3585 = vadd.f32 %v3577, 1.0
      %v3586 = vadd.f32 %v3578, 1.0
      %v3587 = vmul.f32 %v3579, 0.5
      %v3588 = vmul.f32 %v3580, 0.5
      %v3589 = vmul.f32 %v3581, 0.5
      %v3590 = vmul.f32 %v3582, 0.5
      %v3591 = vmul.f32 %v3583, 0.5
      %v3592 = vmul.f32 %v3584, 0.5
      %v3593 = vmul.f32 %v3585, 0.5
      %v3594 = vmul.f32 %v3586, 0.5
      %v3595 = vmul.f32 %v3508, %v3587
      %v3596 = vmul.f32 %v3511, %v3588
      %v3597 = vmul.f32 %v3514, %v3589
      %v3598 = vmul.f32 %v3517, %v3590
      %v3599 = vmul.f32 %v3520, %v3591
      %v3600 = vmul.f32 %v3523, %v3592
      %v3601 = vmul.f32 %v3526, %v3593
      %v3602 = vmul.f32 %v3529, %v3594
      %3603 = vmatpush.msra.mxu0 %v2133
      %3604 = vmatpush.msra.mxu0 %v2132
      %3605 = vmatpush.msra.mxu0 %v2131
      %3606 = vmatpush.msra.mxu0 %v2130
      %3607 = vmatpush.msra.mxu0 %v2129
      %3608 = vmatpush.msra.mxu0 %v2128
      %3609 = vmatpush.msra.mxu0 %v2127
      %3610 = vmatpush.msra.mxu0 %v2126
      %3611 = vmatpush.msra.mxu0 %v2125
      %3612 = vmatpush.msra.mxu0 %v2124
      %3613 = vmatpush.msra.mxu0 %v2123
      %3614 = vmatpush.msra.mxu0 %v2122
      %3615 = vmatpush.msra.mxu0 %v2121
      %3616 = vmatpush.msra.mxu0 %v2120
      %3617 = vmatpush.msra.mxu0 %v2119
      %3618 = vmatpush.msra.mxu0 %v2118
      %3619 = vmatmul.f32.gmra.mxu0 %v3595
      %v3620 = vpop.f32.mrf.mxu0
      %v3621 = vadd.f32 0.0, %v3620
      %3622 = vmatmul.f32.gmra.mxu0 %v3596
      %v3623 = vpop.f32.mrf.mxu0
      %v3624 = vadd.f32 0.0, %v3623
      %3625 = vmatmul.f32.gmra.mxu0 %v3597
      %v3626 = vpop.f32.mrf.mxu0
      %v3627 = vadd.f32 0.0, %v3626
      %3628 = vmatmul.f32.gmra.mxu0 %v3598
      %v3629 = vpop.f32.mrf.mxu0
      %v3630 = vadd.f32 0.0, %v3629
      %3631 = vmatmul.f32.gmra.mxu0 %v3599
      %v3632 = vpop.f32.mrf.mxu0
      %v3633 = vadd.f32 0.0, %v3632
      %3634 = vmatmul.f32.gmra.mxu0 %v3600
      %v3635 = vpop.f32.mrf.mxu0
      %v3636 = vadd.f32 0.0, %v3635
      %3637 = vmatmul.f32.gmra.mxu0 %v3601
      %v3638 = vpop.f32.mrf.mxu0
      %v3639 = vadd.f32 0.0, %v3638
      %3640 = vmatmul.f32.gmra.mxu0 %v3602
      %v3641 = vpop.f32.mrf.mxu0
      %v3642 = vadd.f32 0.0, %v3641
      %3643 = vdwg.mxu0
      %v3644 = vadd.f32 %v3263, %v3621
      %v3645 = vadd.f32 %v3264, %v3624
      %v3646 = vadd.f32 %v3265, %v3627
      %v3647 = vadd.f32 %v3266, %v3630
      %v3648 = vadd.f32 %v3267, %v3633
      %v3649 = vadd.f32 %v3268, %v3636
      %v3650 = vadd.f32 %v3269, %v3639
      %v3651 = vadd.f32 %v3270, %v3642
      %v3652 = vperm.slane %v2136, 2
      %v3653 = vadd.f32 %v3644, %v3652
      %v3654 = vadd.f32 %v3645, %v3652
      %v3655 = vadd.f32 %v3646, %v3652
      %v3656 = vadd.f32 %v3647, %v3652
      %v3657 = vadd.f32 %v3648, %v3652
      %v3658 = vadd.f32 %v3649, %v3652
      %v3659 = vadd.f32 %v3650, %v3652
      %v3660 = vadd.f32 %v3651, %v3652
      %s3661 = scalar_lea.vmem %s16, 128
      %v3662 = vld [vmem:[%s3661] sm:$0xff]
      %v3663 = vld [vmem:[%s3661 + $0x8] sm:$0xff]
      %v3664 = vld [vmem:[%s3661 + $0x10] sm:$0xff]
      %v3665 = vld [vmem:[%s3661 + $0x18] sm:$0xff]
      %s3666 = scalar_lea.vmem %s16, 160
      %v3667 = vld [vmem:[%s3666] sm:$0xff]
      %v3668 = vld [vmem:[%s3666 + $0x8] sm:$0xff]
      %v3669 = vld [vmem:[%s3666 + $0x10] sm:$0xff]
      %v3670 = vld [vmem:[%s3666 + $0x18] sm:$0xff]
      %s3671 = scalar_lea.vmem %s16, 192
      %v3672 = vld [vmem:[%s3671] sm:$0xff]
      %v3673 = vld [vmem:[%s3671 + $0x8] sm:$0xff]
      %v3674 = vld [vmem:[%s3671 + $0x10] sm:$0xff]
      %v3675 = vld [vmem:[%s3671 + $0x18] sm:$0xff]
      %s3676 = scalar_lea.vmem %s16, 224
      %v3677 = vld [vmem:[%s3676] sm:$0xff]
      %v3678 = vld [vmem:[%s3676 + $0x8] sm:$0xff]
      %v3679 = vld [vmem:[%s3676 + $0x10] sm:$0xff]
      %v3680 = vld [vmem:[%s3676 + $0x18] sm:$0xff]
      %s3681 = scalar_lea.vmem %s17, 32
      %v3682 = vld [vmem:[%s3681] sm:$0xff]
      %v3683 = vld [vmem:[%s3681 + $0x8] sm:$0xff]
      %v3684 = vld [vmem:[%s3681 + $0x10] sm:$0xff]
      %v3685 = vld [vmem:[%s3681 + $0x18] sm:$0xff]
      %s3686 = scalar_lea.vmem %s18, 128
      %v3687 = vld [vmem:[%s3686] sm:$0xff]
      %v3688 = vld [vmem:[%s3686 + $0x8] sm:$0xff]
      %v3689 = vld [vmem:[%s3686 + $0x10] sm:$0xff]
      %v3690 = vld [vmem:[%s3686 + $0x18] sm:$0xff]
      %v3691 = vld [vmem:[%s3686 + $0x20] sm:$0xff]
      %v3692 = vld [vmem:[%s3686 + $0x28] sm:$0xff]
      %v3693 = vld [vmem:[%s3686 + $0x30] sm:$0xff]
      %v3694 = vld [vmem:[%s3686 + $0x38] sm:$0xff]
      %v3695 = vld [vmem:[%s3686 + $0x40] sm:$0xff]
      %v3696 = vld [vmem:[%s3686 + $0x48] sm:$0xff]
      %v3697 = vld [vmem:[%s3686 + $0x50] sm:$0xff]
      %v3698 = vld [vmem:[%s3686 + $0x58] sm:$0xff]
      %v3699 = vld [vmem:[%s3686 + $0x60] sm:$0xff]
      %v3700 = vld [vmem:[%s3686 + $0x68] sm:$0xff]
      %v3701 = vld [vmem:[%s3686 + $0x70] sm:$0xff]
      %v3702 = vld [vmem:[%s3686 + $0x78] sm:$0xff]
      %v3703 = vld [vmem:[%s19 + $0x1] sm:$0x1]
      %s3704 = scalar_lea.vmem %s20, 16
      %v3705 = vld [vmem:[%s3704] sm:$0xff]
      %v3706 = vld [vmem:[%s3704 + $0x8] sm:$0xff]
      %v3707 = vperm.slane %v3705, 0
      %v3708 = vmul.f32 %v2499, %v3707
      %v3709 = vmul.f32 %v2500, %v3707
      %v3710 = vmul.f32 %v2501, %v3707
      %v3711 = vmul.f32 %v2502, %v3707
      %v3712 = vmul.f32 %v2503, %v3707
      %v3713 = vmul.f32 %v2504, %v3707
      %v3714 = vmul.f32 %v2505, %v3707
      %v3715 = vmul.f32 %v2506, %v3707
      %v3716 = vperm.slane %v3705, 1
      %v3717 = vadd.f32 %v3708, %v3716
      %v3718 = vadd.f32 %v3709, %v3716
      %v3719 = vadd.f32 %v3710, %v3716
      %v3720 = vadd.f32 %v3711, %v3716
      %v3721 = vadd.f32 %v3712, %v3716
      %v3722 = vadd.f32 %v3713, %v3716
      %v3723 = vadd.f32 %v3714, %v3716
      %v3724 = vadd.f32 %v3715, %v3716
      %v3725 = vperm.slane %v3705, 2
      %v3726 = vmul.f32 %v2305, %v3725
      %v3727 = vmul.f32 %v2306, %v3725
      %v3728 = vmul.f32 %v2307, %v3725
      %v3729 = vmul.f32 %v2308, %v3725
      %v3730 = vmul.f32 %v2309, %v3725
      %v3731 = vmul.f32 %v2310, %v3725
      %v3732 = vmul.f32 %v2311, %v3725
      %v3733 = vmul.f32 %v2312, %v3725
      %v3734 = vperm.slane %v3705, 3
      %v3735 = vadd.f32 %v3726, %v3734
      %v3736 = vadd.f32 %v3727, %v3734
      %v3737 = vadd.f32 %v3728, %v3734
      %v3738 = vadd.f32 %v3729, %v3734
      %v3739 = vadd.f32 %v3730, %v3734
      %v3740 = vadd.f32 %v3731, %v3734
      %v3741 = vadd.f32 %v3732, %v3734
      %v3742 = vadd.f32 %v3733, %v3734
      %v3743 = vadd.f32 %v3717, %v1960
      %v3744 = vadd.f32 %v3718, %v1963
      %v3745 = vadd.f32 %v3719, %v1966
      %v3746 = vadd.f32 %v3720, %v1969
      %v3747 = vadd.f32 %v3721, %v1972
      %v3748 = vadd.f32 %v3722, %v1975
      %v3749 = vadd.f32 %v3723, %v1978
      %v3750 = vadd.f32 %v3724, %v1981
      %v3751 = vperm.slane %v3705, 4
      %v3753 = vsel %vm913, %v3743, 0
      %v3756 = vsel %vm913, %v3744, 0
      %v3759 = vsel %vm913, %v3745, 0
      %v3762 = vsel %vm913, %v3746, 0
      %v3765 = vsel %vm913, %v3747, 0
      %v3768 = vsel %vm913, %v3748, 0
      %v3771 = vsel %vm913, %v3749, 0
      %v3774 = vsel %vm913, %v3750, 0
      %3776 = vmatpush.msra.mxu0 0.0
      %3777 = vmatpush.msra.mxu0 0.0
      %3778 = vmatpush.msra.mxu0 0.0
      %3779 = vmatpush.msra.mxu0 0.0
      %3780 = vmatpush.msra.mxu0 0.0
      %3781 = vmatpush.msra.mxu0 0.0
      %3782 = vmatpush.msra.mxu0 0.0
      %3783 = vmatpush.msra.mxu0 0.0
      %3784 = vmatpush.msra.mxu0 0.0
      %3785 = vmatpush.msra.mxu0 0.0
      %3786 = vmatpush.msra.mxu0 0.0
      %3787 = vmatpush.msra.mxu0 0.0
      %3788 = vmatpush.msra.mxu0 %v3665
      %3789 = vmatpush.msra.mxu0 %v3664
      %3790 = vmatpush.msra.mxu0 %v3663
      %3791 = vmatpush.msra.mxu0 %v3662
      %3792 = vmatmul.f32.gmra.mxu0 %v3753
      %v3793 = vpop.f32.mrf.mxu0
      %v3794 = vadd.f32 %v3751, %v3793
      %3795 = vmatmul.f32.gmra.mxu0 %v3756
      %v3796 = vpop.f32.mrf.mxu0
      %v3797 = vadd.f32 %v3751, %v3796
      %3798 = vmatmul.f32.gmra.mxu0 %v3759
      %v3799 = vpop.f32.mrf.mxu0
      %v3800 = vadd.f32 %v3751, %v3799
      %3801 = vmatmul.f32.gmra.mxu0 %v3762
      %v3802 = vpop.f32.mrf.mxu0
      %v3803 = vadd.f32 %v3751, %v3802
      %3804 = vmatmul.f32.gmra.mxu0 %v3765
      %v3805 = vpop.f32.mrf.mxu0
      %v3806 = vadd.f32 %v3751, %v3805
      %3807 = vmatmul.f32.gmra.mxu0 %v3768
      %v3808 = vpop.f32.mrf.mxu0
      %v3809 = vadd.f32 %v3751, %v3808
      %3810 = vmatmul.f32.gmra.mxu0 %v3771
      %v3811 = vpop.f32.mrf.mxu0
      %v3812 = vadd.f32 %v3751, %v3811
      %3813 = vmatmul.f32.gmra.mxu0 %v3774
      %v3814 = vpop.f32.mrf.mxu0
      %v3815 = vadd.f32 %v3751, %v3814
      %3816 = vdwg.mxu0
      %v3817 = vadd.f32 %v3735, %v1936
      %v3818 = vadd.f32 %v3736, %v1939
      %v3819 = vadd.f32 %v3737, %v1942
      %v3820 = vadd.f32 %v3738, %v1945
      %v3821 = vadd.f32 %v3739, %v1948
      %v3822 = vadd.f32 %v3740, %v1951
      %v3823 = vadd.f32 %v3741, %v1954
      %v3824 = vadd.f32 %v3742, %v1957
      %v3826 = vsel %vm913, %v3667, 0
      %v3829 = vsel %vm913, %v3668, 0
      %v3832 = vsel %vm913, %v3669, 0
      %v3835 = vsel %vm913, %v3670, 0
      %v3838 = vsel %vm913, %v3817, 0
      %v3841 = vsel %vm913, %v3818, 0
      %v3844 = vsel %vm913, %v3819, 0
      %v3847 = vsel %vm913, %v3820, 0
      %v3850 = vsel %vm913, %v3821, 0
      %v3853 = vsel %vm913, %v3822, 0
      %v3856 = vsel %vm913, %v3823, 0
      %v3859 = vsel %vm913, %v3824, 0
      %3861 = vmatpush.xpose.msra.mxu0 0.0
      %3862 = vmatpush.xpose.msra.mxu0 0.0
      %3863 = vmatpush.xpose.msra.mxu0 0.0
      %3864 = vmatpush.xpose.msra.mxu0 0.0
      %3865 = vmatpush.xpose.msra.mxu0 0.0
      %3866 = vmatpush.xpose.msra.mxu0 0.0
      %3867 = vmatpush.xpose.msra.mxu0 0.0
      %3868 = vmatpush.xpose.msra.mxu0 0.0
      %3869 = vmatpush.xpose.msra.mxu0 %v3859
      %3870 = vmatpush.xpose.msra.mxu0 %v3856
      %3871 = vmatpush.xpose.msra.mxu0 %v3853
      %3872 = vmatpush.xpose.msra.mxu0 %v3850
      %3873 = vmatpush.xpose.msra.mxu0 %v3847
      %3874 = vmatpush.xpose.msra.mxu0 %v3844
      %3875 = vmatpush.xpose.msra.mxu0 %v3841
      %3876 = vmatpush.xpose.msra.mxu0 %v3838
      %3877 = vmatmul.f32.gmra.mxu0 %v3826
      %v3878 = vpop.f32.mrf.mxu0
      %v3879 = vadd.f32 0.0, %v3878
      %3880 = vmatmul.f32.gmra.mxu0 %v3829
      %v3881 = vpop.f32.mrf.mxu0
      %v3882 = vadd.f32 0.0, %v3881
      %3883 = vmatmul.f32.gmra.mxu0 %v3832
      %v3884 = vpop.f32.mrf.mxu0
      %v3885 = vadd.f32 0.0, %v3884
      %3886 = vmatmul.f32.gmra.mxu0 %v3835
      %v3887 = vpop.f32.mrf.mxu0
      %v3888 = vadd.f32 0.0, %v3887
      %3889 = vdwg.mxu0
      %v3890 = vperm.slane %v3705, 6
      %v3892 = vsel %vm913, %v3735, 0
      %v3895 = vsel %vm913, %v3736, 0
      %v3898 = vsel %vm913, %v3737, 0
      %v3901 = vsel %vm913, %v3738, 0
      %v3904 = vsel %vm913, %v3739, 0
      %v3907 = vsel %vm913, %v3740, 0
      %v3910 = vsel %vm913, %v3741, 0
      %v3913 = vsel %vm913, %v3742, 0
      %3915 = vmatpush.msra.mxu0 0.0
      %3916 = vmatpush.msra.mxu0 0.0
      %3917 = vmatpush.msra.mxu0 0.0
      %3918 = vmatpush.msra.mxu0 0.0
      %3919 = vmatpush.msra.mxu0 0.0
      %3920 = vmatpush.msra.mxu0 0.0
      %3921 = vmatpush.msra.mxu0 0.0
      %3922 = vmatpush.msra.mxu0 0.0
      %3923 = vmatpush.msra.mxu0 0.0
      %3924 = vmatpush.msra.mxu0 0.0
      %3925 = vmatpush.msra.mxu0 0.0
      %3926 = vmatpush.msra.mxu0 0.0
      %3927 = vmatpush.msra.mxu0 %v3675
      %3928 = vmatpush.msra.mxu0 %v3674
      %3929 = vmatpush.msra.mxu0 %v3673
      %3930 = vmatpush.msra.mxu0 %v3672
      %3931 = vmatmul.f32.gmra.mxu0 %v3892
      %v3932 = vpop.f32.mrf.mxu0
      %v3933 = vadd.f32 %v3890, %v3932
      %3934 = vmatmul.f32.gmra.mxu0 %v3895
      %v3935 = vpop.f32.mrf.mxu0
      %v3936 = vadd.f32 %v3890, %v3935
      %3937 = vmatmul.f32.gmra.mxu0 %v3898
      %v3938 = vpop.f32.mrf.mxu0
      %v3939 = vadd.f32 %v3890, %v3938
      %3940 = vmatmul.f32.gmra.mxu0 %v3901
      %v3941 = vpop.f32.mrf.mxu0
      %v3942 = vadd.f32 %v3890, %v3941
      %3943 = vmatmul.f32.gmra.mxu0 %v3904
      %v3944 = vpop.f32.mrf.mxu0
      %v3945 = vadd.f32 %v3890, %v3944
      %3946 = vmatmul.f32.gmra.mxu0 %v3907
      %v3947 = vpop.f32.mrf.mxu0
      %v3948 = vadd.f32 %v3890, %v3947
      %3949 = vmatmul.f32.gmra.mxu0 %v3910
      %v3950 = vpop.f32.mrf.mxu0
      %v3951 = vadd.f32 %v3890, %v3950
      %3952 = vmatmul.f32.gmra.mxu0 %v3913
      %v3953 = vpop.f32.mrf.mxu0
      %v3954 = vadd.f32 %v3890, %v3953
      %3955 = vdwg.mxu0
      %3960 = vrot.lane.b32.xlu0 %v3879, 64
      %v3961 = vpop.permute.xlu0 %3960
      %3962 = vrot.lane.b32.xlu0 %v3882, 64
      %v3963 = vpop.permute.xlu0 %3962
      %3964 = vrot.lane.b32.xlu0 %v3885, 64
      %v3965 = vpop.permute.xlu0 %3964
      %3966 = vrot.lane.b32.xlu0 %v3888, 64
      %v3967 = vpop.permute.xlu0 %3966
      %v3972 = vsel %vm2754, %v3879, %v3961
      %v3973 = vsel %vm2754, %v3882, %v3963
      %v3974 = vsel %vm2754, %v3885, %v3965
      %v3975 = vsel %vm2754, %v3888, %v3967
      %v3976 = vmul.f32 %v3972, %v2087
      %v3977 = vmul.f32 %v3972, %v2088
      %v3978 = vmul.f32 %v3973, %v2089
      %v3979 = vmul.f32 %v3973, %v2090
      %v3980 = vmul.f32 %v3974, %v2091
      %v3981 = vmul.f32 %v3974, %v2092
      %v3982 = vmul.f32 %v3975, %v2093
      %v3983 = vmul.f32 %v3975, %v2094
      %v3984 = vmul.f32 %v3933, %v2055
      %v3985 = vmul.f32 %v3936, %v2056
      %v3986 = vmul.f32 %v3939, %v2057
      %v3987 = vmul.f32 %v3942, %v2058
      %v3988 = vmul.f32 %v3945, %v2059
      %v3989 = vmul.f32 %v3948, %v2060
      %v3990 = vmul.f32 %v3951, %v2061
      %v3991 = vmul.f32 %v3954, %v2062
      %v3992 = vmul.f32 %v3933, %v2063
      %v3993 = vmul.f32 %v3936, %v2064
      %v3994 = vmul.f32 %v3939, %v2065
      %v3995 = vmul.f32 %v3942, %v2066
      %v3996 = vmul.f32 %v3945, %v2067
      %v3997 = vmul.f32 %v3948, %v2068
      %v3998 = vmul.f32 %v3951, %v2069
      %v3999 = vmul.f32 %v3954, %v2070
      %v4000 = vmul.f32 %v3933, %v2071
      %v4001 = vmul.f32 %v3936, %v2072
      %v4002 = vmul.f32 %v3939, %v2073
      %v4003 = vmul.f32 %v3942, %v2074
      %v4004 = vmul.f32 %v3945, %v2075
      %v4005 = vmul.f32 %v3948, %v2076
      %v4006 = vmul.f32 %v3951, %v2077
      %v4007 = vmul.f32 %v3954, %v2078
      %v4008 = vmul.f32 %v3933, %v2079
      %v4009 = vmul.f32 %v3936, %v2080
      %v4010 = vmul.f32 %v3939, %v2081
      %v4011 = vmul.f32 %v3942, %v2082
      %v4012 = vmul.f32 %v3945, %v2083
      %v4013 = vmul.f32 %v3948, %v2084
      %v4014 = vmul.f32 %v3951, %v2085
      %v4015 = vmul.f32 %v3954, %v2086
      %v4017 = vsel %vm913, %v3794, 0
      %v4020 = vsel %vm913, %v3797, 0
      %v4023 = vsel %vm913, %v3800, 0
      %v4026 = vsel %vm913, %v3803, 0
      %v4029 = vsel %vm913, %v3806, 0
      %v4032 = vsel %vm913, %v3809, 0
      %v4035 = vsel %vm913, %v3812, 0
      %v4038 = vsel %vm913, %v3815, 0
      %4040 = vmatpush.msra.mxu0 0.0
      %4041 = vmatpush.msra.mxu0 0.0
      %4042 = vmatpush.msra.mxu0 0.0
      %4043 = vmatpush.msra.mxu0 0.0
      %4044 = vmatpush.msra.mxu0 0.0
      %4045 = vmatpush.msra.mxu0 0.0
      %4046 = vmatpush.msra.mxu0 0.0
      %4047 = vmatpush.msra.mxu0 0.0
      %4048 = vmatpush.msra.mxu0 0.0
      %4049 = vmatpush.msra.mxu0 0.0
      %4050 = vmatpush.msra.mxu0 0.0
      %4051 = vmatpush.msra.mxu0 0.0
      %4052 = vmatpush.msra.mxu0 %v3982
      %4053 = vmatpush.msra.mxu0 %v3980
      %4054 = vmatpush.msra.mxu0 %v3978
      %4055 = vmatpush.msra.mxu0 %v3976
      %4056 = vmatmul.f32.gmra.mxu0 %v4017
      %v4057 = vpop.f32.mrf.mxu0
      %v4058 = vadd.f32 0.0, %v4057
      %4059 = vmatmul.f32.gmra.mxu0 %v4020
      %v4060 = vpop.f32.mrf.mxu0
      %v4061 = vadd.f32 0.0, %v4060
      %4062 = vmatmul.f32.gmra.mxu0 %v4023
      %v4063 = vpop.f32.mrf.mxu0
      %v4064 = vadd.f32 0.0, %v4063
      %4065 = vmatmul.f32.gmra.mxu0 %v4026
      %v4066 = vpop.f32.mrf.mxu0
      %v4067 = vadd.f32 0.0, %v4066
      %4068 = vmatmul.f32.gmra.mxu0 %v4029
      %v4069 = vpop.f32.mrf.mxu0
      %v4070 = vadd.f32 0.0, %v4069
      %4071 = vmatmul.f32.gmra.mxu0 %v4032
      %v4072 = vpop.f32.mrf.mxu0
      %v4073 = vadd.f32 0.0, %v4072
      %4074 = vmatmul.f32.gmra.mxu0 %v4035
      %v4075 = vpop.f32.mrf.mxu0
      %v4076 = vadd.f32 0.0, %v4075
      %4077 = vmatmul.f32.gmra.mxu0 %v4038
      %v4078 = vpop.f32.mrf.mxu0
      %v4079 = vadd.f32 0.0, %v4078
      %4080 = vdwg.mxu0
      %4081 = vmatpush.msra.mxu0 0.0
      %4082 = vmatpush.msra.mxu0 0.0
      %4083 = vmatpush.msra.mxu0 0.0
      %4084 = vmatpush.msra.mxu0 0.0
      %4085 = vmatpush.msra.mxu0 0.0
      %4086 = vmatpush.msra.mxu0 0.0
      %4087 = vmatpush.msra.mxu0 0.0
      %4088 = vmatpush.msra.mxu0 0.0
      %4089 = vmatpush.msra.mxu0 0.0
      %4090 = vmatpush.msra.mxu0 0.0
      %4091 = vmatpush.msra.mxu0 0.0
      %4092 = vmatpush.msra.mxu0 0.0
      %4093 = vmatpush.msra.mxu0 %v3983
      %4094 = vmatpush.msra.mxu0 %v3981
      %4095 = vmatpush.msra.mxu0 %v3979
      %4096 = vmatpush.msra.mxu0 %v3977
      %4097 = vmatmul.f32.gmra.mxu0 %v4017
      %v4098 = vpop.f32.mrf.mxu0
      %v4099 = vadd.f32 0.0, %v4098
      %4100 = vmatmul.f32.gmra.mxu0 %v4020
      %v4101 = vpop.f32.mrf.mxu0
      %v4102 = vadd.f32 0.0, %v4101
      %4103 = vmatmul.f32.gmra.mxu0 %v4023
      %v4104 = vpop.f32.mrf.mxu0
      %v4105 = vadd.f32 0.0, %v4104
      %4106 = vmatmul.f32.gmra.mxu0 %v4026
      %v4107 = vpop.f32.mrf.mxu0
      %v4108 = vadd.f32 0.0, %v4107
      %4109 = vmatmul.f32.gmra.mxu0 %v4029
      %v4110 = vpop.f32.mrf.mxu0
      %v4111 = vadd.f32 0.0, %v4110
      %4112 = vmatmul.f32.gmra.mxu0 %v4032
      %v4113 = vpop.f32.mrf.mxu0
      %v4114 = vadd.f32 0.0, %v4113
      %4115 = vmatmul.f32.gmra.mxu0 %v4035
      %v4116 = vpop.f32.mrf.mxu0
      %v4117 = vadd.f32 0.0, %v4116
      %4118 = vmatmul.f32.gmra.mxu0 %v4038
      %v4119 = vpop.f32.mrf.mxu0
      %v4120 = vadd.f32 0.0, %v4119
      %4121 = vdwg.mxu0
      %v4122 = vmul.f32 %v4058, 0.35355338
      %v4123 = vmul.f32 %v4099, 0.35355338
      %v4124 = vmul.f32 %v4061, 0.35355338
      %v4125 = vmul.f32 %v4102, 0.35355338
      %v4126 = vmul.f32 %v4064, 0.35355338
      %v4127 = vmul.f32 %v4105, 0.35355338
      %v4128 = vmul.f32 %v4067, 0.35355338
      %v4129 = vmul.f32 %v4108, 0.35355338
      %v4130 = vmul.f32 %v4070, 0.35355338
      %v4131 = vmul.f32 %v4111, 0.35355338
      %v4132 = vmul.f32 %v4073, 0.35355338
      %v4133 = vmul.f32 %v4114, 0.35355338
      %v4134 = vmul.f32 %v4076, 0.35355338
      %v4135 = vmul.f32 %v4117, 0.35355338
      %v4136 = vmul.f32 %v4079, 0.35355338
      %v4137 = vmul.f32 %v4120, 0.35355338
      %v4138 = vadd.f32 %v4122, %v1999
      %v4139 = vadd.f32 %v4123, %v2000
      %v4140 = vadd.f32 %v4124, %v2001
      %v4141 = vadd.f32 %v4125, %v2002
      %v4142 = vadd.f32 %v4126, %v2003
      %v4143 = vadd.f32 %v4127, %v2004
      %v4144 = vadd.f32 %v4128, %v2005
      %v4145 = vadd.f32 %v4129, %v2006
      %v4146 = vadd.f32 %v4130, %v2007
      %v4147 = vadd.f32 %v4131, %v2008
      %v4148 = vadd.f32 %v4132, %v2009
      %v4149 = vadd.f32 %v4133, %v2010
      %v4150 = vadd.f32 %v4134, %v2011
      %v4151 = vadd.f32 %v4135, %v2012
      %v4152 = vadd.f32 %v4136, %v2013
      %v4153 = vadd.f32 %v4137, %v2014
      %v4154 = vmax.f32 %v4138, %v4139
      %4155 = vmax.xlane.f32.xlu0 %v4154
      %v4156 = vpop.xlane.xlu0 %4155
      %v4157 = vmax.f32 %v4140, %v4141
      %4158 = vmax.xlane.f32.xlu0 %v4157
      %v4159 = vpop.xlane.xlu0 %4158
      %v4160 = vmax.f32 %v4142, %v4143
      %4161 = vmax.xlane.f32.xlu0 %v4160
      %v4162 = vpop.xlane.xlu0 %4161
      %v4163 = vmax.f32 %v4144, %v4145
      %4164 = vmax.xlane.f32.xlu0 %v4163
      %v4165 = vpop.xlane.xlu0 %4164
      %v4166 = vmax.f32 %v4146, %v4147
      %4167 = vmax.xlane.f32.xlu0 %v4166
      %v4168 = vpop.xlane.xlu0 %4167
      %v4169 = vmax.f32 %v4148, %v4149
      %4170 = vmax.xlane.f32.xlu0 %v4169
      %v4171 = vpop.xlane.xlu0 %4170
      %v4172 = vmax.f32 %v4150, %v4151
      %4173 = vmax.xlane.f32.xlu0 %v4172
      %v4174 = vpop.xlane.xlu0 %4173
      %v4175 = vmax.f32 %v4152, %v4153
      %4176 = vmax.xlane.f32.xlu0 %v4175
      %v4177 = vpop.xlane.xlu0 %4176
      %v4178 = vsub.f32 %v4138, %v4156
      %v4179 = vsub.f32 %v4139, %v4156
      %v4180 = vsub.f32 %v4140, %v4159
      %v4181 = vsub.f32 %v4141, %v4159
      %v4182 = vsub.f32 %v4142, %v4162
      %v4183 = vsub.f32 %v4143, %v4162
      %v4184 = vsub.f32 %v4144, %v4165
      %v4185 = vsub.f32 %v4145, %v4165
      %v4186 = vsub.f32 %v4146, %v4168
      %v4187 = vsub.f32 %v4147, %v4168
      %v4188 = vsub.f32 %v4148, %v4171
      %v4189 = vsub.f32 %v4149, %v4171
      %v4190 = vsub.f32 %v4150, %v4174
      %v4191 = vsub.f32 %v4151, %v4174
      %v4192 = vsub.f32 %v4152, %v4177
      %v4193 = vsub.f32 %v4153, %v4177
      %v4194 = vmul.f32 %v4178, 1.442695
      %v4195 = vpow.pop %v4194
      %v4196 = vmul.f32 %v4179, 1.442695
      %v4197 = vpow.pop %v4196
      %v4198 = vmul.f32 %v4180, 1.442695
      %v4199 = vpow.pop %v4198
      %v4200 = vmul.f32 %v4181, 1.442695
      %v4201 = vpow.pop %v4200
      %v4202 = vmul.f32 %v4182, 1.442695
      %v4203 = vpow.pop %v4202
      %v4204 = vmul.f32 %v4183, 1.442695
      %v4205 = vpow.pop %v4204
      %v4206 = vmul.f32 %v4184, 1.442695
      %v4207 = vpow.pop %v4206
      %v4208 = vmul.f32 %v4185, 1.442695
      %v4209 = vpow.pop %v4208
      %v4210 = vmul.f32 %v4186, 1.442695
      %v4211 = vpow.pop %v4210
      %v4212 = vmul.f32 %v4187, 1.442695
      %v4213 = vpow.pop %v4212
      %v4214 = vmul.f32 %v4188, 1.442695
      %v4215 = vpow.pop %v4214
      %v4216 = vmul.f32 %v4189, 1.442695
      %v4217 = vpow.pop %v4216
      %v4218 = vmul.f32 %v4190, 1.442695
      %v4219 = vpow.pop %v4218
      %v4220 = vmul.f32 %v4191, 1.442695
      %v4221 = vpow.pop %v4220
      %v4222 = vmul.f32 %v4192, 1.442695
      %v4223 = vpow.pop %v4222
      %v4224 = vmul.f32 %v4193, 1.442695
      %v4225 = vpow.pop %v4224
      %4226 = vmatpush.msra.mxu0 %v2070
      %4227 = vmatpush.msra.mxu0 %v2069
      %4228 = vmatpush.msra.mxu0 %v2068
      %4229 = vmatpush.msra.mxu0 %v2067
      %4230 = vmatpush.msra.mxu0 %v2066
      %4231 = vmatpush.msra.mxu0 %v2065
      %4232 = vmatpush.msra.mxu0 %v2064
      %4233 = vmatpush.msra.mxu0 %v2063
      %4234 = vmatpush.msra.mxu0 %v2062
      %4235 = vmatpush.msra.mxu0 %v2061
      %4236 = vmatpush.msra.mxu0 %v2060
      %4237 = vmatpush.msra.mxu0 %v2059
      %4238 = vmatpush.msra.mxu0 %v2058
      %4239 = vmatpush.msra.mxu0 %v2057
      %4240 = vmatpush.msra.mxu0 %v2056
      %4241 = vmatpush.msra.mxu0 %v2055
      %4242 = vmatmul.f32.gmra.mxu0 %v4195
      %v4243 = vpop.f32.mrf.mxu0
      %v4244 = vadd.f32 0.0, %v4243
      %4245 = vmatmul.f32.gmra.mxu0 %v4199
      %v4246 = vpop.f32.mrf.mxu0
      %v4247 = vadd.f32 0.0, %v4246
      %4248 = vmatmul.f32.gmra.mxu0 %v4203
      %v4249 = vpop.f32.mrf.mxu0
      %v4250 = vadd.f32 0.0, %v4249
      %4251 = vmatmul.f32.gmra.mxu0 %v4207
      %v4252 = vpop.f32.mrf.mxu0
      %v4253 = vadd.f32 0.0, %v4252
      %4254 = vmatmul.f32.gmra.mxu0 %v4211
      %v4255 = vpop.f32.mrf.mxu0
      %v4256 = vadd.f32 0.0, %v4255
      %4257 = vmatmul.f32.gmra.mxu0 %v4215
      %v4258 = vpop.f32.mrf.mxu0
      %v4259 = vadd.f32 0.0, %v4258
      %4260 = vmatmul.f32.gmra.mxu0 %v4219
      %v4261 = vpop.f32.mrf.mxu0
      %v4262 = vadd.f32 0.0, %v4261
      %4263 = vmatmul.f32.gmra.mxu0 %v4223
      %v4264 = vpop.f32.mrf.mxu0
      %v4265 = vadd.f32 0.0, %v4264
      %4266 = vdwg.mxu0
      %4267 = vmatpush.msra.mxu0 %v2086
      %4268 = vmatpush.msra.mxu0 %v2085
      %4269 = vmatpush.msra.mxu0 %v2084
      %4270 = vmatpush.msra.mxu0 %v2083
      %4271 = vmatpush.msra.mxu0 %v2082
      %4272 = vmatpush.msra.mxu0 %v2081
      %4273 = vmatpush.msra.mxu0 %v2080
      %4274 = vmatpush.msra.mxu0 %v2079
      %4275 = vmatpush.msra.mxu0 %v2078
      %4276 = vmatpush.msra.mxu0 %v2077
      %4277 = vmatpush.msra.mxu0 %v2076
      %4278 = vmatpush.msra.mxu0 %v2075
      %4279 = vmatpush.msra.mxu0 %v2074
      %4280 = vmatpush.msra.mxu0 %v2073
      %4281 = vmatpush.msra.mxu0 %v2072
      %4282 = vmatpush.msra.mxu0 %v2071
      %4283 = vmatmul.f32.gmra.mxu0 %v4197
      %v4284 = vpop.f32.mrf.mxu0
      %v4285 = vadd.f32 %v4244, %v4284
      %4286 = vmatmul.f32.gmra.mxu0 %v4201
      %v4287 = vpop.f32.mrf.mxu0
      %v4288 = vadd.f32 %v4247, %v4287
      %4289 = vmatmul.f32.gmra.mxu0 %v4205
      %v4290 = vpop.f32.mrf.mxu0
      %v4291 = vadd.f32 %v4250, %v4290
      %4292 = vmatmul.f32.gmra.mxu0 %v4209
      %v4293 = vpop.f32.mrf.mxu0
      %v4294 = vadd.f32 %v4253, %v4293
      %4295 = vmatmul.f32.gmra.mxu0 %v4213
      %v4296 = vpop.f32.mrf.mxu0
      %v4297 = vadd.f32 %v4256, %v4296
      %4298 = vmatmul.f32.gmra.mxu0 %v4217
      %v4299 = vpop.f32.mrf.mxu0
      %v4300 = vadd.f32 %v4259, %v4299
      %4301 = vmatmul.f32.gmra.mxu0 %v4221
      %v4302 = vpop.f32.mrf.mxu0
      %v4303 = vadd.f32 %v4262, %v4302
      %4304 = vmatmul.f32.gmra.mxu0 %v4225
      %v4305 = vpop.f32.mrf.mxu0
      %v4306 = vadd.f32 %v4265, %v4305
      %4307 = vdwg.mxu0
      %4308 = vmatpush.msra.mxu0 %v3999
      %4309 = vmatpush.msra.mxu0 %v3998
      %4310 = vmatpush.msra.mxu0 %v3997
      %4311 = vmatpush.msra.mxu0 %v3996
      %4312 = vmatpush.msra.mxu0 %v3995
      %4313 = vmatpush.msra.mxu0 %v3994
      %4314 = vmatpush.msra.mxu0 %v3993
      %4315 = vmatpush.msra.mxu0 %v3992
      %4316 = vmatpush.msra.mxu0 %v3991
      %4317 = vmatpush.msra.mxu0 %v3990
      %4318 = vmatpush.msra.mxu0 %v3989
      %4319 = vmatpush.msra.mxu0 %v3988
      %4320 = vmatpush.msra.mxu0 %v3987
      %4321 = vmatpush.msra.mxu0 %v3986
      %4322 = vmatpush.msra.mxu0 %v3985
      %4323 = vmatpush.msra.mxu0 %v3984
      %4324 = vmatmul.f32.gmra.mxu0 %v4195
      %v4325 = vpop.f32.mrf.mxu0
      %v4326 = vadd.f32 0.0, %v4325
      %4327 = vmatmul.f32.gmra.mxu0 %v4199
      %v4328 = vpop.f32.mrf.mxu0
      %v4329 = vadd.f32 0.0, %v4328
      %4330 = vmatmul.f32.gmra.mxu0 %v4203
      %v4331 = vpop.f32.mrf.mxu0
      %v4332 = vadd.f32 0.0, %v4331
      %4333 = vmatmul.f32.gmra.mxu0 %v4207
      %v4334 = vpop.f32.mrf.mxu0
      %v4335 = vadd.f32 0.0, %v4334
      %4336 = vmatmul.f32.gmra.mxu0 %v4211
      %v4337 = vpop.f32.mrf.mxu0
      %v4338 = vadd.f32 0.0, %v4337
      %4339 = vmatmul.f32.gmra.mxu0 %v4215
      %v4340 = vpop.f32.mrf.mxu0
      %v4341 = vadd.f32 0.0, %v4340
      %4342 = vmatmul.f32.gmra.mxu0 %v4219
      %v4343 = vpop.f32.mrf.mxu0
      %v4344 = vadd.f32 0.0, %v4343
      %4345 = vmatmul.f32.gmra.mxu0 %v4223
      %v4346 = vpop.f32.mrf.mxu0
      %v4347 = vadd.f32 0.0, %v4346
      %4348 = vdwg.mxu0
      %4349 = vmatpush.msra.mxu0 %v4015
      %4350 = vmatpush.msra.mxu0 %v4014
      %4351 = vmatpush.msra.mxu0 %v4013
      %4352 = vmatpush.msra.mxu0 %v4012
      %4353 = vmatpush.msra.mxu0 %v4011
      %4354 = vmatpush.msra.mxu0 %v4010
      %4355 = vmatpush.msra.mxu0 %v4009
      %4356 = vmatpush.msra.mxu0 %v4008
      %4357 = vmatpush.msra.mxu0 %v4007
      %4358 = vmatpush.msra.mxu0 %v4006
      %4359 = vmatpush.msra.mxu0 %v4005
      %4360 = vmatpush.msra.mxu0 %v4004
      %4361 = vmatpush.msra.mxu0 %v4003
      %4362 = vmatpush.msra.mxu0 %v4002
      %4363 = vmatpush.msra.mxu0 %v4001
      %4364 = vmatpush.msra.mxu0 %v4000
      %4365 = vmatmul.f32.gmra.mxu0 %v4197
      %v4366 = vpop.f32.mrf.mxu0
      %v4367 = vadd.f32 %v4326, %v4366
      %4368 = vmatmul.f32.gmra.mxu0 %v4201
      %v4369 = vpop.f32.mrf.mxu0
      %v4370 = vadd.f32 %v4329, %v4369
      %4371 = vmatmul.f32.gmra.mxu0 %v4205
      %v4372 = vpop.f32.mrf.mxu0
      %v4373 = vadd.f32 %v4332, %v4372
      %4374 = vmatmul.f32.gmra.mxu0 %v4209
      %v4375 = vpop.f32.mrf.mxu0
      %v4376 = vadd.f32 %v4335, %v4375
      %4377 = vmatmul.f32.gmra.mxu0 %v4213
      %v4378 = vpop.f32.mrf.mxu0
      %v4379 = vadd.f32 %v4338, %v4378
      %4380 = vmatmul.f32.gmra.mxu0 %v4217
      %v4381 = vpop.f32.mrf.mxu0
      %v4382 = vadd.f32 %v4341, %v4381
      %4383 = vmatmul.f32.gmra.mxu0 %v4221
      %v4384 = vpop.f32.mrf.mxu0
      %v4385 = vadd.f32 %v4344, %v4384
      %4386 = vmatmul.f32.gmra.mxu0 %v4225
      %v4387 = vpop.f32.mrf.mxu0
      %v4388 = vadd.f32 %v4347, %v4387
      %4389 = vdwg.mxu0
      %v4390 = vrcp.pop %v4285
      %v4391 = vrcp.pop %v4288
      %v4392 = vrcp.pop %v4291
      %v4393 = vrcp.pop %v4294
      %v4394 = vrcp.pop %v4297
      %v4395 = vrcp.pop %v4300
      %v4396 = vrcp.pop %v4303
      %v4397 = vrcp.pop %v4306
      %v4398 = vmul.f32 %v4367, %v4390
      %v4399 = vmul.f32 %v4370, %v4391
      %v4400 = vmul.f32 %v4373, %v4392
      %v4401 = vmul.f32 %v4376, %v4393
      %v4402 = vmul.f32 %v4379, %v4394
      %v4403 = vmul.f32 %v4382, %v4395
      %v4404 = vmul.f32 %v4385, %v4396
      %v4405 = vmul.f32 %v4388, %v4397
      %v4407 = vsel %vm913, %v4398, 0
      %v4410 = vsel %vm913, %v4399, 0
      %v4413 = vsel %vm913, %v4400, 0
      %v4416 = vsel %vm913, %v4401, 0
      %v4419 = vsel %vm913, %v4402, 0
      %v4422 = vsel %vm913, %v4403, 0
      %v4425 = vsel %vm913, %v4404, 0
      %v4428 = vsel %vm913, %v4405, 0
      %4430 = vmatpush.msra.mxu0 0.0
      %4431 = vmatpush.msra.mxu0 0.0
      %4432 = vmatpush.msra.mxu0 0.0
      %4433 = vmatpush.msra.mxu0 0.0
      %4434 = vmatpush.msra.mxu0 0.0
      %4435 = vmatpush.msra.mxu0 0.0
      %4436 = vmatpush.msra.mxu0 0.0
      %4437 = vmatpush.msra.mxu0 0.0
      %4438 = vmatpush.msra.mxu0 0.0
      %4439 = vmatpush.msra.mxu0 0.0
      %4440 = vmatpush.msra.mxu0 0.0
      %4441 = vmatpush.msra.mxu0 0.0
      %4442 = vmatpush.msra.mxu0 %v3680
      %4443 = vmatpush.msra.mxu0 %v3679
      %4444 = vmatpush.msra.mxu0 %v3678
      %4445 = vmatpush.msra.mxu0 %v3677
      %4446 = vmatmul.f32.gmra.mxu0 %v4407
      %v4447 = vpop.f32.mrf.mxu0
      %v4448 = vadd.f32 0.0, %v4447
      %4449 = vmatmul.f32.gmra.mxu0 %v4410
      %v4450 = vpop.f32.mrf.mxu0
      %v4451 = vadd.f32 0.0, %v4450
      %4452 = vmatmul.f32.gmra.mxu0 %v4413
      %v4453 = vpop.f32.mrf.mxu0
      %v4454 = vadd.f32 0.0, %v4453
      %4455 = vmatmul.f32.gmra.mxu0 %v4416
      %v4456 = vpop.f32.mrf.mxu0
      %v4457 = vadd.f32 0.0, %v4456
      %4458 = vmatmul.f32.gmra.mxu0 %v4419
      %v4459 = vpop.f32.mrf.mxu0
      %v4460 = vadd.f32 0.0, %v4459
      %4461 = vmatmul.f32.gmra.mxu0 %v4422
      %v4462 = vpop.f32.mrf.mxu0
      %v4463 = vadd.f32 0.0, %v4462
      %4464 = vmatmul.f32.gmra.mxu0 %v4425
      %v4465 = vpop.f32.mrf.mxu0
      %v4466 = vadd.f32 0.0, %v4465
      %4467 = vmatmul.f32.gmra.mxu0 %v4428
      %v4468 = vpop.f32.mrf.mxu0
      %v4469 = vadd.f32 0.0, %v4468
      %4470 = vdwg.mxu0
      %v4471 = vadd.f32 %v1895, %v4448
      %v4472 = vadd.f32 %v1898, %v4451
      %v4473 = vadd.f32 %v1901, %v4454
      %v4474 = vadd.f32 %v1904, %v4457
      %v4475 = vadd.f32 %v1907, %v4460
      %v4476 = vadd.f32 %v1910, %v4463
      %v4477 = vadd.f32 %v1913, %v4466
      %v4478 = vadd.f32 %v1916, %v4469
      %v4479 = vperm.slane %v3705, 7
      %v4480 = vadd.f32 %v4471, %v4479
      %v4481 = vadd.f32 %v4472, %v4479
      %v4482 = vadd.f32 %v4473, %v4479
      %v4483 = vadd.f32 %v4474, %v4479
      %v4484 = vadd.f32 %v4475, %v4479
      %v4485 = vadd.f32 %v4476, %v4479
      %v4486 = vadd.f32 %v4477, %v4479
      %v4487 = vadd.f32 %v4478, %v4479
      %v4488 = vsel %vm913, %v4480, 0.0
      %4489 = vadd.xlane.f32.xlu0 %v4488
      %v4490 = vpop.xlane.xlu0 %4489
      %v4491 = vsel %vm913, %v4481, 0.0
      %4492 = vadd.xlane.f32.xlu0 %v4491
      %v4493 = vpop.xlane.xlu0 %4492
      %v4494 = vsel %vm913, %v4482, 0.0
      %4495 = vadd.xlane.f32.xlu0 %v4494
      %v4496 = vpop.xlane.xlu0 %4495
      %v4497 = vsel %vm913, %v4483, 0.0
      %4498 = vadd.xlane.f32.xlu0 %v4497
      %v4499 = vpop.xlane.xlu0 %4498
      %v4500 = vsel %vm913, %v4484, 0.0
      %4501 = vadd.xlane.f32.xlu0 %v4500
      %v4502 = vpop.xlane.xlu0 %4501
      %v4503 = vsel %vm913, %v4485, 0.0
      %4504 = vadd.xlane.f32.xlu0 %v4503
      %v4505 = vpop.xlane.xlu0 %4504
      %v4506 = vsel %vm913, %v4486, 0.0
      %4507 = vadd.xlane.f32.xlu0 %v4506
      %v4508 = vpop.xlane.xlu0 %4507
      %v4509 = vsel %vm913, %v4487, 0.0
      %4510 = vadd.xlane.f32.xlu0 %v4509
      %v4511 = vpop.xlane.xlu0 %4510
      %v4512 = vmul.f32 %v4490, %v968
      %v4513 = vmul.f32 %v4493, %v968
      %v4514 = vmul.f32 %v4496, %v968
      %v4515 = vmul.f32 %v4499, %v968
      %v4516 = vmul.f32 %v4502, %v968
      %v4517 = vmul.f32 %v4505, %v968
      %v4518 = vmul.f32 %v4508, %v968
      %v4519 = vmul.f32 %v4511, %v968
      %v4520 = vsub.f32 %v4480, %v4512
      %v4521 = vsub.f32 %v4481, %v4513
      %v4522 = vsub.f32 %v4482, %v4514
      %v4523 = vsub.f32 %v4483, %v4515
      %v4524 = vsub.f32 %v4484, %v4516
      %v4525 = vsub.f32 %v4485, %v4517
      %v4526 = vsub.f32 %v4486, %v4518
      %v4527 = vsub.f32 %v4487, %v4519
      %v4528 = vmul.f32 %v4520, %v4520
      %v4529 = vmul.f32 %v4521, %v4521
      %v4530 = vmul.f32 %v4522, %v4522
      %v4531 = vmul.f32 %v4523, %v4523
      %v4532 = vmul.f32 %v4524, %v4524
      %v4533 = vmul.f32 %v4525, %v4525
      %v4534 = vmul.f32 %v4526, %v4526
      %v4535 = vmul.f32 %v4527, %v4527
      %v4536 = vsel %vm913, %v4528, 0.0
      %4537 = vadd.xlane.f32.xlu0 %v4536
      %v4538 = vpop.xlane.xlu0 %4537
      %v4539 = vsel %vm913, %v4529, 0.0
      %4540 = vadd.xlane.f32.xlu0 %v4539
      %v4541 = vpop.xlane.xlu0 %4540
      %v4542 = vsel %vm913, %v4530, 0.0
      %4543 = vadd.xlane.f32.xlu0 %v4542
      %v4544 = vpop.xlane.xlu0 %4543
      %v4545 = vsel %vm913, %v4531, 0.0
      %4546 = vadd.xlane.f32.xlu0 %v4545
      %v4547 = vpop.xlane.xlu0 %4546
      %v4548 = vsel %vm913, %v4532, 0.0
      %4549 = vadd.xlane.f32.xlu0 %v4548
      %v4550 = vpop.xlane.xlu0 %4549
      %v4551 = vsel %vm913, %v4533, 0.0
      %4552 = vadd.xlane.f32.xlu0 %v4551
      %v4553 = vpop.xlane.xlu0 %4552
      %v4554 = vsel %vm913, %v4534, 0.0
      %4555 = vadd.xlane.f32.xlu0 %v4554
      %v4556 = vpop.xlane.xlu0 %4555
      %v4557 = vsel %vm913, %v4535, 0.0
      %4558 = vadd.xlane.f32.xlu0 %v4557
      %v4559 = vpop.xlane.xlu0 %4558
      %v4560 = vmul.f32 %v4538, %v968
      %v4561 = vmul.f32 %v4541, %v968
      %v4562 = vmul.f32 %v4544, %v968
      %v4563 = vmul.f32 %v4547, %v968
      %v4564 = vmul.f32 %v4550, %v968
      %v4565 = vmul.f32 %v4553, %v968
      %v4566 = vmul.f32 %v4556, %v968
      %v4567 = vmul.f32 %v4559, %v968
      %v4568 = vadd.f32 %v4560, 1e-06
      %v4569 = vadd.f32 %v4561, 1e-06
      %v4570 = vadd.f32 %v4562, 1e-06
      %v4571 = vadd.f32 %v4563, 1e-06
      %v4572 = vadd.f32 %v4564, 1e-06
      %v4573 = vadd.f32 %v4565, 1e-06
      %v4574 = vadd.f32 %v4566, 1e-06
      %v4575 = vadd.f32 %v4567, 1e-06
      %v4576 = vrsqrt.pop %v4568
      %v4577 = vmul.f32 %v4576, %v4568
      %v4578 = vmul.f32 %v4577, %v4576
      %v4579 = vmul.f32 0.5, %v4578
      %v4580 = vsub.f32 1.5, %v4579
      %v4581 = vmul.f32 %v4576, %v4580
      %vm4582 = vweird.f32 %v4568
      %vm4583 = vweird.f32 %v4576
      %vm4584 = vmor %vm4582, %vm4583
      %v4585 = vsel %vm4584, %v4576, %v4581
      %v4586 = vrsqrt.pop %v4569
      %v4587 = vmul.f32 %v4586, %v4569
      %v4588 = vmul.f32 %v4587, %v4586
      %v4589 = vmul.f32 0.5, %v4588
      %v4590 = vsub.f32 1.5, %v4589
      %v4591 = vmul.f32 %v4586, %v4590
      %vm4592 = vweird.f32 %v4569
      %vm4593 = vweird.f32 %v4586
      %vm4594 = vmor %vm4592, %vm4593
      %v4595 = vsel %vm4594, %v4586, %v4591
      %v4596 = vrsqrt.pop %v4570
      %v4597 = vmul.f32 %v4596, %v4570
      %v4598 = vmul.f32 %v4597, %v4596
      %v4599 = vmul.f32 0.5, %v4598
      %v4600 = vsub.f32 1.5, %v4599
      %v4601 = vmul.f32 %v4596, %v4600
      %vm4602 = vweird.f32 %v4570
      %vm4603 = vweird.f32 %v4596
      %vm4604 = vmor %vm4602, %vm4603
      %v4605 = vsel %vm4604, %v4596, %v4601
      %v4606 = vrsqrt.pop %v4571
      %v4607 = vmul.f32 %v4606, %v4571
      %v4608 = vmul.f32 %v4607, %v4606
      %v4609 = vmul.f32 0.5, %v4608
      %v4610 = vsub.f32 1.5, %v4609
      %v4611 = vmul.f32 %v4606, %v4610
      %vm4612 = vweird.f32 %v4571
      %vm4613 = vweird.f32 %v4606
      %vm4614 = vmor %vm4612, %vm4613
      %v4615 = vsel %vm4614, %v4606, %v4611
      %v4616 = vrsqrt.pop %v4572
      %v4617 = vmul.f32 %v4616, %v4572
      %v4618 = vmul.f32 %v4617, %v4616
      %v4619 = vmul.f32 0.5, %v4618
      %v4620 = vsub.f32 1.5, %v4619
      %v4621 = vmul.f32 %v4616, %v4620
      %vm4622 = vweird.f32 %v4572
      %vm4623 = vweird.f32 %v4616
      %vm4624 = vmor %vm4622, %vm4623
      %v4625 = vsel %vm4624, %v4616, %v4621
      %v4626 = vrsqrt.pop %v4573
      %v4627 = vmul.f32 %v4626, %v4573
      %v4628 = vmul.f32 %v4627, %v4626
      %v4629 = vmul.f32 0.5, %v4628
      %v4630 = vsub.f32 1.5, %v4629
      %v4631 = vmul.f32 %v4626, %v4630
      %vm4632 = vweird.f32 %v4573
      %vm4633 = vweird.f32 %v4626
      %vm4634 = vmor %vm4632, %vm4633
      %v4635 = vsel %vm4634, %v4626, %v4631
      %v4636 = vrsqrt.pop %v4574
      %v4637 = vmul.f32 %v4636, %v4574
      %v4638 = vmul.f32 %v4637, %v4636
      %v4639 = vmul.f32 0.5, %v4638
      %v4640 = vsub.f32 1.5, %v4639
      %v4641 = vmul.f32 %v4636, %v4640
      %vm4642 = vweird.f32 %v4574
      %vm4643 = vweird.f32 %v4636
      %vm4644 = vmor %vm4642, %vm4643
      %v4645 = vsel %vm4644, %v4636, %v4641
      %v4646 = vrsqrt.pop %v4575
      %v4647 = vmul.f32 %v4646, %v4575
      %v4648 = vmul.f32 %v4647, %v4646
      %v4649 = vmul.f32 0.5, %v4648
      %v4650 = vsub.f32 1.5, %v4649
      %v4651 = vmul.f32 %v4646, %v4650
      %vm4652 = vweird.f32 %v4575
      %vm4653 = vweird.f32 %v4646
      %vm4654 = vmor %vm4652, %vm4653
      %v4655 = vsel %vm4654, %v4646, %v4651
      %v4656 = vmul.f32 %v4520, %v4585
      %v4657 = vmul.f32 %v4521, %v4595
      %v4658 = vmul.f32 %v4522, %v4605
      %v4659 = vmul.f32 %v4523, %v4615
      %v4660 = vmul.f32 %v4524, %v4625
      %v4661 = vmul.f32 %v4525, %v4635
      %v4662 = vmul.f32 %v4526, %v4645
      %v4663 = vmul.f32 %v4527, %v4655
      %v4664 = vperm.slane %v3706, 0
      %v4665 = vmul.f32 %v4656, %v4664
      %v4666 = vmul.f32 %v4657, %v4664
      %v4667 = vmul.f32 %v4658, %v4664
      %v4668 = vmul.f32 %v4659, %v4664
      %v4669 = vmul.f32 %v4660, %v4664
      %v4670 = vmul.f32 %v4661, %v4664
      %v4671 = vmul.f32 %v4662, %v4664
      %v4672 = vmul.f32 %v4663, %v4664
      %v4673 = vperm.slane %v3706, 1
      %v4674 = vadd.f32 %v4665, %v4673
      %v4675 = vadd.f32 %v4666, %v4673
      %v4676 = vadd.f32 %v4667, %v4673
      %v4677 = vadd.f32 %v4668, %v4673
      %v4678 = vadd.f32 %v4669, %v4673
      %v4679 = vadd.f32 %v4670, %v4673
      %v4680 = vadd.f32 %v4671, %v4673
      %v4681 = vadd.f32 %v4672, %v4673
      %v4682 = vperm.slane %v3703, 0
      %v4684 = vsel %vm913, %v4674, 0
      %v4687 = vsel %vm913, %v4675, 0
      %v4690 = vsel %vm913, %v4676, 0
      %v4693 = vsel %vm913, %v4677, 0
      %v4696 = vsel %vm913, %v4678, 0
      %v4699 = vsel %vm913, %v4679, 0
      %v4702 = vsel %vm913, %v4680, 0
      %v4705 = vsel %vm913, %v4681, 0
      %4707 = vmatpush.msra.mxu0 0.0
      %4708 = vmatpush.msra.mxu0 0.0
      %4709 = vmatpush.msra.mxu0 0.0
      %4710 = vmatpush.msra.mxu0 0.0
      %4711 = vmatpush.msra.mxu0 0.0
      %4712 = vmatpush.msra.mxu0 0.0
      %4713 = vmatpush.msra.mxu0 0.0
      %4714 = vmatpush.msra.mxu0 0.0
      %4715 = vmatpush.msra.mxu0 0.0
      %4716 = vmatpush.msra.mxu0 0.0
      %4717 = vmatpush.msra.mxu0 0.0
      %4718 = vmatpush.msra.mxu0 0.0
      %4719 = vmatpush.msra.mxu0 %v3685
      %4720 = vmatpush.msra.mxu0 %v3684
      %4721 = vmatpush.msra.mxu0 %v3683
      %4722 = vmatpush.msra.mxu0 %v3682
      %4723 = vmatmul.f32.gmra.mxu0 %v4684
      %v4724 = vpop.f32.mrf.mxu0
      %v4725 = vadd.f32 %v4682, %v4724
      %4726 = vmatmul.f32.gmra.mxu0 %v4687
      %v4727 = vpop.f32.mrf.mxu0
      %v4728 = vadd.f32 %v4682, %v4727
      %4729 = vmatmul.f32.gmra.mxu0 %v4690
      %v4730 = vpop.f32.mrf.mxu0
      %v4731 = vadd.f32 %v4682, %v4730
      %4732 = vmatmul.f32.gmra.mxu0 %v4693
      %v4733 = vpop.f32.mrf.mxu0
      %v4734 = vadd.f32 %v4682, %v4733
      %4735 = vmatmul.f32.gmra.mxu0 %v4696
      %v4736 = vpop.f32.mrf.mxu0
      %v4737 = vadd.f32 %v4682, %v4736
      %4738 = vmatmul.f32.gmra.mxu0 %v4699
      %v4739 = vpop.f32.mrf.mxu0
      %v4740 = vadd.f32 %v4682, %v4739
      %4741 = vmatmul.f32.gmra.mxu0 %v4702
      %v4742 = vpop.f32.mrf.mxu0
      %v4743 = vadd.f32 %v4682, %v4742
      %4744 = vmatmul.f32.gmra.mxu0 %v4705
      %v4745 = vpop.f32.mrf.mxu0
      %v4746 = vadd.f32 %v4682, %v4745
      %4747 = vdwg.mxu0
      %v4748 = vmul.f32 %v4725, %v4725
      %v4749 = vmul.f32 %v4728, %v4728
      %v4750 = vmul.f32 %v4731, %v4731
      %v4751 = vmul.f32 %v4734, %v4734
      %v4752 = vmul.f32 %v4737, %v4737
      %v4753 = vmul.f32 %v4740, %v4740
      %v4754 = vmul.f32 %v4743, %v4743
      %v4755 = vmul.f32 %v4746, %v4746
      %v4756 = vmul.f32 %v4725, %v4748
      %v4757 = vmul.f32 %v4728, %v4749
      %v4758 = vmul.f32 %v4731, %v4750
      %v4759 = vmul.f32 %v4734, %v4751
      %v4760 = vmul.f32 %v4737, %v4752
      %v4761 = vmul.f32 %v4740, %v4753
      %v4762 = vmul.f32 %v4743, %v4754
      %v4763 = vmul.f32 %v4746, %v4755
      %v4764 = vmul.f32 %v4756, 0.044715
      %v4765 = vmul.f32 %v4757, 0.044715
      %v4766 = vmul.f32 %v4758, 0.044715
      %v4767 = vmul.f32 %v4759, 0.044715
      %v4768 = vmul.f32 %v4760, 0.044715
      %v4769 = vmul.f32 %v4761, 0.044715
      %v4770 = vmul.f32 %v4762, 0.044715
      %v4771 = vmul.f32 %v4763, 0.044715
      %v4772 = vadd.f32 %v4725, %v4764
      %v4773 = vadd.f32 %v4728, %v4765
      %v4774 = vadd.f32 %v4731, %v4766
      %v4775 = vadd.f32 %v4734, %v4767
      %v4776 = vadd.f32 %v4737, %v4768
      %v4777 = vadd.f32 %v4740, %v4769
      %v4778 = vadd.f32 %v4743, %v4770
      %v4779 = vadd.f32 %v4746, %v4771
      %v4780 = vmul.f32 %v4772, 0.7978846
      %v4781 = vmul.f32 %v4773, 0.7978846
      %v4782 = vmul.f32 %v4774, 0.7978846
      %v4783 = vmul.f32 %v4775, 0.7978846
      %v4784 = vmul.f32 %v4776, 0.7978846
      %v4785 = vmul.f32 %v4777, 0.7978846
      %v4786 = vmul.f32 %v4778, 0.7978846
      %v4787 = vmul.f32 %v4779, 0.7978846
      %v4788 = vtanh.pop %v4780
      %v4789 = vtanh.pop %v4781
      %v4790 = vtanh.pop %v4782
      %v4791 = vtanh.pop %v4783
      %v4792 = vtanh.pop %v4784
      %v4793 = vtanh.pop %v4785
      %v4794 = vtanh.pop %v4786
      %v4795 = vtanh.pop %v4787
      %v4796 = vadd.f32 %v4788, 1.0
      %v4797 = vadd.f32 %v4789, 1.0
      %v4798 = vadd.f32 %v4790, 1.0
      %v4799 = vadd.f32 %v4791, 1.0
      %v4800 = vadd.f32 %v4792, 1.0
      %v4801 = vadd.f32 %v4793, 1.0
      %v4802 = vadd.f32 %v4794, 1.0
      %v4803 = vadd.f32 %v4795, 1.0
      %v4804 = vmul.f32 %v4796, 0.5
      %v4805 = vmul.f32 %v4797, 0.5
      %v4806 = vmul.f32 %v4798, 0.5
      %v4807 = vmul.f32 %v4799, 0.5
      %v4808 = vmul.f32 %v4800, 0.5
      %v4809 = vmul.f32 %v4801, 0.5
      %v4810 = vmul.f32 %v4802, 0.5
      %v4811 = vmul.f32 %v4803, 0.5
      %v4812 = vmul.f32 %v4725, %v4804
      %v4813 = vmul.f32 %v4728, %v4805
      %v4814 = vmul.f32 %v4731, %v4806
      %v4815 = vmul.f32 %v4734, %v4807
      %v4816 = vmul.f32 %v4737, %v4808
      %v4817 = vmul.f32 %v4740, %v4809
      %v4818 = vmul.f32 %v4743, %v4810
      %v4819 = vmul.f32 %v4746, %v4811
      %4820 = vmatpush.msra.mxu0 %v3702
      %4821 = vmatpush.msra.mxu0 %v3701
      %4822 = vmatpush.msra.mxu0 %v3700
      %4823 = vmatpush.msra.mxu0 %v3699
      %4824 = vmatpush.msra.mxu0 %v3698
      %4825 = vmatpush.msra.mxu0 %v3697
      %4826 = vmatpush.msra.mxu0 %v3696
      %4827 = vmatpush.msra.mxu0 %v3695
      %4828 = vmatpush.msra.mxu0 %v3694
      %4829 = vmatpush.msra.mxu0 %v3693
      %4830 = vmatpush.msra.mxu0 %v3692
      %4831 = vmatpush.msra.mxu0 %v3691
      %4832 = vmatpush.msra.mxu0 %v3690
      %4833 = vmatpush.msra.mxu0 %v3689
      %4834 = vmatpush.msra.mxu0 %v3688
      %4835 = vmatpush.msra.mxu0 %v3687
      %4836 = vmatmul.f32.gmra.mxu0 %v4812
      %v4837 = vpop.f32.mrf.mxu0
      %v4838 = vadd.f32 0.0, %v4837
      %4839 = vmatmul.f32.gmra.mxu0 %v4813
      %v4840 = vpop.f32.mrf.mxu0
      %v4841 = vadd.f32 0.0, %v4840
      %4842 = vmatmul.f32.gmra.mxu0 %v4814
      %v4843 = vpop.f32.mrf.mxu0
      %v4844 = vadd.f32 0.0, %v4843
      %4845 = vmatmul.f32.gmra.mxu0 %v4815
      %v4846 = vpop.f32.mrf.mxu0
      %v4847 = vadd.f32 0.0, %v4846
      %4848 = vmatmul.f32.gmra.mxu0 %v4816
      %v4849 = vpop.f32.mrf.mxu0
      %v4850 = vadd.f32 0.0, %v4849
      %4851 = vmatmul.f32.gmra.mxu0 %v4817
      %v4852 = vpop.f32.mrf.mxu0
      %v4853 = vadd.f32 0.0, %v4852
      %4854 = vmatmul.f32.gmra.mxu0 %v4818
      %v4855 = vpop.f32.mrf.mxu0
      %v4856 = vadd.f32 0.0, %v4855
      %4857 = vmatmul.f32.gmra.mxu0 %v4819
      %v4858 = vpop.f32.mrf.mxu0
      %v4859 = vadd.f32 0.0, %v4858
      %4860 = vdwg.mxu0
      %v4861 = vadd.f32 %v4480, %v4838
      %v4862 = vadd.f32 %v4481, %v4841
      %v4863 = vadd.f32 %v4482, %v4844
      %v4864 = vadd.f32 %v4483, %v4847
      %v4865 = vadd.f32 %v4484, %v4850
      %v4866 = vadd.f32 %v4485, %v4853
      %v4867 = vadd.f32 %v4486, %v4856
      %v4868 = vadd.f32 %v4487, %v4859
      %v4869 = vperm.slane %v3706, 2
      %v4870 = vadd.f32 %v4861, %v4869
      %v4871 = vadd.f32 %v4862, %v4869
      %v4872 = vadd.f32 %v4863, %v4869
      %v4873 = vadd.f32 %v4864, %v4869
      %v4874 = vadd.f32 %v4865, %v4869
      %v4875 = vadd.f32 %v4866, %v4869
      %v4876 = vadd.f32 %v4867, %v4869
      %v4877 = vadd.f32 %v4868, %v4869
      %s4878 = scalar_lea.vmem %s16, 256
      %v4879 = vld [vmem:[%s4878] sm:$0xff]
      %v4880 = vld [vmem:[%s4878 + $0x8] sm:$0xff]
      %v4881 = vld [vmem:[%s4878 + $0x10] sm:$0xff]
      %v4882 = vld [vmem:[%s4878 + $0x18] sm:$0xff]
      %s4883 = scalar_lea.vmem %s16, 288
      %v4884 = vld [vmem:[%s4883] sm:$0xff]
      %v4885 = vld [vmem:[%s4883 + $0x8] sm:$0xff]
      %v4886 = vld [vmem:[%s4883 + $0x10] sm:$0xff]
      %v4887 = vld [vmem:[%s4883 + $0x18] sm:$0xff]
      %s4888 = scalar_lea.vmem %s16, 320
      %v4889 = vld [vmem:[%s4888] sm:$0xff]
      %v4890 = vld [vmem:[%s4888 + $0x8] sm:$0xff]
      %v4891 = vld [vmem:[%s4888 + $0x10] sm:$0xff]
      %v4892 = vld [vmem:[%s4888 + $0x18] sm:$0xff]
      %s4893 = scalar_lea.vmem %s16, 352
      %v4894 = vld [vmem:[%s4893] sm:$0xff]
      %v4895 = vld [vmem:[%s4893 + $0x8] sm:$0xff]
      %v4896 = vld [vmem:[%s4893 + $0x10] sm:$0xff]
      %v4897 = vld [vmem:[%s4893 + $0x18] sm:$0xff]
      %s4898 = scalar_lea.vmem %s17, 64
      %v4899 = vld [vmem:[%s4898] sm:$0xff]
      %v4900 = vld [vmem:[%s4898 + $0x8] sm:$0xff]
      %v4901 = vld [vmem:[%s4898 + $0x10] sm:$0xff]
      %v4902 = vld [vmem:[%s4898 + $0x18] sm:$0xff]
      %s4903 = scalar_lea.vmem %s18, 256
      %v4904 = vld [vmem:[%s4903] sm:$0xff]
      %v4905 = vld [vmem:[%s4903 + $0x8] sm:$0xff]
      %v4906 = vld [vmem:[%s4903 + $0x10] sm:$0xff]
      %v4907 = vld [vmem:[%s4903 + $0x18] sm:$0xff]
      %v4908 = vld [vmem:[%s4903 + $0x20] sm:$0xff]
      %v4909 = vld [vmem:[%s4903 + $0x28] sm:$0xff]
      %v4910 = vld [vmem:[%s4903 + $0x30] sm:$0xff]
      %v4911 = vld [vmem:[%s4903 + $0x38] sm:$0xff]
      %v4912 = vld [vmem:[%s4903 + $0x40] sm:$0xff]
      %v4913 = vld [vmem:[%s4903 + $0x48] sm:$0xff]
      %v4914 = vld [vmem:[%s4903 + $0x50] sm:$0xff]
      %v4915 = vld [vmem:[%s4903 + $0x58] sm:$0xff]
      %v4916 = vld [vmem:[%s4903 + $0x60] sm:$0xff]
      %v4917 = vld [vmem:[%s4903 + $0x68] sm:$0xff]
      %v4918 = vld [vmem:[%s4903 + $0x70] sm:$0xff]
      %v4919 = vld [vmem:[%s4903 + $0x78] sm:$0xff]
      %v4920 = vld [vmem:[%s19 + $0x2] sm:$0x1]
      %s4921 = scalar_lea.vmem %s20, 32
      %v4922 = vld [vmem:[%s4921] sm:$0xff]
      %v4923 = vld [vmem:[%s4921 + $0x8] sm:$0xff]
      %v4924 = vsel %vm913, %v3653, 0.0
      %4925 = vadd.xlane.f32.xlu0 %v4924
      %v4926 = vpop.xlane.xlu0 %4925
      %v4927 = vsel %vm913, %v3654, 0.0
      %4928 = vadd.xlane.f32.xlu0 %v4927
      %v4929 = vpop.xlane.xlu0 %4928
      %v4930 = vsel %vm913, %v3655, 0.0
      %4931 = vadd.xlane.f32.xlu0 %v4930
      %v4932 = vpop.xlane.xlu0 %4931
      %v4933 = vsel %vm913, %v3656, 0.0
      %4934 = vadd.xlane.f32.xlu0 %v4933
      %v4935 = vpop.xlane.xlu0 %4934
      %v4936 = vsel %vm913, %v3657, 0.0
      %4937 = vadd.xlane.f32.xlu0 %v4936
      %v4938 = vpop.xlane.xlu0 %4937
      %v4939 = vsel %vm913, %v3658, 0.0
      %4940 = vadd.xlane.f32.xlu0 %v4939
      %v4941 = vpop.xlane.xlu0 %4940
      %v4942 = vsel %vm913, %v3659, 0.0
      %4943 = vadd.xlane.f32.xlu0 %v4942
      %v4944 = vpop.xlane.xlu0 %4943
      %v4945 = vsel %vm913, %v3660, 0.0
      %4946 = vadd.xlane.f32.xlu0 %v4945
      %v4947 = vpop.xlane.xlu0 %4946
      %v4948 = vmul.f32 %v4926, %v968
      %v4949 = vmul.f32 %v4929, %v968
      %v4950 = vmul.f32 %v4932, %v968
      %v4951 = vmul.f32 %v4935, %v968
      %v4952 = vmul.f32 %v4938, %v968
      %v4953 = vmul.f32 %v4941, %v968
      %v4954 = vmul.f32 %v4944, %v968
      %v4955 = vmul.f32 %v4947, %v968
      %v4956 = vsub.f32 %v3653, %v4948
      %v4957 = vsub.f32 %v3654, %v4949
      %v4958 = vsub.f32 %v3655, %v4950
      %v4959 = vsub.f32 %v3656, %v4951
      %v4960 = vsub.f32 %v3657, %v4952
      %v4961 = vsub.f32 %v3658, %v4953
      %v4962 = vsub.f32 %v3659, %v4954
      %v4963 = vsub.f32 %v3660, %v4955
      %v4964 = vmul.f32 %v4956, %v4956
      %v4965 = vmul.f32 %v4957, %v4957
      %v4966 = vmul.f32 %v4958, %v4958
      %v4967 = vmul.f32 %v4959, %v4959
      %v4968 = vmul.f32 %v4960, %v4960
      %v4969 = vmul.f32 %v4961, %v4961
      %v4970 = vmul.f32 %v4962, %v4962
      %v4971 = vmul.f32 %v4963, %v4963
      %v4972 = vsel %vm913, %v4964, 0.0
      %4973 = vadd.xlane.f32.xlu0 %v4972
      %v4974 = vpop.xlane.xlu0 %4973
      %v4975 = vsel %vm913, %v4965, 0.0
      %4976 = vadd.xlane.f32.xlu0 %v4975
      %v4977 = vpop.xlane.xlu0 %4976
      %v4978 = vsel %vm913, %v4966, 0.0
      %4979 = vadd.xlane.f32.xlu0 %v4978
      %v4980 = vpop.xlane.xlu0 %4979
      %v4981 = vsel %vm913, %v4967, 0.0
      %4982 = vadd.xlane.f32.xlu0 %v4981
      %v4983 = vpop.xlane.xlu0 %4982
      %v4984 = vsel %vm913, %v4968, 0.0
      %4985 = vadd.xlane.f32.xlu0 %v4984
      %v4986 = vpop.xlane.xlu0 %4985
      %v4987 = vsel %vm913, %v4969, 0.0
      %4988 = vadd.xlane.f32.xlu0 %v4987
      %v4989 = vpop.xlane.xlu0 %4988
      %v4990 = vsel %vm913, %v4970, 0.0
      %4991 = vadd.xlane.f32.xlu0 %v4990
      %v4992 = vpop.xlane.xlu0 %4991
      %v4993 = vsel %vm913, %v4971, 0.0
      %4994 = vadd.xlane.f32.xlu0 %v4993
      %v4995 = vpop.xlane.xlu0 %4994
      %v4996 = vmul.f32 %v4974, %v968
      %v4997 = vmul.f32 %v4977, %v968
      %v4998 = vmul.f32 %v4980, %v968
      %v4999 = vmul.f32 %v4983, %v968
      %v5000 = vmul.f32 %v4986, %v968
      %v5001 = vmul.f32 %v4989, %v968
      %v5002 = vmul.f32 %v4992, %v968
      %v5003 = vmul.f32 %v4995, %v968
      %v5004 = vadd.f32 %v4996, 1e-06
      %v5005 = vadd.f32 %v4997, 1e-06
      %v5006 = vadd.f32 %v4998, 1e-06
      %v5007 = vadd.f32 %v4999, 1e-06
      %v5008 = vadd.f32 %v5000, 1e-06
      %v5009 = vadd.f32 %v5001, 1e-06
      %v5010 = vadd.f32 %v5002, 1e-06
      %v5011 = vadd.f32 %v5003, 1e-06
      %v5012 = vrsqrt.pop %v5004
      %v5013 = vmul.f32 %v5012, %v5004
      %v5014 = vmul.f32 %v5013, %v5012
      %v5015 = vmul.f32 0.5, %v5014
      %v5016 = vsub.f32 1.5, %v5015
      %v5017 = vmul.f32 %v5012, %v5016
      %vm5018 = vweird.f32 %v5004
      %vm5019 = vweird.f32 %v5012
      %vm5020 = vmor %vm5018, %vm5019
      %v5021 = vsel %vm5020, %v5012, %v5017
      %v5022 = vrsqrt.pop %v5005
      %v5023 = vmul.f32 %v5022, %v5005
      %v5024 = vmul.f32 %v5023, %v5022
      %v5025 = vmul.f32 0.5, %v5024
      %v5026 = vsub.f32 1.5, %v5025
      %v5027 = vmul.f32 %v5022, %v5026
      %vm5028 = vweird.f32 %v5005
      %vm5029 = vweird.f32 %v5022
      %vm5030 = vmor %vm5028, %vm5029
      %v5031 = vsel %vm5030, %v5022, %v5027
      %v5032 = vrsqrt.pop %v5006
      %v5033 = vmul.f32 %v5032, %v5006
      %v5034 = vmul.f32 %v5033, %v5032
      %v5035 = vmul.f32 0.5, %v5034
      %v5036 = vsub.f32 1.5, %v5035
      %v5037 = vmul.f32 %v5032, %v5036
      %vm5038 = vweird.f32 %v5006
      %vm5039 = vweird.f32 %v5032
      %vm5040 = vmor %vm5038, %vm5039
      %v5041 = vsel %vm5040, %v5032, %v5037
      %v5042 = vrsqrt.pop %v5007
      %v5043 = vmul.f32 %v5042, %v5007
      %v5044 = vmul.f32 %v5043, %v5042
      %v5045 = vmul.f32 0.5, %v5044
      %v5046 = vsub.f32 1.5, %v5045
      %v5047 = vmul.f32 %v5042, %v5046
      %vm5048 = vweird.f32 %v5007
      %vm5049 = vweird.f32 %v5042
      %vm5050 = vmor %vm5048, %vm5049
      %v5051 = vsel %vm5050, %v5042, %v5047
      %v5052 = vrsqrt.pop %v5008
      %v5053 = vmul.f32 %v5052, %v5008
      %v5054 = vmul.f32 %v5053, %v5052
      %v5055 = vmul.f32 0.5, %v5054
      %v5056 = vsub.f32 1.5, %v5055
      %v5057 = vmul.f32 %v5052, %v5056
      %vm5058 = vweird.f32 %v5008
      %vm5059 = vweird.f32 %v5052
      %vm5060 = vmor %vm5058, %vm5059
      %v5061 = vsel %vm5060, %v5052, %v5057
      %v5062 = vrsqrt.pop %v5009
      %v5063 = vmul.f32 %v5062, %v5009
      %v5064 = vmul.f32 %v5063, %v5062
      %v5065 = vmul.f32 0.5, %v5064
      %v5066 = vsub.f32 1.5, %v5065
      %v5067 = vmul.f32 %v5062, %v5066
      %vm5068 = vweird.f32 %v5009
      %vm5069 = vweird.f32 %v5062
      %vm5070 = vmor %vm5068, %vm5069
      %v5071 = vsel %vm5070, %v5062, %v5067
      %v5072 = vrsqrt.pop %v5010
      %v5073 = vmul.f32 %v5072, %v5010
      %v5074 = vmul.f32 %v5073, %v5072
      %v5075 = vmul.f32 0.5, %v5074
      %v5076 = vsub.f32 1.5, %v5075
      %v5077 = vmul.f32 %v5072, %v5076
      %vm5078 = vweird.f32 %v5010
      %vm5079 = vweird.f32 %v5072
      %vm5080 = vmor %vm5078, %vm5079
      %v5081 = vsel %vm5080, %v5072, %v5077
      %v5082 = vrsqrt.pop %v5011
      %v5083 = vmul.f32 %v5082, %v5011
      %v5084 = vmul.f32 %v5083, %v5082
      %v5085 = vmul.f32 0.5, %v5084
      %v5086 = vsub.f32 1.5, %v5085
      %v5087 = vmul.f32 %v5082, %v5086
      %vm5088 = vweird.f32 %v5011
      %vm5089 = vweird.f32 %v5082
      %vm5090 = vmor %vm5088, %vm5089
      %v5091 = vsel %vm5090, %v5082, %v5087
      %v5092 = vmul.f32 %v4956, %v5021
      %v5093 = vmul.f32 %v4957, %v5031
      %v5094 = vmul.f32 %v4958, %v5041
      %v5095 = vmul.f32 %v4959, %v5051
      %v5096 = vmul.f32 %v4960, %v5061
      %v5097 = vmul.f32 %v4961, %v5071
      %v5098 = vmul.f32 %v4962, %v5081
      %v5099 = vmul.f32 %v4963, %v5091
      %v5100 = vperm.slane %v4922, 0
      %v5101 = vmul.f32 %v5092, %v5100
      %v5102 = vmul.f32 %v5093, %v5100
      %v5103 = vmul.f32 %v5094, %v5100
      %v5104 = vmul.f32 %v5095, %v5100
      %v5105 = vmul.f32 %v5096, %v5100
      %v5106 = vmul.f32 %v5097, %v5100
      %v5107 = vmul.f32 %v5098, %v5100
      %v5108 = vmul.f32 %v5099, %v5100
      %v5109 = vperm.slane %v4922, 1
      %v5110 = vadd.f32 %v5101, %v5109
      %v5111 = vadd.f32 %v5102, %v5109
      %v5112 = vadd.f32 %v5103, %v5109
      %v5113 = vadd.f32 %v5104, %v5109
      %v5114 = vadd.f32 %v5105, %v5109
      %v5115 = vadd.f32 %v5106, %v5109
      %v5116 = vadd.f32 %v5107, %v5109
      %v5117 = vadd.f32 %v5108, %v5109
      %v5118 = vsel %vm913, %v4870, 0.0
      %5119 = vadd.xlane.f32.xlu0 %v5118
      %v5120 = vpop.xlane.xlu0 %5119
      %v5121 = vsel %vm913, %v4871, 0.0
      %5122 = vadd.xlane.f32.xlu0 %v5121
      %v5123 = vpop.xlane.xlu0 %5122
      %v5124 = vsel %vm913, %v4872, 0.0
      %5125 = vadd.xlane.f32.xlu0 %v5124
      %v5126 = vpop.xlane.xlu0 %5125
      %v5127 = vsel %vm913, %v4873, 0.0
      %5128 = vadd.xlane.f32.xlu0 %v5127
      %v5129 = vpop.xlane.xlu0 %5128
      %v5130 = vsel %vm913, %v4874, 0.0
      %5131 = vadd.xlane.f32.xlu0 %v5130
      %v5132 = vpop.xlane.xlu0 %5131
      %v5133 = vsel %vm913, %v4875, 0.0
      %5134 = vadd.xlane.f32.xlu0 %v5133
      %v5135 = vpop.xlane.xlu0 %5134
      %v5136 = vsel %vm913, %v4876, 0.0
      %5137 = vadd.xlane.f32.xlu0 %v5136
      %v5138 = vpop.xlane.xlu0 %5137
      %v5139 = vsel %vm913, %v4877, 0.0
      %5140 = vadd.xlane.f32.xlu0 %v5139
      %v5141 = vpop.xlane.xlu0 %5140
      %v5142 = vmul.f32 %v5120, %v968
      %v5143 = vmul.f32 %v5123, %v968
      %v5144 = vmul.f32 %v5126, %v968
      %v5145 = vmul.f32 %v5129, %v968
      %v5146 = vmul.f32 %v5132, %v968
      %v5147 = vmul.f32 %v5135, %v968
      %v5148 = vmul.f32 %v5138, %v968
      %v5149 = vmul.f32 %v5141, %v968
      %v5150 = vsub.f32 %v4870, %v5142
      %v5151 = vsub.f32 %v4871, %v5143
      %v5152 = vsub.f32 %v4872, %v5144
      %v5153 = vsub.f32 %v4873, %v5145
      %v5154 = vsub.f32 %v4874, %v5146
      %v5155 = vsub.f32 %v4875, %v5147
      %v5156 = vsub.f32 %v4876, %v5148
      %v5157 = vsub.f32 %v4877, %v5149
      %v5158 = vmul.f32 %v5150, %v5150
      %v5159 = vmul.f32 %v5151, %v5151
      %v5160 = vmul.f32 %v5152, %v5152
      %v5161 = vmul.f32 %v5153, %v5153
      %v5162 = vmul.f32 %v5154, %v5154
      %v5163 = vmul.f32 %v5155, %v5155
      %v5164 = vmul.f32 %v5156, %v5156
      %v5165 = vmul.f32 %v5157, %v5157
      %v5166 = vsel %vm913, %v5158, 0.0
      %5167 = vadd.xlane.f32.xlu0 %v5166
      %v5168 = vpop.xlane.xlu0 %5167
      %v5169 = vsel %vm913, %v5159, 0.0
      %5170 = vadd.xlane.f32.xlu0 %v5169
      %v5171 = vpop.xlane.xlu0 %5170
      %v5172 = vsel %vm913, %v5160, 0.0
      %5173 = vadd.xlane.f32.xlu0 %v5172
      %v5174 = vpop.xlane.xlu0 %5173
      %v5175 = vsel %vm913, %v5161, 0.0
      %5176 = vadd.xlane.f32.xlu0 %v5175
      %v5177 = vpop.xlane.xlu0 %5176
      %v5178 = vsel %vm913, %v5162, 0.0
      %5179 = vadd.xlane.f32.xlu0 %v5178
      %v5180 = vpop.xlane.xlu0 %5179
      %v5181 = vsel %vm913, %v5163, 0.0
      %5182 = vadd.xlane.f32.xlu0 %v5181
      %v5183 = vpop.xlane.xlu0 %5182
      %v5184 = vsel %vm913, %v5164, 0.0
      %5185 = vadd.xlane.f32.xlu0 %v5184
      %v5186 = vpop.xlane.xlu0 %5185
      %v5187 = vsel %vm913, %v5165, 0.0
      %5188 = vadd.xlane.f32.xlu0 %v5187
      %v5189 = vpop.xlane.xlu0 %5188
      %v5190 = vmul.f32 %v5168, %v968
      %v5191 = vmul.f32 %v5171, %v968
      %v5192 = vmul.f32 %v5174, %v968
      %v5193 = vmul.f32 %v5177, %v968
      %v5194 = vmul.f32 %v5180, %v968
      %v5195 = vmul.f32 %v5183, %v968
      %v5196 = vmul.f32 %v5186, %v968
      %v5197 = vmul.f32 %v5189, %v968
      %v5198 = vadd.f32 %v5190, 1e-06
      %v5199 = vadd.f32 %v5191, 1e-06
      %v5200 = vadd.f32 %v5192, 1e-06
      %v5201 = vadd.f32 %v5193, 1e-06
      %v5202 = vadd.f32 %v5194, 1e-06
      %v5203 = vadd.f32 %v5195, 1e-06
      %v5204 = vadd.f32 %v5196, 1e-06
      %v5205 = vadd.f32 %v5197, 1e-06
      %v5206 = vrsqrt.pop %v5198
      %v5207 = vmul.f32 %v5206, %v5198
      %v5208 = vmul.f32 %v5207, %v5206
      %v5209 = vmul.f32 0.5, %v5208
      %v5210 = vsub.f32 1.5, %v5209
      %v5211 = vmul.f32 %v5206, %v5210
      %vm5212 = vweird.f32 %v5198
      %vm5213 = vweird.f32 %v5206
      %vm5214 = vmor %vm5212, %vm5213
      %v5215 = vsel %vm5214, %v5206, %v5211
      %v5216 = vrsqrt.pop %v5199
      %v5217 = vmul.f32 %v5216, %v5199
      %v5218 = vmul.f32 %v5217, %v5216
      %v5219 = vmul.f32 0.5, %v5218
      %v5220 = vsub.f32 1.5, %v5219
      %v5221 = vmul.f32 %v5216, %v5220
      %vm5222 = vweird.f32 %v5199
      %vm5223 = vweird.f32 %v5216
      %vm5224 = vmor %vm5222, %vm5223
      %v5225 = vsel %vm5224, %v5216, %v5221
      %v5226 = vrsqrt.pop %v5200
      %v5227 = vmul.f32 %v5226, %v5200
      %v5228 = vmul.f32 %v5227, %v5226
      %v5229 = vmul.f32 0.5, %v5228
      %v5230 = vsub.f32 1.5, %v5229
      %v5231 = vmul.f32 %v5226, %v5230
      %vm5232 = vweird.f32 %v5200
      %vm5233 = vweird.f32 %v5226
      %vm5234 = vmor %vm5232, %vm5233
      %v5235 = vsel %vm5234, %v5226, %v5231
      %v5236 = vrsqrt.pop %v5201
      %v5237 = vmul.f32 %v5236, %v5201
      %v5238 = vmul.f32 %v5237, %v5236
      %v5239 = vmul.f32 0.5, %v5238
      %v5240 = vsub.f32 1.5, %v5239
      %v5241 = vmul.f32 %v5236, %v5240
      %vm5242 = vweird.f32 %v5201
      %vm5243 = vweird.f32 %v5236
      %vm5244 = vmor %vm5242, %vm5243
      %v5245 = vsel %vm5244, %v5236, %v5241
      %v5246 = vrsqrt.pop %v5202
      %v5247 = vmul.f32 %v5246, %v5202
      %v5248 = vmul.f32 %v5247, %v5246
      %v5249 = vmul.f32 0.5, %v5248
      %v5250 = vsub.f32 1.5, %v5249
      %v5251 = vmul.f32 %v5246, %v5250
      %vm5252 = vweird.f32 %v5202
      %vm5253 = vweird.f32 %v5246
      %vm5254 = vmor %vm5252, %vm5253
      %v5255 = vsel %vm5254, %v5246, %v5251
      %v5256 = vrsqrt.pop %v5203
      %v5257 = vmul.f32 %v5256, %v5203
      %v5258 = vmul.f32 %v5257, %v5256
      %v5259 = vmul.f32 0.5, %v5258
      %v5260 = vsub.f32 1.5, %v5259
      %v5261 = vmul.f32 %v5256, %v5260
      %vm5262 = vweird.f32 %v5203
      %vm5263 = vweird.f32 %v5256
      %vm5264 = vmor %vm5262, %vm5263
      %v5265 = vsel %vm5264, %v5256, %v5261
      %v5266 = vrsqrt.pop %v5204
      %v5267 = vmul.f32 %v5266, %v5204
      %v5268 = vmul.f32 %v5267, %v5266
      %v5269 = vmul.f32 0.5, %v5268
      %v5270 = vsub.f32 1.5, %v5269
      %v5271 = vmul.f32 %v5266, %v5270
      %vm5272 = vweird.f32 %v5204
      %vm5273 = vweird.f32 %v5266
      %vm5274 = vmor %vm5272, %vm5273
      %v5275 = vsel %vm5274, %v5266, %v5271
      %v5276 = vrsqrt.pop %v5205
      %v5277 = vmul.f32 %v5276, %v5205
      %v5278 = vmul.f32 %v5277, %v5276
      %v5279 = vmul.f32 0.5, %v5278
      %v5280 = vsub.f32 1.5, %v5279
      %v5281 = vmul.f32 %v5276, %v5280
      %vm5282 = vweird.f32 %v5205
      %vm5283 = vweird.f32 %v5276
      %vm5284 = vmor %vm5282, %vm5283
      %v5285 = vsel %vm5284, %v5276, %v5281
      %v5286 = vmul.f32 %v5150, %v5215
      %v5287 = vmul.f32 %v5151, %v5225
      %v5288 = vmul.f32 %v5152, %v5235
      %v5289 = vmul.f32 %v5153, %v5245
      %v5290 = vmul.f32 %v5154, %v5255
      %v5291 = vmul.f32 %v5155, %v5265
      %v5292 = vmul.f32 %v5156, %v5275
      %v5293 = vmul.f32 %v5157, %v5285
      %v5294 = vperm.slane %v4922, 2
      %v5295 = vmul.f32 %v5286, %v5294
      %v5296 = vmul.f32 %v5287, %v5294
      %v5297 = vmul.f32 %v5288, %v5294
      %v5298 = vmul.f32 %v5289, %v5294
      %v5299 = vmul.f32 %v5290, %v5294
      %v5300 = vmul.f32 %v5291, %v5294
      %v5301 = vmul.f32 %v5292, %v5294
      %v5302 = vmul.f32 %v5293, %v5294
      %v5303 = vperm.slane %v4922, 3
      %v5304 = vadd.f32 %v5295, %v5303
      %v5305 = vadd.f32 %v5296, %v5303
      %v5306 = vadd.f32 %v5297, %v5303
      %v5307 = vadd.f32 %v5298, %v5303
      %v5308 = vadd.f32 %v5299, %v5303
      %v5309 = vadd.f32 %v5300, %v5303
      %v5310 = vadd.f32 %v5301, %v5303
      %v5311 = vadd.f32 %v5302, %v5303
      %v5312 = vadd.f32 %v5110, %v1936
      %v5313 = vadd.f32 %v5111, %v1939
      %v5314 = vadd.f32 %v5112, %v1942
      %v5315 = vadd.f32 %v5113, %v1945
      %v5316 = vadd.f32 %v5114, %v1948
      %v5317 = vadd.f32 %v5115, %v1951
      %v5318 = vadd.f32 %v5116, %v1954
      %v5319 = vadd.f32 %v5117, %v1957
      %v5320 = vperm.slane %v4922, 4
      %v5322 = vsel %vm913, %v5312, 0
      %v5325 = vsel %vm913, %v5313, 0
      %v5328 = vsel %vm913, %v5314, 0
      %v5331 = vsel %vm913, %v5315, 0
      %v5334 = vsel %vm913, %v5316, 0
      %v5337 = vsel %vm913, %v5317, 0
      %v5340 = vsel %vm913, %v5318, 0
      %v5343 = vsel %vm913, %v5319, 0
      %5345 = vmatpush.msra.mxu0 0.0
      %5346 = vmatpush.msra.mxu0 0.0
      %5347 = vmatpush.msra.mxu0 0.0
      %5348 = vmatpush.msra.mxu0 0.0
      %5349 = vmatpush.msra.mxu0 0.0
      %5350 = vmatpush.msra.mxu0 0.0
      %5351 = vmatpush.msra.mxu0 0.0
      %5352 = vmatpush.msra.mxu0 0.0
      %5353 = vmatpush.msra.mxu0 0.0
      %5354 = vmatpush.msra.mxu0 0.0
      %5355 = vmatpush.msra.mxu0 0.0
      %5356 = vmatpush.msra.mxu0 0.0
      %5357 = vmatpush.msra.mxu0 %v4882
      %5358 = vmatpush.msra.mxu0 %v4881
      %5359 = vmatpush.msra.mxu0 %v4880
      %5360 = vmatpush.msra.mxu0 %v4879
      %5361 = vmatmul.f32.gmra.mxu0 %v5322
      %v5362 = vpop.f32.mrf.mxu0
      %v5363 = vadd.f32 %v5320, %v5362
      %5364 = vmatmul.f32.gmra.mxu0 %v5325
      %v5365 = vpop.f32.mrf.mxu0
      %v5366 = vadd.f32 %v5320, %v5365
      %5367 = vmatmul.f32.gmra.mxu0 %v5328
      %v5368 = vpop.f32.mrf.mxu0
      %v5369 = vadd.f32 %v5320, %v5368
      %5370 = vmatmul.f32.gmra.mxu0 %v5331
      %v5371 = vpop.f32.mrf.mxu0
      %v5372 = vadd.f32 %v5320, %v5371
      %5373 = vmatmul.f32.gmra.mxu0 %v5334
      %v5374 = vpop.f32.mrf.mxu0
      %v5375 = vadd.f32 %v5320, %v5374
      %5376 = vmatmul.f32.gmra.mxu0 %v5337
      %v5377 = vpop.f32.mrf.mxu0
      %v5378 = vadd.f32 %v5320, %v5377
      %5379 = vmatmul.f32.gmra.mxu0 %v5340
      %v5380 = vpop.f32.mrf.mxu0
      %v5381 = vadd.f32 %v5320, %v5380
      %5382 = vmatmul.f32.gmra.mxu0 %v5343
      %v5383 = vpop.f32.mrf.mxu0
      %v5384 = vadd.f32 %v5320, %v5383
      %5385 = vdwg.mxu0
      %v5386 = vadd.f32 %v5304, %v1960
      %v5387 = vadd.f32 %v5305, %v1963
      %v5388 = vadd.f32 %v5306, %v1966
      %v5389 = vadd.f32 %v5307, %v1969
      %v5390 = vadd.f32 %v5308, %v1972
      %v5391 = vadd.f32 %v5309, %v1975
      %v5392 = vadd.f32 %v5310, %v1978
      %v5393 = vadd.f32 %v5311, %v1981
      %v5395 = vsel %vm913, %v4884, 0
      %v5398 = vsel %vm913, %v4885, 0
      %v5401 = vsel %vm913, %v4886, 0
      %v5404 = vsel %vm913, %v4887, 0
      %v5407 = vsel %vm913, %v5386, 0
      %v5410 = vsel %vm913, %v5387, 0
      %v5413 = vsel %vm913, %v5388, 0
      %v5416 = vsel %vm913, %v5389, 0
      %v5419 = vsel %vm913, %v5390, 0
      %v5422 = vsel %vm913, %v5391, 0
      %v5425 = vsel %vm913, %v5392, 0
      %v5428 = vsel %vm913, %v5393, 0
      %5430 = vmatpush.xpose.msra.mxu0 0.0
      %5431 = vmatpush.xpose.msra.mxu0 0.0
      %5432 = vmatpush.xpose.msra.mxu0 0.0
      %5433 = vmatpush.xpose.msra.mxu0 0.0
      %5434 = vmatpush.xpose.msra.mxu0 0.0
      %5435 = vmatpush.xpose.msra.mxu0 0.0
      %5436 = vmatpush.xpose.msra.mxu0 0.0
      %5437 = vmatpush.xpose.msra.mxu0 0.0
      %5438 = vmatpush.xpose.msra.mxu0 %v5428
      %5439 = vmatpush.xpose.msra.mxu0 %v5425
      %5440 = vmatpush.xpose.msra.mxu0 %v5422
      %5441 = vmatpush.xpose.msra.mxu0 %v5419
      %5442 = vmatpush.xpose.msra.mxu0 %v5416
      %5443 = vmatpush.xpose.msra.mxu0 %v5413
      %5444 = vmatpush.xpose.msra.mxu0 %v5410
      %5445 = vmatpush.xpose.msra.mxu0 %v5407
      %5446 = vmatmul.f32.gmra.mxu0 %v5395
      %v5447 = vpop.f32.mrf.mxu0
      %v5448 = vadd.f32 0.0, %v5447
      %5449 = vmatmul.f32.gmra.mxu0 %v5398
      %v5450 = vpop.f32.mrf.mxu0
      %v5451 = vadd.f32 0.0, %v5450
      %5452 = vmatmul.f32.gmra.mxu0 %v5401
      %v5453 = vpop.f32.mrf.mxu0
      %v5454 = vadd.f32 0.0, %v5453
      %5455 = vmatmul.f32.gmra.mxu0 %v5404
      %v5456 = vpop.f32.mrf.mxu0
      %v5457 = vadd.f32 0.0, %v5456
      %5458 = vdwg.mxu0
      %v5459 = vperm.slane %v4922, 6
      %v5461 = vsel %vm913, %v5304, 0
      %v5464 = vsel %vm913, %v5305, 0
      %v5467 = vsel %vm913, %v5306, 0
      %v5470 = vsel %vm913, %v5307, 0
      %v5473 = vsel %vm913, %v5308, 0
      %v5476 = vsel %vm913, %v5309, 0
      %v5479 = vsel %vm913, %v5310, 0
      %v5482 = vsel %vm913, %v5311, 0
      %5484 = vmatpush.msra.mxu0 0.0
      %5485 = vmatpush.msra.mxu0 0.0
      %5486 = vmatpush.msra.mxu0 0.0
      %5487 = vmatpush.msra.mxu0 0.0
      %5488 = vmatpush.msra.mxu0 0.0
      %5489 = vmatpush.msra.mxu0 0.0
      %5490 = vmatpush.msra.mxu0 0.0
      %5491 = vmatpush.msra.mxu0 0.0
      %5492 = vmatpush.msra.mxu0 0.0
      %5493 = vmatpush.msra.mxu0 0.0
      %5494 = vmatpush.msra.mxu0 0.0
      %5495 = vmatpush.msra.mxu0 0.0
      %5496 = vmatpush.msra.mxu0 %v4892
      %5497 = vmatpush.msra.mxu0 %v4891
      %5498 = vmatpush.msra.mxu0 %v4890
      %5499 = vmatpush.msra.mxu0 %v4889
      %5500 = vmatmul.f32.gmra.mxu0 %v5461
      %v5501 = vpop.f32.mrf.mxu0
      %v5502 = vadd.f32 %v5459, %v5501
      %5503 = vmatmul.f32.gmra.mxu0 %v5464
      %v5504 = vpop.f32.mrf.mxu0
      %v5505 = vadd.f32 %v5459, %v5504
      %5506 = vmatmul.f32.gmra.mxu0 %v5467
      %v5507 = vpop.f32.mrf.mxu0
      %v5508 = vadd.f32 %v5459, %v5507
      %5509 = vmatmul.f32.gmra.mxu0 %v5470
      %v5510 = vpop.f32.mrf.mxu0
      %v5511 = vadd.f32 %v5459, %v5510
      %5512 = vmatmul.f32.gmra.mxu0 %v5473
      %v5513 = vpop.f32.mrf.mxu0
      %v5514 = vadd.f32 %v5459, %v5513
      %5515 = vmatmul.f32.gmra.mxu0 %v5476
      %v5516 = vpop.f32.mrf.mxu0
      %v5517 = vadd.f32 %v5459, %v5516
      %5518 = vmatmul.f32.gmra.mxu0 %v5479
      %v5519 = vpop.f32.mrf.mxu0
      %v5520 = vadd.f32 %v5459, %v5519
      %5521 = vmatmul.f32.gmra.mxu0 %v5482
      %v5522 = vpop.f32.mrf.mxu0
      %v5523 = vadd.f32 %v5459, %v5522
      %5524 = vdwg.mxu0
      %5529 = vrot.lane.b32.xlu0 %v5448, 64
      %v5530 = vpop.permute.xlu0 %5529
      %5531 = vrot.lane.b32.xlu0 %v5451, 64
      %v5532 = vpop.permute.xlu0 %5531
      %5533 = vrot.lane.b32.xlu0 %v5454, 64
      %v5534 = vpop.permute.xlu0 %5533
      %5535 = vrot.lane.b32.xlu0 %v5457, 64
      %v5536 = vpop.permute.xlu0 %5535
      %v5541 = vsel %vm2754, %v5448, %v5530
      %v5542 = vsel %vm2754, %v5451, %v5532
      %v5543 = vsel %vm2754, %v5454, %v5534
      %v5544 = vsel %vm2754, %v5457, %v5536
      %v5545 = vmul.f32 %v5541, %v2047
      %v5546 = vmul.f32 %v5541, %v2048
      %v5547 = vmul.f32 %v5542, %v2049
      %v5548 = vmul.f32 %v5542, %v2050
      %v5549 = vmul.f32 %v5543, %v2051
      %v5550 = vmul.f32 %v5543, %v2052
      %v5551 = vmul.f32 %v5544, %v2053
      %v5552 = vmul.f32 %v5544, %v2054
      %v5553 = vmul.f32 %v5502, %v2015
      %v5554 = vmul.f32 %v5505, %v2016
      %v5555 = vmul.f32 %v5508, %v2017
      %v5556 = vmul.f32 %v5511, %v2018
      %v5557 = vmul.f32 %v5514, %v2019
      %v5558 = vmul.f32 %v5517, %v2020
      %v5559 = vmul.f32 %v5520, %v2021
      %v5560 = vmul.f32 %v5523, %v2022
      %v5561 = vmul.f32 %v5502, %v2023
      %v5562 = vmul.f32 %v5505, %v2024
      %v5563 = vmul.f32 %v5508, %v2025
      %v5564 = vmul.f32 %v5511, %v2026
      %v5565 = vmul.f32 %v5514, %v2027
      %v5566 = vmul.f32 %v5517, %v2028
      %v5567 = vmul.f32 %v5520, %v2029
      %v5568 = vmul.f32 %v5523, %v2030
      %v5569 = vmul.f32 %v5502, %v2031
      %v5570 = vmul.f32 %v5505, %v2032
      %v5571 = vmul.f32 %v5508, %v2033
      %v5572 = vmul.f32 %v5511, %v2034
      %v5573 = vmul.f32 %v5514, %v2035
      %v5574 = vmul.f32 %v5517, %v2036
      %v5575 = vmul.f32 %v5520, %v2037
      %v5576 = vmul.f32 %v5523, %v2038
      %v5577 = vmul.f32 %v5502, %v2039
      %v5578 = vmul.f32 %v5505, %v2040
      %v5579 = vmul.f32 %v5508, %v2041
      %v5580 = vmul.f32 %v5511, %v2042
      %v5581 = vmul.f32 %v5514, %v2043
      %v5582 = vmul.f32 %v5517, %v2044
      %v5583 = vmul.f32 %v5520, %v2045
      %v5584 = vmul.f32 %v5523, %v2046
      %v5586 = vsel %vm913, %v5363, 0
      %v5589 = vsel %vm913, %v5366, 0
      %v5592 = vsel %vm913, %v5369, 0
      %v5595 = vsel %vm913, %v5372, 0
      %v5598 = vsel %vm913, %v5375, 0
      %v5601 = vsel %vm913, %v5378, 0
      %v5604 = vsel %vm913, %v5381, 0
      %v5607 = vsel %vm913, %v5384, 0
      %5609 = vmatpush.msra.mxu0 0.0
      %5610 = vmatpush.msra.mxu0 0.0
      %5611 = vmatpush.msra.mxu0 0.0
      %5612 = vmatpush.msra.mxu0 0.0
      %5613 = vmatpush.msra.mxu0 0.0
      %5614 = vmatpush.msra.mxu0 0.0
      %5615 = vmatpush.msra.mxu0 0.0
      %5616 = vmatpush.msra.mxu0 0.0
      %5617 = vmatpush.msra.mxu0 0.0
      %5618 = vmatpush.msra.mxu0 0.0
      %5619 = vmatpush.msra.mxu0 0.0
      %5620 = vmatpush.msra.mxu0 0.0
      %5621 = vmatpush.msra.mxu0 %v5551
      %5622 = vmatpush.msra.mxu0 %v5549
      %5623 = vmatpush.msra.mxu0 %v5547
      %5624 = vmatpush.msra.mxu0 %v5545
      %5625 = vmatmul.f32.gmra.mxu0 %v5586
      %v5626 = vpop.f32.mrf.mxu0
      %v5627 = vadd.f32 0.0, %v5626
      %5628 = vmatmul.f32.gmra.mxu0 %v5589
      %v5629 = vpop.f32.mrf.mxu0
      %v5630 = vadd.f32 0.0, %v5629
      %5631 = vmatmul.f32.gmra.mxu0 %v5592
      %v5632 = vpop.f32.mrf.mxu0
      %v5633 = vadd.f32 0.0, %v5632
      %5634 = vmatmul.f32.gmra.mxu0 %v5595
      %v5635 = vpop.f32.mrf.mxu0
      %v5636 = vadd.f32 0.0, %v5635
      %5637 = vmatmul.f32.gmra.mxu0 %v5598
      %v5638 = vpop.f32.mrf.mxu0
      %v5639 = vadd.f32 0.0, %v5638
      %5640 = vmatmul.f32.gmra.mxu0 %v5601
      %v5641 = vpop.f32.mrf.mxu0
      %v5642 = vadd.f32 0.0, %v5641
      %5643 = vmatmul.f32.gmra.mxu0 %v5604
      %v5644 = vpop.f32.mrf.mxu0
      %v5645 = vadd.f32 0.0, %v5644
      %5646 = vmatmul.f32.gmra.mxu0 %v5607
      %v5647 = vpop.f32.mrf.mxu0
      %v5648 = vadd.f32 0.0, %v5647
      %5649 = vdwg.mxu0
      %5650 = vmatpush.msra.mxu0 0.0
      %5651 = vmatpush.msra.mxu0 0.0
      %5652 = vmatpush.msra.mxu0 0.0
      %5653 = vmatpush.msra.mxu0 0.0
      %5654 = vmatpush.msra.mxu0 0.0
      %5655 = vmatpush.msra.mxu0 0.0
      %5656 = vmatpush.msra.mxu0 0.0
      %5657 = vmatpush.msra.mxu0 0.0
      %5658 = vmatpush.msra.mxu0 0.0
      %5659 = vmatpush.msra.mxu0 0.0
      %5660 = vmatpush.msra.mxu0 0.0
      %5661 = vmatpush.msra.mxu0 0.0
      %5662 = vmatpush.msra.mxu0 %v5552
      %5663 = vmatpush.msra.mxu0 %v5550
      %5664 = vmatpush.msra.mxu0 %v5548
      %5665 = vmatpush.msra.mxu0 %v5546
      %5666 = vmatmul.f32.gmra.mxu0 %v5586
      %v5667 = vpop.f32.mrf.mxu0
      %v5668 = vadd.f32 0.0, %v5667
      %5669 = vmatmul.f32.gmra.mxu0 %v5589
      %v5670 = vpop.f32.mrf.mxu0
      %v5671 = vadd.f32 0.0, %v5670
      %5672 = vmatmul.f32.gmra.mxu0 %v5592
      %v5673 = vpop.f32.mrf.mxu0
      %v5674 = vadd.f32 0.0, %v5673
      %5675 = vmatmul.f32.gmra.mxu0 %v5595
      %v5676 = vpop.f32.mrf.mxu0
      %v5677 = vadd.f32 0.0, %v5676
      %5678 = vmatmul.f32.gmra.mxu0 %v5598
      %v5679 = vpop.f32.mrf.mxu0
      %v5680 = vadd.f32 0.0, %v5679
      %5681 = vmatmul.f32.gmra.mxu0 %v5601
      %v5682 = vpop.f32.mrf.mxu0
      %v5683 = vadd.f32 0.0, %v5682
      %5684 = vmatmul.f32.gmra.mxu0 %v5604
      %v5685 = vpop.f32.mrf.mxu0
      %v5686 = vadd.f32 0.0, %v5685
      %5687 = vmatmul.f32.gmra.mxu0 %v5607
      %v5688 = vpop.f32.mrf.mxu0
      %v5689 = vadd.f32 0.0, %v5688
      %5690 = vdwg.mxu0
      %v5691 = vmul.f32 %v5627, 0.35355338
      %v5692 = vmul.f32 %v5668, 0.35355338
      %v5693 = vmul.f32 %v5630, 0.35355338
      %v5694 = vmul.f32 %v5671, 0.35355338
      %v5695 = vmul.f32 %v5633, 0.35355338
      %v5696 = vmul.f32 %v5674, 0.35355338
      %v5697 = vmul.f32 %v5636, 0.35355338
      %v5698 = vmul.f32 %v5677, 0.35355338
      %v5699 = vmul.f32 %v5639, 0.35355338
      %v5700 = vmul.f32 %v5680, 0.35355338
      %v5701 = vmul.f32 %v5642, 0.35355338
      %v5702 = vmul.f32 %v5683, 0.35355338
      %v5703 = vmul.f32 %v5645, 0.35355338
      %v5704 = vmul.f32 %v5686, 0.35355338
      %v5705 = vmul.f32 %v5648, 0.35355338
      %v5706 = vmul.f32 %v5689, 0.35355338
      %v5707 = vadd.f32 %v5691, %v1983
      %v5708 = vadd.f32 %v5692, %v1984
      %v5709 = vadd.f32 %v5693, %v1985
      %v5710 = vadd.f32 %v5694, %v1986
      %v5711 = vadd.f32 %v5695, %v1987
      %v5712 = vadd.f32 %v5696, %v1988
      %v5713 = vadd.f32 %v5697, %v1989
      %v5714 = vadd.f32 %v5698, %v1990
      %v5715 = vadd.f32 %v5699, %v1991
      %v5716 = vadd.f32 %v5700, %v1992
      %v5717 = vadd.f32 %v5701, %v1993
      %v5718 = vadd.f32 %v5702, %v1994
      %v5719 = vadd.f32 %v5703, %v1995
      %v5720 = vadd.f32 %v5704, %v1996
      %v5721 = vadd.f32 %v5705, %v1997
      %v5722 = vadd.f32 %v5706, %v1998
      %v5723 = vmax.f32 %v5707, %v5708
      %5724 = vmax.xlane.f32.xlu0 %v5723
      %v5725 = vpop.xlane.xlu0 %5724
      %v5726 = vmax.f32 %v5709, %v5710
      %5727 = vmax.xlane.f32.xlu0 %v5726
      %v5728 = vpop.xlane.xlu0 %5727
      %v5729 = vmax.f32 %v5711, %v5712
      %5730 = vmax.xlane.f32.xlu0 %v5729
      %v5731 = vpop.xlane.xlu0 %5730
      %v5732 = vmax.f32 %v5713, %v5714
      %5733 = vmax.xlane.f32.xlu0 %v5732
      %v5734 = vpop.xlane.xlu0 %5733
      %v5735 = vmax.f32 %v5715, %v5716
      %5736 = vmax.xlane.f32.xlu0 %v5735
      %v5737 = vpop.xlane.xlu0 %5736
      %v5738 = vmax.f32 %v5717, %v5718
      %5739 = vmax.xlane.f32.xlu0 %v5738
      %v5740 = vpop.xlane.xlu0 %5739
      %v5741 = vmax.f32 %v5719, %v5720
      %5742 = vmax.xlane.f32.xlu0 %v5741
      %v5743 = vpop.xlane.xlu0 %5742
      %v5744 = vmax.f32 %v5721, %v5722
      %5745 = vmax.xlane.f32.xlu0 %v5744
      %v5746 = vpop.xlane.xlu0 %5745
      %v5747 = vsub.f32 %v5707, %v5725
      %v5748 = vsub.f32 %v5708, %v5725
      %v5749 = vsub.f32 %v5709, %v5728
      %v5750 = vsub.f32 %v5710, %v5728
      %v5751 = vsub.f32 %v5711, %v5731
      %v5752 = vsub.f32 %v5712, %v5731
      %v5753 = vsub.f32 %v5713, %v5734
      %v5754 = vsub.f32 %v5714, %v5734
      %v5755 = vsub.f32 %v5715, %v5737
      %v5756 = vsub.f32 %v5716, %v5737
      %v5757 = vsub.f32 %v5717, %v5740
      %v5758 = vsub.f32 %v5718, %v5740
      %v5759 = vsub.f32 %v5719, %v5743
      %v5760 = vsub.f32 %v5720, %v5743
      %v5761 = vsub.f32 %v5721, %v5746
      %v5762 = vsub.f32 %v5722, %v5746
      %v5763 = vmul.f32 %v5747, 1.442695
      %v5764 = vpow.pop %v5763
      %v5765 = vmul.f32 %v5748, 1.442695
      %v5766 = vpow.pop %v5765
      %v5767 = vmul.f32 %v5749, 1.442695
      %v5768 = vpow.pop %v5767
      %v5769 = vmul.f32 %v5750, 1.442695
      %v5770 = vpow.pop %v5769
      %v5771 = vmul.f32 %v5751, 1.442695
      %v5772 = vpow.pop %v5771
      %v5773 = vmul.f32 %v5752, 1.442695
      %v5774 = vpow.pop %v5773
      %v5775 = vmul.f32 %v5753, 1.442695
      %v5776 = vpow.pop %v5775
      %v5777 = vmul.f32 %v5754, 1.442695
      %v5778 = vpow.pop %v5777
      %v5779 = vmul.f32 %v5755, 1.442695
      %v5780 = vpow.pop %v5779
      %v5781 = vmul.f32 %v5756, 1.442695
      %v5782 = vpow.pop %v5781
      %v5783 = vmul.f32 %v5757, 1.442695
      %v5784 = vpow.pop %v5783
      %v5785 = vmul.f32 %v5758, 1.442695
      %v5786 = vpow.pop %v5785
      %v5787 = vmul.f32 %v5759, 1.442695
      %v5788 = vpow.pop %v5787
      %v5789 = vmul.f32 %v5760, 1.442695
      %v5790 = vpow.pop %v5789
      %v5791 = vmul.f32 %v5761, 1.442695
      %v5792 = vpow.pop %v5791
      %v5793 = vmul.f32 %v5762, 1.442695
      %v5794 = vpow.pop %v5793
      %5795 = vmatpush.msra.mxu0 %v2030
      %5796 = vmatpush.msra.mxu0 %v2029
      %5797 = vmatpush.msra.mxu0 %v2028
      %5798 = vmatpush.msra.mxu0 %v2027
      %5799 = vmatpush.msra.mxu0 %v2026
      %5800 = vmatpush.msra.mxu0 %v2025
      %5801 = vmatpush.msra.mxu0 %v2024
      %5802 = vmatpush.msra.mxu0 %v2023
      %5803 = vmatpush.msra.mxu0 %v2022
      %5804 = vmatpush.msra.mxu0 %v2021
      %5805 = vmatpush.msra.mxu0 %v2020
      %5806 = vmatpush.msra.mxu0 %v2019
      %5807 = vmatpush.msra.mxu0 %v2018
      %5808 = vmatpush.msra.mxu0 %v2017
      %5809 = vmatpush.msra.mxu0 %v2016
      %5810 = vmatpush.msra.mxu0 %v2015
      %5811 = vmatmul.f32.gmra.mxu0 %v5764
      %v5812 = vpop.f32.mrf.mxu0
      %v5813 = vadd.f32 0.0, %v5812
      %5814 = vmatmul.f32.gmra.mxu0 %v5768
      %v5815 = vpop.f32.mrf.mxu0
      %v5816 = vadd.f32 0.0, %v5815
      %5817 = vmatmul.f32.gmra.mxu0 %v5772
      %v5818 = vpop.f32.mrf.mxu0
      %v5819 = vadd.f32 0.0, %v5818
      %5820 = vmatmul.f32.gmra.mxu0 %v5776
      %v5821 = vpop.f32.mrf.mxu0
      %v5822 = vadd.f32 0.0, %v5821
      %5823 = vmatmul.f32.gmra.mxu0 %v5780
      %v5824 = vpop.f32.mrf.mxu0
      %v5825 = vadd.f32 0.0, %v5824
      %5826 = vmatmul.f32.gmra.mxu0 %v5784
      %v5827 = vpop.f32.mrf.mxu0
      %v5828 = vadd.f32 0.0, %v5827
      %5829 = vmatmul.f32.gmra.mxu0 %v5788
      %v5830 = vpop.f32.mrf.mxu0
      %v5831 = vadd.f32 0.0, %v5830
      %5832 = vmatmul.f32.gmra.mxu0 %v5792
      %v5833 = vpop.f32.mrf.mxu0
      %v5834 = vadd.f32 0.0, %v5833
      %5835 = vdwg.mxu0
      %5836 = vmatpush.msra.mxu0 %v2046
      %5837 = vmatpush.msra.mxu0 %v2045
      %5838 = vmatpush.msra.mxu0 %v2044
      %5839 = vmatpush.msra.mxu0 %v2043
      %5840 = vmatpush.msra.mxu0 %v2042
      %5841 = vmatpush.msra.mxu0 %v2041
      %5842 = vmatpush.msra.mxu0 %v2040
      %5843 = vmatpush.msra.mxu0 %v2039
      %5844 = vmatpush.msra.mxu0 %v2038
      %5845 = vmatpush.msra.mxu0 %v2037
      %5846 = vmatpush.msra.mxu0 %v2036
      %5847 = vmatpush.msra.mxu0 %v2035
      %5848 = vmatpush.msra.mxu0 %v2034
      %5849 = vmatpush.msra.mxu0 %v2033
      %5850 = vmatpush.msra.mxu0 %v2032
      %5851 = vmatpush.msra.mxu0 %v2031
      %5852 = vmatmul.f32.gmra.mxu0 %v5766
      %v5853 = vpop.f32.mrf.mxu0
      %v5854 = vadd.f32 %v5813, %v5853
      %5855 = vmatmul.f32.gmra.mxu0 %v5770
      %v5856 = vpop.f32.mrf.mxu0
      %v5857 = vadd.f32 %v5816, %v5856
      %5858 = vmatmul.f32.gmra.mxu0 %v5774
      %v5859 = vpop.f32.mrf.mxu0
      %v5860 = vadd.f32 %v5819, %v5859
      %5861 = vmatmul.f32.gmra.mxu0 %v5778
      %v5862 = vpop.f32.mrf.mxu0
      %v5863 = vadd.f32 %v5822, %v5862
      %5864 = vmatmul.f32.gmra.mxu0 %v5782
      %v5865 = vpop.f32.mrf.mxu0
      %v5866 = vadd.f32 %v5825, %v5865
      %5867 = vmatmul.f32.gmra.mxu0 %v5786
      %v5868 = vpop.f32.mrf.mxu0
      %v5869 = vadd.f32 %v5828, %v5868
      %5870 = vmatmul.f32.gmra.mxu0 %v5790
      %v5871 = vpop.f32.mrf.mxu0
      %v5872 = vadd.f32 %v5831, %v5871
      %5873 = vmatmul.f32.gmra.mxu0 %v5794
      %v5874 = vpop.f32.mrf.mxu0
      %v5875 = vadd.f32 %v5834, %v5874
      %5876 = vdwg.mxu0
      %5877 = vmatpush.msra.mxu0 %v5568
      %5878 = vmatpush.msra.mxu0 %v5567
      %5879 = vmatpush.msra.mxu0 %v5566
      %5880 = vmatpush.msra.mxu0 %v5565
      %5881 = vmatpush.msra.mxu0 %v5564
      %5882 = vmatpush.msra.mxu0 %v5563
      %5883 = vmatpush.msra.mxu0 %v5562
      %5884 = vmatpush.msra.mxu0 %v5561
      %5885 = vmatpush.msra.mxu0 %v5560
      %5886 = vmatpush.msra.mxu0 %v5559
      %5887 = vmatpush.msra.mxu0 %v5558
      %5888 = vmatpush.msra.mxu0 %v5557
      %5889 = vmatpush.msra.mxu0 %v5556
      %5890 = vmatpush.msra.mxu0 %v5555
      %5891 = vmatpush.msra.mxu0 %v5554
      %5892 = vmatpush.msra.mxu0 %v5553
      %5893 = vmatmul.f32.gmra.mxu0 %v5764
      %v5894 = vpop.f32.mrf.mxu0
      %v5895 = vadd.f32 0.0, %v5894
      %5896 = vmatmul.f32.gmra.mxu0 %v5768
      %v5897 = vpop.f32.mrf.mxu0
      %v5898 = vadd.f32 0.0, %v5897
      %5899 = vmatmul.f32.gmra.mxu0 %v5772
      %v5900 = vpop.f32.mrf.mxu0
      %v5901 = vadd.f32 0.0, %v5900
      %5902 = vmatmul.f32.gmra.mxu0 %v5776
      %v5903 = vpop.f32.mrf.mxu0
      %v5904 = vadd.f32 0.0, %v5903
      %5905 = vmatmul.f32.gmra.mxu0 %v5780
      %v5906 = vpop.f32.mrf.mxu0
      %v5907 = vadd.f32 0.0, %v5906
      %5908 = vmatmul.f32.gmra.mxu0 %v5784
      %v5909 = vpop.f32.mrf.mxu0
      %v5910 = vadd.f32 0.0, %v5909
      %5911 = vmatmul.f32.gmra.mxu0 %v5788
      %v5912 = vpop.f32.mrf.mxu0
      %v5913 = vadd.f32 0.0, %v5912
      %5914 = vmatmul.f32.gmra.mxu0 %v5792
      %v5915 = vpop.f32.mrf.mxu0
      %v5916 = vadd.f32 0.0, %v5915
      %5917 = vdwg.mxu0
      %5918 = vmatpush.msra.mxu0 %v5584
      %5919 = vmatpush.msra.mxu0 %v5583
      %5920 = vmatpush.msra.mxu0 %v5582
      %5921 = vmatpush.msra.mxu0 %v5581
      %5922 = vmatpush.msra.mxu0 %v5580
      %5923 = vmatpush.msra.mxu0 %v5579
      %5924 = vmatpush.msra.mxu0 %v5578
      %5925 = vmatpush.msra.mxu0 %v5577
      %5926 = vmatpush.msra.mxu0 %v5576
      %5927 = vmatpush.msra.mxu0 %v5575
      %5928 = vmatpush.msra.mxu0 %v5574
      %5929 = vmatpush.msra.mxu0 %v5573
      %5930 = vmatpush.msra.mxu0 %v5572
      %5931 = vmatpush.msra.mxu0 %v5571
      %5932 = vmatpush.msra.mxu0 %v5570
      %5933 = vmatpush.msra.mxu0 %v5569
      %5934 = vmatmul.f32.gmra.mxu0 %v5766
      %v5935 = vpop.f32.mrf.mxu0
      %v5936 = vadd.f32 %v5895, %v5935
      %5937 = vmatmul.f32.gmra.mxu0 %v5770
      %v5938 = vpop.f32.mrf.mxu0
      %v5939 = vadd.f32 %v5898, %v5938
      %5940 = vmatmul.f32.gmra.mxu0 %v5774
      %v5941 = vpop.f32.mrf.mxu0
      %v5942 = vadd.f32 %v5901, %v5941
      %5943 = vmatmul.f32.gmra.mxu0 %v5778
      %v5944 = vpop.f32.mrf.mxu0
      %v5945 = vadd.f32 %v5904, %v5944
      %5946 = vmatmul.f32.gmra.mxu0 %v5782
      %v5947 = vpop.f32.mrf.mxu0
      %v5948 = vadd.f32 %v5907, %v5947
      %5949 = vmatmul.f32.gmra.mxu0 %v5786
      %v5950 = vpop.f32.mrf.mxu0
      %v5951 = vadd.f32 %v5910, %v5950
      %5952 = vmatmul.f32.gmra.mxu0 %v5790
      %v5953 = vpop.f32.mrf.mxu0
      %v5954 = vadd.f32 %v5913, %v5953
      %5955 = vmatmul.f32.gmra.mxu0 %v5794
      %v5956 = vpop.f32.mrf.mxu0
      %v5957 = vadd.f32 %v5916, %v5956
      %5958 = vdwg.mxu0
      %v5959 = vrcp.pop %v5854
      %v5960 = vrcp.pop %v5857
      %v5961 = vrcp.pop %v5860
      %v5962 = vrcp.pop %v5863
      %v5963 = vrcp.pop %v5866
      %v5964 = vrcp.pop %v5869
      %v5965 = vrcp.pop %v5872
      %v5966 = vrcp.pop %v5875
      %v5967 = vmul.f32 %v5936, %v5959
      %v5968 = vmul.f32 %v5939, %v5960
      %v5969 = vmul.f32 %v5942, %v5961
      %v5970 = vmul.f32 %v5945, %v5962
      %v5971 = vmul.f32 %v5948, %v5963
      %v5972 = vmul.f32 %v5951, %v5964
      %v5973 = vmul.f32 %v5954, %v5965
      %v5974 = vmul.f32 %v5957, %v5966
      %v5976 = vsel %vm913, %v5967, 0
      %v5979 = vsel %vm913, %v5968, 0
      %v5982 = vsel %vm913, %v5969, 0
      %v5985 = vsel %vm913, %v5970, 0
      %v5988 = vsel %vm913, %v5971, 0
      %v5991 = vsel %vm913, %v5972, 0
      %v5994 = vsel %vm913, %v5973, 0
      %v5997 = vsel %vm913, %v5974, 0
      %5999 = vmatpush.msra.mxu0 0.0
      %6000 = vmatpush.msra.mxu0 0.0
      %6001 = vmatpush.msra.mxu0 0.0
      %6002 = vmatpush.msra.mxu0 0.0
      %6003 = vmatpush.msra.mxu0 0.0
      %6004 = vmatpush.msra.mxu0 0.0
      %6005 = vmatpush.msra.mxu0 0.0
      %6006 = vmatpush.msra.mxu0 0.0
      %6007 = vmatpush.msra.mxu0 0.0
      %6008 = vmatpush.msra.mxu0 0.0
      %6009 = vmatpush.msra.mxu0 0.0
      %6010 = vmatpush.msra.mxu0 0.0
      %6011 = vmatpush.msra.mxu0 %v4897
      %6012 = vmatpush.msra.mxu0 %v4896
      %6013 = vmatpush.msra.mxu0 %v4895
      %6014 = vmatpush.msra.mxu0 %v4894
      %6015 = vmatmul.f32.gmra.mxu0 %v5976
      %v6016 = vpop.f32.mrf.mxu0
      %v6017 = vadd.f32 0.0, %v6016
      %6018 = vmatmul.f32.gmra.mxu0 %v5979
      %v6019 = vpop.f32.mrf.mxu0
      %v6020 = vadd.f32 0.0, %v6019
      %6021 = vmatmul.f32.gmra.mxu0 %v5982
      %v6022 = vpop.f32.mrf.mxu0
      %v6023 = vadd.f32 0.0, %v6022
      %6024 = vmatmul.f32.gmra.mxu0 %v5985
      %v6025 = vpop.f32.mrf.mxu0
      %v6026 = vadd.f32 0.0, %v6025
      %6027 = vmatmul.f32.gmra.mxu0 %v5988
      %v6028 = vpop.f32.mrf.mxu0
      %v6029 = vadd.f32 0.0, %v6028
      %6030 = vmatmul.f32.gmra.mxu0 %v5991
      %v6031 = vpop.f32.mrf.mxu0
      %v6032 = vadd.f32 0.0, %v6031
      %6033 = vmatmul.f32.gmra.mxu0 %v5994
      %v6034 = vpop.f32.mrf.mxu0
      %v6035 = vadd.f32 0.0, %v6034
      %6036 = vmatmul.f32.gmra.mxu0 %v5997
      %v6037 = vpop.f32.mrf.mxu0
      %v6038 = vadd.f32 0.0, %v6037
      %6039 = vdwg.mxu0
      %v6040 = vadd.f32 %v3653, %v6017
      %v6041 = vadd.f32 %v3654, %v6020
      %v6042 = vadd.f32 %v3655, %v6023
      %v6043 = vadd.f32 %v3656, %v6026
      %v6044 = vadd.f32 %v3657, %v6029
      %v6045 = vadd.f32 %v3658, %v6032
      %v6046 = vadd.f32 %v3659, %v6035
      %v6047 = vadd.f32 %v3660, %v6038
      %v6048 = vperm.slane %v4922, 7
      %v6049 = vadd.f32 %v6040, %v6048
      %v6050 = vadd.f32 %v6041, %v6048
      %v6051 = vadd.f32 %v6042, %v6048
      %v6052 = vadd.f32 %v6043, %v6048
      %v6053 = vadd.f32 %v6044, %v6048
      %v6054 = vadd.f32 %v6045, %v6048
      %v6055 = vadd.f32 %v6046, %v6048
      %v6056 = vadd.f32 %v6047, %v6048
      %v6057 = vsel %vm913, %v6049, 0.0
      %6058 = vadd.xlane.f32.xlu0 %v6057
      %v6059 = vpop.xlane.xlu0 %6058
      %v6060 = vsel %vm913, %v6050, 0.0
      %6061 = vadd.xlane.f32.xlu0 %v6060
      %v6062 = vpop.xlane.xlu0 %6061
      %v6063 = vsel %vm913, %v6051, 0.0
      %6064 = vadd.xlane.f32.xlu0 %v6063
      %v6065 = vpop.xlane.xlu0 %6064
      %v6066 = vsel %vm913, %v6052, 0.0
      %6067 = vadd.xlane.f32.xlu0 %v6066
      %v6068 = vpop.xlane.xlu0 %6067
      %v6069 = vsel %vm913, %v6053, 0.0
      %6070 = vadd.xlane.f32.xlu0 %v6069
      %v6071 = vpop.xlane.xlu0 %6070
      %v6072 = vsel %vm913, %v6054, 0.0
      %6073 = vadd.xlane.f32.xlu0 %v6072
      %v6074 = vpop.xlane.xlu0 %6073
      %v6075 = vsel %vm913, %v6055, 0.0
      %6076 = vadd.xlane.f32.xlu0 %v6075
      %v6077 = vpop.xlane.xlu0 %6076
      %v6078 = vsel %vm913, %v6056, 0.0
      %6079 = vadd.xlane.f32.xlu0 %v6078
      %v6080 = vpop.xlane.xlu0 %6079
      %v6081 = vmul.f32 %v6059, %v968
      %v6082 = vmul.f32 %v6062, %v968
      %v6083 = vmul.f32 %v6065, %v968
      %v6084 = vmul.f32 %v6068, %v968
      %v6085 = vmul.f32 %v6071, %v968
      %v6086 = vmul.f32 %v6074, %v968
      %v6087 = vmul.f32 %v6077, %v968
      %v6088 = vmul.f32 %v6080, %v968
      %v6089 = vsub.f32 %v6049, %v6081
      %v6090 = vsub.f32 %v6050, %v6082
      %v6091 = vsub.f32 %v6051, %v6083
      %v6092 = vsub.f32 %v6052, %v6084
      %v6093 = vsub.f32 %v6053, %v6085
      %v6094 = vsub.f32 %v6054, %v6086
      %v6095 = vsub.f32 %v6055, %v6087
      %v6096 = vsub.f32 %v6056, %v6088
      %v6097 = vmul.f32 %v6089, %v6089
      %v6098 = vmul.f32 %v6090, %v6090
      %v6099 = vmul.f32 %v6091, %v6091
      %v6100 = vmul.f32 %v6092, %v6092
      %v6101 = vmul.f32 %v6093, %v6093
      %v6102 = vmul.f32 %v6094, %v6094
      %v6103 = vmul.f32 %v6095, %v6095
      %v6104 = vmul.f32 %v6096, %v6096
      %v6105 = vsel %vm913, %v6097, 0.0
      %6106 = vadd.xlane.f32.xlu0 %v6105
      %v6107 = vpop.xlane.xlu0 %6106
      %v6108 = vsel %vm913, %v6098, 0.0
      %6109 = vadd.xlane.f32.xlu0 %v6108
      %v6110 = vpop.xlane.xlu0 %6109
      %v6111 = vsel %vm913, %v6099, 0.0
      %6112 = vadd.xlane.f32.xlu0 %v6111
      %v6113 = vpop.xlane.xlu0 %6112
      %v6114 = vsel %vm913, %v6100, 0.0
      %6115 = vadd.xlane.f32.xlu0 %v6114
      %v6116 = vpop.xlane.xlu0 %6115
      %v6117 = vsel %vm913, %v6101, 0.0
      %6118 = vadd.xlane.f32.xlu0 %v6117
      %v6119 = vpop.xlane.xlu0 %6118
      %v6120 = vsel %vm913, %v6102, 0.0
      %6121 = vadd.xlane.f32.xlu0 %v6120
      %v6122 = vpop.xlane.xlu0 %6121
      %v6123 = vsel %vm913, %v6103, 0.0
      %6124 = vadd.xlane.f32.xlu0 %v6123
      %v6125 = vpop.xlane.xlu0 %6124
      %v6126 = vsel %vm913, %v6104, 0.0
      %6127 = vadd.xlane.f32.xlu0 %v6126
      %v6128 = vpop.xlane.xlu0 %6127
      %v6129 = vmul.f32 %v6107, %v968
      %v6130 = vmul.f32 %v6110, %v968
      %v6131 = vmul.f32 %v6113, %v968
      %v6132 = vmul.f32 %v6116, %v968
      %v6133 = vmul.f32 %v6119, %v968
      %v6134 = vmul.f32 %v6122, %v968
      %v6135 = vmul.f32 %v6125, %v968
      %v6136 = vmul.f32 %v6128, %v968
      %v6137 = vadd.f32 %v6129, 1e-06
      %v6138 = vadd.f32 %v6130, 1e-06
      %v6139 = vadd.f32 %v6131, 1e-06
      %v6140 = vadd.f32 %v6132, 1e-06
      %v6141 = vadd.f32 %v6133, 1e-06
      %v6142 = vadd.f32 %v6134, 1e-06
      %v6143 = vadd.f32 %v6135, 1e-06
      %v6144 = vadd.f32 %v6136, 1e-06
      %v6145 = vrsqrt.pop %v6137
      %v6146 = vmul.f32 %v6145, %v6137
      %v6147 = vmul.f32 %v6146, %v6145
      %v6148 = vmul.f32 0.5, %v6147
      %v6149 = vsub.f32 1.5, %v6148
      %v6150 = vmul.f32 %v6145, %v6149
      %vm6151 = vweird.f32 %v6137
      %vm6152 = vweird.f32 %v6145
      %vm6153 = vmor %vm6151, %vm6152
      %v6154 = vsel %vm6153, %v6145, %v6150
      %v6155 = vrsqrt.pop %v6138
      %v6156 = vmul.f32 %v6155, %v6138
      %v6157 = vmul.f32 %v6156, %v6155
      %v6158 = vmul.f32 0.5, %v6157
      %v6159 = vsub.f32 1.5, %v6158
      %v6160 = vmul.f32 %v6155, %v6159
      %vm6161 = vweird.f32 %v6138
      %vm6162 = vweird.f32 %v6155
      %vm6163 = vmor %vm6161, %vm6162
      %v6164 = vsel %vm6163, %v6155, %v6160
      %v6165 = vrsqrt.pop %v6139
      %v6166 = vmul.f32 %v6165, %v6139
      %v6167 = vmul.f32 %v6166, %v6165
      %v6168 = vmul.f32 0.5, %v6167
      %v6169 = vsub.f32 1.5, %v6168
      %v6170 = vmul.f32 %v6165, %v6169
      %vm6171 = vweird.f32 %v6139
      %vm6172 = vweird.f32 %v6165
      %vm6173 = vmor %vm6171, %vm6172
      %v6174 = vsel %vm6173, %v6165, %v6170
      %v6175 = vrsqrt.pop %v6140
      %v6176 = vmul.f32 %v6175, %v6140
      %v6177 = vmul.f32 %v6176, %v6175
      %v6178 = vmul.f32 0.5, %v6177
      %v6179 = vsub.f32 1.5, %v6178
      %v6180 = vmul.f32 %v6175, %v6179
      %vm6181 = vweird.f32 %v6140
      %vm6182 = vweird.f32 %v6175
      %vm6183 = vmor %vm6181, %vm6182
      %v6184 = vsel %vm6183, %v6175, %v6180
      %v6185 = vrsqrt.pop %v6141
      %v6186 = vmul.f32 %v6185, %v6141
      %v6187 = vmul.f32 %v6186, %v6185
      %v6188 = vmul.f32 0.5, %v6187
      %v6189 = vsub.f32 1.5, %v6188
      %v6190 = vmul.f32 %v6185, %v6189
      %vm6191 = vweird.f32 %v6141
      %vm6192 = vweird.f32 %v6185
      %vm6193 = vmor %vm6191, %vm6192
      %v6194 = vsel %vm6193, %v6185, %v6190
      %v6195 = vrsqrt.pop %v6142
      %v6196 = vmul.f32 %v6195, %v6142
      %v6197 = vmul.f32 %v6196, %v6195
      %v6198 = vmul.f32 0.5, %v6197
      %v6199 = vsub.f32 1.5, %v6198
      %v6200 = vmul.f32 %v6195, %v6199
      %vm6201 = vweird.f32 %v6142
      %vm6202 = vweird.f32 %v6195
      %vm6203 = vmor %vm6201, %vm6202
      %v6204 = vsel %vm6203, %v6195, %v6200
      %v6205 = vrsqrt.pop %v6143
      %v6206 = vmul.f32 %v6205, %v6143
      %v6207 = vmul.f32 %v6206, %v6205
      %v6208 = vmul.f32 0.5, %v6207
      %v6209 = vsub.f32 1.5, %v6208
      %v6210 = vmul.f32 %v6205, %v6209
      %vm6211 = vweird.f32 %v6143
      %vm6212 = vweird.f32 %v6205
      %vm6213 = vmor %vm6211, %vm6212
      %v6214 = vsel %vm6213, %v6205, %v6210
      %v6215 = vrsqrt.pop %v6144
      %v6216 = vmul.f32 %v6215, %v6144
      %v6217 = vmul.f32 %v6216, %v6215
      %v6218 = vmul.f32 0.5, %v6217
      %v6219 = vsub.f32 1.5, %v6218
      %v6220 = vmul.f32 %v6215, %v6219
      %vm6221 = vweird.f32 %v6144
      %vm6222 = vweird.f32 %v6215
      %vm6223 = vmor %vm6221, %vm6222
      %v6224 = vsel %vm6223, %v6215, %v6220
      %v6225 = vmul.f32 %v6089, %v6154
      %v6226 = vmul.f32 %v6090, %v6164
      %v6227 = vmul.f32 %v6091, %v6174
      %v6228 = vmul.f32 %v6092, %v6184
      %v6229 = vmul.f32 %v6093, %v6194
      %v6230 = vmul.f32 %v6094, %v6204
      %v6231 = vmul.f32 %v6095, %v6214
      %v6232 = vmul.f32 %v6096, %v6224
      %v6233 = vperm.slane %v4923, 0
      %v6234 = vmul.f32 %v6225, %v6233
      %v6235 = vmul.f32 %v6226, %v6233
      %v6236 = vmul.f32 %v6227, %v6233
      %v6237 = vmul.f32 %v6228, %v6233
      %v6238 = vmul.f32 %v6229, %v6233
      %v6239 = vmul.f32 %v6230, %v6233
      %v6240 = vmul.f32 %v6231, %v6233
      %v6241 = vmul.f32 %v6232, %v6233
      %v6242 = vperm.slane %v4923, 1
      %v6243 = vadd.f32 %v6234, %v6242
      %v6244 = vadd.f32 %v6235, %v6242
      %v6245 = vadd.f32 %v6236, %v6242
      %v6246 = vadd.f32 %v6237, %v6242
      %v6247 = vadd.f32 %v6238, %v6242
      %v6248 = vadd.f32 %v6239, %v6242
      %v6249 = vadd.f32 %v6240, %v6242
      %v6250 = vadd.f32 %v6241, %v6242
      %v6251 = vperm.slane %v4920, 0
      %v6253 = vsel %vm913, %v6243, 0
      %v6256 = vsel %vm913, %v6244, 0
      %v6259 = vsel %vm913, %v6245, 0
      %v6262 = vsel %vm913, %v6246, 0
      %v6265 = vsel %vm913, %v6247, 0
      %v6268 = vsel %vm913, %v6248, 0
      %v6271 = vsel %vm913, %v6249, 0
      %v6274 = vsel %vm913, %v6250, 0
      %6276 = vmatpush.msra.mxu0 0.0
      %6277 = vmatpush.msra.mxu0 0.0
      %6278 = vmatpush.msra.mxu0 0.0
      %6279 = vmatpush.msra.mxu0 0.0
      %6280 = vmatpush.msra.mxu0 0.0
      %6281 = vmatpush.msra.mxu0 0.0
      %6282 = vmatpush.msra.mxu0 0.0
      %6283 = vmatpush.msra.mxu0 0.0
      %6284 = vmatpush.msra.mxu0 0.0
      %6285 = vmatpush.msra.mxu0 0.0
      %6286 = vmatpush.msra.mxu0 0.0
      %6287 = vmatpush.msra.mxu0 0.0
      %6288 = vmatpush.msra.mxu0 %v4902
      %6289 = vmatpush.msra.mxu0 %v4901
      %6290 = vmatpush.msra.mxu0 %v4900
      %6291 = vmatpush.msra.mxu0 %v4899
      %6292 = vmatmul.f32.gmra.mxu0 %v6253
      %v6293 = vpop.f32.mrf.mxu0
      %v6294 = vadd.f32 %v6251, %v6293
      %6295 = vmatmul.f32.gmra.mxu0 %v6256
      %v6296 = vpop.f32.mrf.mxu0
      %v6297 = vadd.f32 %v6251, %v6296
      %6298 = vmatmul.f32.gmra.mxu0 %v6259
      %v6299 = vpop.f32.mrf.mxu0
      %v6300 = vadd.f32 %v6251, %v6299
      %6301 = vmatmul.f32.gmra.mxu0 %v6262
      %v6302 = vpop.f32.mrf.mxu0
      %v6303 = vadd.f32 %v6251, %v6302
      %6304 = vmatmul.f32.gmra.mxu0 %v6265
      %v6305 = vpop.f32.mrf.mxu0
      %v6306 = vadd.f32 %v6251, %v6305
      %6307 = vmatmul.f32.gmra.mxu0 %v6268
      %v6308 = vpop.f32.mrf.mxu0
      %v6309 = vadd.f32 %v6251, %v6308
      %6310 = vmatmul.f32.gmra.mxu0 %v6271
      %v6311 = vpop.f32.mrf.mxu0
      %v6312 = vadd.f32 %v6251, %v6311
      %6313 = vmatmul.f32.gmra.mxu0 %v6274
      %v6314 = vpop.f32.mrf.mxu0
      %v6315 = vadd.f32 %v6251, %v6314
      %6316 = vdwg.mxu0
      %v6317 = vmul.f32 %v6294, %v6294
      %v6318 = vmul.f32 %v6297, %v6297
      %v6319 = vmul.f32 %v6300, %v6300
      %v6320 = vmul.f32 %v6303, %v6303
      %v6321 = vmul.f32 %v6306, %v6306
      %v6322 = vmul.f32 %v6309, %v6309
      %v6323 = vmul.f32 %v6312, %v6312
      %v6324 = vmul.f32 %v6315, %v6315
      %v6325 = vmul.f32 %v6294, %v6317
      %v6326 = vmul.f32 %v6297, %v6318
      %v6327 = vmul.f32 %v6300, %v6319
      %v6328 = vmul.f32 %v6303, %v6320
      %v6329 = vmul.f32 %v6306, %v6321
      %v6330 = vmul.f32 %v6309, %v6322
      %v6331 = vmul.f32 %v6312, %v6323
      %v6332 = vmul.f32 %v6315, %v6324
      %v6333 = vmul.f32 %v6325, 0.044715
      %v6334 = vmul.f32 %v6326, 0.044715
      %v6335 = vmul.f32 %v6327, 0.044715
      %v6336 = vmul.f32 %v6328, 0.044715
      %v6337 = vmul.f32 %v6329, 0.044715
      %v6338 = vmul.f32 %v6330, 0.044715
      %v6339 = vmul.f32 %v6331, 0.044715
      %v6340 = vmul.f32 %v6332, 0.044715
      %v6341 = vadd.f32 %v6294, %v6333
      %v6342 = vadd.f32 %v6297, %v6334
      %v6343 = vadd.f32 %v6300, %v6335
      %v6344 = vadd.f32 %v6303, %v6336
      %v6345 = vadd.f32 %v6306, %v6337
      %v6346 = vadd.f32 %v6309, %v6338
      %v6347 = vadd.f32 %v6312, %v6339
      %v6348 = vadd.f32 %v6315, %v6340
      %v6349 = vmul.f32 %v6341, 0.7978846
      %v6350 = vmul.f32 %v6342, 0.7978846
      %v6351 = vmul.f32 %v6343, 0.7978846
      %v6352 = vmul.f32 %v6344, 0.7978846
      %v6353 = vmul.f32 %v6345, 0.7978846
      %v6354 = vmul.f32 %v6346, 0.7978846
      %v6355 = vmul.f32 %v6347, 0.7978846
      %v6356 = vmul.f32 %v6348, 0.7978846
      %v6357 = vtanh.pop %v6349
      %v6358 = vtanh.pop %v6350
      %v6359 = vtanh.pop %v6351
      %v6360 = vtanh.pop %v6352
      %v6361 = vtanh.pop %v6353
      %v6362 = vtanh.pop %v6354
      %v6363 = vtanh.pop %v6355
      %v6364 = vtanh.pop %v6356
      %v6365 = vadd.f32 %v6357, 1.0
      %v6366 = vadd.f32 %v6358, 1.0
      %v6367 = vadd.f32 %v6359, 1.0
      %v6368 = vadd.f32 %v6360, 1.0
      %v6369 = vadd.f32 %v6361, 1.0
      %v6370 = vadd.f32 %v6362, 1.0
      %v6371 = vadd.f32 %v6363, 1.0
      %v6372 = vadd.f32 %v6364, 1.0
      %v6373 = vmul.f32 %v6365, 0.5
      %v6374 = vmul.f32 %v6366, 0.5
      %v6375 = vmul.f32 %v6367, 0.5
      %v6376 = vmul.f32 %v6368, 0.5
      %v6377 = vmul.f32 %v6369, 0.5
      %v6378 = vmul.f32 %v6370, 0.5
      %v6379 = vmul.f32 %v6371, 0.5
      %v6380 = vmul.f32 %v6372, 0.5
      %v6381 = vmul.f32 %v6294, %v6373
      %v6382 = vmul.f32 %v6297, %v6374
      %v6383 = vmul.f32 %v6300, %v6375
      %v6384 = vmul.f32 %v6303, %v6376
      %v6385 = vmul.f32 %v6306, %v6377
      %v6386 = vmul.f32 %v6309, %v6378
      %v6387 = vmul.f32 %v6312, %v6379
      %v6388 = vmul.f32 %v6315, %v6380
      %6389 = vmatpush.msra.mxu0 %v4919
      %6390 = vmatpush.msra.mxu0 %v4918
      %6391 = vmatpush.msra.mxu0 %v4917
      %6392 = vmatpush.msra.mxu0 %v4916
      %6393 = vmatpush.msra.mxu0 %v4915
      %6394 = vmatpush.msra.mxu0 %v4914
      %6395 = vmatpush.msra.mxu0 %v4913
      %6396 = vmatpush.msra.mxu0 %v4912
      %6397 = vmatpush.msra.mxu0 %v4911
      %6398 = vmatpush.msra.mxu0 %v4910
      %6399 = vmatpush.msra.mxu0 %v4909
      %6400 = vmatpush.msra.mxu0 %v4908
      %6401 = vmatpush.msra.mxu0 %v4907
      %6402 = vmatpush.msra.mxu0 %v4906
      %6403 = vmatpush.msra.mxu0 %v4905
      %6404 = vmatpush.msra.mxu0 %v4904
      %6405 = vmatmul.f32.gmra.mxu0 %v6381
      %v6406 = vpop.f32.mrf.mxu0
      %v6407 = vadd.f32 0.0, %v6406
      %6408 = vmatmul.f32.gmra.mxu0 %v6382
      %v6409 = vpop.f32.mrf.mxu0
      %v6410 = vadd.f32 0.0, %v6409
      %6411 = vmatmul.f32.gmra.mxu0 %v6383
      %v6412 = vpop.f32.mrf.mxu0
      %v6413 = vadd.f32 0.0, %v6412
      %6414 = vmatmul.f32.gmra.mxu0 %v6384
      %v6415 = vpop.f32.mrf.mxu0
      %v6416 = vadd.f32 0.0, %v6415
      %6417 = vmatmul.f32.gmra.mxu0 %v6385
      %v6418 = vpop.f32.mrf.mxu0
      %v6419 = vadd.f32 0.0, %v6418
      %6420 = vmatmul.f32.gmra.mxu0 %v6386
      %v6421 = vpop.f32.mrf.mxu0
      %v6422 = vadd.f32 0.0, %v6421
      %6423 = vmatmul.f32.gmra.mxu0 %v6387
      %v6424 = vpop.f32.mrf.mxu0
      %v6425 = vadd.f32 0.0, %v6424
      %6426 = vmatmul.f32.gmra.mxu0 %v6388
      %v6427 = vpop.f32.mrf.mxu0
      %v6428 = vadd.f32 0.0, %v6427
      %6429 = vdwg.mxu0
      %v6430 = vadd.f32 %v6049, %v6407
      %v6431 = vadd.f32 %v6050, %v6410
      %v6432 = vadd.f32 %v6051, %v6413
      %v6433 = vadd.f32 %v6052, %v6416
      %v6434 = vadd.f32 %v6053, %v6419
      %v6435 = vadd.f32 %v6054, %v6422
      %v6436 = vadd.f32 %v6055, %v6425
      %v6437 = vadd.f32 %v6056, %v6428
      %v6438 = vperm.slane %v4923, 2
      %v6439 = vadd.f32 %v6430, %v6438
      %v6440 = vadd.f32 %v6431, %v6438
      %v6441 = vadd.f32 %v6432, %v6438
      %v6442 = vadd.f32 %v6433, %v6438
      %v6443 = vadd.f32 %v6434, %v6438
      %v6444 = vadd.f32 %v6435, %v6438
      %v6445 = vadd.f32 %v6436, %v6438
      %v6446 = vadd.f32 %v6437, %v6438
      %s6447 = scalar_lea.vmem %s16, 384
      %v6448 = vld [vmem:[%s6447] sm:$0xff]
      %v6449 = vld [vmem:[%s6447 + $0x8] sm:$0xff]
      %v6450 = vld [vmem:[%s6447 + $0x10] sm:$0xff]
      %v6451 = vld [vmem:[%s6447 + $0x18] sm:$0xff]
      %s6452 = scalar_lea.vmem %s16, 416
      %v6453 = vld [vmem:[%s6452] sm:$0xff]
      %v6454 = vld [vmem:[%s6452 + $0x8] sm:$0xff]
      %v6455 = vld [vmem:[%s6452 + $0x10] sm:$0xff]
      %v6456 = vld [vmem:[%s6452 + $0x18] sm:$0xff]
      %s6457 = scalar_lea.vmem %s16, 448
      %v6458 = vld [vmem:[%s6457] sm:$0xff]
      %v6459 = vld [vmem:[%s6457 + $0x8] sm:$0xff]
      %v6460 = vld [vmem:[%s6457 + $0x10] sm:$0xff]
      %v6461 = vld [vmem:[%s6457 + $0x18] sm:$0xff]
      %s6462 = scalar_lea.vmem %s16, 480
      %v6463 = vld [vmem:[%s6462] sm:$0xff]
      %v6464 = vld [vmem:[%s6462 + $0x8] sm:$0xff]
      %v6465 = vld [vmem:[%s6462 + $0x10] sm:$0xff]
      %v6466 = vld [vmem:[%s6462 + $0x18] sm:$0xff]
      %s6467 = scalar_lea.vmem %s17, 96
      %v6468 = vld [vmem:[%s6467] sm:$0xff]
      %v6469 = vld [vmem:[%s6467 + $0x8] sm:$0xff]
      %v6470 = vld [vmem:[%s6467 + $0x10] sm:$0xff]
      %v6471 = vld [vmem:[%s6467 + $0x18] sm:$0xff]
      %s6472 = scalar_lea.vmem %s18, 384
      %v6473 = vld [vmem:[%s6472] sm:$0xff]
      %v6474 = vld [vmem:[%s6472 + $0x8] sm:$0xff]
      %v6475 = vld [vmem:[%s6472 + $0x10] sm:$0xff]
      %v6476 = vld [vmem:[%s6472 + $0x18] sm:$0xff]
      %v6477 = vld [vmem:[%s6472 + $0x20] sm:$0xff]
      %v6478 = vld [vmem:[%s6472 + $0x28] sm:$0xff]
      %v6479 = vld [vmem:[%s6472 + $0x30] sm:$0xff]
      %v6480 = vld [vmem:[%s6472 + $0x38] sm:$0xff]
      %v6481 = vld [vmem:[%s6472 + $0x40] sm:$0xff]
      %v6482 = vld [vmem:[%s6472 + $0x48] sm:$0xff]
      %v6483 = vld [vmem:[%s6472 + $0x50] sm:$0xff]
      %v6484 = vld [vmem:[%s6472 + $0x58] sm:$0xff]
      %v6485 = vld [vmem:[%s6472 + $0x60] sm:$0xff]
      %v6486 = vld [vmem:[%s6472 + $0x68] sm:$0xff]
      %v6487 = vld [vmem:[%s6472 + $0x70] sm:$0xff]
      %v6488 = vld [vmem:[%s6472 + $0x78] sm:$0xff]
      %v6489 = vld [vmem:[%s19 + $0x3] sm:$0x1]
      %s6490 = scalar_lea.vmem %s20, 48
      %v6491 = vld [vmem:[%s6490] sm:$0xff]
      %v6492 = vld [vmem:[%s6490 + $0x8] sm:$0xff]
      %v6493 = vperm.slane %v6491, 0
      %v6494 = vmul.f32 %v5286, %v6493
      %v6495 = vmul.f32 %v5287, %v6493
      %v6496 = vmul.f32 %v5288, %v6493
      %v6497 = vmul.f32 %v5289, %v6493
      %v6498 = vmul.f32 %v5290, %v6493
      %v6499 = vmul.f32 %v5291, %v6493
      %v6500 = vmul.f32 %v5292, %v6493
      %v6501 = vmul.f32 %v5293, %v6493
      %v6502 = vperm.slane %v6491, 1
      %v6503 = vadd.f32 %v6494, %v6502
      %v6504 = vadd.f32 %v6495, %v6502
      %v6505 = vadd.f32 %v6496, %v6502
      %v6506 = vadd.f32 %v6497, %v6502
      %v6507 = vadd.f32 %v6498, %v6502
      %v6508 = vadd.f32 %v6499, %v6502
      %v6509 = vadd.f32 %v6500, %v6502
      %v6510 = vadd.f32 %v6501, %v6502
      %v6511 = vperm.slane %v6491, 2
      %v6512 = vmul.f32 %v5092, %v6511
      %v6513 = vmul.f32 %v5093, %v6511
      %v6514 = vmul.f32 %v5094, %v6511
      %v6515 = vmul.f32 %v5095, %v6511
      %v6516 = vmul.f32 %v5096, %v6511
      %v6517 = vmul.f32 %v5097, %v6511
      %v6518 = vmul.f32 %v5098, %v6511
      %v6519 = vmul.f32 %v5099, %v6511
      %v6520 = vperm.slane %v6491, 3
      %v6521 = vadd.f32 %v6512, %v6520
      %v6522 = vadd.f32 %v6513, %v6520
      %v6523 = vadd.f32 %v6514, %v6520
      %v6524 = vadd.f32 %v6515, %v6520
      %v6525 = vadd.f32 %v6516, %v6520
      %v6526 = vadd.f32 %v6517, %v6520
      %v6527 = vadd.f32 %v6518, %v6520
      %v6528 = vadd.f32 %v6519, %v6520
      %v6529 = vadd.f32 %v6503, %v1960
      %v6530 = vadd.f32 %v6504, %v1963
      %v6531 = vadd.f32 %v6505, %v1966
      %v6532 = vadd.f32 %v6506, %v1969
      %v6533 = vadd.f32 %v6507, %v1972
      %v6534 = vadd.f32 %v6508, %v1975
      %v6535 = vadd.f32 %v6509, %v1978
      %v6536 = vadd.f32 %v6510, %v1981
      %v6537 = vperm.slane %v6491, 4
      %v6539 = vsel %vm913, %v6529, 0
      %v6542 = vsel %vm913, %v6530, 0
      %v6545 = vsel %vm913, %v6531, 0
      %v6548 = vsel %vm913, %v6532, 0
      %v6551 = vsel %vm913, %v6533, 0
      %v6554 = vsel %vm913, %v6534, 0
      %v6557 = vsel %vm913, %v6535, 0
      %v6560 = vsel %vm913, %v6536, 0
      %6562 = vmatpush.msra.mxu0 0.0
      %6563 = vmatpush.msra.mxu0 0.0
      %6564 = vmatpush.msra.mxu0 0.0
      %6565 = vmatpush.msra.mxu0 0.0
      %6566 = vmatpush.msra.mxu0 0.0
      %6567 = vmatpush.msra.mxu0 0.0
      %6568 = vmatpush.msra.mxu0 0.0
      %6569 = vmatpush.msra.mxu0 0.0
      %6570 = vmatpush.msra.mxu0 0.0
      %6571 = vmatpush.msra.mxu0 0.0
      %6572 = vmatpush.msra.mxu0 0.0
      %6573 = vmatpush.msra.mxu0 0.0
      %6574 = vmatpush.msra.mxu0 %v6451
      %6575 = vmatpush.msra.mxu0 %v6450
      %6576 = vmatpush.msra.mxu0 %v6449
      %6577 = vmatpush.msra.mxu0 %v6448
      %6578 = vmatmul.f32.gmra.mxu0 %v6539
      %v6579 = vpop.f32.mrf.mxu0
      %v6580 = vadd.f32 %v6537, %v6579
      %6581 = vmatmul.f32.gmra.mxu0 %v6542
      %v6582 = vpop.f32.mrf.mxu0
      %v6583 = vadd.f32 %v6537, %v6582
      %6584 = vmatmul.f32.gmra.mxu0 %v6545
      %v6585 = vpop.f32.mrf.mxu0
      %v6586 = vadd.f32 %v6537, %v6585
      %6587 = vmatmul.f32.gmra.mxu0 %v6548
      %v6588 = vpop.f32.mrf.mxu0
      %v6589 = vadd.f32 %v6537, %v6588
      %6590 = vmatmul.f32.gmra.mxu0 %v6551
      %v6591 = vpop.f32.mrf.mxu0
      %v6592 = vadd.f32 %v6537, %v6591
      %6593 = vmatmul.f32.gmra.mxu0 %v6554
      %v6594 = vpop.f32.mrf.mxu0
      %v6595 = vadd.f32 %v6537, %v6594
      %6596 = vmatmul.f32.gmra.mxu0 %v6557
      %v6597 = vpop.f32.mrf.mxu0
      %v6598 = vadd.f32 %v6537, %v6597
      %6599 = vmatmul.f32.gmra.mxu0 %v6560
      %v6600 = vpop.f32.mrf.mxu0
      %v6601 = vadd.f32 %v6537, %v6600
      %6602 = vdwg.mxu0
      %v6603 = vadd.f32 %v6521, %v1936
      %v6604 = vadd.f32 %v6522, %v1939
      %v6605 = vadd.f32 %v6523, %v1942
      %v6606 = vadd.f32 %v6524, %v1945
      %v6607 = vadd.f32 %v6525, %v1948
      %v6608 = vadd.f32 %v6526, %v1951
      %v6609 = vadd.f32 %v6527, %v1954
      %v6610 = vadd.f32 %v6528, %v1957
      %v6612 = vsel %vm913, %v6453, 0
      %v6615 = vsel %vm913, %v6454, 0
      %v6618 = vsel %vm913, %v6455, 0
      %v6621 = vsel %vm913, %v6456, 0
      %v6624 = vsel %vm913, %v6603, 0
      %v6627 = vsel %vm913, %v6604, 0
      %v6630 = vsel %vm913, %v6605, 0
      %v6633 = vsel %vm913, %v6606, 0
      %v6636 = vsel %vm913, %v6607, 0
      %v6639 = vsel %vm913, %v6608, 0
      %v6642 = vsel %vm913, %v6609, 0
      %v6645 = vsel %vm913, %v6610, 0
      %6647 = vmatpush.xpose.msra.mxu0 0.0
      %6648 = vmatpush.xpose.msra.mxu0 0.0
      %6649 = vmatpush.xpose.msra.mxu0 0.0
      %6650 = vmatpush.xpose.msra.mxu0 0.0
      %6651 = vmatpush.xpose.msra.mxu0 0.0
      %6652 = vmatpush.xpose.msra.mxu0 0.0
      %6653 = vmatpush.xpose.msra.mxu0 0.0
      %6654 = vmatpush.xpose.msra.mxu0 0.0
      %6655 = vmatpush.xpose.msra.mxu0 %v6645
      %6656 = vmatpush.xpose.msra.mxu0 %v6642
      %6657 = vmatpush.xpose.msra.mxu0 %v6639
      %6658 = vmatpush.xpose.msra.mxu0 %v6636
      %6659 = vmatpush.xpose.msra.mxu0 %v6633
      %6660 = vmatpush.xpose.msra.mxu0 %v6630
      %6661 = vmatpush.xpose.msra.mxu0 %v6627
      %6662 = vmatpush.xpose.msra.mxu0 %v6624
      %6663 = vmatmul.f32.gmra.mxu0 %v6612
      %v6664 = vpop.f32.mrf.mxu0
      %v6665 = vadd.f32 0.0, %v6664
      %6666 = vmatmul.f32.gmra.mxu0 %v6615
      %v6667 = vpop.f32.mrf.mxu0
      %v6668 = vadd.f32 0.0, %v6667
      %6669 = vmatmul.f32.gmra.mxu0 %v6618
      %v6670 = vpop.f32.mrf.mxu0
      %v6671 = vadd.f32 0.0, %v6670
      %6672 = vmatmul.f32.gmra.mxu0 %v6621
      %v6673 = vpop.f32.mrf.mxu0
      %v6674 = vadd.f32 0.0, %v6673
      %6675 = vdwg.mxu0
      %v6676 = vperm.slane %v6491, 6
      %v6678 = vsel %vm913, %v6521, 0
      %v6681 = vsel %vm913, %v6522, 0
      %v6684 = vsel %vm913, %v6523, 0
      %v6687 = vsel %vm913, %v6524, 0
      %v6690 = vsel %vm913, %v6525, 0
      %v6693 = vsel %vm913, %v6526, 0
      %v6696 = vsel %vm913, %v6527, 0
      %v6699 = vsel %vm913, %v6528, 0
      %6701 = vmatpush.msra.mxu0 0.0
      %6702 = vmatpush.msra.mxu0 0.0
      %6703 = vmatpush.msra.mxu0 0.0
      %6704 = vmatpush.msra.mxu0 0.0
      %6705 = vmatpush.msra.mxu0 0.0
      %6706 = vmatpush.msra.mxu0 0.0
      %6707 = vmatpush.msra.mxu0 0.0
      %6708 = vmatpush.msra.mxu0 0.0
      %6709 = vmatpush.msra.mxu0 0.0
      %6710 = vmatpush.msra.mxu0 0.0
      %6711 = vmatpush.msra.mxu0 0.0
      %6712 = vmatpush.msra.mxu0 0.0
      %6713 = vmatpush.msra.mxu0 %v6461
      %6714 = vmatpush.msra.mxu0 %v6460
      %6715 = vmatpush.msra.mxu0 %v6459
      %6716 = vmatpush.msra.mxu0 %v6458
      %6717 = vmatmul.f32.gmra.mxu0 %v6678
      %v6718 = vpop.f32.mrf.mxu0
      %v6719 = vadd.f32 %v6676, %v6718
      %6720 = vmatmul.f32.gmra.mxu0 %v6681
      %v6721 = vpop.f32.mrf.mxu0
      %v6722 = vadd.f32 %v6676, %v6721
      %6723 = vmatmul.f32.gmra.mxu0 %v6684
      %v6724 = vpop.f32.mrf.mxu0
      %v6725 = vadd.f32 %v6676, %v6724
      %6726 = vmatmul.f32.gmra.mxu0 %v6687
      %v6727 = vpop.f32.mrf.mxu0
      %v6728 = vadd.f32 %v6676, %v6727
      %6729 = vmatmul.f32.gmra.mxu0 %v6690
      %v6730 = vpop.f32.mrf.mxu0
      %v6731 = vadd.f32 %v6676, %v6730
      %6732 = vmatmul.f32.gmra.mxu0 %v6693
      %v6733 = vpop.f32.mrf.mxu0
      %v6734 = vadd.f32 %v6676, %v6733
      %6735 = vmatmul.f32.gmra.mxu0 %v6696
      %v6736 = vpop.f32.mrf.mxu0
      %v6737 = vadd.f32 %v6676, %v6736
      %6738 = vmatmul.f32.gmra.mxu0 %v6699
      %v6739 = vpop.f32.mrf.mxu0
      %v6740 = vadd.f32 %v6676, %v6739
      %6741 = vdwg.mxu0
      %6746 = vrot.lane.b32.xlu0 %v6665, 64
      %v6747 = vpop.permute.xlu0 %6746
      %6748 = vrot.lane.b32.xlu0 %v6668, 64
      %v6749 = vpop.permute.xlu0 %6748
      %6750 = vrot.lane.b32.xlu0 %v6671, 64
      %v6751 = vpop.permute.xlu0 %6750
      %6752 = vrot.lane.b32.xlu0 %v6674, 64
      %v6753 = vpop.permute.xlu0 %6752
      %v6758 = vsel %vm2754, %v6665, %v6747
      %v6759 = vsel %vm2754, %v6668, %v6749
      %v6760 = vsel %vm2754, %v6671, %v6751
      %v6761 = vsel %vm2754, %v6674, %v6753
      %v6762 = vmul.f32 %v6758, %v2087
      %v6763 = vmul.f32 %v6758, %v2088
      %v6764 = vmul.f32 %v6759, %v2089
      %v6765 = vmul.f32 %v6759, %v2090
      %v6766 = vmul.f32 %v6760, %v2091
      %v6767 = vmul.f32 %v6760, %v2092
      %v6768 = vmul.f32 %v6761, %v2093
      %v6769 = vmul.f32 %v6761, %v2094
      %v6770 = vmul.f32 %v6719, %v2055
      %v6771 = vmul.f32 %v6722, %v2056
      %v6772 = vmul.f32 %v6725, %v2057
      %v6773 = vmul.f32 %v6728, %v2058
      %v6774 = vmul.f32 %v6731, %v2059
      %v6775 = vmul.f32 %v6734, %v2060
      %v6776 = vmul.f32 %v6737, %v2061
      %v6777 = vmul.f32 %v6740, %v2062
      %v6778 = vmul.f32 %v6719, %v2063
      %v6779 = vmul.f32 %v6722, %v2064
      %v6780 = vmul.f32 %v6725, %v2065
      %v6781 = vmul.f32 %v6728, %v2066
      %v6782 = vmul.f32 %v6731, %v2067
      %v6783 = vmul.f32 %v6734, %v2068
      %v6784 = vmul.f32 %v6737, %v2069
      %v6785 = vmul.f32 %v6740, %v2070
      %v6786 = vmul.f32 %v6719, %v2071
      %v6787 = vmul.f32 %v6722, %v2072
      %v6788 = vmul.f32 %v6725, %v2073
      %v6789 = vmul.f32 %v6728, %v2074
      %v6790 = vmul.f32 %v6731, %v2075
      %v6791 = vmul.f32 %v6734, %v2076
      %v6792 = vmul.f32 %v6737, %v2077
      %v6793 = vmul.f32 %v6740, %v2078
      %v6794 = vmul.f32 %v6719, %v2079
      %v6795 = vmul.f32 %v6722, %v2080
      %v6796 = vmul.f32 %v6725, %v2081
      %v6797 = vmul.f32 %v6728, %v2082
      %v6798 = vmul.f32 %v6731, %v2083
      %v6799 = vmul.f32 %v6734, %v2084
      %v6800 = vmul.f32 %v6737, %v2085
      %v6801 = vmul.f32 %v6740, %v2086
      %v6803 = vsel %vm913, %v6580, 0
      %v6806 = vsel %vm913, %v6583, 0
      %v6809 = vsel %vm913, %v6586, 0
      %v6812 = vsel %vm913, %v6589, 0
      %v6815 = vsel %vm913, %v6592, 0
      %v6818 = vsel %vm913, %v6595, 0
      %v6821 = vsel %vm913, %v6598, 0
      %v6824 = vsel %vm913, %v6601, 0
      %6826 = vmatpush.msra.mxu0 0.0
      %6827 = vmatpush.msra.mxu0 0.0
      %6828 = vmatpush.msra.mxu0 0.0
      %6829 = vmatpush.msra.mxu0 0.0
      %6830 = vmatpush.msra.mxu0 0.0
      %6831 = vmatpush.msra.mxu0 0.0
      %6832 = vmatpush.msra.mxu0 0.0
      %6833 = vmatpush.msra.mxu0 0.0
      %6834 = vmatpush.msra.mxu0 0.0
      %6835 = vmatpush.msra.mxu0 0.0
      %6836 = vmatpush.msra.mxu0 0.0
      %6837 = vmatpush.msra.mxu0 0.0
      %6838 = vmatpush.msra.mxu0 %v6768
      %6839 = vmatpush.msra.mxu0 %v6766
      %6840 = vmatpush.msra.mxu0 %v6764
      %6841 = vmatpush.msra.mxu0 %v6762
      %6842 = vmatmul.f32.gmra.mxu0 %v6803
      %v6843 = vpop.f32.mrf.mxu0
      %v6844 = vadd.f32 0.0, %v6843
      %6845 = vmatmul.f32.gmra.mxu0 %v6806
      %v6846 = vpop.f32.mrf.mxu0
      %v6847 = vadd.f32 0.0, %v6846
      %6848 = vmatmul.f32.gmra.mxu0 %v6809
      %v6849 = vpop.f32.mrf.mxu0
      %v6850 = vadd.f32 0.0, %v6849
      %6851 = vmatmul.f32.gmra.mxu0 %v6812
      %v6852 = vpop.f32.mrf.mxu0
      %v6853 = vadd.f32 0.0, %v6852
      %6854 = vmatmul.f32.gmra.mxu0 %v6815
      %v6855 = vpop.f32.mrf.mxu0
      %v6856 = vadd.f32 0.0, %v6855
      %6857 = vmatmul.f32.gmra.mxu0 %v6818
      %v6858 = vpop.f32.mrf.mxu0
      %v6859 = vadd.f32 0.0, %v6858
      %6860 = vmatmul.f32.gmra.mxu0 %v6821
      %v6861 = vpop.f32.mrf.mxu0
      %v6862 = vadd.f32 0.0, %v6861
      %6863 = vmatmul.f32.gmra.mxu0 %v6824
      %v6864 = vpop.f32.mrf.mxu0
      %v6865 = vadd.f32 0.0, %v6864
      %6866 = vdwg.mxu0
      %6867 = vmatpush.msra.mxu0 0.0
      %6868 = vmatpush.msra.mxu0 0.0
      %6869 = vmatpush.msra.mxu0 0.0
      %6870 = vmatpush.msra.mxu0 0.0
      %6871 = vmatpush.msra.mxu0 0.0
      %6872 = vmatpush.msra.mxu0 0.0
      %6873 = vmatpush.msra.mxu0 0.0
      %6874 = vmatpush.msra.mxu0 0.0
      %6875 = vmatpush.msra.mxu0 0.0
      %6876 = vmatpush.msra.mxu0 0.0
      %6877 = vmatpush.msra.mxu0 0.0
      %6878 = vmatpush.msra.mxu0 0.0
      %6879 = vmatpush.msra.mxu0 %v6769
      %6880 = vmatpush.msra.mxu0 %v6767
      %6881 = vmatpush.msra.mxu0 %v6765
      %6882 = vmatpush.msra.mxu0 %v6763
      %6883 = vmatmul.f32.gmra.mxu0 %v6803
      %v6884 = vpop.f32.mrf.mxu0
      %v6885 = vadd.f32 0.0, %v6884
      %6886 = vmatmul.f32.gmra.mxu0 %v6806
      %v6887 = vpop.f32.mrf.mxu0
      %v6888 = vadd.f32 0.0, %v6887
      %6889 = vmatmul.f32.gmra.mxu0 %v6809
      %v6890 = vpop.f32.mrf.mxu0
      %v6891 = vadd.f32 0.0, %v6890
      %6892 = vmatmul.f32.gmra.mxu0 %v6812
      %v6893 = vpop.f32.mrf.mxu0
      %v6894 = vadd.f32 0.0, %v6893
      %6895 = vmatmul.f32.gmra.mxu0 %v6815
      %v6896 = vpop.f32.mrf.mxu0
      %v6897 = vadd.f32 0.0, %v6896
      %6898 = vmatmul.f32.gmra.mxu0 %v6818
      %v6899 = vpop.f32.mrf.mxu0
      %v6900 = vadd.f32 0.0, %v6899
      %6901 = vmatmul.f32.gmra.mxu0 %v6821
      %v6902 = vpop.f32.mrf.mxu0
      %v6903 = vadd.f32 0.0, %v6902
      %6904 = vmatmul.f32.gmra.mxu0 %v6824
      %v6905 = vpop.f32.mrf.mxu0
      %v6906 = vadd.f32 0.0, %v6905
      %6907 = vdwg.mxu0
      %v6908 = vmul.f32 %v6844, 0.35355338
      %v6909 = vmul.f32 %v6885, 0.35355338
      %v6910 = vmul.f32 %v6847, 0.35355338
      %v6911 = vmul.f32 %v6888, 0.35355338
      %v6912 = vmul.f32 %v6850, 0.35355338
      %v6913 = vmul.f32 %v6891, 0.35355338
      %v6914 = vmul.f32 %v6853, 0.35355338
      %v6915 = vmul.f32 %v6894, 0.35355338
      %v6916 = vmul.f32 %v6856, 0.35355338
      %v6917 = vmul.f32 %v6897, 0.35355338
      %v6918 = vmul.f32 %v6859, 0.35355338
      %v6919 = vmul.f32 %v6900, 0.35355338
      %v6920 = vmul.f32 %v6862, 0.35355338
      %v6921 = vmul.f32 %v6903, 0.35355338
      %v6922 = vmul.f32 %v6865, 0.35355338
      %v6923 = vmul.f32 %v6906, 0.35355338
      %v6924 = vadd.f32 %v6908, %v1999
      %v6925 = vadd.f32 %v6909, %v2000
      %v6926 = vadd.f32 %v6910, %v2001
      %v6927 = vadd.f32 %v6911, %v2002
      %v6928 = vadd.f32 %v6912, %v2003
      %v6929 = vadd.f32 %v6913, %v2004
      %v6930 = vadd.f32 %v6914, %v2005
      %v6931 = vadd.f32 %v6915, %v2006
      %v6932 = vadd.f32 %v6916, %v2007
      %v6933 = vadd.f32 %v6917, %v2008
      %v6934 = vadd.f32 %v6918, %v2009
      %v6935 = vadd.f32 %v6919, %v2010
      %v6936 = vadd.f32 %v6920, %v2011
      %v6937 = vadd.f32 %v6921, %v2012
      %v6938 = vadd.f32 %v6922, %v2013
      %v6939 = vadd.f32 %v6923, %v2014
      %v6940 = vmax.f32 %v6924, %v6925
      %6941 = vmax.xlane.f32.xlu0 %v6940
      %v6942 = vpop.xlane.xlu0 %6941
      %v6943 = vmax.f32 %v6926, %v6927
      %6944 = vmax.xlane.f32.xlu0 %v6943
      %v6945 = vpop.xlane.xlu0 %6944
      %v6946 = vmax.f32 %v6928, %v6929
      %6947 = vmax.xlane.f32.xlu0 %v6946
      %v6948 = vpop.xlane.xlu0 %6947
      %v6949 = vmax.f32 %v6930, %v6931
      %6950 = vmax.xlane.f32.xlu0 %v6949
      %v6951 = vpop.xlane.xlu0 %6950
      %v6952 = vmax.f32 %v6932, %v6933
      %6953 = vmax.xlane.f32.xlu0 %v6952
      %v6954 = vpop.xlane.xlu0 %6953
      %v6955 = vmax.f32 %v6934, %v6935
      %6956 = vmax.xlane.f32.xlu0 %v6955
      %v6957 = vpop.xlane.xlu0 %6956
      %v6958 = vmax.f32 %v6936, %v6937
      %6959 = vmax.xlane.f32.xlu0 %v6958
      %v6960 = vpop.xlane.xlu0 %6959
      %v6961 = vmax.f32 %v6938, %v6939
      %6962 = vmax.xlane.f32.xlu0 %v6961
      %v6963 = vpop.xlane.xlu0 %6962
      %v6964 = vsub.f32 %v6924, %v6942
      %v6965 = vsub.f32 %v6925, %v6942
      %v6966 = vsub.f32 %v6926, %v6945
      %v6967 = vsub.f32 %v6927, %v6945
      %v6968 = vsub.f32 %v6928, %v6948
      %v6969 = vsub.f32 %v6929, %v6948
      %v6970 = vsub.f32 %v6930, %v6951
      %v6971 = vsub.f32 %v6931, %v6951
      %v6972 = vsub.f32 %v6932, %v6954
      %v6973 = vsub.f32 %v6933, %v6954
      %v6974 = vsub.f32 %v6934, %v6957
      %v6975 = vsub.f32 %v6935, %v6957
      %v6976 = vsub.f32 %v6936, %v6960
      %v6977 = vsub.f32 %v6937, %v6960
      %v6978 = vsub.f32 %v6938, %v6963
      %v6979 = vsub.f32 %v6939, %v6963
      %v6980 = vmul.f32 %v6964, 1.442695
      %v6981 = vpow.pop %v6980
      %v6982 = vmul.f32 %v6965, 1.442695
      %v6983 = vpow.pop %v6982
      %v6984 = vmul.f32 %v6966, 1.442695
      %v6985 = vpow.pop %v6984
      %v6986 = vmul.f32 %v6967, 1.442695
      %v6987 = vpow.pop %v6986
      %v6988 = vmul.f32 %v6968, 1.442695
      %v6989 = vpow.pop %v6988
      %v6990 = vmul.f32 %v6969, 1.442695
      %v6991 = vpow.pop %v6990
      %v6992 = vmul.f32 %v6970, 1.442695
      %v6993 = vpow.pop %v6992
      %v6994 = vmul.f32 %v6971, 1.442695
      %v6995 = vpow.pop %v6994
      %v6996 = vmul.f32 %v6972, 1.442695
      %v6997 = vpow.pop %v6996
      %v6998 = vmul.f32 %v6973, 1.442695
      %v6999 = vpow.pop %v6998
      %v7000 = vmul.f32 %v6974, 1.442695
      %v7001 = vpow.pop %v7000
      %v7002 = vmul.f32 %v6975, 1.442695
      %v7003 = vpow.pop %v7002
      %v7004 = vmul.f32 %v6976, 1.442695
      %v7005 = vpow.pop %v7004
      %v7006 = vmul.f32 %v6977, 1.442695
      %v7007 = vpow.pop %v7006
      %v7008 = vmul.f32 %v6978, 1.442695
      %v7009 = vpow.pop %v7008
      %v7010 = vmul.f32 %v6979, 1.442695
      %v7011 = vpow.pop %v7010
      %7012 = vmatpush.msra.mxu0 %v2070
      %7013 = vmatpush.msra.mxu0 %v2069
      %7014 = vmatpush.msra.mxu0 %v2068
      %7015 = vmatpush.msra.mxu0 %v2067
      %7016 = vmatpush.msra.mxu0 %v2066
      %7017 = vmatpush.msra.mxu0 %v2065
      %7018 = vmatpush.msra.mxu0 %v2064
      %7019 = vmatpush.msra.mxu0 %v2063
      %7020 = vmatpush.msra.mxu0 %v2062
      %7021 = vmatpush.msra.mxu0 %v2061
      %7022 = vmatpush.msra.mxu0 %v2060
      %7023 = vmatpush.msra.mxu0 %v2059
      %7024 = vmatpush.msra.mxu0 %v2058
      %7025 = vmatpush.msra.mxu0 %v2057
      %7026 = vmatpush.msra.mxu0 %v2056
      %7027 = vmatpush.msra.mxu0 %v2055
      %7028 = vmatmul.f32.gmra.mxu0 %v6981
      %v7029 = vpop.f32.mrf.mxu0
      %v7030 = vadd.f32 0.0, %v7029
      %7031 = vmatmul.f32.gmra.mxu0 %v6985
      %v7032 = vpop.f32.mrf.mxu0
      %v7033 = vadd.f32 0.0, %v7032
      %7034 = vmatmul.f32.gmra.mxu0 %v6989
      %v7035 = vpop.f32.mrf.mxu0
      %v7036 = vadd.f32 0.0, %v7035
      %7037 = vmatmul.f32.gmra.mxu0 %v6993
      %v7038 = vpop.f32.mrf.mxu0
      %v7039 = vadd.f32 0.0, %v7038
      %7040 = vmatmul.f32.gmra.mxu0 %v6997
      %v7041 = vpop.f32.mrf.mxu0
      %v7042 = vadd.f32 0.0, %v7041
      %7043 = vmatmul.f32.gmra.mxu0 %v7001
      %v7044 = vpop.f32.mrf.mxu0
      %v7045 = vadd.f32 0.0, %v7044
      %7046 = vmatmul.f32.gmra.mxu0 %v7005
      %v7047 = vpop.f32.mrf.mxu0
      %v7048 = vadd.f32 0.0, %v7047
      %7049 = vmatmul.f32.gmra.mxu0 %v7009
      %v7050 = vpop.f32.mrf.mxu0
      %v7051 = vadd.f32 0.0, %v7050
      %7052 = vdwg.mxu0
      %7053 = vmatpush.msra.mxu0 %v2086
      %7054 = vmatpush.msra.mxu0 %v2085
      %7055 = vmatpush.msra.mxu0 %v2084
      %7056 = vmatpush.msra.mxu0 %v2083
      %7057 = vmatpush.msra.mxu0 %v2082
      %7058 = vmatpush.msra.mxu0 %v2081
      %7059 = vmatpush.msra.mxu0 %v2080
      %7060 = vmatpush.msra.mxu0 %v2079
      %7061 = vmatpush.msra.mxu0 %v2078
      %7062 = vmatpush.msra.mxu0 %v2077
      %7063 = vmatpush.msra.mxu0 %v2076
      %7064 = vmatpush.msra.mxu0 %v2075
      %7065 = vmatpush.msra.mxu0 %v2074
      %7066 = vmatpush.msra.mxu0 %v2073
      %7067 = vmatpush.msra.mxu0 %v2072
      %7068 = vmatpush.msra.mxu0 %v2071
      %7069 = vmatmul.f32.gmra.mxu0 %v6983
      %v7070 = vpop.f32.mrf.mxu0
      %v7071 = vadd.f32 %v7030, %v7070
      %7072 = vmatmul.f32.gmra.mxu0 %v6987
      %v7073 = vpop.f32.mrf.mxu0
      %v7074 = vadd.f32 %v7033, %v7073
      %7075 = vmatmul.f32.gmra.mxu0 %v6991
      %v7076 = vpop.f32.mrf.mxu0
      %v7077 = vadd.f32 %v7036, %v7076
      %7078 = vmatmul.f32.gmra.mxu0 %v6995
      %v7079 = vpop.f32.mrf.mxu0
      %v7080 = vadd.f32 %v7039, %v7079
      %7081 = vmatmul.f32.gmra.mxu0 %v6999
      %v7082 = vpop.f32.mrf.mxu0
      %v7083 = vadd.f32 %v7042, %v7082
      %7084 = vmatmul.f32.gmra.mxu0 %v7003
      %v7085 = vpop.f32.mrf.mxu0
      %v7086 = vadd.f32 %v7045, %v7085
      %7087 = vmatmul.f32.gmra.mxu0 %v7007
      %v7088 = vpop.f32.mrf.mxu0
      %v7089 = vadd.f32 %v7048, %v7088
      %7090 = vmatmul.f32.gmra.mxu0 %v7011
      %v7091 = vpop.f32.mrf.mxu0
      %v7092 = vadd.f32 %v7051, %v7091
      %7093 = vdwg.mxu0
      %7094 = vmatpush.msra.mxu0 %v6785
      %7095 = vmatpush.msra.mxu0 %v6784
      %7096 = vmatpush.msra.mxu0 %v6783
      %7097 = vmatpush.msra.mxu0 %v6782
      %7098 = vmatpush.msra.mxu0 %v6781
      %7099 = vmatpush.msra.mxu0 %v6780
      %7100 = vmatpush.msra.mxu0 %v6779
      %7101 = vmatpush.msra.mxu0 %v6778
      %7102 = vmatpush.msra.mxu0 %v6777
      %7103 = vmatpush.msra.mxu0 %v6776
      %7104 = vmatpush.msra.mxu0 %v6775
      %7105 = vmatpush.msra.mxu0 %v6774
      %7106 = vmatpush.msra.mxu0 %v6773
      %7107 = vmatpush.msra.mxu0 %v6772
      %7108 = vmatpush.msra.mxu0 %v6771
      %7109 = vmatpush.msra.mxu0 %v6770
      %7110 = vmatmul.f32.gmra.mxu0 %v6981
      %v7111 = vpop.f32.mrf.mxu0
      %v7112 = vadd.f32 0.0, %v7111
      %7113 = vmatmul.f32.gmra.mxu0 %v6985
      %v7114 = vpop.f32.mrf.mxu0
      %v7115 = vadd.f32 0.0, %v7114
      %7116 = vmatmul.f32.gmra.mxu0 %v6989
      %v7117 = vpop.f32.mrf.mxu0
      %v7118 = vadd.f32 0.0, %v7117
      %7119 = vmatmul.f32.gmra.mxu0 %v6993
      %v7120 = vpop.f32.mrf.mxu0
      %v7121 = vadd.f32 0.0, %v7120
      %7122 = vmatmul.f32.gmra.mxu0 %v6997
      %v7123 = vpop.f32.mrf.mxu0
      %v7124 = vadd.f32 0.0, %v7123
      %7125 = vmatmul.f32.gmra.mxu0 %v7001
      %v7126 = vpop.f32.mrf.mxu0
      %v7127 = vadd.f32 0.0, %v7126
      %7128 = vmatmul.f32.gmra.mxu0 %v7005
      %v7129 = vpop.f32.mrf.mxu0
      %v7130 = vadd.f32 0.0, %v7129
      %7131 = vmatmul.f32.gmra.mxu0 %v7009
      %v7132 = vpop.f32.mrf.mxu0
      %v7133 = vadd.f32 0.0, %v7132
      %7134 = vdwg.mxu0
      %7135 = vmatpush.msra.mxu0 %v6801
      %7136 = vmatpush.msra.mxu0 %v6800
      %7137 = vmatpush.msra.mxu0 %v6799
      %7138 = vmatpush.msra.mxu0 %v6798
      %7139 = vmatpush.msra.mxu0 %v6797
      %7140 = vmatpush.msra.mxu0 %v6796
      %7141 = vmatpush.msra.mxu0 %v6795
      %7142 = vmatpush.msra.mxu0 %v6794
      %7143 = vmatpush.msra.mxu0 %v6793
      %7144 = vmatpush.msra.mxu0 %v6792
      %7145 = vmatpush.msra.mxu0 %v6791
      %7146 = vmatpush.msra.mxu0 %v6790
      %7147 = vmatpush.msra.mxu0 %v6789
      %7148 = vmatpush.msra.mxu0 %v6788
      %7149 = vmatpush.msra.mxu0 %v6787
      %7150 = vmatpush.msra.mxu0 %v6786
      %7151 = vmatmul.f32.gmra.mxu0 %v6983
      %v7152 = vpop.f32.mrf.mxu0
      %v7153 = vadd.f32 %v7112, %v7152
      %7154 = vmatmul.f32.gmra.mxu0 %v6987
      %v7155 = vpop.f32.mrf.mxu0
      %v7156 = vadd.f32 %v7115, %v7155
      %7157 = vmatmul.f32.gmra.mxu0 %v6991
      %v7158 = vpop.f32.mrf.mxu0
      %v7159 = vadd.f32 %v7118, %v7158
      %7160 = vmatmul.f32.gmra.mxu0 %v6995
      %v7161 = vpop.f32.mrf.mxu0
      %v7162 = vadd.f32 %v7121, %v7161
      %7163 = vmatmul.f32.gmra.mxu0 %v6999
      %v7164 = vpop.f32.mrf.mxu0
      %v7165 = vadd.f32 %v7124, %v7164
      %7166 = vmatmul.f32.gmra.mxu0 %v7003
      %v7167 = vpop.f32.mrf.mxu0
      %v7168 = vadd.f32 %v7127, %v7167
      %7169 = vmatmul.f32.gmra.mxu0 %v7007
      %v7170 = vpop.f32.mrf.mxu0
      %v7171 = vadd.f32 %v7130, %v7170
      %7172 = vmatmul.f32.gmra.mxu0 %v7011
      %v7173 = vpop.f32.mrf.mxu0
      %v7174 = vadd.f32 %v7133, %v7173
      %7175 = vdwg.mxu0
      %v7176 = vrcp.pop %v7071
      %v7177 = vrcp.pop %v7074
      %v7178 = vrcp.pop %v7077
      %v7179 = vrcp.pop %v7080
      %v7180 = vrcp.pop %v7083
      %v7181 = vrcp.pop %v7086
      %v7182 = vrcp.pop %v7089
      %v7183 = vrcp.pop %v7092
      %v7184 = vmul.f32 %v7153, %v7176
      %v7185 = vmul.f32 %v7156, %v7177
      %v7186 = vmul.f32 %v7159, %v7178
      %v7187 = vmul.f32 %v7162, %v7179
      %v7188 = vmul.f32 %v7165, %v7180
      %v7189 = vmul.f32 %v7168, %v7181
      %v7190 = vmul.f32 %v7171, %v7182
      %v7191 = vmul.f32 %v7174, %v7183
      %v7193 = vsel %vm913, %v7184, 0
      %v7196 = vsel %vm913, %v7185, 0
      %v7199 = vsel %vm913, %v7186, 0
      %v7202 = vsel %vm913, %v7187, 0
      %v7205 = vsel %vm913, %v7188, 0
      %v7208 = vsel %vm913, %v7189, 0
      %v7211 = vsel %vm913, %v7190, 0
      %v7214 = vsel %vm913, %v7191, 0
      %7216 = vmatpush.msra.mxu0 0.0
      %7217 = vmatpush.msra.mxu0 0.0
      %7218 = vmatpush.msra.mxu0 0.0
      %7219 = vmatpush.msra.mxu0 0.0
      %7220 = vmatpush.msra.mxu0 0.0
      %7221 = vmatpush.msra.mxu0 0.0
      %7222 = vmatpush.msra.mxu0 0.0
      %7223 = vmatpush.msra.mxu0 0.0
      %7224 = vmatpush.msra.mxu0 0.0
      %7225 = vmatpush.msra.mxu0 0.0
      %7226 = vmatpush.msra.mxu0 0.0
      %7227 = vmatpush.msra.mxu0 0.0
      %7228 = vmatpush.msra.mxu0 %v6466
      %7229 = vmatpush.msra.mxu0 %v6465
      %7230 = vmatpush.msra.mxu0 %v6464
      %7231 = vmatpush.msra.mxu0 %v6463
      %7232 = vmatmul.f32.gmra.mxu0 %v7193
      %v7233 = vpop.f32.mrf.mxu0
      %v7234 = vadd.f32 0.0, %v7233
      %7235 = vmatmul.f32.gmra.mxu0 %v7196
      %v7236 = vpop.f32.mrf.mxu0
      %v7237 = vadd.f32 0.0, %v7236
      %7238 = vmatmul.f32.gmra.mxu0 %v7199
      %v7239 = vpop.f32.mrf.mxu0
      %v7240 = vadd.f32 0.0, %v7239
      %7241 = vmatmul.f32.gmra.mxu0 %v7202
      %v7242 = vpop.f32.mrf.mxu0
      %v7243 = vadd.f32 0.0, %v7242
      %7244 = vmatmul.f32.gmra.mxu0 %v7205
      %v7245 = vpop.f32.mrf.mxu0
      %v7246 = vadd.f32 0.0, %v7245
      %7247 = vmatmul.f32.gmra.mxu0 %v7208
      %v7248 = vpop.f32.mrf.mxu0
      %v7249 = vadd.f32 0.0, %v7248
      %7250 = vmatmul.f32.gmra.mxu0 %v7211
      %v7251 = vpop.f32.mrf.mxu0
      %v7252 = vadd.f32 0.0, %v7251
      %7253 = vmatmul.f32.gmra.mxu0 %v7214
      %v7254 = vpop.f32.mrf.mxu0
      %v7255 = vadd.f32 0.0, %v7254
      %7256 = vdwg.mxu0
      %v7257 = vadd.f32 %v4870, %v7234
      %v7258 = vadd.f32 %v4871, %v7237
      %v7259 = vadd.f32 %v4872, %v7240
      %v7260 = vadd.f32 %v4873, %v7243
      %v7261 = vadd.f32 %v4874, %v7246
      %v7262 = vadd.f32 %v4875, %v7249
      %v7263 = vadd.f32 %v4876, %v7252
      %v7264 = vadd.f32 %v4877, %v7255
      %v7265 = vperm.slane %v6491, 7
      %v7266 = vadd.f32 %v7257, %v7265
      %v7267 = vadd.f32 %v7258, %v7265
      %v7268 = vadd.f32 %v7259, %v7265
      %v7269 = vadd.f32 %v7260, %v7265
      %v7270 = vadd.f32 %v7261, %v7265
      %v7271 = vadd.f32 %v7262, %v7265
      %v7272 = vadd.f32 %v7263, %v7265
      %v7273 = vadd.f32 %v7264, %v7265
      %v7274 = vsel %vm913, %v7266, 0.0
      %7275 = vadd.xlane.f32.xlu0 %v7274
      %v7276 = vpop.xlane.xlu0 %7275
      %v7277 = vsel %vm913, %v7267, 0.0
      %7278 = vadd.xlane.f32.xlu0 %v7277
      %v7279 = vpop.xlane.xlu0 %7278
      %v7280 = vsel %vm913, %v7268, 0.0
      %7281 = vadd.xlane.f32.xlu0 %v7280
      %v7282 = vpop.xlane.xlu0 %7281
      %v7283 = vsel %vm913, %v7269, 0.0
      %7284 = vadd.xlane.f32.xlu0 %v7283
      %v7285 = vpop.xlane.xlu0 %7284
      %v7286 = vsel %vm913, %v7270, 0.0
      %7287 = vadd.xlane.f32.xlu0 %v7286
      %v7288 = vpop.xlane.xlu0 %7287
      %v7289 = vsel %vm913, %v7271, 0.0
      %7290 = vadd.xlane.f32.xlu0 %v7289
      %v7291 = vpop.xlane.xlu0 %7290
      %v7292 = vsel %vm913, %v7272, 0.0
      %7293 = vadd.xlane.f32.xlu0 %v7292
      %v7294 = vpop.xlane.xlu0 %7293
      %v7295 = vsel %vm913, %v7273, 0.0
      %7296 = vadd.xlane.f32.xlu0 %v7295
      %v7297 = vpop.xlane.xlu0 %7296
      %v7298 = vmul.f32 %v7276, %v968
      %v7299 = vmul.f32 %v7279, %v968
      %v7300 = vmul.f32 %v7282, %v968
      %v7301 = vmul.f32 %v7285, %v968
      %v7302 = vmul.f32 %v7288, %v968
      %v7303 = vmul.f32 %v7291, %v968
      %v7304 = vmul.f32 %v7294, %v968
      %v7305 = vmul.f32 %v7297, %v968
      %v7306 = vsub.f32 %v7266, %v7298
      %v7307 = vsub.f32 %v7267, %v7299
      %v7308 = vsub.f32 %v7268, %v7300
      %v7309 = vsub.f32 %v7269, %v7301
      %v7310 = vsub.f32 %v7270, %v7302
      %v7311 = vsub.f32 %v7271, %v7303
      %v7312 = vsub.f32 %v7272, %v7304
      %v7313 = vsub.f32 %v7273, %v7305
      %v7314 = vmul.f32 %v7306, %v7306
      %v7315 = vmul.f32 %v7307, %v7307
      %v7316 = vmul.f32 %v7308, %v7308
      %v7317 = vmul.f32 %v7309, %v7309
      %v7318 = vmul.f32 %v7310, %v7310
      %v7319 = vmul.f32 %v7311, %v7311
      %v7320 = vmul.f32 %v7312, %v7312
      %v7321 = vmul.f32 %v7313, %v7313
      %v7322 = vsel %vm913, %v7314, 0.0
      %7323 = vadd.xlane.f32.xlu0 %v7322
      %v7324 = vpop.xlane.xlu0 %7323
      %v7325 = vsel %vm913, %v7315, 0.0
      %7326 = vadd.xlane.f32.xlu0 %v7325
      %v7327 = vpop.xlane.xlu0 %7326
      %v7328 = vsel %vm913, %v7316, 0.0
      %7329 = vadd.xlane.f32.xlu0 %v7328
      %v7330 = vpop.xlane.xlu0 %7329
      %v7331 = vsel %vm913, %v7317, 0.0
      %7332 = vadd.xlane.f32.xlu0 %v7331
      %v7333 = vpop.xlane.xlu0 %7332
      %v7334 = vsel %vm913, %v7318, 0.0
      %7335 = vadd.xlane.f32.xlu0 %v7334
      %v7336 = vpop.xlane.xlu0 %7335
      %v7337 = vsel %vm913, %v7319, 0.0
      %7338 = vadd.xlane.f32.xlu0 %v7337
      %v7339 = vpop.xlane.xlu0 %7338
      %v7340 = vsel %vm913, %v7320, 0.0
      %7341 = vadd.xlane.f32.xlu0 %v7340
      %v7342 = vpop.xlane.xlu0 %7341
      %v7343 = vsel %vm913, %v7321, 0.0
      %7344 = vadd.xlane.f32.xlu0 %v7343
      %v7345 = vpop.xlane.xlu0 %7344
      %v7346 = vmul.f32 %v7324, %v968
      %v7347 = vmul.f32 %v7327, %v968
      %v7348 = vmul.f32 %v7330, %v968
      %v7349 = vmul.f32 %v7333, %v968
      %v7350 = vmul.f32 %v7336, %v968
      %v7351 = vmul.f32 %v7339, %v968
      %v7352 = vmul.f32 %v7342, %v968
      %v7353 = vmul.f32 %v7345, %v968
      %v7354 = vadd.f32 %v7346, 1e-06
      %v7355 = vadd.f32 %v7347, 1e-06
      %v7356 = vadd.f32 %v7348, 1e-06
      %v7357 = vadd.f32 %v7349, 1e-06
      %v7358 = vadd.f32 %v7350, 1e-06
      %v7359 = vadd.f32 %v7351, 1e-06
      %v7360 = vadd.f32 %v7352, 1e-06
      %v7361 = vadd.f32 %v7353, 1e-06
      %v7362 = vrsqrt.pop %v7354
      %v7363 = vmul.f32 %v7362, %v7354
      %v7364 = vmul.f32 %v7363, %v7362
      %v7365 = vmul.f32 0.5, %v7364
      %v7366 = vsub.f32 1.5, %v7365
      %v7367 = vmul.f32 %v7362, %v7366
      %vm7368 = vweird.f32 %v7354
      %vm7369 = vweird.f32 %v7362
      %vm7370 = vmor %vm7368, %vm7369
      %v7371 = vsel %vm7370, %v7362, %v7367
      %v7372 = vrsqrt.pop %v7355
      %v7373 = vmul.f32 %v7372, %v7355
      %v7374 = vmul.f32 %v7373, %v7372
      %v7375 = vmul.f32 0.5, %v7374
      %v7376 = vsub.f32 1.5, %v7375
      %v7377 = vmul.f32 %v7372, %v7376
      %vm7378 = vweird.f32 %v7355
      %vm7379 = vweird.f32 %v7372
      %vm7380 = vmor %vm7378, %vm7379
      %v7381 = vsel %vm7380, %v7372, %v7377
      %v7382 = vrsqrt.pop %v7356
      %v7383 = vmul.f32 %v7382, %v7356
      %v7384 = vmul.f32 %v7383, %v7382
      %v7385 = vmul.f32 0.5, %v7384
      %v7386 = vsub.f32 1.5, %v7385
      %v7387 = vmul.f32 %v7382, %v7386
      %vm7388 = vweird.f32 %v7356
      %vm7389 = vweird.f32 %v7382
      %vm7390 = vmor %vm7388, %vm7389
      %v7391 = vsel %vm7390, %v7382, %v7387
      %v7392 = vrsqrt.pop %v7357
      %v7393 = vmul.f32 %v7392, %v7357
      %v7394 = vmul.f32 %v7393, %v7392
      %v7395 = vmul.f32 0.5, %v7394
      %v7396 = vsub.f32 1.5, %v7395
      %v7397 = vmul.f32 %v7392, %v7396
      %vm7398 = vweird.f32 %v7357
      %vm7399 = vweird.f32 %v7392
      %vm7400 = vmor %vm7398, %vm7399
      %v7401 = vsel %vm7400, %v7392, %v7397
      %v7402 = vrsqrt.pop %v7358
      %v7403 = vmul.f32 %v7402, %v7358
      %v7404 = vmul.f32 %v7403, %v7402
      %v7405 = vmul.f32 0.5, %v7404
      %v7406 = vsub.f32 1.5, %v7405
      %v7407 = vmul.f32 %v7402, %v7406
      %vm7408 = vweird.f32 %v7358
      %vm7409 = vweird.f32 %v7402
      %vm7410 = vmor %vm7408, %vm7409
      %v7411 = vsel %vm7410, %v7402, %v7407
      %v7412 = vrsqrt.pop %v7359
      %v7413 = vmul.f32 %v7412, %v7359
      %v7414 = vmul.f32 %v7413, %v7412
      %v7415 = vmul.f32 0.5, %v7414
      %v7416 = vsub.f32 1.5, %v7415
      %v7417 = vmul.f32 %v7412, %v7416
      %vm7418 = vweird.f32 %v7359
      %vm7419 = vweird.f32 %v7412
      %vm7420 = vmor %vm7418, %vm7419
      %v7421 = vsel %vm7420, %v7412, %v7417
      %v7422 = vrsqrt.pop %v7360
      %v7423 = vmul.f32 %v7422, %v7360
      %v7424 = vmul.f32 %v7423, %v7422
      %v7425 = vmul.f32 0.5, %v7424
      %v7426 = vsub.f32 1.5, %v7425
      %v7427 = vmul.f32 %v7422, %v7426
      %vm7428 = vweird.f32 %v7360
      %vm7429 = vweird.f32 %v7422
      %vm7430 = vmor %vm7428, %vm7429
      %v7431 = vsel %vm7430, %v7422, %v7427
      %v7432 = vrsqrt.pop %v7361
      %v7433 = vmul.f32 %v7432, %v7361
      %v7434 = vmul.f32 %v7433, %v7432
      %v7435 = vmul.f32 0.5, %v7434
      %v7436 = vsub.f32 1.5, %v7435
      %v7437 = vmul.f32 %v7432, %v7436
      %vm7438 = vweird.f32 %v7361
      %vm7439 = vweird.f32 %v7432
      %vm7440 = vmor %vm7438, %vm7439
      %v7441 = vsel %vm7440, %v7432, %v7437
      %v7442 = vmul.f32 %v7306, %v7371
      %v7443 = vmul.f32 %v7307, %v7381
      %v7444 = vmul.f32 %v7308, %v7391
      %v7445 = vmul.f32 %v7309, %v7401
      %v7446 = vmul.f32 %v7310, %v7411
      %v7447 = vmul.f32 %v7311, %v7421
      %v7448 = vmul.f32 %v7312, %v7431
      %v7449 = vmul.f32 %v7313, %v7441
      %v7450 = vperm.slane %v6492, 0
      %v7451 = vmul.f32 %v7442, %v7450
      %v7452 = vmul.f32 %v7443, %v7450
      %v7453 = vmul.f32 %v7444, %v7450
      %v7454 = vmul.f32 %v7445, %v7450
      %v7455 = vmul.f32 %v7446, %v7450
      %v7456 = vmul.f32 %v7447, %v7450
      %v7457 = vmul.f32 %v7448, %v7450
      %v7458 = vmul.f32 %v7449, %v7450
      %v7459 = vperm.slane %v6492, 1
      %v7460 = vadd.f32 %v7451, %v7459
      %v7461 = vadd.f32 %v7452, %v7459
      %v7462 = vadd.f32 %v7453, %v7459
      %v7463 = vadd.f32 %v7454, %v7459
      %v7464 = vadd.f32 %v7455, %v7459
      %v7465 = vadd.f32 %v7456, %v7459
      %v7466 = vadd.f32 %v7457, %v7459
      %v7467 = vadd.f32 %v7458, %v7459
      %v7468 = vperm.slane %v6489, 0
      %v7470 = vsel %vm913, %v7460, 0
      %v7473 = vsel %vm913, %v7461, 0
      %v7476 = vsel %vm913, %v7462, 0
      %v7479 = vsel %vm913, %v7463, 0
      %v7482 = vsel %vm913, %v7464, 0
      %v7485 = vsel %vm913, %v7465, 0
      %v7488 = vsel %vm913, %v7466, 0
      %v7491 = vsel %vm913, %v7467, 0
      %7493 = vmatpush.msra.mxu0 0.0
      %7494 = vmatpush.msra.mxu0 0.0
      %7495 = vmatpush.msra.mxu0 0.0
      %7496 = vmatpush.msra.mxu0 0.0
      %7497 = vmatpush.msra.mxu0 0.0
      %7498 = vmatpush.msra.mxu0 0.0
      %7499 = vmatpush.msra.mxu0 0.0
      %7500 = vmatpush.msra.mxu0 0.0
      %7501 = vmatpush.msra.mxu0 0.0
      %7502 = vmatpush.msra.mxu0 0.0
      %7503 = vmatpush.msra.mxu0 0.0
      %7504 = vmatpush.msra.mxu0 0.0
      %7505 = vmatpush.msra.mxu0 %v6471
      %7506 = vmatpush.msra.mxu0 %v6470
      %7507 = vmatpush.msra.mxu0 %v6469
      %7508 = vmatpush.msra.mxu0 %v6468
      %7509 = vmatmul.f32.gmra.mxu0 %v7470
      %v7510 = vpop.f32.mrf.mxu0
      %v7511 = vadd.f32 %v7468, %v7510
      %7512 = vmatmul.f32.gmra.mxu0 %v7473
      %v7513 = vpop.f32.mrf.mxu0
      %v7514 = vadd.f32 %v7468, %v7513
      %7515 = vmatmul.f32.gmra.mxu0 %v7476
      %v7516 = vpop.f32.mrf.mxu0
      %v7517 = vadd.f32 %v7468, %v7516
      %7518 = vmatmul.f32.gmra.mxu0 %v7479
      %v7519 = vpop.f32.mrf.mxu0
      %v7520 = vadd.f32 %v7468, %v7519
      %7521 = vmatmul.f32.gmra.mxu0 %v7482
      %v7522 = vpop.f32.mrf.mxu0
      %v7523 = vadd.f32 %v7468, %v7522
      %7524 = vmatmul.f32.gmra.mxu0 %v7485
      %v7525 = vpop.f32.mrf.mxu0
      %v7526 = vadd.f32 %v7468, %v7525
      %7527 = vmatmul.f32.gmra.mxu0 %v7488
      %v7528 = vpop.f32.mrf.mxu0
      %v7529 = vadd.f32 %v7468, %v7528
      %7530 = vmatmul.f32.gmra.mxu0 %v7491
      %v7531 = vpop.f32.mrf.mxu0
      %v7532 = vadd.f32 %v7468, %v7531
      %7533 = vdwg.mxu0
      %v7534 = vmul.f32 %v7511, %v7511
      %v7535 = vmul.f32 %v7514, %v7514
      %v7536 = vmul.f32 %v7517, %v7517
      %v7537 = vmul.f32 %v7520, %v7520
      %v7538 = vmul.f32 %v7523, %v7523
      %v7539 = vmul.f32 %v7526, %v7526
      %v7540 = vmul.f32 %v7529, %v7529
      %v7541 = vmul.f32 %v7532, %v7532
      %v7542 = vmul.f32 %v7511, %v7534
      %v7543 = vmul.f32 %v7514, %v7535
      %v7544 = vmul.f32 %v7517, %v7536
      %v7545 = vmul.f32 %v7520, %v7537
      %v7546 = vmul.f32 %v7523, %v7538
      %v7547 = vmul.f32 %v7526, %v7539
      %v7548 = vmul.f32 %v7529, %v7540
      %v7549 = vmul.f32 %v7532, %v7541
      %v7550 = vmul.f32 %v7542, 0.044715
      %v7551 = vmul.f32 %v7543, 0.044715
      %v7552 = vmul.f32 %v7544, 0.044715
      %v7553 = vmul.f32 %v7545, 0.044715
      %v7554 = vmul.f32 %v7546, 0.044715
      %v7555 = vmul.f32 %v7547, 0.044715
      %v7556 = vmul.f32 %v7548, 0.044715
      %v7557 = vmul.f32 %v7549, 0.044715
      %v7558 = vadd.f32 %v7511, %v7550
      %v7559 = vadd.f32 %v7514, %v7551
      %v7560 = vadd.f32 %v7517, %v7552
      %v7561 = vadd.f32 %v7520, %v7553
      %v7562 = vadd.f32 %v7523, %v7554
      %v7563 = vadd.f32 %v7526, %v7555
      %v7564 = vadd.f32 %v7529, %v7556
      %v7565 = vadd.f32 %v7532, %v7557
      %v7566 = vmul.f32 %v7558, 0.7978846
      %v7567 = vmul.f32 %v7559, 0.7978846
      %v7568 = vmul.f32 %v7560, 0.7978846
      %v7569 = vmul.f32 %v7561, 0.7978846
      %v7570 = vmul.f32 %v7562, 0.7978846
      %v7571 = vmul.f32 %v7563, 0.7978846
      %v7572 = vmul.f32 %v7564, 0.7978846
      %v7573 = vmul.f32 %v7565, 0.7978846
      %v7574 = vtanh.pop %v7566
      %v7575 = vtanh.pop %v7567
      %v7576 = vtanh.pop %v7568
      %v7577 = vtanh.pop %v7569
      %v7578 = vtanh.pop %v7570
      %v7579 = vtanh.pop %v7571
      %v7580 = vtanh.pop %v7572
      %v7581 = vtanh.pop %v7573
      %v7582 = vadd.f32 %v7574, 1.0
      %v7583 = vadd.f32 %v7575, 1.0
      %v7584 = vadd.f32 %v7576, 1.0
      %v7585 = vadd.f32 %v7577, 1.0
      %v7586 = vadd.f32 %v7578, 1.0
      %v7587 = vadd.f32 %v7579, 1.0
      %v7588 = vadd.f32 %v7580, 1.0
      %v7589 = vadd.f32 %v7581, 1.0
      %v7590 = vmul.f32 %v7582, 0.5
      %v7591 = vmul.f32 %v7583, 0.5
      %v7592 = vmul.f32 %v7584, 0.5
      %v7593 = vmul.f32 %v7585, 0.5
      %v7594 = vmul.f32 %v7586, 0.5
      %v7595 = vmul.f32 %v7587, 0.5
      %v7596 = vmul.f32 %v7588, 0.5
      %v7597 = vmul.f32 %v7589, 0.5
      %v7598 = vmul.f32 %v7511, %v7590
      %v7599 = vmul.f32 %v7514, %v7591
      %v7600 = vmul.f32 %v7517, %v7592
      %v7601 = vmul.f32 %v7520, %v7593
      %v7602 = vmul.f32 %v7523, %v7594
      %v7603 = vmul.f32 %v7526, %v7595
      %v7604 = vmul.f32 %v7529, %v7596
      %v7605 = vmul.f32 %v7532, %v7597
      %7606 = vmatpush.msra.mxu0 %v6488
      %7607 = vmatpush.msra.mxu0 %v6487
      %7608 = vmatpush.msra.mxu0 %v6486
      %7609 = vmatpush.msra.mxu0 %v6485
      %7610 = vmatpush.msra.mxu0 %v6484
      %7611 = vmatpush.msra.mxu0 %v6483
      %7612 = vmatpush.msra.mxu0 %v6482
      %7613 = vmatpush.msra.mxu0 %v6481
      %7614 = vmatpush.msra.mxu0 %v6480
      %7615 = vmatpush.msra.mxu0 %v6479
      %7616 = vmatpush.msra.mxu0 %v6478
      %7617 = vmatpush.msra.mxu0 %v6477
      %7618 = vmatpush.msra.mxu0 %v6476
      %7619 = vmatpush.msra.mxu0 %v6475
      %7620 = vmatpush.msra.mxu0 %v6474
      %7621 = vmatpush.msra.mxu0 %v6473
      %7622 = vmatmul.f32.gmra.mxu0 %v7598
      %v7623 = vpop.f32.mrf.mxu0
      %v7624 = vadd.f32 0.0, %v7623
      %7625 = vmatmul.f32.gmra.mxu0 %v7599
      %v7626 = vpop.f32.mrf.mxu0
      %v7627 = vadd.f32 0.0, %v7626
      %7628 = vmatmul.f32.gmra.mxu0 %v7600
      %v7629 = vpop.f32.mrf.mxu0
      %v7630 = vadd.f32 0.0, %v7629
      %7631 = vmatmul.f32.gmra.mxu0 %v7601
      %v7632 = vpop.f32.mrf.mxu0
      %v7633 = vadd.f32 0.0, %v7632
      %7634 = vmatmul.f32.gmra.mxu0 %v7602
      %v7635 = vpop.f32.mrf.mxu0
      %v7636 = vadd.f32 0.0, %v7635
      %7637 = vmatmul.f32.gmra.mxu0 %v7603
      %v7638 = vpop.f32.mrf.mxu0
      %v7639 = vadd.f32 0.0, %v7638
      %7640 = vmatmul.f32.gmra.mxu0 %v7604
      %v7641 = vpop.f32.mrf.mxu0
      %v7642 = vadd.f32 0.0, %v7641
      %7643 = vmatmul.f32.gmra.mxu0 %v7605
      %v7644 = vpop.f32.mrf.mxu0
      %v7645 = vadd.f32 0.0, %v7644
      %7646 = vdwg.mxu0
      %v7647 = vadd.f32 %v7266, %v7624
      %v7648 = vadd.f32 %v7267, %v7627
      %v7649 = vadd.f32 %v7268, %v7630
      %v7650 = vadd.f32 %v7269, %v7633
      %v7651 = vadd.f32 %v7270, %v7636
      %v7652 = vadd.f32 %v7271, %v7639
      %v7653 = vadd.f32 %v7272, %v7642
      %v7654 = vadd.f32 %v7273, %v7645
      %v7655 = vperm.slane %v6492, 2
      %v7656 = vadd.f32 %v7647, %v7655
      %v7657 = vadd.f32 %v7648, %v7655
      %v7658 = vadd.f32 %v7649, %v7655
      %v7659 = vadd.f32 %v7650, %v7655
      %v7660 = vadd.f32 %v7651, %v7655
      %v7661 = vadd.f32 %v7652, %v7655
      %v7662 = vadd.f32 %v7653, %v7655
      %v7663 = vadd.f32 %v7654, %v7655
      %v7664 = vld [vmem:[%s10] sm:$0xff]
      %v7665 = vld [vmem:[%s11] sm:$0xff]
      %v7667 = vsel %vm2754, %v7665, 0
      %7669 = vmatpush.msra.mxu0 0.0
      %7670 = vmatpush.msra.mxu0 0.0
      %7671 = vmatpush.msra.mxu0 0.0
      %7672 = vmatpush.msra.mxu0 0.0
      %7673 = vmatpush.msra.mxu0 0.0
      %7674 = vmatpush.msra.mxu0 0.0
      %7675 = vmatpush.msra.mxu0 0.0
      %7676 = vmatpush.msra.mxu0 0.0
      %7677 = vmatpush.msra.mxu0 %v7663
      %7678 = vmatpush.msra.mxu0 %v7662
      %7679 = vmatpush.msra.mxu0 %v7661
      %7680 = vmatpush.msra.mxu0 %v7660
      %7681 = vmatpush.msra.mxu0 %v7659
      %7682 = vmatpush.msra.mxu0 %v7658
      %7683 = vmatpush.msra.mxu0 %v7657
      %7684 = vmatpush.msra.mxu0 %v7656
      %7685 = vmatmul.f32.gmra.mxu0 %v7667
      %v7686 = vpop.f32.mrf.mxu0
      %v7687 = vadd.f32 0.0, %v7686
      %7688 = vdwg.mxu0
      %v7690 = vsel %vm2754, %v7664, 0
      %7692 = vmatpush.msra.mxu0 0.0
      %7693 = vmatpush.msra.mxu0 0.0
      %7694 = vmatpush.msra.mxu0 0.0
      %7695 = vmatpush.msra.mxu0 0.0
      %7696 = vmatpush.msra.mxu0 0.0
      %7697 = vmatpush.msra.mxu0 0.0
      %7698 = vmatpush.msra.mxu0 0.0
      %7699 = vmatpush.msra.mxu0 0.0
      %7700 = vmatpush.msra.mxu0 %v6446
      %7701 = vmatpush.msra.mxu0 %v6445
      %7702 = vmatpush.msra.mxu0 %v6444
      %7703 = vmatpush.msra.mxu0 %v6443
      %7704 = vmatpush.msra.mxu0 %v6442
      %7705 = vmatpush.msra.mxu0 %v6441
      %7706 = vmatpush.msra.mxu0 %v6440
      %7707 = vmatpush.msra.mxu0 %v6439
      %7708 = vmatmul.f32.gmra.mxu0 %v7690
      %v7709 = vpop.f32.mrf.mxu0
      %v7710 = vadd.f32 %v7687, %v7709
      %7711 = vdwg.mxu0
      %v7712 = vld [vmem:[%s21] sm:$0xff]
      %v7713 = vld [vmem:[%s21 + $0x8] sm:$0xff]
      %v7714 = vld [vmem:[%s21 + $0x10] sm:$0xff]
      %v7715 = vld [vmem:[%s21 + $0x18] sm:$0xff]
      %v7716 = vperm.slane %v792, 5
      %v7718 = vsel %vm913, %v7710, 0
      %7720 = vmatpush.msra.mxu0 0.0
      %7721 = vmatpush.msra.mxu0 0.0
      %7722 = vmatpush.msra.mxu0 0.0
      %7723 = vmatpush.msra.mxu0 0.0
      %7724 = vmatpush.msra.mxu0 0.0
      %7725 = vmatpush.msra.mxu0 0.0
      %7726 = vmatpush.msra.mxu0 0.0
      %7727 = vmatpush.msra.mxu0 0.0
      %7728 = vmatpush.msra.mxu0 0.0
      %7729 = vmatpush.msra.mxu0 0.0
      %7730 = vmatpush.msra.mxu0 0.0
      %7731 = vmatpush.msra.mxu0 0.0
      %7732 = vmatpush.msra.mxu0 %v7715
      %7733 = vmatpush.msra.mxu0 %v7714
      %7734 = vmatpush.msra.mxu0 %v7713
      %7735 = vmatpush.msra.mxu0 %v7712
      %7736 = vmatmul.f32.gmra.mxu0 %v7718
      %v7737 = vpop.f32.mrf.mxu0
      %v7738 = vadd.f32 %v7716, %v7737
      %7739 = vdwg.mxu0
      %v7740 = vmax.f32 %v7738, 0.0
      %v7741 = vld [vmem:[%s22] sm:$0xff]
      %v7742 = vld [vmem:[%s22 + $0x8] sm:$0xff]
      %v7743 = vld [vmem:[%s22 + $0x10] sm:$0xff]
      %v7744 = vld [vmem:[%s22 + $0x18] sm:$0xff]
      %v7745 = vld [vmem:[%s23] sm:$0x1]
      %v7747 = vperm.slane %v7745, 0
      %v7750 = vsel %vm913, %v7740, 0
      %7752 = vmatpush.msra.mxu0 0.0
      %7753 = vmatpush.msra.mxu0 0.0
      %7754 = vmatpush.msra.mxu0 0.0
      %7755 = vmatpush.msra.mxu0 0.0
      %7756 = vmatpush.msra.mxu0 0.0
      %7757 = vmatpush.msra.mxu0 0.0
      %7758 = vmatpush.msra.mxu0 0.0
      %7759 = vmatpush.msra.mxu0 0.0
      %7760 = vmatpush.msra.mxu0 0.0
      %7761 = vmatpush.msra.mxu0 0.0
      %7762 = vmatpush.msra.mxu0 0.0
      %7763 = vmatpush.msra.mxu0 0.0
      %7764 = vmatpush.msra.mxu0 %v7744
      %7765 = vmatpush.msra.mxu0 %v7743
      %7766 = vmatpush.msra.mxu0 %v7742
      %7767 = vmatpush.msra.mxu0 %v7741
      %7768 = vmatmul.f32.gmra.mxu0 %v7750
      %v7769 = vpop.f32.mrf.mxu0
      %v7770 = vadd.f32 %v7747, %v7769
      %7771 = vdwg.mxu0
      %7772 = vst [vmem:[%s759] sm:$0xff] %v7770
      %p7773 = scmp.lt.s32.totalorder %s35, 1
      %s7774 = scalar_select %p7773, %s35, 1
      %s7775 = smul.addr %s7774, 8
      %s7776 = scalar_lea.vmem %s24, %s7775
      // Predicated region
      $region117: #{stlt_forward.1} parent=115 // pred_check
        %p7777 = pneg %p567
      $region118: #{stlt_forward.1} parent=115 // pred_check_branch
        %7779 = sbr.rel (%p7777) target = $region120
      $region119: #{stlt_forward.1} parent=115 // pred_region
        _
      $region120: #{stlt_forward.1} parent=115 // pred_fallthru
        _
    $region116: #{stlt_forward.1} parent=5 // pred_fallthru
      _
    %p7780 = scmp.le.s32.totalorder 2, %s30
    // Predicated region
    $region121: #{stlt_forward.1} parent=5 // pred_check
      %p7781 = pneg %p7780
    $region122: #{stlt_forward.1} parent=5 // pred_check_branch
      %7783 = sbr.rel (%p7781) target = $region124
    $region123: #{stlt_forward.1} parent=5 // pred_region
      %s7784 = ssub.s32 %s30, 2
      // Predicated region
      $region125: #{stlt_forward.1} parent=123 // pred_check
        %p7785 = pneg %p573
      $region126: #{stlt_forward.1} parent=123 // pred_check_branch
        %7787 = sbr.rel (%p7785) target = $region128
      $region127: #{stlt_forward.1} parent=123 // pred_region
        %p7788 = scmp.lt.s32.totalorder %s36, 1
        %s7789 = scalar_select %p7788, %s36, 1
        %s7790 = smul.addr %s7789, 8
        %s7791 = scalar_lea.vmem %s24, %s7790
      $region128: #{stlt_forward.1} parent=123 // pred_fallthru
        _
    $region124: #{stlt_forward.1} parent=5 // pred_fallthru
      _
  $region6: #{stlt_forward.1} parent=0 // loop_footer
    %s34 = sadd.s32 1, %s30
  $region7: #{stlt_forward.1} parent=0 // loop_footer_branch
    %29 = sbr.rel target = $region3
  $region8: #{stlt_forward.1} parent=0 // loop_exit
    _

</llo_original>
